<compile_context>
chip_gen: v5e
topology: v5e:2x2
jax: 0.10.0
libtpu: 0.0.40
codegen_flags: <defaults>
</compile_context>

<pallas_src>
import functools
import math

import jax
import jax.numpy as jnp
from jax.experimental import pallas as pl
from jax.experimental.pallas import tpu as pltpu


# ----------------------------------------------------------------------------
# In-kernel helpers
# ----------------------------------------------------------------------------
def _store_into_padded(pad_ref, y, *, h, w, TB, C):
    """Write pooled activation y (h, w, TB, C) f32 into pad_ref's interior
    (bf16) and zero only the 1-pixel halo strips of the (h+2, w+2) region.
    All indexing is on untiled leading dims -> no relayout, full-lane stores.
    """
    zrow = jnp.zeros((1, w + 2, TB, C), jnp.bfloat16)
    zcol = jnp.zeros((h, 1, TB, C), jnp.bfloat16)
    pad_ref[0:1, 0:w + 2, :, :] = zrow
    pad_ref[h + 1:h + 2, 0:w + 2, :, :] = zrow
    pad_ref[1:h + 1, 0:1, :, :] = zcol
    pad_ref[1:h + 1, w + 1:w + 2, :, :] = zcol
    pad_ref[1:h + 1, 1:w + 1, :, :] = y.astype(jnp.bfloat16)


def _conv_pool_block(pad_ref, w_ref, s_ref, *, h, w, TB, C):
    """3x3 conv (bias/BN folded) + ReLU + 2x2/2 max-pool on the (h+2, w+2)
    region of pad_ref (bf16, layout (y, x, TB, C)).

    The 9 taps are leading-dim slices of the padded slab feeding 9
    accumulating MXU dots with M = h*w*TB; pooling is leading-dim reshapes +
    elementwise max (pure VPU).  Returns (h//2, w//2, TB, C) f32.
    """
    M = h * w * TB
    xpad = pad_ref[0:h + 2, 0:w + 2, :, :]                      # bf16 value
    acc = None
    for k in range(9):
        dy, dx = divmod(k, 3)
        tap = xpad[dy:dy + h, dx:dx + w].reshape(M, C)          # leading dims
        d = jnp.dot(tap, w_ref[k], preferred_element_type=jnp.float32)
        acc = d if acc is None else acc + d
    y = jnp.maximum(acc + s_ref[...], 0.0).reshape(h, w, TB, C)  # f32 math
    y = y.reshape(h, w // 2, 2, TB, C).max(axis=2)
    y = y.reshape(h // 2, 2, w // 2, TB, C).max(axis=1)
    return y                                                     # (h/2,w/2,TB,C)


def classifier_kernel(p1_ref, w1, s1, w2, s2, w3, s3, w4, s4, *rest,
                      H, W, Cin, C, TB, Hf, Wf, use_fc, n_pad):
    # p1_ref : (H, W, TB, 9*Cin) bf16  -- wrapper-built layer-1 im2col patches
    # wX/sX  : folded conv weights / per-channel shift
    # rest   : [w5 (Hf,Wf,C,n_pad) bf16, b5 (1,n_pad) f32,] o_ref, pad_ref
    if use_fc:
        w5_ref, b5_ref, o_ref, pad_ref = rest
    else:
        o_ref, pad_ref = rest

    # ---- layer 1: one dense matmul over the wrapper-built patches ----------
    M1 = H * W * TB
    patches = p1_ref[...].reshape(M1, 9 * Cin)                   # bf16
    acc = jnp.dot(patches, w1[...], preferred_element_type=jnp.float32)
    y = jnp.maximum(acc + s1[...], 0.0).reshape(H, W, TB, C)
    y = y.reshape(H, W // 2, 2, TB, C).max(axis=2)
    y = y.reshape(H // 2, 2, W // 2, TB, C).max(axis=1)          # (H/2,W/2,TB,C)

    # ---- layers 2-4: bf16 VMEM-resident activations -------------------------
    h, w = H // 2, W // 2
    for (wl, sl) in ((w2, s2), (w3, s3), (w4, s4)):
        _store_into_padded(pad_ref, y, h=h, w=w, TB=TB, C=C)
        y = _conv_pool_block(pad_ref, wl, sl, h=h, w=w, TB=TB, C=C)
        h, w = h // 2, w // 2
    # y: (Hf, Wf, TB, C) f32

    # ---- head ---------------------------------------------------------------
    if use_fc:
        acc = None
        for yy in range(Hf):
            for xx in range(Wf):
                d = jnp.dot(y[yy, xx].astype(jnp.bfloat16), w5_ref[yy, xx],
                            preferred_element_type=jnp.float32)
                acc = d if acc is None else acc + d
        o_ref[...] = acc + b5_ref[...]                 # (TB, n_pad) dense store
    else:
        o_ref[...] = y                                 # (Hf, Wf, TB, C)


# ----------------------------------------------------------------------------
# Wrapper
# ----------------------------------------------------------------------------
def _pick_tb(N, H, W, Cin, C):
    """Batch-tile size: multiple of 8 (sublane-dense (TB, C) tiles, BlockSpec
    divisibility), sized against a ~24 MiB VMEM budget (fits v7x's 32 MiB
    scoped / 64 MiB physical), and reduced so grid >= 2 when the batch allows
    it (feeds both v7x TensorCores through the "parallel" grid axis)."""
    per_img = 2 * H * W * 9 * Cin * 2                  # layer-1 patches, 2 bufs
    per_img += (H // 2 + 2) * (W // 2 + 2) * C * 2     # bf16 pad scratch
    per_img += 2 * H * W * C * 4                       # transient f32 conv out
    budget = 24 * 1024 * 1024
    tb = max(8, min(64, (budget // max(per_img, 1)) // 8 * 8))
    n8 = ((N + 7) // 8) * 8
    if n8 < 2 * tb:                                    # prefer >= 2 grid steps
        tb = max(8, (n8 // 2) // 8 * 8) if n8 >= 16 else 8
    return tb


def classifier_forward(params, image_nchw, n_classes, *, eps=1e-5):
    N, Cin, H, W = image_nchw.shape
    C = params["layer1"]["w"].shape[-1]
    assert H % 16 == 0 and W % 16 == 0, "requires image_size % 16 == 0"

    TB = _pick_tb(N, H, W, Cin, C)
    N_pad = ((N + TB - 1) // TB) * TB

    # NCHW -> NHWC, pad batch to a multiple of TB.
    x = jnp.transpose(image_nchw, (0, 2, 3, 1)).astype(jnp.float32)
    if N_pad != N:
        x = jnp.pad(x, ((0, N_pad - N), (0, 0), (0, 0), (0, 0)))

    # Layer-1 im2col in the wrapper (Cin is 1/3 -> in-kernel taps would be
    # 1-lane ops).  Layout (H, W, N, 9*Cin): batch+K are the tiled dims.
    xpad = jnp.pad(x, ((0, 0), (1, 1), (1, 1), (0, 0)))
    taps = [xpad[:, dy:dy + H, dx:dx + W, :]
            for dy in range(3) for dx in range(3)]
    p1 = jnp.concatenate(taps, axis=-1)                      # (N,H,W,9*Cin)
    p1 = jnp.transpose(p1, (1, 2, 0, 3)).astype(jnp.bfloat16)  # (H,W,N,9*Cin)

    # Fold conv bias + BatchNorm (eval) into weights / per-channel shift.
    def fold(p):
        scale = p["gamma"] * jax.lax.rsqrt(p["var"] + eps)       # (C,)
        wf = p["w"] * scale                                      # HWIO scaled
        shift = (p["beta"] + (p["b"] - p["mean"]) * scale).reshape(1, C)
        return wf, shift.astype(jnp.float32)

    w1f, s1 = fold(params["layer1"])
    conv_inputs = [w1f.reshape(9 * Cin, C).astype(jnp.bfloat16), s1]
    conv_specs = [pl.BlockSpec((9 * Cin, C), lambda n: (0, 0)),
                  pl.BlockSpec((1, C), lambda n: (0, 0))]
    for name in ("layer2", "layer3", "layer4"):
        wf, sh = fold(params[name])
        conv_inputs += [wf.reshape(9, C, C).astype(jnp.bfloat16), sh]
        conv_specs += [pl.BlockSpec((9, C, C), lambda n: (0, 0, 0)),
                       pl.BlockSpec((1, C), lambda n: (0, 0))]

    Hf, Wf = H // 16, W // 16
    out_size = Hf * Wf * C
    use_fc = n_classes > 0

    if use_fc:
        n_pad_out = ((n_classes + 127) // 128) * 128     # lane-dense output
        # torch Linear weight rows are CHW-flatten ordered -> (Hf, Wf, C, cls).
        w5 = params["layer5"]["w"].reshape(C, Hf, Wf, n_classes)
        w5 = jnp.transpose(w5, (1, 2, 0, 3))
        w5 = jnp.pad(w5, ((0, 0), (0, 0), (0, 0), (0, n_pad_out - n_classes)))
        b5 = jnp.pad(params["layer5"]["b"], (0, n_pad_out - n_classes))
        fc_inputs = [w5.astype(jnp.bfloat16),
                     b5.reshape(1, n_pad_out).astype(jnp.float32)]
        fc_specs = [pl.BlockSpec((Hf, Wf, C, n_pad_out), lambda n: (0, 0, 0, 0)),
                    pl.BlockSpec((1, n_pad_out), lambda n: (0, 0))]
        out_shape = jax.ShapeDtypeStruct((N_pad, n_pad_out), jnp.float32)
        out_spec = pl.BlockSpec((TB, n_pad_out), lambda n: (n, 0))
    else:
        n_pad_out = 0
        fc_inputs, fc_specs = [], []
        out_shape = jax.ShapeDtypeStruct((Hf, Wf, N_pad, C), jnp.float32)
        out_spec = pl.BlockSpec((Hf, Wf, TB, C), lambda n: (0, 0, n, 0))

    kernel = functools.partial(classifier_kernel, H=H, W=W, Cin=Cin, C=C,
                               TB=TB, Hf=Hf, Wf=Wf, use_fc=use_fc,
                               n_pad=n_pad_out)

    out = pl.pallas_call(
        kernel,
        out_shape=out_shape,
        grid=(N_pad // TB,),
        in_specs=[pl.BlockSpec((H, W, TB, 9 * Cin), lambda n: (0, 0, n, 0))]
                 + conv_specs + fc_specs,
        out_specs=out_spec,
        scratch_shapes=[
            pltpu.VMEM((H // 2 + 2, W // 2 + 2, TB, C), jnp.bfloat16)],
        compiler_params=pltpu.CompilerParams(
            dimension_semantics=("parallel",),
            vmem_limit_bytes=32 * 1024 * 1024),
    )(p1, *conv_inputs, *fc_inputs)

    if use_fc:
        return out[:N, :n_classes]
    # Kernel layout (Hf, Wf, N, C) -> torch CHW-order flatten.
    feats = jnp.transpose(out, (2, 3, 0, 1)).reshape(N_pad, out_size)
    return feats[:N]


# ----------------------------------------------------------------------------
# Parameter construction (deterministic, mirrors weights_init)
# ----------------------------------------------------------------------------
def xavier_uniform_conv(key, cin, cout, gain):
    fan_in, fan_out = cin * 9, cout * 9
    bound = gain * math.sqrt(6.0 / (fan_in + fan_out))
    return jax.random.uniform(key, (3, 3, cin, cout), jnp.float32,   # HWIO
                              minval=-bound, maxval=bound)


def make_conv_block_params(key, cin, cout):
    return dict(
        w=xavier_uniform_conv(key, cin, cout, gain=math.sqrt(2.0)),
        b=jnp.zeros((cout,), jnp.float32),        # init.constant_(bias, 0)
        gamma=jnp.ones((cout,), jnp.float32),     # BN weight = 1
        beta=jnp.zeros((cout,), jnp.float32),     # BN bias = 0
        mean=jnp.zeros((cout,), jnp.float32),     # running_mean
        var=jnp.ones((cout,), jnp.float32),       # running_var
    )


def make_classifier_params(key, layer_size, num_channels, n_classes, out_size):
    keys = jax.random.split(key, 6)
    params = {
        "layer1": make_conv_block_params(keys[0], num_channels, layer_size),
        "layer2": make_conv_block_params(keys[1], layer_size, layer_size),
        "layer3": make_conv_block_params(keys[2], layer_size, layer_size),
        "layer4": make_conv_block_params(keys[3], layer_size, layer_size),
    }
    if n_classes > 0:
        bound = 1.0 / math.sqrt(out_size)         # PyTorch Linear default init
        params["layer5"] = dict(
            w=jax.random.uniform(keys[4], (out_size, n_classes), jnp.float32,
                                 minval=-bound, maxval=bound),
            b=jax.random.uniform(keys[5], (n_classes,), jnp.float32,
                                 minval=-bound, maxval=bound),
        )
    return params


if __name__ == "__main__":
    # Small shapes consistent with the module: batch=2, num_channels=1,
    # layer_size=32, image_size=16 (16 -> 8 -> 4 -> 2 -> 1), n_classes=10.
    batch, num_channels, image_size = 2, 1, 16
    layer_size, n_classes = 32, 10
    final_size = image_size // 16
    out_size = final_size * final_size * layer_size

    key = jax.random.PRNGKey(0)
    k_params, k_input = jax.random.split(key)
    params = make_classifier_params(k_params, layer_size, num_channels,
                                    n_classes, out_size)
    image = jax.random.normal(
        k_input, (batch, num_channels, image_size, image_size), jnp.float32)

    out = classifier_forward(params, image, n_classes)
    out = jax.block_until_ready(out)
    assert out.shape == (batch, n_classes), out.shape
    assert bool(jnp.all(jnp.isfinite(out)))
    print("KERNEL_OK")
</pallas_src>

<mosaic_0001>
module attributes {stable_mosaic.version = 11 : i64} {
  func.func @classifier_kernel(%arg0: i32, %arg1: memref<16x16x8x9xbf16, #tpu.memory_space<vmem>>, %arg2: memref<9x32xbf16, #tpu.memory_space<vmem>>, %arg3: memref<1x32xf32, #tpu.memory_space<vmem>>, %arg4: memref<9x32x32xbf16, #tpu.memory_space<vmem>>, %arg5: memref<1x32xf32, #tpu.memory_space<vmem>>, %arg6: memref<9x32x32xbf16, #tpu.memory_space<vmem>>, %arg7: memref<1x32xf32, #tpu.memory_space<vmem>>, %arg8: memref<9x32x32xbf16, #tpu.memory_space<vmem>>, %arg9: memref<1x32xf32, #tpu.memory_space<vmem>>, %arg10: memref<1x1x32x128xbf16, #tpu.memory_space<vmem>>, %arg11: memref<1x128xf32, #tpu.memory_space<vmem>>, %arg12: memref<8x128xf32, #tpu.memory_space<vmem>>, %arg13: memref<10x10x8x32xbf16, #tpu.memory_space<vmem>>) attributes {dimension_semantics = [#tpu.dimension_semantics<parallel>], iteration_bounds = array<i64: 1>, scalar_prefetch = 0 : i64, scratch_operands = 1 : i64, tpu.core_type = #tpu.core_type<tc>, window_params = [{transform_indices = @transform_0, window_bounds = array<i64: 16, 16, 8, 9>}, {pipeline_mode = #tpu.pipeline_mode<synchronous>, transform_indices = @transform_1, window_bounds = array<i64: 9, 32>}, {pipeline_mode = #tpu.pipeline_mode<synchronous>, transform_indices = @transform_2, window_bounds = array<i64: 1, 32>}, {pipeline_mode = #tpu.pipeline_mode<synchronous>, transform_indices = @transform_3, window_bounds = array<i64: 9, 32, 32>}, {pipeline_mode = #tpu.pipeline_mode<synchronous>, transform_indices = @transform_4, window_bounds = array<i64: 1, 32>}, {pipeline_mode = #tpu.pipeline_mode<synchronous>, transform_indices = @transform_5, window_bounds = array<i64: 9, 32, 32>}, {pipeline_mode = #tpu.pipeline_mode<synchronous>, transform_indices = @transform_6, window_bounds = array<i64: 1, 32>}, {pipeline_mode = #tpu.pipeline_mode<synchronous>, transform_indices = @transform_7, window_bounds = array<i64: 9, 32, 32>}, {pipeline_mode = #tpu.pipeline_mode<synchronous>, transform_indices = @transform_8, window_bounds = array<i64: 1, 32>}, {pipeline_mode = #tpu.pipeline_mode<synchronous>, transform_indices = @transform_9, window_bounds = array<i64: 1, 1, 32, 128>}, {pipeline_mode = #tpu.pipeline_mode<synchronous>, transform_indices = @transform_10, window_bounds = array<i64: 1, 128>}, {transform_indices = @transform_11, window_bounds = array<i64: 8, 128>}]} {
    %c0 = arith.constant 0 : index
    %c0_0 = arith.constant 0 : index
    %c0_1 = arith.constant 0 : index
    %c0_2 = arith.constant 0 : index
    %0 = vector.load %arg1[%c0, %c0_0, %c0_1, %c0_2] : memref<16x16x8x9xbf16, #tpu.memory_space<vmem>>, vector<16x16x8x9xbf16>
    %1 = vector.shape_cast %0 : vector<16x16x8x9xbf16> to vector<2048x9xbf16>
    %c0_3 = arith.constant 0 : index
    %c0_4 = arith.constant 0 : index
    %2 = vector.load %arg2[%c0_3, %c0_4] : memref<9x32xbf16, #tpu.memory_space<vmem>>, vector<9x32xbf16>
    %cst = arith.constant dense<0.000000e+00> : vector<2048x32xf32>
    %3 = tpu.matmul %1, %2, %cst {dimension_numbers = #tpu.dot_dimension_numbers<[1], [0], [0], [1], [0, 0, 1, 1], [], []>} : vector<2048x9xbf16>, vector<9x32xbf16>, vector<2048x32xf32> -> vector<2048x32xf32>
    %c0_5 = arith.constant 0 : index
    %c0_6 = arith.constant 0 : index
    %4 = vector.load %arg3[%c0_5, %c0_6] : memref<1x32xf32, #tpu.memory_space<vmem>>, vector<1x32xf32>
    %5 = vector.broadcast %4 : vector<1x32xf32> to vector<2048x32xf32>
    %6 = arith.addf %3, %5 : vector<2048x32xf32>
    %cst_7 = arith.constant 0.000000e+00 : f32
    %7 = vector.broadcast %cst_7 : f32 to vector<2048x32xf32>
    %8 = arith.maximumf %6, %7 : vector<2048x32xf32>
    %9 = vector.shape_cast %8 : vector<2048x32xf32> to vector<16x16x8x32xf32>
    %10 = vector.shape_cast %9 : vector<16x16x8x32xf32> to vector<16x8x2x8x32xf32>
    %cst_8 = arith.constant dense<0xFF800000> : vector<16x8x8x32xf32>
    %11 = vector.multi_reduction <maximumf>, %10, %cst_8 [2] : vector<16x8x2x8x32xf32> to vector<16x8x8x32xf32>
    %12 = vector.shape_cast %11 : vector<16x8x8x32xf32> to vector<8x2x8x8x32xf32>
    %cst_9 = arith.constant dense<0xFF800000> : vector<8x8x8x32xf32>
    %13 = vector.multi_reduction <maximumf>, %12, %cst_9 [1] : vector<8x2x8x8x32xf32> to vector<8x8x8x32xf32>
    %cst_10 = arith.constant 0.000000e+00 : bf16
    %14 = vector.broadcast %cst_10 : bf16 to vector<1x10x8x32xbf16>
    %cst_11 = arith.constant 0.000000e+00 : bf16
    %15 = vector.broadcast %cst_11 : bf16 to vector<8x1x8x32xbf16>
    %c0_12 = arith.constant 0 : index
    %c0_13 = arith.constant 0 : index
    %c0_14 = arith.constant 0 : index
    %c0_15 = arith.constant 0 : index
    %16 = vector.load %arg13[%c0_12, %c0_13, %c0_14, %c0_15] : memref<10x10x8x32xbf16, #tpu.memory_space<vmem>>, vector<1x10x8x32xbf16>
    tpu.vector_store %arg13[%c0_12, %c0_13, %c0_14, %c0_15], %14 {strides = array<i32>} : memref<10x10x8x32xbf16, #tpu.memory_space<vmem>>, vector<1x10x8x32xbf16>,
    %c9 = arith.constant 9 : index
    %c0_16 = arith.constant 0 : index
    %c0_17 = arith.constant 0 : index
    %c0_18 = arith.constant 0 : index
    %17 = vector.load %arg13[%c9, %c0_16, %c0_17, %c0_18] : memref<10x10x8x32xbf16, #tpu.memory_space<vmem>>, vector<1x10x8x32xbf16>
    tpu.vector_store %arg13[%c9, %c0_16, %c0_17, %c0_18], %14 {strides = array<i32>} : memref<10x10x8x32xbf16, #tpu.memory_space<vmem>>, vector<1x10x8x32xbf16>,
    %c1 = arith.constant 1 : index
    %c0_19 = arith.constant 0 : index
    %c0_20 = arith.constant 0 : index
    %c0_21 = arith.constant 0 : index
    %18 = vector.load %arg13[%c1, %c0_19, %c0_20, %c0_21] : memref<10x10x8x32xbf16, #tpu.memory_space<vmem>>, vector<8x1x8x32xbf16>
    tpu.vector_store %arg13[%c1, %c0_19, %c0_20, %c0_21], %15 {strides = array<i32>} : memref<10x10x8x32xbf16, #tpu.memory_space<vmem>>, vector<8x1x8x32xbf16>,
    %c1_22 = arith.constant 1 : index
    %c9_23 = arith.constant 9 : index
    %c0_24 = arith.constant 0 : index
    %c0_25 = arith.constant 0 : index
    %19 = vector.load %arg13[%c1_22, %c9_23, %c0_24, %c0_25] : memref<10x10x8x32xbf16, #tpu.memory_space<vmem>>, vector<8x1x8x32xbf16>
    tpu.vector_store %arg13[%c1_22, %c9_23, %c0_24, %c0_25], %15 {strides = array<i32>} : memref<10x10x8x32xbf16, #tpu.memory_space<vmem>>, vector<8x1x8x32xbf16>,
    %20 = arith.truncf %13 : vector<8x8x8x32xf32> to vector<8x8x8x32xbf16>
    %c1_26 = arith.constant 1 : index
    %c1_27 = arith.constant 1 : index
    %c0_28 = arith.constant 0 : index
    %c0_29 = arith.constant 0 : index
    %21 = vector.load %arg13[%c1_26, %c1_27, %c0_28, %c0_29] : memref<10x10x8x32xbf16, #tpu.memory_space<vmem>>, vector<8x8x8x32xbf16>
    tpu.vector_store %arg13[%c1_26, %c1_27, %c0_28, %c0_29], %20 {strides = array<i32>} : memref<10x10x8x32xbf16, #tpu.memory_space<vmem>>, vector<8x8x8x32xbf16>,
    %c0_30 = arith.constant 0 : index
    %c0_31 = arith.constant 0 : index
    %c0_32 = arith.constant 0 : index
    %c0_33 = arith.constant 0 : index
    %22 = vector.load %arg13[%c0_30, %c0_31, %c0_32, %c0_33] : memref<10x10x8x32xbf16, #tpu.memory_space<vmem>>, vector<10x10x8x32xbf16>
    %23 = vector.extract_strided_slice %22 {offsets = [0, 0, 0, 0], sizes = [8, 8, 8, 32], strides = [1, 1, 1, 1]} : vector<10x10x8x32xbf16> to vector<8x8x8x32xbf16>
    %24 = vector.shape_cast %23 : vector<8x8x8x32xbf16> to vector<512x32xbf16>
    %c0_34 = arith.constant 0 : index
    %c0_35 = arith.constant 0 : index
    %c0_36 = arith.constant 0 : index
    %25 = vector.load %arg4[%c0_34, %c0_35, %c0_36] : memref<9x32x32xbf16, #tpu.memory_space<vmem>>, vector<1x32x32xbf16>
    %26 = vector.shape_cast %25 : vector<1x32x32xbf16> to vector<32x32xbf16>
    %cst_37 = arith.constant dense<0.000000e+00> : vector<512x32xf32>
    %27 = tpu.matmul %24, %26, %cst_37 {dimension_numbers = #tpu.dot_dimension_numbers<[1], [0], [0], [1], [0, 0, 1, 1], [], []>} : vector<512x32xbf16>, vector<32x32xbf16>, vector<512x32xf32> -> vector<512x32xf32>
    %28 = vector.extract_strided_slice %22 {offsets = [0, 1, 0, 0], sizes = [8, 8, 8, 32], strides = [1, 1, 1, 1]} : vector<10x10x8x32xbf16> to vector<8x8x8x32xbf16>
    %29 = vector.shape_cast %28 : vector<8x8x8x32xbf16> to vector<512x32xbf16>
    %c1_38 = arith.constant 1 : index
    %c0_39 = arith.constant 0 : index
    %c0_40 = arith.constant 0 : index
    %30 = vector.load %arg4[%c1_38, %c0_39, %c0_40] : memref<9x32x32xbf16, #tpu.memory_space<vmem>>, vector<1x32x32xbf16>
    %31 = vector.shape_cast %30 : vector<1x32x32xbf16> to vector<32x32xbf16>
    %cst_41 = arith.constant dense<0.000000e+00> : vector<512x32xf32>
    %32 = tpu.matmul %29, %31, %cst_41 {dimension_numbers = #tpu.dot_dimension_numbers<[1], [0], [0], [1], [0, 0, 1, 1], [], []>} : vector<512x32xbf16>, vector<32x32xbf16>, vector<512x32xf32> -> vector<512x32xf32>
    %33 = arith.addf %27, %32 : vector<512x32xf32>
    %34 = vector.extract_strided_slice %22 {offsets = [0, 2, 0, 0], sizes = [8, 8, 8, 32], strides = [1, 1, 1, 1]} : vector<10x10x8x32xbf16> to vector<8x8x8x32xbf16>
    %35 = vector.shape_cast %34 : vector<8x8x8x32xbf16> to vector<512x32xbf16>
    %c2 = arith.constant 2 : index
    %c0_42 = arith.constant 0 : index
    %c0_43 = arith.constant 0 : index
    %36 = vector.load %arg4[%c2, %c0_42, %c0_43] : memref<9x32x32xbf16, #tpu.memory_space<vmem>>, vector<1x32x32xbf16>
    %37 = vector.shape_cast %36 : vector<1x32x32xbf16> to vector<32x32xbf16>
    %cst_44 = arith.constant dense<0.000000e+00> : vector<512x32xf32>
    %38 = tpu.matmul %35, %37, %cst_44 {dimension_numbers = #tpu.dot_dimension_numbers<[1], [0], [0], [1], [0, 0, 1, 1], [], []>} : vector<512x32xbf16>, vector<32x32xbf16>, vector<512x32xf32> -> vector<512x32xf32>
    %39 = arith.addf %33, %38 : vector<512x32xf32>
    %40 = vector.extract_strided_slice %22 {offsets = [1, 0, 0, 0], sizes = [8, 8, 8, 32], strides = [1, 1, 1, 1]} : vector<10x10x8x32xbf16> to vector<8x8x8x32xbf16>
    %41 = vector.shape_cast %40 : vector<8x8x8x32xbf16> to vector<512x32xbf16>
    %c3 = arith.constant 3 : index
    %c0_45 = arith.constant 0 : index
    %c0_46 = arith.constant 0 : index
    %42 = vector.load %arg4[%c3, %c0_45, %c0_46] : memref<9x32x32xbf16, #tpu.memory_space<vmem>>, vector<1x32x32xbf16>
    %43 = vector.shape_cast %42 : vector<1x32x32xbf16> to vector<32x32xbf16>
    %cst_47 = arith.constant dense<0.000000e+00> : vector<512x32xf32>
    %44 = tpu.matmul %41, %43, %cst_47 {dimension_numbers = #tpu.dot_dimension_numbers<[1], [0], [0], [1], [0, 0, 1, 1], [], []>} : vector<512x32xbf16>, vector<32x32xbf16>, vector<512x32xf32> -> vector<512x32xf32>
    %45 = arith.addf %39, %44 : vector<512x32xf32>
    %46 = vector.extract_strided_slice %22 {offsets = [1, 1, 0, 0], sizes = [8, 8, 8, 32], strides = [1, 1, 1, 1]} : vector<10x10x8x32xbf16> to vector<8x8x8x32xbf16>
    %47 = vector.shape_cast %46 : vector<8x8x8x32xbf16> to vector<512x32xbf16>
    %c4 = arith.constant 4 : index
    %c0_48 = arith.constant 0 : index
    %c0_49 = arith.constant 0 : index
    %48 = vector.load %arg4[%c4, %c0_48, %c0_49] : memref<9x32x32xbf16, #tpu.memory_space<vmem>>, vector<1x32x32xbf16>
    %49 = vector.shape_cast %48 : vector<1x32x32xbf16> to vector<32x32xbf16>
    %cst_50 = arith.constant dense<0.000000e+00> : vector<512x32xf32>
    %50 = tpu.matmul %47, %49, %cst_50 {dimension_numbers = #tpu.dot_dimension_numbers<[1], [0], [0], [1], [0, 0, 1, 1], [], []>} : vector<512x32xbf16>, vector<32x32xbf16>, vector<512x32xf32> -> vector<512x32xf32>
    %51 = arith.addf %45, %50 : vector<512x32xf32>
    %52 = vector.extract_strided_slice %22 {offsets = [1, 2, 0, 0], sizes = [8, 8, 8, 32], strides = [1, 1, 1, 1]} : vector<10x10x8x32xbf16> to vector<8x8x8x32xbf16>
    %53 = vector.shape_cast %52 : vector<8x8x8x32xbf16> to vector<512x32xbf16>
    %c5 = arith.constant 5 : index
    %c0_51 = arith.constant 0 : index
    %c0_52 = arith.constant 0 : index
    %54 = vector.load %arg4[%c5, %c0_51, %c0_52] : memref<9x32x32xbf16, #tpu.memory_space<vmem>>, vector<1x32x32xbf16>
    %55 = vector.shape_cast %54 : vector<1x32x32xbf16> to vector<32x32xbf16>
    %cst_53 = arith.constant dense<0.000000e+00> : vector<512x32xf32>
    %56 = tpu.matmul %53, %55, %cst_53 {dimension_numbers = #tpu.dot_dimension_numbers<[1], [0], [0], [1], [0, 0, 1, 1], [], []>} : vector<512x32xbf16>, vector<32x32xbf16>, vector<512x32xf32> -> vector<512x32xf32>
    %57 = arith.addf %51, %56 : vector<512x32xf32>
    %58 = vector.extract_strided_slice %22 {offsets = [2, 0, 0, 0], sizes = [8, 8, 8, 32], strides = [1, 1, 1, 1]} : vector<10x10x8x32xbf16> to vector<8x8x8x32xbf16>
    %59 = vector.shape_cast %58 : vector<8x8x8x32xbf16> to vector<512x32xbf16>
    %c6 = arith.constant 6 : index
    %c0_54 = arith.constant 0 : index
    %c0_55 = arith.constant 0 : index
    %60 = vector.load %arg4[%c6, %c0_54, %c0_55] : memref<9x32x32xbf16, #tpu.memory_space<vmem>>, vector<1x32x32xbf16>
    %61 = vector.shape_cast %60 : vector<1x32x32xbf16> to vector<32x32xbf16>
    %cst_56 = arith.constant dense<0.000000e+00> : vector<512x32xf32>
    %62 = tpu.matmul %59, %61, %cst_56 {dimension_numbers = #tpu.dot_dimension_numbers<[1], [0], [0], [1], [0, 0, 1, 1], [], []>} : vector<512x32xbf16>, vector<32x32xbf16>, vector<512x32xf32> -> vector<512x32xf32>
    %63 = arith.addf %57, %62 : vector<512x32xf32>
    %64 = vector.extract_strided_slice %22 {offsets = [2, 1, 0, 0], sizes = [8, 8, 8, 32], strides = [1, 1, 1, 1]} : vector<10x10x8x32xbf16> to vector<8x8x8x32xbf16>
    %65 = vector.shape_cast %64 : vector<8x8x8x32xbf16> to vector<512x32xbf16>
    %c7 = arith.constant 7 : index
    %c0_57 = arith.constant 0 : index
    %c0_58 = arith.constant 0 : index
    %66 = vector.load %arg4[%c7, %c0_57, %c0_58] : memref<9x32x32xbf16, #tpu.memory_space<vmem>>, vector<1x32x32xbf16>
    %67 = vector.shape_cast %66 : vector<1x32x32xbf16> to vector<32x32xbf16>
    %cst_59 = arith.constant dense<0.000000e+00> : vector<512x32xf32>
    %68 = tpu.matmul %65, %67, %cst_59 {dimension_numbers = #tpu.dot_dimension_numbers<[1], [0], [0], [1], [0, 0, 1, 1], [], []>} : vector<512x32xbf16>, vector<32x32xbf16>, vector<512x32xf32> -> vector<512x32xf32>
    %69 = arith.addf %63, %68 : vector<512x32xf32>
    %70 = vector.extract_strided_slice %22 {offsets = [2, 2, 0, 0], sizes = [8, 8, 8, 32], strides = [1, 1, 1, 1]} : vector<10x10x8x32xbf16> to vector<8x8x8x32xbf16>
    %71 = vector.shape_cast %70 : vector<8x8x8x32xbf16> to vector<512x32xbf16>
    %c8 = arith.constant 8 : index
    %c0_60 = arith.constant 0 : index
    %c0_61 = arith.constant 0 : index
    %72 = vector.load %arg4[%c8, %c0_60, %c0_61] : memref<9x32x32xbf16, #tpu.memory_space<vmem>>, vector<1x32x32xbf16>
    %73 = vector.shape_cast %72 : vector<1x32x32xbf16> to vector<32x32xbf16>
    %cst_62 = arith.constant dense<0.000000e+00> : vector<512x32xf32>
    %74 = tpu.matmul %71, %73, %cst_62 {dimension_numbers = #tpu.dot_dimension_numbers<[1], [0], [0], [1], [0, 0, 1, 1], [], []>} : vector<512x32xbf16>, vector<32x32xbf16>, vector<512x32xf32> -> vector<512x32xf32>
    %75 = arith.addf %69, %74 : vector<512x32xf32>
    %c0_63 = arith.constant 0 : index
    %c0_64 = arith.constant 0 : index
    %76 = vector.load %arg5[%c0_63, %c0_64] : memref<1x32xf32, #tpu.memory_space<vmem>>, vector<1x32xf32>
    %77 = vector.broadcast %76 : vector<1x32xf32> to vector<512x32xf32>
    %78 = arith.addf %75, %77 : vector<512x32xf32>
    %cst_65 = arith.constant 0.000000e+00 : f32
    %79 = vector.broadcast %cst_65 : f32 to vector<512x32xf32>
    %80 = arith.maximumf %78, %79 : vector<512x32xf32>
    %81 = vector.shape_cast %80 : vector<512x32xf32> to vector<8x8x8x32xf32>
    %82 = vector.shape_cast %81 : vector<8x8x8x32xf32> to vector<8x4x2x8x32xf32>
    %cst_66 = arith.constant dense<0xFF800000> : vector<8x4x8x32xf32>
    %83 = vector.multi_reduction <maximumf>, %82, %cst_66 [2] : vector<8x4x2x8x32xf32> to vector<8x4x8x32xf32>
    %84 = vector.shape_cast %83 : vector<8x4x8x32xf32> to vector<4x2x4x8x32xf32>
    %cst_67 = arith.constant dense<0xFF800000> : vector<4x4x8x32xf32>
    %85 = vector.multi_reduction <maximumf>, %84, %cst_67 [1] : vector<4x2x4x8x32xf32> to vector<4x4x8x32xf32>
    %cst_68 = arith.constant 0.000000e+00 : bf16
    %86 = vector.broadcast %cst_68 : bf16 to vector<1x6x8x32xbf16>
    %cst_69 = arith.constant 0.000000e+00 : bf16
    %87 = vector.broadcast %cst_69 : bf16 to vector<4x1x8x32xbf16>
    %c0_70 = arith.constant 0 : index
    %c0_71 = arith.constant 0 : index
    %c0_72 = arith.constant 0 : index
    %c0_73 = arith.constant 0 : index
    %88 = vector.load %arg13[%c0_70, %c0_71, %c0_72, %c0_73] : memref<10x10x8x32xbf16, #tpu.memory_space<vmem>>, vector<1x6x8x32xbf16>
    tpu.vector_store %arg13[%c0_70, %c0_71, %c0_72, %c0_73], %86 {strides = array<i32>} : memref<10x10x8x32xbf16, #tpu.memory_space<vmem>>, vector<1x6x8x32xbf16>,
    %c5_74 = arith.constant 5 : index
    %c0_75 = arith.constant 0 : index
    %c0_76 = arith.constant 0 : index
    %c0_77 = arith.constant 0 : index
    %89 = vector.load %arg13[%c5_74, %c0_75, %c0_76, %c0_77] : memref<10x10x8x32xbf16, #tpu.memory_space<vmem>>, vector<1x6x8x32xbf16>
    tpu.vector_store %arg13[%c5_74, %c0_75, %c0_76, %c0_77], %86 {strides = array<i32>} : memref<10x10x8x32xbf16, #tpu.memory_space<vmem>>, vector<1x6x8x32xbf16>,
    %c1_78 = arith.constant 1 : index
    %c0_79 = arith.constant 0 : index
    %c0_80 = arith.constant 0 : index
    %c0_81 = arith.constant 0 : index
    %90 = vector.load %arg13[%c1_78, %c0_79, %c0_80, %c0_81] : memref<10x10x8x32xbf16, #tpu.memory_space<vmem>>, vector<4x1x8x32xbf16>
    tpu.vector_store %arg13[%c1_78, %c0_79, %c0_80, %c0_81], %87 {strides = array<i32>} : memref<10x10x8x32xbf16, #tpu.memory_space<vmem>>, vector<4x1x8x32xbf16>,
    %c1_82 = arith.constant 1 : index
    %c5_83 = arith.constant 5 : index
    %c0_84 = arith.constant 0 : index
    %c0_85 = arith.constant 0 : index
    %91 = vector.load %arg13[%c1_82, %c5_83, %c0_84, %c0_85] : memref<10x10x8x32xbf16, #tpu.memory_space<vmem>>, vector<4x1x8x32xbf16>
    tpu.vector_store %arg13[%c1_82, %c5_83, %c0_84, %c0_85], %87 {strides = array<i32>} : memref<10x10x8x32xbf16, #tpu.memory_space<vmem>>, vector<4x1x8x32xbf16>,
    %92 = arith.truncf %85 : vector<4x4x8x32xf32> to vector<4x4x8x32xbf16>
    %c1_86 = arith.constant 1 : index
    %c1_87 = arith.constant 1 : index
    %c0_88 = arith.constant 0 : index
    %c0_89 = arith.constant 0 : index
    %93 = vector.load %arg13[%c1_86, %c1_87, %c0_88, %c0_89] : memref<10x10x8x32xbf16, #tpu.memory_space<vmem>>, vector<4x4x8x32xbf16>
    tpu.vector_store %arg13[%c1_86, %c1_87, %c0_88, %c0_89], %92 {strides = array<i32>} : memref<10x10x8x32xbf16, #tpu.memory_space<vmem>>, vector<4x4x8x32xbf16>,
    %c0_90 = arith.constant 0 : index
    %c0_91 = arith.constant 0 : index
    %c0_92 = arith.constant 0 : index
    %c0_93 = arith.constant 0 : index
    %94 = vector.load %arg13[%c0_90, %c0_91, %c0_92, %c0_93] : memref<10x10x8x32xbf16, #tpu.memory_space<vmem>>, vector<6x6x8x32xbf16>
    %95 = vector.extract_strided_slice %94 {offsets = [0, 0, 0, 0], sizes = [4, 4, 8, 32], strides = [1, 1, 1, 1]} : vector<6x6x8x32xbf16> to vector<4x4x8x32xbf16>
    %96 = vector.shape_cast %95 : vector<4x4x8x32xbf16> to vector<128x32xbf16>
    %c0_94 = arith.constant 0 : index
    %c0_95 = arith.constant 0 : index
    %c0_96 = arith.constant 0 : index
    %97 = vector.load %arg6[%c0_94, %c0_95, %c0_96] : memref<9x32x32xbf16, #tpu.memory_space<vmem>>, vector<1x32x32xbf16>
    %98 = vector.shape_cast %97 : vector<1x32x32xbf16> to vector<32x32xbf16>
    %cst_97 = arith.constant dense<0.000000e+00> : vector<128x32xf32>
    %99 = tpu.matmul %96, %98, %cst_97 {dimension_numbers = #tpu.dot_dimension_numbers<[1], [0], [0], [1], [0, 0, 1, 1], [], []>} : vector<128x32xbf16>, vector<32x32xbf16>, vector<128x32xf32> -> vector<128x32xf32>
    %100 = vector.extract_strided_slice %94 {offsets = [0, 1, 0, 0], sizes = [4, 4, 8, 32], strides = [1, 1, 1, 1]} : vector<6x6x8x32xbf16> to vector<4x4x8x32xbf16>
    %101 = vector.shape_cast %100 : vector<4x4x8x32xbf16> to vector<128x32xbf16>
    %c1_98 = arith.constant 1 : index
    %c0_99 = arith.constant 0 : index
    %c0_100 = arith.constant 0 : index
    %102 = vector.load %arg6[%c1_98, %c0_99, %c0_100] : memref<9x32x32xbf16, #tpu.memory_space<vmem>>, vector<1x32x32xbf16>
    %103 = vector.shape_cast %102 : vector<1x32x32xbf16> to vector<32x32xbf16>
    %cst_101 = arith.constant dense<0.000000e+00> : vector<128x32xf32>
    %104 = tpu.matmul %101, %103, %cst_101 {dimension_numbers = #tpu.dot_dimension_numbers<[1], [0], [0], [1], [0, 0, 1, 1], [], []>} : vector<128x32xbf16>, vector<32x32xbf16>, vector<128x32xf32> -> vector<128x32xf32>
    %105 = arith.addf %99, %104 : vector<128x32xf32>
    %106 = vector.extract_strided_slice %94 {offsets = [0, 2, 0, 0], sizes = [4, 4, 8, 32], strides = [1, 1, 1, 1]} : vector<6x6x8x32xbf16> to vector<4x4x8x32xbf16>
    %107 = vector.shape_cast %106 : vector<4x4x8x32xbf16> to vector<128x32xbf16>
    %c2_102 = arith.constant 2 : index
    %c0_103 = arith.constant 0 : index
    %c0_104 = arith.constant 0 : index
    %108 = vector.load %arg6[%c2_102, %c0_103, %c0_104] : memref<9x32x32xbf16, #tpu.memory_space<vmem>>, vector<1x32x32xbf16>
    %109 = vector.shape_cast %108 : vector<1x32x32xbf16> to vector<32x32xbf16>
    %cst_105 = arith.constant dense<0.000000e+00> : vector<128x32xf32>
    %110 = tpu.matmul %107, %109, %cst_105 {dimension_numbers = #tpu.dot_dimension_numbers<[1], [0], [0], [1], [0, 0, 1, 1], [], []>} : vector<128x32xbf16>, vector<32x32xbf16>, vector<128x32xf32> -> vector<128x32xf32>
    %111 = arith.addf %105, %110 : vector<128x32xf32>
    %112 = vector.extract_strided_slice %94 {offsets = [1, 0, 0, 0], sizes = [4, 4, 8, 32], strides = [1, 1, 1, 1]} : vector<6x6x8x32xbf16> to vector<4x4x8x32xbf16>
    %113 = vector.shape_cast %112 : vector<4x4x8x32xbf16> to vector<128x32xbf16>
    %c3_106 = arith.constant 3 : index
    %c0_107 = arith.constant 0 : index
    %c0_108 = arith.constant 0 : index
    %114 = vector.load %arg6[%c3_106, %c0_107, %c0_108] : memref<9x32x32xbf16, #tpu.memory_space<vmem>>, vector<1x32x32xbf16>
    %115 = vector.shape_cast %114 : vector<1x32x32xbf16> to vector<32x32xbf16>
    %cst_109 = arith.constant dense<0.000000e+00> : vector<128x32xf32>
    %116 = tpu.matmul %113, %115, %cst_109 {dimension_numbers = #tpu.dot_dimension_numbers<[1], [0], [0], [1], [0, 0, 1, 1], [], []>} : vector<128x32xbf16>, vector<32x32xbf16>, vector<128x32xf32> -> vector<128x32xf32>
    %117 = arith.addf %111, %116 : vector<128x32xf32>
    %118 = vector.extract_strided_slice %94 {offsets = [1, 1, 0, 0], sizes = [4, 4, 8, 32], strides = [1, 1, 1, 1]} : vector<6x6x8x32xbf16> to vector<4x4x8x32xbf16>
    %119 = vector.shape_cast %118 : vector<4x4x8x32xbf16> to vector<128x32xbf16>
    %c4_110 = arith.constant 4 : index
    %c0_111 = arith.constant 0 : index
    %c0_112 = arith.constant 0 : index
    %120 = vector.load %arg6[%c4_110, %c0_111, %c0_112] : memref<9x32x32xbf16, #tpu.memory_space<vmem>>, vector<1x32x32xbf16>
    %121 = vector.shape_cast %120 : vector<1x32x32xbf16> to vector<32x32xbf16>
    %cst_113 = arith.constant dense<0.000000e+00> : vector<128x32xf32>
    %122 = tpu.matmul %119, %121, %cst_113 {dimension_numbers = #tpu.dot_dimension_numbers<[1], [0], [0], [1], [0, 0, 1, 1], [], []>} : vector<128x32xbf16>, vector<32x32xbf16>, vector<128x32xf32> -> vector<128x32xf32>
    %123 = arith.addf %117, %122 : vector<128x32xf32>
    %124 = vector.extract_strided_slice %94 {offsets = [1, 2, 0, 0], sizes = [4, 4, 8, 32], strides = [1, 1, 1, 1]} : vector<6x6x8x32xbf16> to vector<4x4x8x32xbf16>
    %125 = vector.shape_cast %124 : vector<4x4x8x32xbf16> to vector<128x32xbf16>
    %c5_114 = arith.constant 5 : index
    %c0_115 = arith.constant 0 : index
    %c0_116 = arith.constant 0 : index
    %126 = vector.load %arg6[%c5_114, %c0_115, %c0_116] : memref<9x32x32xbf16, #tpu.memory_space<vmem>>, vector<1x32x32xbf16>
    %127 = vector.shape_cast %126 : vector<1x32x32xbf16> to vector<32x32xbf16>
    %cst_117 = arith.constant dense<0.000000e+00> : vector<128x32xf32>
    %128 = tpu.matmul %125, %127, %cst_117 {dimension_numbers = #tpu.dot_dimension_numbers<[1], [0], [0], [1], [0, 0, 1, 1], [], []>} : vector<128x32xbf16>, vector<32x32xbf16>, vector<128x32xf32> -> vector<128x32xf32>
    %129 = arith.addf %123, %128 : vector<128x32xf32>
    %130 = vector.extract_strided_slice %94 {offsets = [2, 0, 0, 0], sizes = [4, 4, 8, 32], strides = [1, 1, 1, 1]} : vector<6x6x8x32xbf16> to vector<4x4x8x32xbf16>
    %131 = vector.shape_cast %130 : vector<4x4x8x32xbf16> to vector<128x32xbf16>
    %c6_118 = arith.constant 6 : index
    %c0_119 = arith.constant 0 : index
    %c0_120 = arith.constant 0 : index
    %132 = vector.load %arg6[%c6_118, %c0_119, %c0_120] : memref<9x32x32xbf16, #tpu.memory_space<vmem>>, vector<1x32x32xbf16>
    %133 = vector.shape_cast %132 : vector<1x32x32xbf16> to vector<32x32xbf16>
    %cst_121 = arith.constant dense<0.000000e+00> : vector<128x32xf32>
    %134 = tpu.matmul %131, %133, %cst_121 {dimension_numbers = #tpu.dot_dimension_numbers<[1], [0], [0], [1], [0, 0, 1, 1], [], []>} : vector<128x32xbf16>, vector<32x32xbf16>, vector<128x32xf32> -> vector<128x32xf32>
    %135 = arith.addf %129, %134 : vector<128x32xf32>
    %136 = vector.extract_strided_slice %94 {offsets = [2, 1, 0, 0], sizes = [4, 4, 8, 32], strides = [1, 1, 1, 1]} : vector<6x6x8x32xbf16> to vector<4x4x8x32xbf16>
    %137 = vector.shape_cast %136 : vector<4x4x8x32xbf16> to vector<128x32xbf16>
    %c7_122 = arith.constant 7 : index
    %c0_123 = arith.constant 0 : index
    %c0_124 = arith.constant 0 : index
    %138 = vector.load %arg6[%c7_122, %c0_123, %c0_124] : memref<9x32x32xbf16, #tpu.memory_space<vmem>>, vector<1x32x32xbf16>
    %139 = vector.shape_cast %138 : vector<1x32x32xbf16> to vector<32x32xbf16>
    %cst_125 = arith.constant dense<0.000000e+00> : vector<128x32xf32>
    %140 = tpu.matmul %137, %139, %cst_125 {dimension_numbers = #tpu.dot_dimension_numbers<[1], [0], [0], [1], [0, 0, 1, 1], [], []>} : vector<128x32xbf16>, vector<32x32xbf16>, vector<128x32xf32> -> vector<128x32xf32>
    %141 = arith.addf %135, %140 : vector<128x32xf32>
    %142 = vector.extract_strided_slice %94 {offsets = [2, 2, 0, 0], sizes = [4, 4, 8, 32], strides = [1, 1, 1, 1]} : vector<6x6x8x32xbf16> to vector<4x4x8x32xbf16>
    %143 = vector.shape_cast %142 : vector<4x4x8x32xbf16> to vector<128x32xbf16>
    %c8_126 = arith.constant 8 : index
    %c0_127 = arith.constant 0 : index
    %c0_128 = arith.constant 0 : index
    %144 = vector.load %arg6[%c8_126, %c0_127, %c0_128] : memref<9x32x32xbf16, #tpu.memory_space<vmem>>, vector<1x32x32xbf16>
    %145 = vector.shape_cast %144 : vector<1x32x32xbf16> to vector<32x32xbf16>
    %cst_129 = arith.constant dense<0.000000e+00> : vector<128x32xf32>
    %146 = tpu.matmul %143, %145, %cst_129 {dimension_numbers = #tpu.dot_dimension_numbers<[1], [0], [0], [1], [0, 0, 1, 1], [], []>} : vector<128x32xbf16>, vector<32x32xbf16>, vector<128x32xf32> -> vector<128x32xf32>
    %147 = arith.addf %141, %146 : vector<128x32xf32>
    %c0_130 = arith.constant 0 : index
    %c0_131 = arith.constant 0 : index
    %148 = vector.load %arg7[%c0_130, %c0_131] : memref<1x32xf32, #tpu.memory_space<vmem>>, vector<1x32xf32>
    %149 = vector.broadcast %148 : vector<1x32xf32> to vector<128x32xf32>
    %150 = arith.addf %147, %149 : vector<128x32xf32>
    %cst_132 = arith.constant 0.000000e+00 : f32
    %151 = vector.broadcast %cst_132 : f32 to vector<128x32xf32>
    %152 = arith.maximumf %150, %151 : vector<128x32xf32>
    %153 = vector.shape_cast %152 : vector<128x32xf32> to vector<4x4x8x32xf32>
    %154 = vector.shape_cast %153 : vector<4x4x8x32xf32> to vector<4x2x2x8x32xf32>
    %cst_133 = arith.constant dense<0xFF800000> : vector<4x2x8x32xf32>
    %155 = vector.multi_reduction <maximumf>, %154, %cst_133 [2] : vector<4x2x2x8x32xf32> to vector<4x2x8x32xf32>
    %156 = vector.shape_cast %155 : vector<4x2x8x32xf32> to vector<2x2x2x8x32xf32>
    %cst_134 = arith.constant dense<0xFF800000> : vector<2x2x8x32xf32>
    %157 = vector.multi_reduction <maximumf>, %156, %cst_134 [1] : vector<2x2x2x8x32xf32> to vector<2x2x8x32xf32>
    %cst_135 = arith.constant 0.000000e+00 : bf16
    %158 = vector.broadcast %cst_135 : bf16 to vector<1x4x8x32xbf16>
    %cst_136 = arith.constant 0.000000e+00 : bf16
    %159 = vector.broadcast %cst_136 : bf16 to vector<2x1x8x32xbf16>
    %c0_137 = arith.constant 0 : index
    %c0_138 = arith.constant 0 : index
    %c0_139 = arith.constant 0 : index
    %c0_140 = arith.constant 0 : index
    %160 = vector.load %arg13[%c0_137, %c0_138, %c0_139, %c0_140] : memref<10x10x8x32xbf16, #tpu.memory_space<vmem>>, vector<1x4x8x32xbf16>
    tpu.vector_store %arg13[%c0_137, %c0_138, %c0_139, %c0_140], %158 {strides = array<i32>} : memref<10x10x8x32xbf16, #tpu.memory_space<vmem>>, vector<1x4x8x32xbf16>,
    %c3_141 = arith.constant 3 : index
    %c0_142 = arith.constant 0 : index
    %c0_143 = arith.constant 0 : index
    %c0_144 = arith.constant 0 : index
    %161 = vector.load %arg13[%c3_141, %c0_142, %c0_143, %c0_144] : memref<10x10x8x32xbf16, #tpu.memory_space<vmem>>, vector<1x4x8x32xbf16>
    tpu.vector_store %arg13[%c3_141, %c0_142, %c0_143, %c0_144], %158 {strides = array<i32>} : memref<10x10x8x32xbf16, #tpu.memory_space<vmem>>, vector<1x4x8x32xbf16>,
    %c1_145 = arith.constant 1 : index
    %c0_146 = arith.constant 0 : index
    %c0_147 = arith.constant 0 : index
    %c0_148 = arith.constant 0 : index
    %162 = vector.load %arg13[%c1_145, %c0_146, %c0_147, %c0_148] : memref<10x10x8x32xbf16, #tpu.memory_space<vmem>>, vector<2x1x8x32xbf16>
    tpu.vector_store %arg13[%c1_145, %c0_146, %c0_147, %c0_148], %159 {strides = array<i32>} : memref<10x10x8x32xbf16, #tpu.memory_space<vmem>>, vector<2x1x8x32xbf16>,
    %c1_149 = arith.constant 1 : index
    %c3_150 = arith.constant 3 : index
    %c0_151 = arith.constant 0 : index
    %c0_152 = arith.constant 0 : index
    %163 = vector.load %arg13[%c1_149, %c3_150, %c0_151, %c0_152] : memref<10x10x8x32xbf16, #tpu.memory_space<vmem>>, vector<2x1x8x32xbf16>
    tpu.vector_store %arg13[%c1_149, %c3_150, %c0_151, %c0_152], %159 {strides = array<i32>} : memref<10x10x8x32xbf16, #tpu.memory_space<vmem>>, vector<2x1x8x32xbf16>,
    %164 = arith.truncf %157 : vector<2x2x8x32xf32> to vector<2x2x8x32xbf16>
    %c1_153 = arith.constant 1 : index
    %c1_154 = arith.constant 1 : index
    %c0_155 = arith.constant 0 : index
    %c0_156 = arith.constant 0 : index
    %165 = vector.load %arg13[%c1_153, %c1_154, %c0_155, %c0_156] : memref<10x10x8x32xbf16, #tpu.memory_space<vmem>>, vector<2x2x8x32xbf16>
    tpu.vector_store %arg13[%c1_153, %c1_154, %c0_155, %c0_156], %164 {strides = array<i32>} : memref<10x10x8x32xbf16, #tpu.memory_space<vmem>>, vector<2x2x8x32xbf16>,
    %c0_157 = arith.constant 0 : index
    %c0_158 = arith.constant 0 : index
    %c0_159 = arith.constant 0 : index
    %c0_160 = arith.constant 0 : index
    %166 = vector.load %arg13[%c0_157, %c0_158, %c0_159, %c0_160] : memref<10x10x8x32xbf16, #tpu.memory_space<vmem>>, vector<4x4x8x32xbf16>
    %167 = vector.extract_strided_slice %166 {offsets = [0, 0, 0, 0], sizes = [2, 2, 8, 32], strides = [1, 1, 1, 1]} : vector<4x4x8x32xbf16> to vector<2x2x8x32xbf16>
    %168 = vector.shape_cast %167 : vector<2x2x8x32xbf16> to vector<32x32xbf16>
    %c0_161 = arith.constant 0 : index
    %c0_162 = arith.constant 0 : index
    %c0_163 = arith.constant 0 : index
    %169 = vector.load %arg8[%c0_161, %c0_162, %c0_163] : memref<9x32x32xbf16, #tpu.memory_space<vmem>>, vector<1x32x32xbf16>
    %170 = vector.shape_cast %169 : vector<1x32x32xbf16> to vector<32x32xbf16>
    %cst_164 = arith.constant dense<0.000000e+00> : vector<32x32xf32>
    %171 = tpu.matmul %168, %170, %cst_164 {dimension_numbers = #tpu.dot_dimension_numbers<[1], [0], [0], [1], [0, 0, 1, 1], [], []>} : vector<32x32xbf16>, vector<32x32xbf16>, vector<32x32xf32> -> vector<32x32xf32>
    %172 = vector.extract_strided_slice %166 {offsets = [0, 1, 0, 0], sizes = [2, 2, 8, 32], strides = [1, 1, 1, 1]} : vector<4x4x8x32xbf16> to vector<2x2x8x32xbf16>
    %173 = vector.shape_cast %172 : vector<2x2x8x32xbf16> to vector<32x32xbf16>
    %c1_165 = arith.constant 1 : index
    %c0_166 = arith.constant 0 : index
    %c0_167 = arith.constant 0 : index
    %174 = vector.load %arg8[%c1_165, %c0_166, %c0_167] : memref<9x32x32xbf16, #tpu.memory_space<vmem>>, vector<1x32x32xbf16>
    %175 = vector.shape_cast %174 : vector<1x32x32xbf16> to vector<32x32xbf16>
    %cst_168 = arith.constant dense<0.000000e+00> : vector<32x32xf32>
    %176 = tpu.matmul %173, %175, %cst_168 {dimension_numbers = #tpu.dot_dimension_numbers<[1], [0], [0], [1], [0, 0, 1, 1], [], []>} : vector<32x32xbf16>, vector<32x32xbf16>, vector<32x32xf32> -> vector<32x32xf32>
    %177 = arith.addf %171, %176 : vector<32x32xf32>
    %178 = vector.extract_strided_slice %166 {offsets = [0, 2, 0, 0], sizes = [2, 2, 8, 32], strides = [1, 1, 1, 1]} : vector<4x4x8x32xbf16> to vector<2x2x8x32xbf16>
    %179 = vector.shape_cast %178 : vector<2x2x8x32xbf16> to vector<32x32xbf16>
    %c2_169 = arith.constant 2 : index
    %c0_170 = arith.constant 0 : index
    %c0_171 = arith.constant 0 : index
    %180 = vector.load %arg8[%c2_169, %c0_170, %c0_171] : memref<9x32x32xbf16, #tpu.memory_space<vmem>>, vector<1x32x32xbf16>
    %181 = vector.shape_cast %180 : vector<1x32x32xbf16> to vector<32x32xbf16>
    %cst_172 = arith.constant dense<0.000000e+00> : vector<32x32xf32>
    %182 = tpu.matmul %179, %181, %cst_172 {dimension_numbers = #tpu.dot_dimension_numbers<[1], [0], [0], [1], [0, 0, 1, 1], [], []>} : vector<32x32xbf16>, vector<32x32xbf16>, vector<32x32xf32> -> vector<32x32xf32>
    %183 = arith.addf %177, %182 : vector<32x32xf32>
    %184 = vector.extract_strided_slice %166 {offsets = [1, 0, 0, 0], sizes = [2, 2, 8, 32], strides = [1, 1, 1, 1]} : vector<4x4x8x32xbf16> to vector<2x2x8x32xbf16>
    %185 = vector.shape_cast %184 : vector<2x2x8x32xbf16> to vector<32x32xbf16>
    %c3_173 = arith.constant 3 : index
    %c0_174 = arith.constant 0 : index
    %c0_175 = arith.constant 0 : index
    %186 = vector.load %arg8[%c3_173, %c0_174, %c0_175] : memref<9x32x32xbf16, #tpu.memory_space<vmem>>, vector<1x32x32xbf16>
    %187 = vector.shape_cast %186 : vector<1x32x32xbf16> to vector<32x32xbf16>
    %cst_176 = arith.constant dense<0.000000e+00> : vector<32x32xf32>
    %188 = tpu.matmul %185, %187, %cst_176 {dimension_numbers = #tpu.dot_dimension_numbers<[1], [0], [0], [1], [0, 0, 1, 1], [], []>} : vector<32x32xbf16>, vector<32x32xbf16>, vector<32x32xf32> -> vector<32x32xf32>
    %189 = arith.addf %183, %188 : vector<32x32xf32>
    %190 = vector.extract_strided_slice %166 {offsets = [1, 1, 0, 0], sizes = [2, 2, 8, 32], strides = [1, 1, 1, 1]} : vector<4x4x8x32xbf16> to vector<2x2x8x32xbf16>
    %191 = vector.shape_cast %190 : vector<2x2x8x32xbf16> to vector<32x32xbf16>
    %c4_177 = arith.constant 4 : index
    %c0_178 = arith.constant 0 : index
    %c0_179 = arith.constant 0 : index
    %192 = vector.load %arg8[%c4_177, %c0_178, %c0_179] : memref<9x32x32xbf16, #tpu.memory_space<vmem>>, vector<1x32x32xbf16>
    %193 = vector.shape_cast %192 : vector<1x32x32xbf16> to vector<32x32xbf16>
    %cst_180 = arith.constant dense<0.000000e+00> : vector<32x32xf32>
    %194 = tpu.matmul %191, %193, %cst_180 {dimension_numbers = #tpu.dot_dimension_numbers<[1], [0], [0], [1], [0, 0, 1, 1], [], []>} : vector<32x32xbf16>, vector<32x32xbf16>, vector<32x32xf32> -> vector<32x32xf32>
    %195 = arith.addf %189, %194 : vector<32x32xf32>
    %196 = vector.extract_strided_slice %166 {offsets = [1, 2, 0, 0], sizes = [2, 2, 8, 32], strides = [1, 1, 1, 1]} : vector<4x4x8x32xbf16> to vector<2x2x8x32xbf16>
    %197 = vector.shape_cast %196 : vector<2x2x8x32xbf16> to vector<32x32xbf16>
    %c5_181 = arith.constant 5 : index
    %c0_182 = arith.constant 0 : index
    %c0_183 = arith.constant 0 : index
    %198 = vector.load %arg8[%c5_181, %c0_182, %c0_183] : memref<9x32x32xbf16, #tpu.memory_space<vmem>>, vector<1x32x32xbf16>
    %199 = vector.shape_cast %198 : vector<1x32x32xbf16> to vector<32x32xbf16>
    %cst_184 = arith.constant dense<0.000000e+00> : vector<32x32xf32>
    %200 = tpu.matmul %197, %199, %cst_184 {dimension_numbers = #tpu.dot_dimension_numbers<[1], [0], [0], [1], [0, 0, 1, 1], [], []>} : vector<32x32xbf16>, vector<32x32xbf16>, vector<32x32xf32> -> vector<32x32xf32>
    %201 = arith.addf %195, %200 : vector<32x32xf32>
    %202 = vector.extract_strided_slice %166 {offsets = [2, 0, 0, 0], sizes = [2, 2, 8, 32], strides = [1, 1, 1, 1]} : vector<4x4x8x32xbf16> to vector<2x2x8x32xbf16>
    %203 = vector.shape_cast %202 : vector<2x2x8x32xbf16> to vector<32x32xbf16>
    %c6_185 = arith.constant 6 : index
    %c0_186 = arith.constant 0 : index
    %c0_187 = arith.constant 0 : index
    %204 = vector.load %arg8[%c6_185, %c0_186, %c0_187] : memref<9x32x32xbf16, #tpu.memory_space<vmem>>, vector<1x32x32xbf16>
    %205 = vector.shape_cast %204 : vector<1x32x32xbf16> to vector<32x32xbf16>
    %cst_188 = arith.constant dense<0.000000e+00> : vector<32x32xf32>
    %206 = tpu.matmul %203, %205, %cst_188 {dimension_numbers = #tpu.dot_dimension_numbers<[1], [0], [0], [1], [0, 0, 1, 1], [], []>} : vector<32x32xbf16>, vector<32x32xbf16>, vector<32x32xf32> -> vector<32x32xf32>
    %207 = arith.addf %201, %206 : vector<32x32xf32>
    %208 = vector.extract_strided_slice %166 {offsets = [2, 1, 0, 0], sizes = [2, 2, 8, 32], strides = [1, 1, 1, 1]} : vector<4x4x8x32xbf16> to vector<2x2x8x32xbf16>
    %209 = vector.shape_cast %208 : vector<2x2x8x32xbf16> to vector<32x32xbf16>
    %c7_189 = arith.constant 7 : index
    %c0_190 = arith.constant 0 : index
    %c0_191 = arith.constant 0 : index
    %210 = vector.load %arg8[%c7_189, %c0_190, %c0_191] : memref<9x32x32xbf16, #tpu.memory_space<vmem>>, vector<1x32x32xbf16>
    %211 = vector.shape_cast %210 : vector<1x32x32xbf16> to vector<32x32xbf16>
    %cst_192 = arith.constant dense<0.000000e+00> : vector<32x32xf32>
    %212 = tpu.matmul %209, %211, %cst_192 {dimension_numbers = #tpu.dot_dimension_numbers<[1], [0], [0], [1], [0, 0, 1, 1], [], []>} : vector<32x32xbf16>, vector<32x32xbf16>, vector<32x32xf32> -> vector<32x32xf32>
    %213 = arith.addf %207, %212 : vector<32x32xf32>
    %214 = vector.extract_strided_slice %166 {offsets = [2, 2, 0, 0], sizes = [2, 2, 8, 32], strides = [1, 1, 1, 1]} : vector<4x4x8x32xbf16> to vector<2x2x8x32xbf16>
    %215 = vector.shape_cast %214 : vector<2x2x8x32xbf16> to vector<32x32xbf16>
    %c8_193 = arith.constant 8 : index
    %c0_194 = arith.constant 0 : index
    %c0_195 = arith.constant 0 : index
    %216 = vector.load %arg8[%c8_193, %c0_194, %c0_195] : memref<9x32x32xbf16, #tpu.memory_space<vmem>>, vector<1x32x32xbf16>
    %217 = vector.shape_cast %216 : vector<1x32x32xbf16> to vector<32x32xbf16>
    %cst_196 = arith.constant dense<0.000000e+00> : vector<32x32xf32>
    %218 = tpu.matmul %215, %217, %cst_196 {dimension_numbers = #tpu.dot_dimension_numbers<[1], [0], [0], [1], [0, 0, 1, 1], [], []>} : vector<32x32xbf16>, vector<32x32xbf16>, vector<32x32xf32> -> vector<32x32xf32>
    %219 = arith.addf %213, %218 : vector<32x32xf32>
    %c0_197 = arith.constant 0 : index
    %c0_198 = arith.constant 0 : index
    %220 = vector.load %arg9[%c0_197, %c0_198] : memref<1x32xf32, #tpu.memory_space<vmem>>, vector<1x32xf32>
    %221 = vector.broadcast %220 : vector<1x32xf32> to vector<32x32xf32>
    %222 = arith.addf %219, %221 : vector<32x32xf32>
    %cst_199 = arith.constant 0.000000e+00 : f32
    %223 = vector.broadcast %cst_199 : f32 to vector<32x32xf32>
    %224 = arith.maximumf %222, %223 : vector<32x32xf32>
    %225 = vector.shape_cast %224 : vector<32x32xf32> to vector<2x2x8x32xf32>
    %226 = vector.shape_cast %225 : vector<2x2x8x32xf32> to vector<2x1x2x8x32xf32>
    %cst_200 = arith.constant dense<0xFF800000> : vector<2x1x8x32xf32>
    %227 = vector.multi_reduction <maximumf>, %226, %cst_200 [2] : vector<2x1x2x8x32xf32> to vector<2x1x8x32xf32>
    %228 = vector.shape_cast %227 : vector<2x1x8x32xf32> to vector<1x2x1x8x32xf32>
    %cst_201 = arith.constant dense<0xFF800000> : vector<1x1x8x32xf32>
    %229 = vector.multi_reduction <maximumf>, %228, %cst_201 [1] : vector<1x2x1x8x32xf32> to vector<1x1x8x32xf32>
    %230 = vector.shape_cast %229 : vector<1x1x8x32xf32> to vector<8x32xf32>
    %231 = arith.truncf %230 : vector<8x32xf32> to vector<8x32xbf16>
    %c0_202 = arith.constant 0 : index
    %c0_203 = arith.constant 0 : index
    %c0_204 = arith.constant 0 : index
    %c0_205 = arith.constant 0 : index
    %232 = vector.load %arg10[%c0_202, %c0_203, %c0_204, %c0_205] : memref<1x1x32x128xbf16, #tpu.memory_space<vmem>>, vector<1x1x32x128xbf16>
    %233 = vector.shape_cast %232 : vector<1x1x32x128xbf16> to vector<32x128xbf16>
    %cst_206 = arith.constant dense<0.000000e+00> : vector<8x128xf32>
    %234 = tpu.matmul %231, %233, %cst_206 {dimension_numbers = #tpu.dot_dimension_numbers<[1], [0], [0], [1], [0, 0, 1, 1], [], []>} : vector<8x32xbf16>, vector<32x128xbf16>, vector<8x128xf32> -> vector<8x128xf32>
    %c0_207 = arith.constant 0 : index
    %c0_208 = arith.constant 0 : index
    %235 = vector.load %arg11[%c0_207, %c0_208] : memref<1x128xf32, #tpu.memory_space<vmem>>, vector<1x128xf32>
    %236 = vector.broadcast %235 : vector<1x128xf32> to vector<8x128xf32>
    %237 = arith.addf %234, %236 : vector<8x128xf32>
    %c0_209 = arith.constant 0 : index
    %c0_210 = arith.constant 0 : index
    %238 = vector.load %arg12[%c0_209, %c0_210] : memref<8x128xf32, #tpu.memory_space<vmem>>, vector<8x128xf32>
    tpu.vector_store %arg12[%c0_209, %c0_210], %237 {strides = array<i32>} : memref<8x128xf32, #tpu.memory_space<vmem>>, vector<8x128xf32>,
    return
  }
  func.func @transform_0(%arg0: i32) -> (i32, i32, i32, i32) {
    %c0_i32 = arith.constant 0 : i32
    %c0_i32_0 = arith.constant 0 : i32
    %c0_i32_1 = arith.constant 0 : i32
    %c0_i32_2 = arith.constant 0 : i32
    return %c0_i32, %c0_i32_0, %arg0, %c0_i32_1 : i32, i32, i32, i32
  }
  func.func @transform_1(%arg0: i32) -> (i32, i32) {
    %c0_i32 = arith.constant 0 : i32
    %c0_i32_0 = arith.constant 0 : i32
    %c0_i32_1 = arith.constant 0 : i32
    return %c0_i32, %c0_i32_0 : i32, i32
  }
  func.func @transform_2(%arg0: i32) -> (i32, i32) {
    %c0_i32 = arith.constant 0 : i32
    %c0_i32_0 = arith.constant 0 : i32
    %c0_i32_1 = arith.constant 0 : i32
    return %c0_i32, %c0_i32_0 : i32, i32
  }
  func.func @transform_3(%arg0: i32) -> (i32, i32, i32) {
    %c0_i32 = arith.constant 0 : i32
    %c0_i32_0 = arith.constant 0 : i32
    %c0_i32_1 = arith.constant 0 : i32
    %c0_i32_2 = arith.constant 0 : i32
    return %c0_i32, %c0_i32_0, %c0_i32_1 : i32, i32, i32
  }
  func.func @transform_4(%arg0: i32) -> (i32, i32) {
    %c0_i32 = arith.constant 0 : i32
    %c0_i32_0 = arith.constant 0 : i32
    %c0_i32_1 = arith.constant 0 : i32
    return %c0_i32, %c0_i32_0 : i32, i32
  }
  func.func @transform_5(%arg0: i32) -> (i32, i32, i32) {
    %c0_i32 = arith.constant 0 : i32
    %c0_i32_0 = arith.constant 0 : i32
    %c0_i32_1 = arith.constant 0 : i32
    %c0_i32_2 = arith.constant 0 : i32
    return %c0_i32, %c0_i32_0, %c0_i32_1 : i32, i32, i32
  }
  func.func @transform_6(%arg0: i32) -> (i32, i32) {
    %c0_i32 = arith.constant 0 : i32
    %c0_i32_0 = arith.constant 0 : i32
    %c0_i32_1 = arith.constant 0 : i32
    return %c0_i32, %c0_i32_0 : i32, i32
  }
  func.func @transform_7(%arg0: i32) -> (i32, i32, i32) {
    %c0_i32 = arith.constant 0 : i32
    %c0_i32_0 = arith.constant 0 : i32
    %c0_i32_1 = arith.constant 0 : i32
    %c0_i32_2 = arith.constant 0 : i32
    return %c0_i32, %c0_i32_0, %c0_i32_1 : i32, i32, i32
  }
  func.func @transform_8(%arg0: i32) -> (i32, i32) {
    %c0_i32 = arith.constant 0 : i32
    %c0_i32_0 = arith.constant 0 : i32
    %c0_i32_1 = arith.constant 0 : i32
    return %c0_i32, %c0_i32_0 : i32, i32
  }
  func.func @transform_9(%arg0: i32) -> (i32, i32, i32, i32) {
    %c0_i32 = arith.constant 0 : i32
    %c0_i32_0 = arith.constant 0 : i32
    %c0_i32_1 = arith.constant 0 : i32
    %c0_i32_2 = arith.constant 0 : i32
    %c0_i32_3 = arith.constant 0 : i32
    return %c0_i32, %c0_i32_0, %c0_i32_1, %c0_i32_2 : i32, i32, i32, i32
  }
  func.func @transform_10(%arg0: i32) -> (i32, i32) {
    %c0_i32 = arith.constant 0 : i32
    %c0_i32_0 = arith.constant 0 : i32
    %c0_i32_1 = arith.constant 0 : i32
    return %c0_i32, %c0_i32_0 : i32, i32
  }
  func.func @transform_11(%arg0: i32) -> (i32, i32) {
    %c0_i32 = arith.constant 0 : i32
    %c0_i32_0 = arith.constant 0 : i32
    return %arg0, %c0_i32 : i32, i32
  }
}

</mosaic_0001>

<llo_original>
// kernel: tpu_custom_call.1
$region0: #{tpu_custom_call.1}
  #allocation0 [shape = 'u32[]', space=smem, size = 0x4, offset = 0x4, fixed_abs, tag = 'smem constant byte address 0x4 - core index']
  #allocation1 [shape = 'u32[72,128]{1,0:T(1,128)}', space=vmem, size = 0x9000, scoped, tag = 'internal scratch']
  #allocation2 [shape = 'bf16[10,10,8,32]{3,2,1,0:T(8,128)(2,1)}', space=vmem, size = 0x32000, scoped, tag = 'scratch operand']
  %s0 = inlined_call_operand.vmem [shape: bf16[16,16,8,9], index: 0, kind: input, shape index: {}]
  %s1 = inlined_call_operand.vmem [shape: bf16[9,32], index: 1, kind: input, shape index: {}]
  %s2 = inlined_call_operand.vmem [shape: f32[1,32], index: 2, kind: input, shape index: {}]
  %s3 = inlined_call_operand.vmem [shape: bf16[9,32,32], index: 3, kind: input, shape index: {}]
  %s4 = inlined_call_operand.vmem [shape: f32[1,32], index: 4, kind: input, shape index: {}]
  %s5 = inlined_call_operand.vmem [shape: bf16[9,32,32], index: 5, kind: input, shape index: {}]
  %s6 = inlined_call_operand.vmem [shape: f32[1,32], index: 6, kind: input, shape index: {}]
  %s7 = inlined_call_operand.vmem [shape: bf16[9,32,32], index: 7, kind: input, shape index: {}]
  %s8 = inlined_call_operand.vmem [shape: f32[1,32], index: 8, kind: input, shape index: {}]
  %s9 = inlined_call_operand.vmem [shape: bf16[1,1,32,128], index: 9, kind: input, shape index: {}]
  %s10 = inlined_call_operand.vmem [shape: f32[1,128], index: 10, kind: input, shape index: {}]
  %s11 = inlined_call_operand.hbm [shape: f32[8,128], index: 11, kind: output, shape index: {}]
  %s12 = sld [smem:[#allocation0]]
  $region54: #{tpu_custom_call.1} parent=0
    _
  %s14 = ssub.s32 1, %s12
  %s15 = scalar_select 0, %s14, %s12
  $region1: #{tpu_custom_call.1} parent=0
    #allocation3 [shape = 'u8[4096]{0}', space=vmem, size = 0x1000, scoped, tag = 'output window, operand 0, single buffered']
    #allocation4 [shape = 's32[1]{0}', space=sflag, size = 0x4, scoped, tag = 'scoped memory for tpu_custom_call.1']
    %16 = vsyncpa [#allocation4], 0
    // Predicated region
    $region2: #{tpu_custom_call.1} parent=1 // pred_check
      _
    $region3: #{tpu_custom_call.1} parent=1 // pred_check_branch
      %18 = sbr.rel (0) target = $region5
    $region4: #{tpu_custom_call.1} parent=1 // pred_region
      _
    $region5: #{tpu_custom_call.1} parent=1 // pred_fallthru
      _
    // Predicated region
    $region6: #{tpu_custom_call.1} parent=1 // pred_check
      _
    $region7: #{tpu_custom_call.1} parent=1 // pred_check_branch
      %20 = sbr.rel (0) target = $region9
    $region8: #{tpu_custom_call.1} parent=1 // pred_region
      _
    $region9: #{tpu_custom_call.1} parent=1 // pred_fallthru
      _
    // Predicated region
    $region10: #{tpu_custom_call.1} parent=1 // pred_check
      _
    $region11: #{tpu_custom_call.1} parent=1 // pred_check_branch
      %22 = sbr.rel (0) target = $region13
    $region12: #{tpu_custom_call.1} parent=1 // pred_region
      _
    $region13: #{tpu_custom_call.1} parent=1 // pred_fallthru
      _
    // Predicated region
    $region14: #{tpu_custom_call.1} parent=1 // pred_check
      _
    $region15: #{tpu_custom_call.1} parent=1 // pred_check_branch
      %24 = sbr.rel (0) target = $region17
    $region16: #{tpu_custom_call.1} parent=1 // pred_region
      _
    $region17: #{tpu_custom_call.1} parent=1 // pred_fallthru
      _
    // Predicated region
    $region18: #{tpu_custom_call.1} parent=1 // pred_check
      _
    $region19: #{tpu_custom_call.1} parent=1 // pred_check_branch
      %26 = sbr.rel (0) target = $region21
    $region20: #{tpu_custom_call.1} parent=1 // pred_region
      _
    $region21: #{tpu_custom_call.1} parent=1 // pred_fallthru
      _
    // Predicated region
    $region22: #{tpu_custom_call.1} parent=1 // pred_check
      _
    $region23: #{tpu_custom_call.1} parent=1 // pred_check_branch
      %28 = sbr.rel (0) target = $region25
    $region24: #{tpu_custom_call.1} parent=1 // pred_region
      _
    $region25: #{tpu_custom_call.1} parent=1 // pred_fallthru
      _
    // Predicated region
    $region26: #{tpu_custom_call.1} parent=1 // pred_check
      _
    $region27: #{tpu_custom_call.1} parent=1 // pred_check_branch
      %30 = sbr.rel (0) target = $region29
    $region28: #{tpu_custom_call.1} parent=1 // pred_region
      _
    $region29: #{tpu_custom_call.1} parent=1 // pred_fallthru
      _
    // Predicated region
    $region30: #{tpu_custom_call.1} parent=1 // pred_check
      _
    $region31: #{tpu_custom_call.1} parent=1 // pred_check_branch
      %32 = sbr.rel (0) target = $region33
    $region32: #{tpu_custom_call.1} parent=1 // pred_region
      _
    $region33: #{tpu_custom_call.1} parent=1 // pred_fallthru
      _
    // Predicated region
    $region34: #{tpu_custom_call.1} parent=1 // pred_check
      _
    $region35: #{tpu_custom_call.1} parent=1 // pred_check_branch
      %34 = sbr.rel (0) target = $region37
    $region36: #{tpu_custom_call.1} parent=1 // pred_region
      _
    $region37: #{tpu_custom_call.1} parent=1 // pred_fallthru
      _
    // Predicated region
    $region38: #{tpu_custom_call.1} parent=1 // pred_check
      _
    $region39: #{tpu_custom_call.1} parent=1 // pred_check_branch
      %36 = sbr.rel (0) target = $region41
    $region40: #{tpu_custom_call.1} parent=1 // pred_region
      _
    $region41: #{tpu_custom_call.1} parent=1 // pred_fallthru
      _
    // Predicated region
    $region42: #{tpu_custom_call.1} parent=1 // pred_check
      _
    $region43: #{tpu_custom_call.1} parent=1 // pred_check_branch
      %38 = sbr.rel (0) target = $region45
    $region44: #{tpu_custom_call.1} parent=1 // pred_region
      _
    $region45: #{tpu_custom_call.1} parent=1 // pred_fallthru
      _
    %v40 = vld [vmem:[%s0] sm:$0xf]
    %v41 = vld [vmem:[%s0 + $0x4] sm:$0xf]
    %v42 = vld [vmem:[%s0 + $0x8] sm:$0xf]
    %v43 = vld [vmem:[%s0 + $0xc] sm:$0xf]
    %v44 = vld [vmem:[%s0 + $0x10] sm:$0xf]
    %v45 = vld [vmem:[%s0 + $0x14] sm:$0xf]
    %v46 = vld [vmem:[%s0 + $0x18] sm:$0xf]
    %v47 = vld [vmem:[%s0 + $0x1c] sm:$0xf]
    %v48 = vld [vmem:[%s0 + $0x20] sm:$0xf]
    %v49 = vld [vmem:[%s0 + $0x24] sm:$0xf]
    %v50 = vld [vmem:[%s0 + $0x28] sm:$0xf]
    %v51 = vld [vmem:[%s0 + $0x2c] sm:$0xf]
    %v52 = vld [vmem:[%s0 + $0x30] sm:$0xf]
    %v53 = vld [vmem:[%s0 + $0x34] sm:$0xf]
    %v54 = vld [vmem:[%s0 + $0x38] sm:$0xf]
    %v55 = vld [vmem:[%s0 + $0x3c] sm:$0xf]
    %v56 = vld [vmem:[%s0 + $0x40] sm:$0xf]
    %v57 = vld [vmem:[%s0 + $0x44] sm:$0xf]
    %v58 = vld [vmem:[%s0 + $0x48] sm:$0xf]
    %v59 = vld [vmem:[%s0 + $0x4c] sm:$0xf]
    %v60 = vld [vmem:[%s0 + $0x50] sm:$0xf]
    %v61 = vld [vmem:[%s0 + $0x54] sm:$0xf]
    %v62 = vld [vmem:[%s0 + $0x58] sm:$0xf]
    %v63 = vld [vmem:[%s0 + $0x5c] sm:$0xf]
    %v64 = vld [vmem:[%s0 + $0x60] sm:$0xf]
    %v65 = vld [vmem:[%s0 + $0x64] sm:$0xf]
    %v66 = vld [vmem:[%s0 + $0x68] sm:$0xf]
    %v67 = vld [vmem:[%s0 + $0x6c] sm:$0xf]
    %v68 = vld [vmem:[%s0 + $0x70] sm:$0xf]
    %v69 = vld [vmem:[%s0 + $0x74] sm:$0xf]
    %v70 = vld [vmem:[%s0 + $0x78] sm:$0xf]
    %v71 = vld [vmem:[%s0 + $0x7c] sm:$0xf]
    %v72 = vld [vmem:[%s0 + $0x80] sm:$0xf]
    %v73 = vld [vmem:[%s0 + $0x84] sm:$0xf]
    %v74 = vld [vmem:[%s0 + $0x88] sm:$0xf]
    %v75 = vld [vmem:[%s0 + $0x8c] sm:$0xf]
    %v76 = vld [vmem:[%s0 + $0x90] sm:$0xf]
    %v77 = vld [vmem:[%s0 + $0x94] sm:$0xf]
    %v78 = vld [vmem:[%s0 + $0x98] sm:$0xf]
    %v79 = vld [vmem:[%s0 + $0x9c] sm:$0xf]
    %v80 = vld [vmem:[%s0 + $0xa0] sm:$0xf]
    %v81 = vld [vmem:[%s0 + $0xa4] sm:$0xf]
    %v82 = vld [vmem:[%s0 + $0xa8] sm:$0xf]
    %v83 = vld [vmem:[%s0 + $0xac] sm:$0xf]
    %v84 = vld [vmem:[%s0 + $0xb0] sm:$0xf]
    %v85 = vld [vmem:[%s0 + $0xb4] sm:$0xf]
    %v86 = vld [vmem:[%s0 + $0xb8] sm:$0xf]
    %v87 = vld [vmem:[%s0 + $0xbc] sm:$0xf]
    %v88 = vld [vmem:[%s0 + $0xc0] sm:$0xf]
    %v89 = vld [vmem:[%s0 + $0xc4] sm:$0xf]
    %v90 = vld [vmem:[%s0 + $0xc8] sm:$0xf]
    %v91 = vld [vmem:[%s0 + $0xcc] sm:$0xf]
    %v92 = vld [vmem:[%s0 + $0xd0] sm:$0xf]
    %v93 = vld [vmem:[%s0 + $0xd4] sm:$0xf]
    %v94 = vld [vmem:[%s0 + $0xd8] sm:$0xf]
    %v95 = vld [vmem:[%s0 + $0xdc] sm:$0xf]
    %v96 = vld [vmem:[%s0 + $0xe0] sm:$0xf]
    %v97 = vld [vmem:[%s0 + $0xe4] sm:$0xf]
    %v98 = vld [vmem:[%s0 + $0xe8] sm:$0xf]
    %v99 = vld [vmem:[%s0 + $0xec] sm:$0xf]
    %v100 = vld [vmem:[%s0 + $0xf0] sm:$0xf]
    %v101 = vld [vmem:[%s0 + $0xf4] sm:$0xf]
    %v102 = vld [vmem:[%s0 + $0xf8] sm:$0xf]
    %v103 = vld [vmem:[%s0 + $0xfc] sm:$0xf]
    %v104 = vld [vmem:[%s0 + $0x100] sm:$0xf]
    %v105 = vld [vmem:[%s0 + $0x104] sm:$0xf]
    %v106 = vld [vmem:[%s0 + $0x108] sm:$0xf]
    %v107 = vld [vmem:[%s0 + $0x10c] sm:$0xf]
    %v108 = vld [vmem:[%s0 + $0x110] sm:$0xf]
    %v109 = vld [vmem:[%s0 + $0x114] sm:$0xf]
    %v110 = vld [vmem:[%s0 + $0x118] sm:$0xf]
    %v111 = vld [vmem:[%s0 + $0x11c] sm:$0xf]
    %v112 = vld [vmem:[%s0 + $0x120] sm:$0xf]
    %v113 = vld [vmem:[%s0 + $0x124] sm:$0xf]
    %v114 = vld [vmem:[%s0 + $0x128] sm:$0xf]
    %v115 = vld [vmem:[%s0 + $0x12c] sm:$0xf]
    %v116 = vld [vmem:[%s0 + $0x130] sm:$0xf]
    %v117 = vld [vmem:[%s0 + $0x134] sm:$0xf]
    %v118 = vld [vmem:[%s0 + $0x138] sm:$0xf]
    %v119 = vld [vmem:[%s0 + $0x13c] sm:$0xf]
    %v120 = vld [vmem:[%s0 + $0x140] sm:$0xf]
    %v121 = vld [vmem:[%s0 + $0x144] sm:$0xf]
    %v122 = vld [vmem:[%s0 + $0x148] sm:$0xf]
    %v123 = vld [vmem:[%s0 + $0x14c] sm:$0xf]
    %v124 = vld [vmem:[%s0 + $0x150] sm:$0xf]
    %v125 = vld [vmem:[%s0 + $0x154] sm:$0xf]
    %v126 = vld [vmem:[%s0 + $0x158] sm:$0xf]
    %v127 = vld [vmem:[%s0 + $0x15c] sm:$0xf]
    %v128 = vld [vmem:[%s0 + $0x160] sm:$0xf]
    %v129 = vld [vmem:[%s0 + $0x164] sm:$0xf]
    %v130 = vld [vmem:[%s0 + $0x168] sm:$0xf]
    %v131 = vld [vmem:[%s0 + $0x16c] sm:$0xf]
    %v132 = vld [vmem:[%s0 + $0x170] sm:$0xf]
    %v133 = vld [vmem:[%s0 + $0x174] sm:$0xf]
    %v134 = vld [vmem:[%s0 + $0x178] sm:$0xf]
    %v135 = vld [vmem:[%s0 + $0x17c] sm:$0xf]
    %v136 = vld [vmem:[%s0 + $0x180] sm:$0xf]
    %v137 = vld [vmem:[%s0 + $0x184] sm:$0xf]
    %v138 = vld [vmem:[%s0 + $0x188] sm:$0xf]
    %v139 = vld [vmem:[%s0 + $0x18c] sm:$0xf]
    %v140 = vld [vmem:[%s0 + $0x190] sm:$0xf]
    %v141 = vld [vmem:[%s0 + $0x194] sm:$0xf]
    %v142 = vld [vmem:[%s0 + $0x198] sm:$0xf]
    %v143 = vld [vmem:[%s0 + $0x19c] sm:$0xf]
    %v144 = vld [vmem:[%s0 + $0x1a0] sm:$0xf]
    %v145 = vld [vmem:[%s0 + $0x1a4] sm:$0xf]
    %v146 = vld [vmem:[%s0 + $0x1a8] sm:$0xf]
    %v147 = vld [vmem:[%s0 + $0x1ac] sm:$0xf]
    %v148 = vld [vmem:[%s0 + $0x1b0] sm:$0xf]
    %v149 = vld [vmem:[%s0 + $0x1b4] sm:$0xf]
    %v150 = vld [vmem:[%s0 + $0x1b8] sm:$0xf]
    %v151 = vld [vmem:[%s0 + $0x1bc] sm:$0xf]
    %v152 = vld [vmem:[%s0 + $0x1c0] sm:$0xf]
    %v153 = vld [vmem:[%s0 + $0x1c4] sm:$0xf]
    %v154 = vld [vmem:[%s0 + $0x1c8] sm:$0xf]
    %v155 = vld [vmem:[%s0 + $0x1cc] sm:$0xf]
    %v156 = vld [vmem:[%s0 + $0x1d0] sm:$0xf]
    %v157 = vld [vmem:[%s0 + $0x1d4] sm:$0xf]
    %v158 = vld [vmem:[%s0 + $0x1d8] sm:$0xf]
    %v159 = vld [vmem:[%s0 + $0x1dc] sm:$0xf]
    %v160 = vld [vmem:[%s0 + $0x1e0] sm:$0xf]
    %v161 = vld [vmem:[%s0 + $0x1e4] sm:$0xf]
    %v162 = vld [vmem:[%s0 + $0x1e8] sm:$0xf]
    %v163 = vld [vmem:[%s0 + $0x1ec] sm:$0xf]
    %v164 = vld [vmem:[%s0 + $0x1f0] sm:$0xf]
    %v165 = vld [vmem:[%s0 + $0x1f4] sm:$0xf]
    %v166 = vld [vmem:[%s0 + $0x1f8] sm:$0xf]
    %v167 = vld [vmem:[%s0 + $0x1fc] sm:$0xf]
    %v168 = vld [vmem:[%s0 + $0x200] sm:$0xf]
    %v169 = vld [vmem:[%s0 + $0x204] sm:$0xf]
    %v170 = vld [vmem:[%s0 + $0x208] sm:$0xf]
    %v171 = vld [vmem:[%s0 + $0x20c] sm:$0xf]
    %v172 = vld [vmem:[%s0 + $0x210] sm:$0xf]
    %v173 = vld [vmem:[%s0 + $0x214] sm:$0xf]
    %v174 = vld [vmem:[%s0 + $0x218] sm:$0xf]
    %v175 = vld [vmem:[%s0 + $0x21c] sm:$0xf]
    %v176 = vld [vmem:[%s0 + $0x220] sm:$0xf]
    %v177 = vld [vmem:[%s0 + $0x224] sm:$0xf]
    %v178 = vld [vmem:[%s0 + $0x228] sm:$0xf]
    %v179 = vld [vmem:[%s0 + $0x22c] sm:$0xf]
    %v180 = vld [vmem:[%s0 + $0x230] sm:$0xf]
    %v181 = vld [vmem:[%s0 + $0x234] sm:$0xf]
    %v182 = vld [vmem:[%s0 + $0x238] sm:$0xf]
    %v183 = vld [vmem:[%s0 + $0x23c] sm:$0xf]
    %v184 = vld [vmem:[%s0 + $0x240] sm:$0xf]
    %v185 = vld [vmem:[%s0 + $0x244] sm:$0xf]
    %v186 = vld [vmem:[%s0 + $0x248] sm:$0xf]
    %v187 = vld [vmem:[%s0 + $0x24c] sm:$0xf]
    %v188 = vld [vmem:[%s0 + $0x250] sm:$0xf]
    %v189 = vld [vmem:[%s0 + $0x254] sm:$0xf]
    %v190 = vld [vmem:[%s0 + $0x258] sm:$0xf]
    %v191 = vld [vmem:[%s0 + $0x25c] sm:$0xf]
    %v192 = vld [vmem:[%s0 + $0x260] sm:$0xf]
    %v193 = vld [vmem:[%s0 + $0x264] sm:$0xf]
    %v194 = vld [vmem:[%s0 + $0x268] sm:$0xf]
    %v195 = vld [vmem:[%s0 + $0x26c] sm:$0xf]
    %v196 = vld [vmem:[%s0 + $0x270] sm:$0xf]
    %v197 = vld [vmem:[%s0 + $0x274] sm:$0xf]
    %v198 = vld [vmem:[%s0 + $0x278] sm:$0xf]
    %v199 = vld [vmem:[%s0 + $0x27c] sm:$0xf]
    %v200 = vld [vmem:[%s0 + $0x280] sm:$0xf]
    %v201 = vld [vmem:[%s0 + $0x284] sm:$0xf]
    %v202 = vld [vmem:[%s0 + $0x288] sm:$0xf]
    %v203 = vld [vmem:[%s0 + $0x28c] sm:$0xf]
    %v204 = vld [vmem:[%s0 + $0x290] sm:$0xf]
    %v205 = vld [vmem:[%s0 + $0x294] sm:$0xf]
    %v206 = vld [vmem:[%s0 + $0x298] sm:$0xf]
    %v207 = vld [vmem:[%s0 + $0x29c] sm:$0xf]
    %v208 = vld [vmem:[%s0 + $0x2a0] sm:$0xf]
    %v209 = vld [vmem:[%s0 + $0x2a4] sm:$0xf]
    %v210 = vld [vmem:[%s0 + $0x2a8] sm:$0xf]
    %v211 = vld [vmem:[%s0 + $0x2ac] sm:$0xf]
    %v212 = vld [vmem:[%s0 + $0x2b0] sm:$0xf]
    %v213 = vld [vmem:[%s0 + $0x2b4] sm:$0xf]
    %v214 = vld [vmem:[%s0 + $0x2b8] sm:$0xf]
    %v215 = vld [vmem:[%s0 + $0x2bc] sm:$0xf]
    %v216 = vld [vmem:[%s0 + $0x2c0] sm:$0xf]
    %v217 = vld [vmem:[%s0 + $0x2c4] sm:$0xf]
    %v218 = vld [vmem:[%s0 + $0x2c8] sm:$0xf]
    %v219 = vld [vmem:[%s0 + $0x2cc] sm:$0xf]
    %v220 = vld [vmem:[%s0 + $0x2d0] sm:$0xf]
    %v221 = vld [vmem:[%s0 + $0x2d4] sm:$0xf]
    %v222 = vld [vmem:[%s0 + $0x2d8] sm:$0xf]
    %v223 = vld [vmem:[%s0 + $0x2dc] sm:$0xf]
    %v224 = vld [vmem:[%s0 + $0x2e0] sm:$0xf]
    %v225 = vld [vmem:[%s0 + $0x2e4] sm:$0xf]
    %v226 = vld [vmem:[%s0 + $0x2e8] sm:$0xf]
    %v227 = vld [vmem:[%s0 + $0x2ec] sm:$0xf]
    %v228 = vld [vmem:[%s0 + $0x2f0] sm:$0xf]
    %v229 = vld [vmem:[%s0 + $0x2f4] sm:$0xf]
    %v230 = vld [vmem:[%s0 + $0x2f8] sm:$0xf]
    %v231 = vld [vmem:[%s0 + $0x2fc] sm:$0xf]
    %v232 = vld [vmem:[%s0 + $0x300] sm:$0xf]
    %v233 = vld [vmem:[%s0 + $0x304] sm:$0xf]
    %v234 = vld [vmem:[%s0 + $0x308] sm:$0xf]
    %v235 = vld [vmem:[%s0 + $0x30c] sm:$0xf]
    %v236 = vld [vmem:[%s0 + $0x310] sm:$0xf]
    %v237 = vld [vmem:[%s0 + $0x314] sm:$0xf]
    %v238 = vld [vmem:[%s0 + $0x318] sm:$0xf]
    %v239 = vld [vmem:[%s0 + $0x31c] sm:$0xf]
    %v240 = vld [vmem:[%s0 + $0x320] sm:$0xf]
    %v241 = vld [vmem:[%s0 + $0x324] sm:$0xf]
    %v242 = vld [vmem:[%s0 + $0x328] sm:$0xf]
    %v243 = vld [vmem:[%s0 + $0x32c] sm:$0xf]
    %v244 = vld [vmem:[%s0 + $0x330] sm:$0xf]
    %v245 = vld [vmem:[%s0 + $0x334] sm:$0xf]
    %v246 = vld [vmem:[%s0 + $0x338] sm:$0xf]
    %v247 = vld [vmem:[%s0 + $0x33c] sm:$0xf]
    %v248 = vld [vmem:[%s0 + $0x340] sm:$0xf]
    %v249 = vld [vmem:[%s0 + $0x344] sm:$0xf]
    %v250 = vld [vmem:[%s0 + $0x348] sm:$0xf]
    %v251 = vld [vmem:[%s0 + $0x34c] sm:$0xf]
    %v252 = vld [vmem:[%s0 + $0x350] sm:$0xf]
    %v253 = vld [vmem:[%s0 + $0x354] sm:$0xf]
    %v254 = vld [vmem:[%s0 + $0x358] sm:$0xf]
    %v255 = vld [vmem:[%s0 + $0x35c] sm:$0xf]
    %v256 = vld [vmem:[%s0 + $0x360] sm:$0xf]
    %v257 = vld [vmem:[%s0 + $0x364] sm:$0xf]
    %v258 = vld [vmem:[%s0 + $0x368] sm:$0xf]
    %v259 = vld [vmem:[%s0 + $0x36c] sm:$0xf]
    %v260 = vld [vmem:[%s0 + $0x370] sm:$0xf]
    %v261 = vld [vmem:[%s0 + $0x374] sm:$0xf]
    %v262 = vld [vmem:[%s0 + $0x378] sm:$0xf]
    %v263 = vld [vmem:[%s0 + $0x37c] sm:$0xf]
    %v264 = vld [vmem:[%s0 + $0x380] sm:$0xf]
    %v265 = vld [vmem:[%s0 + $0x384] sm:$0xf]
    %v266 = vld [vmem:[%s0 + $0x388] sm:$0xf]
    %v267 = vld [vmem:[%s0 + $0x38c] sm:$0xf]
    %v268 = vld [vmem:[%s0 + $0x390] sm:$0xf]
    %v269 = vld [vmem:[%s0 + $0x394] sm:$0xf]
    %v270 = vld [vmem:[%s0 + $0x398] sm:$0xf]
    %v271 = vld [vmem:[%s0 + $0x39c] sm:$0xf]
    %v272 = vld [vmem:[%s0 + $0x3a0] sm:$0xf]
    %v273 = vld [vmem:[%s0 + $0x3a4] sm:$0xf]
    %v274 = vld [vmem:[%s0 + $0x3a8] sm:$0xf]
    %v275 = vld [vmem:[%s0 + $0x3ac] sm:$0xf]
    %v276 = vld [vmem:[%s0 + $0x3b0] sm:$0xf]
    %v277 = vld [vmem:[%s0 + $0x3b4] sm:$0xf]
    %v278 = vld [vmem:[%s0 + $0x3b8] sm:$0xf]
    %v279 = vld [vmem:[%s0 + $0x3bc] sm:$0xf]
    %v280 = vld [vmem:[%s0 + $0x3c0] sm:$0xf]
    %v281 = vld [vmem:[%s0 + $0x3c4] sm:$0xf]
    %v282 = vld [vmem:[%s0 + $0x3c8] sm:$0xf]
    %v283 = vld [vmem:[%s0 + $0x3cc] sm:$0xf]
    %v284 = vld [vmem:[%s0 + $0x3d0] sm:$0xf]
    %v285 = vld [vmem:[%s0 + $0x3d4] sm:$0xf]
    %v286 = vld [vmem:[%s0 + $0x3d8] sm:$0xf]
    %v287 = vld [vmem:[%s0 + $0x3dc] sm:$0xf]
    %v288 = vld [vmem:[%s0 + $0x3e0] sm:$0xf]
    %v289 = vld [vmem:[%s0 + $0x3e4] sm:$0xf]
    %v290 = vld [vmem:[%s0 + $0x3e8] sm:$0xf]
    %v291 = vld [vmem:[%s0 + $0x3ec] sm:$0xf]
    %v292 = vld [vmem:[%s0 + $0x3f0] sm:$0xf]
    %v293 = vld [vmem:[%s0 + $0x3f4] sm:$0xf]
    %v294 = vld [vmem:[%s0 + $0x3f8] sm:$0xf]
    %v295 = vld [vmem:[%s0 + $0x3fc] sm:$0xf]
    %v296 = vld [vmem:[%s1] sm:$0xf]
    %v297 = vld [vmem:[%s1 + $0x4] sm:$0x1]
    %v298 = vld [vmem:[%s2] sm:$0x1]
    %v300 = vperm.slane %v298, 0
    %v558 = vunpack.c.l.b16 %v40
    %v559 = vunpack.c.l.b16 %v41
    %v560 = vunpack.c.l.b16 %v42
    %v561 = vunpack.c.l.b16 %v43
    %v562 = vunpack.c.l.b16 %v44
    %v563 = vunpack.c.l.b16 %v45
    %v564 = vunpack.c.l.b16 %v46
    %v565 = vunpack.c.l.b16 %v47
    %v566 = vunpack.c.l.b16 %v48
    %v567 = vunpack.c.l.b16 %v49
    %v568 = vunpack.c.l.b16 %v50
    %v569 = vunpack.c.l.b16 %v51
    %v570 = vunpack.c.l.b16 %v52
    %v571 = vunpack.c.l.b16 %v53
    %v572 = vunpack.c.l.b16 %v54
    %v573 = vunpack.c.l.b16 %v55
    %v574 = vunpack.c.l.b16 %v56
    %v575 = vunpack.c.l.b16 %v57
    %v576 = vunpack.c.l.b16 %v58
    %v577 = vunpack.c.l.b16 %v59
    %v578 = vunpack.c.l.b16 %v60
    %v579 = vunpack.c.l.b16 %v61
    %v580 = vunpack.c.l.b16 %v62
    %v581 = vunpack.c.l.b16 %v63
    %v582 = vunpack.c.l.b16 %v64
    %v583 = vunpack.c.l.b16 %v65
    %v584 = vunpack.c.l.b16 %v66
    %v585 = vunpack.c.l.b16 %v67
    %v586 = vunpack.c.l.b16 %v68
    %v587 = vunpack.c.l.b16 %v69
    %v588 = vunpack.c.l.b16 %v70
    %v589 = vunpack.c.l.b16 %v71
    %v590 = vunpack.c.l.b16 %v72
    %v591 = vunpack.c.l.b16 %v73
    %v592 = vunpack.c.l.b16 %v74
    %v593 = vunpack.c.l.b16 %v75
    %v594 = vunpack.c.l.b16 %v76
    %v595 = vunpack.c.l.b16 %v77
    %v596 = vunpack.c.l.b16 %v78
    %v597 = vunpack.c.l.b16 %v79
    %v598 = vunpack.c.l.b16 %v80
    %v599 = vunpack.c.l.b16 %v81
    %v600 = vunpack.c.l.b16 %v82
    %v601 = vunpack.c.l.b16 %v83
    %v602 = vunpack.c.l.b16 %v84
    %v603 = vunpack.c.l.b16 %v85
    %v604 = vunpack.c.l.b16 %v86
    %v605 = vunpack.c.l.b16 %v87
    %v606 = vunpack.c.l.b16 %v88
    %v607 = vunpack.c.l.b16 %v89
    %v608 = vunpack.c.l.b16 %v90
    %v609 = vunpack.c.l.b16 %v91
    %v610 = vunpack.c.l.b16 %v92
    %v611 = vunpack.c.l.b16 %v93
    %v612 = vunpack.c.l.b16 %v94
    %v613 = vunpack.c.l.b16 %v95
    %v614 = vunpack.c.l.b16 %v96
    %v615 = vunpack.c.l.b16 %v97
    %v616 = vunpack.c.l.b16 %v98
    %v617 = vunpack.c.l.b16 %v99
    %v618 = vunpack.c.l.b16 %v100
    %v619 = vunpack.c.l.b16 %v101
    %v620 = vunpack.c.l.b16 %v102
    %v621 = vunpack.c.l.b16 %v103
    %v622 = vunpack.c.l.b16 %v104
    %v623 = vunpack.c.l.b16 %v105
    %v624 = vunpack.c.l.b16 %v106
    %v625 = vunpack.c.l.b16 %v107
    %v626 = vunpack.c.l.b16 %v108
    %v627 = vunpack.c.l.b16 %v109
    %v628 = vunpack.c.l.b16 %v110
    %v629 = vunpack.c.l.b16 %v111
    %v630 = vunpack.c.l.b16 %v112
    %v631 = vunpack.c.l.b16 %v113
    %v632 = vunpack.c.l.b16 %v114
    %v633 = vunpack.c.l.b16 %v115
    %v634 = vunpack.c.l.b16 %v116
    %v635 = vunpack.c.l.b16 %v117
    %v636 = vunpack.c.l.b16 %v118
    %v637 = vunpack.c.l.b16 %v119
    %v638 = vunpack.c.l.b16 %v120
    %v639 = vunpack.c.l.b16 %v121
    %v640 = vunpack.c.l.b16 %v122
    %v641 = vunpack.c.l.b16 %v123
    %v642 = vunpack.c.l.b16 %v124
    %v643 = vunpack.c.l.b16 %v125
    %v644 = vunpack.c.l.b16 %v126
    %v645 = vunpack.c.l.b16 %v127
    %v646 = vunpack.c.l.b16 %v128
    %v647 = vunpack.c.l.b16 %v129
    %v648 = vunpack.c.l.b16 %v130
    %v649 = vunpack.c.l.b16 %v131
    %v650 = vunpack.c.l.b16 %v132
    %v651 = vunpack.c.l.b16 %v133
    %v652 = vunpack.c.l.b16 %v134
    %v653 = vunpack.c.l.b16 %v135
    %v654 = vunpack.c.l.b16 %v136
    %v655 = vunpack.c.l.b16 %v137
    %v656 = vunpack.c.l.b16 %v138
    %v657 = vunpack.c.l.b16 %v139
    %v658 = vunpack.c.l.b16 %v140
    %v659 = vunpack.c.l.b16 %v141
    %v660 = vunpack.c.l.b16 %v142
    %v661 = vunpack.c.l.b16 %v143
    %v662 = vunpack.c.l.b16 %v144
    %v663 = vunpack.c.l.b16 %v145
    %v664 = vunpack.c.l.b16 %v146
    %v665 = vunpack.c.l.b16 %v147
    %v666 = vunpack.c.l.b16 %v148
    %v667 = vunpack.c.l.b16 %v149
    %v668 = vunpack.c.l.b16 %v150
    %v669 = vunpack.c.l.b16 %v151
    %v670 = vunpack.c.l.b16 %v152
    %v671 = vunpack.c.l.b16 %v153
    %v672 = vunpack.c.l.b16 %v154
    %v673 = vunpack.c.l.b16 %v155
    %v674 = vunpack.c.l.b16 %v156
    %v675 = vunpack.c.l.b16 %v157
    %v676 = vunpack.c.l.b16 %v158
    %v677 = vunpack.c.l.b16 %v159
    %v678 = vunpack.c.l.b16 %v160
    %v679 = vunpack.c.l.b16 %v161
    %v680 = vunpack.c.l.b16 %v162
    %v681 = vunpack.c.l.b16 %v163
    %v682 = vunpack.c.l.b16 %v164
    %v683 = vunpack.c.l.b16 %v165
    %v684 = vunpack.c.l.b16 %v166
    %v685 = vunpack.c.l.b16 %v167
    %v686 = vunpack.c.l.b16 %v168
    %v687 = vunpack.c.l.b16 %v169
    %v688 = vunpack.c.l.b16 %v170
    %v689 = vunpack.c.l.b16 %v171
    %v690 = vunpack.c.l.b16 %v172
    %v691 = vunpack.c.l.b16 %v173
    %v692 = vunpack.c.l.b16 %v174
    %v693 = vunpack.c.l.b16 %v175
    %v694 = vunpack.c.l.b16 %v176
    %v695 = vunpack.c.l.b16 %v177
    %v696 = vunpack.c.l.b16 %v178
    %v697 = vunpack.c.l.b16 %v179
    %v698 = vunpack.c.l.b16 %v180
    %v699 = vunpack.c.l.b16 %v181
    %v700 = vunpack.c.l.b16 %v182
    %v701 = vunpack.c.l.b16 %v183
    %v702 = vunpack.c.l.b16 %v184
    %v703 = vunpack.c.l.b16 %v185
    %v704 = vunpack.c.l.b16 %v186
    %v705 = vunpack.c.l.b16 %v187
    %v706 = vunpack.c.l.b16 %v188
    %v707 = vunpack.c.l.b16 %v189
    %v708 = vunpack.c.l.b16 %v190
    %v709 = vunpack.c.l.b16 %v191
    %v710 = vunpack.c.l.b16 %v192
    %v711 = vunpack.c.l.b16 %v193
    %v712 = vunpack.c.l.b16 %v194
    %v713 = vunpack.c.l.b16 %v195
    %v714 = vunpack.c.l.b16 %v196
    %v715 = vunpack.c.l.b16 %v197
    %v716 = vunpack.c.l.b16 %v198
    %v717 = vunpack.c.l.b16 %v199
    %v718 = vunpack.c.l.b16 %v200
    %v719 = vunpack.c.l.b16 %v201
    %v720 = vunpack.c.l.b16 %v202
    %v721 = vunpack.c.l.b16 %v203
    %v722 = vunpack.c.l.b16 %v204
    %v723 = vunpack.c.l.b16 %v205
    %v724 = vunpack.c.l.b16 %v206
    %v725 = vunpack.c.l.b16 %v207
    %v726 = vunpack.c.l.b16 %v208
    %v727 = vunpack.c.l.b16 %v209
    %v728 = vunpack.c.l.b16 %v210
    %v729 = vunpack.c.l.b16 %v211
    %v730 = vunpack.c.l.b16 %v212
    %v731 = vunpack.c.l.b16 %v213
    %v732 = vunpack.c.l.b16 %v214
    %v733 = vunpack.c.l.b16 %v215
    %v734 = vunpack.c.l.b16 %v216
    %v735 = vunpack.c.l.b16 %v217
    %v736 = vunpack.c.l.b16 %v218
    %v737 = vunpack.c.l.b16 %v219
    %v738 = vunpack.c.l.b16 %v220
    %v739 = vunpack.c.l.b16 %v221
    %v740 = vunpack.c.l.b16 %v222
    %v741 = vunpack.c.l.b16 %v223
    %v742 = vunpack.c.l.b16 %v224
    %v743 = vunpack.c.l.b16 %v225
    %v744 = vunpack.c.l.b16 %v226
    %v745 = vunpack.c.l.b16 %v227
    %v746 = vunpack.c.l.b16 %v228
    %v747 = vunpack.c.l.b16 %v229
    %v748 = vunpack.c.l.b16 %v230
    %v749 = vunpack.c.l.b16 %v231
    %v750 = vunpack.c.l.b16 %v232
    %v751 = vunpack.c.l.b16 %v233
    %v752 = vunpack.c.l.b16 %v234
    %v753 = vunpack.c.l.b16 %v235
    %v754 = vunpack.c.l.b16 %v236
    %v755 = vunpack.c.l.b16 %v237
    %v756 = vunpack.c.l.b16 %v238
    %v757 = vunpack.c.l.b16 %v239
    %v758 = vunpack.c.l.b16 %v240
    %v759 = vunpack.c.l.b16 %v241
    %v760 = vunpack.c.l.b16 %v242
    %v761 = vunpack.c.l.b16 %v243
    %v762 = vunpack.c.l.b16 %v244
    %v763 = vunpack.c.l.b16 %v245
    %v764 = vunpack.c.l.b16 %v246
    %v765 = vunpack.c.l.b16 %v247
    %v766 = vunpack.c.l.b16 %v248
    %v767 = vunpack.c.l.b16 %v249
    %v768 = vunpack.c.l.b16 %v250
    %v769 = vunpack.c.l.b16 %v251
    %v770 = vunpack.c.l.b16 %v252
    %v771 = vunpack.c.l.b16 %v253
    %v772 = vunpack.c.l.b16 %v254
    %v773 = vunpack.c.l.b16 %v255
    %v774 = vunpack.c.l.b16 %v256
    %v775 = vunpack.c.l.b16 %v257
    %v776 = vunpack.c.l.b16 %v258
    %v777 = vunpack.c.l.b16 %v259
    %v778 = vunpack.c.l.b16 %v260
    %v779 = vunpack.c.l.b16 %v261
    %v780 = vunpack.c.l.b16 %v262
    %v781 = vunpack.c.l.b16 %v263
    %v782 = vunpack.c.l.b16 %v264
    %v783 = vunpack.c.l.b16 %v265
    %v784 = vunpack.c.l.b16 %v266
    %v785 = vunpack.c.l.b16 %v267
    %v786 = vunpack.c.l.b16 %v268
    %v787 = vunpack.c.l.b16 %v269
    %v788 = vunpack.c.l.b16 %v270
    %v789 = vunpack.c.l.b16 %v271
    %v790 = vunpack.c.l.b16 %v272
    %v791 = vunpack.c.l.b16 %v273
    %v792 = vunpack.c.l.b16 %v274
    %v793 = vunpack.c.l.b16 %v275
    %v794 = vunpack.c.l.b16 %v276
    %v795 = vunpack.c.l.b16 %v277
    %v796 = vunpack.c.l.b16 %v278
    %v797 = vunpack.c.l.b16 %v279
    %v798 = vunpack.c.l.b16 %v280
    %v799 = vunpack.c.l.b16 %v281
    %v800 = vunpack.c.l.b16 %v282
    %v801 = vunpack.c.l.b16 %v283
    %v802 = vunpack.c.l.b16 %v284
    %v803 = vunpack.c.l.b16 %v285
    %v804 = vunpack.c.l.b16 %v286
    %v805 = vunpack.c.l.b16 %v287
    %v806 = vunpack.c.l.b16 %v288
    %v807 = vunpack.c.l.b16 %v289
    %v808 = vunpack.c.l.b16 %v290
    %v809 = vunpack.c.l.b16 %v291
    %v810 = vunpack.c.l.b16 %v292
    %v811 = vunpack.c.l.b16 %v293
    %v812 = vunpack.c.l.b16 %v294
    %v813 = vunpack.c.l.b16 %v295
    %v814 = vpack.c.b16 %v559, %v558
    %v815 = vpack.c.b16 %v561, %v560
    %v816 = vpack.c.b16 %v563, %v562
    %v817 = vpack.c.b16 %v565, %v564
    %v818 = vpack.c.b16 %v567, %v566
    %v819 = vpack.c.b16 %v569, %v568
    %v820 = vpack.c.b16 %v571, %v570
    %v821 = vpack.c.b16 %v573, %v572
    %v822 = vpack.c.b16 %v575, %v574
    %v823 = vpack.c.b16 %v577, %v576
    %v824 = vpack.c.b16 %v579, %v578
    %v825 = vpack.c.b16 %v581, %v580
    %v826 = vpack.c.b16 %v583, %v582
    %v827 = vpack.c.b16 %v585, %v584
    %v828 = vpack.c.b16 %v587, %v586
    %v829 = vpack.c.b16 %v589, %v588
    %v830 = vpack.c.b16 %v591, %v590
    %v831 = vpack.c.b16 %v593, %v592
    %v832 = vpack.c.b16 %v595, %v594
    %v833 = vpack.c.b16 %v597, %v596
    %v834 = vpack.c.b16 %v599, %v598
    %v835 = vpack.c.b16 %v601, %v600
    %v836 = vpack.c.b16 %v603, %v602
    %v837 = vpack.c.b16 %v605, %v604
    %v838 = vpack.c.b16 %v607, %v606
    %v839 = vpack.c.b16 %v609, %v608
    %v840 = vpack.c.b16 %v611, %v610
    %v841 = vpack.c.b16 %v613, %v612
    %v842 = vpack.c.b16 %v615, %v614
    %v843 = vpack.c.b16 %v617, %v616
    %v844 = vpack.c.b16 %v619, %v618
    %v845 = vpack.c.b16 %v621, %v620
    %v846 = vpack.c.b16 %v623, %v622
    %v847 = vpack.c.b16 %v625, %v624
    %v848 = vpack.c.b16 %v627, %v626
    %v849 = vpack.c.b16 %v629, %v628
    %v850 = vpack.c.b16 %v631, %v630
    %v851 = vpack.c.b16 %v633, %v632
    %v852 = vpack.c.b16 %v635, %v634
    %v853 = vpack.c.b16 %v637, %v636
    %v854 = vpack.c.b16 %v639, %v638
    %v855 = vpack.c.b16 %v641, %v640
    %v856 = vpack.c.b16 %v643, %v642
    %v857 = vpack.c.b16 %v645, %v644
    %v858 = vpack.c.b16 %v647, %v646
    %v859 = vpack.c.b16 %v649, %v648
    %v860 = vpack.c.b16 %v651, %v650
    %v861 = vpack.c.b16 %v653, %v652
    %v862 = vpack.c.b16 %v655, %v654
    %v863 = vpack.c.b16 %v657, %v656
    %v864 = vpack.c.b16 %v659, %v658
    %v865 = vpack.c.b16 %v661, %v660
    %v866 = vpack.c.b16 %v663, %v662
    %v867 = vpack.c.b16 %v665, %v664
    %v868 = vpack.c.b16 %v667, %v666
    %v869 = vpack.c.b16 %v669, %v668
    %v870 = vpack.c.b16 %v671, %v670
    %v871 = vpack.c.b16 %v673, %v672
    %v872 = vpack.c.b16 %v675, %v674
    %v873 = vpack.c.b16 %v677, %v676
    %v874 = vpack.c.b16 %v679, %v678
    %v875 = vpack.c.b16 %v681, %v680
    %v876 = vpack.c.b16 %v683, %v682
    %v877 = vpack.c.b16 %v685, %v684
    %v878 = vpack.c.b16 %v687, %v686
    %v879 = vpack.c.b16 %v689, %v688
    %v880 = vpack.c.b16 %v691, %v690
    %v881 = vpack.c.b16 %v693, %v692
    %v882 = vpack.c.b16 %v695, %v694
    %v883 = vpack.c.b16 %v697, %v696
    %v884 = vpack.c.b16 %v699, %v698
    %v885 = vpack.c.b16 %v701, %v700
    %v886 = vpack.c.b16 %v703, %v702
    %v887 = vpack.c.b16 %v705, %v704
    %v888 = vpack.c.b16 %v707, %v706
    %v889 = vpack.c.b16 %v709, %v708
    %v890 = vpack.c.b16 %v711, %v710
    %v891 = vpack.c.b16 %v713, %v712
    %v892 = vpack.c.b16 %v715, %v714
    %v893 = vpack.c.b16 %v717, %v716
    %v894 = vpack.c.b16 %v719, %v718
    %v895 = vpack.c.b16 %v721, %v720
    %v896 = vpack.c.b16 %v723, %v722
    %v897 = vpack.c.b16 %v725, %v724
    %v898 = vpack.c.b16 %v727, %v726
    %v899 = vpack.c.b16 %v729, %v728
    %v900 = vpack.c.b16 %v731, %v730
    %v901 = vpack.c.b16 %v733, %v732
    %v902 = vpack.c.b16 %v735, %v734
    %v903 = vpack.c.b16 %v737, %v736
    %v904 = vpack.c.b16 %v739, %v738
    %v905 = vpack.c.b16 %v741, %v740
    %v906 = vpack.c.b16 %v743, %v742
    %v907 = vpack.c.b16 %v745, %v744
    %v908 = vpack.c.b16 %v747, %v746
    %v909 = vpack.c.b16 %v749, %v748
    %v910 = vpack.c.b16 %v751, %v750
    %v911 = vpack.c.b16 %v753, %v752
    %v912 = vpack.c.b16 %v755, %v754
    %v913 = vpack.c.b16 %v757, %v756
    %v914 = vpack.c.b16 %v759, %v758
    %v915 = vpack.c.b16 %v761, %v760
    %v916 = vpack.c.b16 %v763, %v762
    %v917 = vpack.c.b16 %v765, %v764
    %v918 = vpack.c.b16 %v767, %v766
    %v919 = vpack.c.b16 %v769, %v768
    %v920 = vpack.c.b16 %v771, %v770
    %v921 = vpack.c.b16 %v773, %v772
    %v922 = vpack.c.b16 %v775, %v774
    %v923 = vpack.c.b16 %v777, %v776
    %v924 = vpack.c.b16 %v779, %v778
    %v925 = vpack.c.b16 %v781, %v780
    %v926 = vpack.c.b16 %v783, %v782
    %v927 = vpack.c.b16 %v785, %v784
    %v928 = vpack.c.b16 %v787, %v786
    %v929 = vpack.c.b16 %v789, %v788
    %v930 = vpack.c.b16 %v791, %v790
    %v931 = vpack.c.b16 %v793, %v792
    %v932 = vpack.c.b16 %v795, %v794
    %v933 = vpack.c.b16 %v797, %v796
    %v934 = vpack.c.b16 %v799, %v798
    %v935 = vpack.c.b16 %v801, %v800
    %v936 = vpack.c.b16 %v803, %v802
    %v937 = vpack.c.b16 %v805, %v804
    %v938 = vpack.c.b16 %v807, %v806
    %v939 = vpack.c.b16 %v809, %v808
    %v940 = vpack.c.b16 %v811, %v810
    %v941 = vpack.c.b16 %v813, %v812
    %v944 = vunpack.c.l.b16 %v296
    %v945 = vunpack.c.l.b16 %v297
    %v946 = vpack.c.b16 %v945, %v944
    %vm947 = vcmask 72704
    %v949 = vsel %vm947, %v814, 0
    %v952 = vsel %vm947, %v815, 0
    %v955 = vsel %vm947, %v816, 0
    %v958 = vsel %vm947, %v817, 0
    %v961 = vsel %vm947, %v818, 0
    %v964 = vsel %vm947, %v819, 0
    %v967 = vsel %vm947, %v820, 0
    %v970 = vsel %vm947, %v821, 0
    %v973 = vsel %vm947, %v822, 0
    %v976 = vsel %vm947, %v823, 0
    %v979 = vsel %vm947, %v824, 0
    %v982 = vsel %vm947, %v825, 0
    %v985 = vsel %vm947, %v826, 0
    %v988 = vsel %vm947, %v827, 0
    %v991 = vsel %vm947, %v828, 0
    %v994 = vsel %vm947, %v829, 0
    %v997 = vsel %vm947, %v830, 0
    %v1000 = vsel %vm947, %v831, 0
    %v1003 = vsel %vm947, %v832, 0
    %v1006 = vsel %vm947, %v833, 0
    %v1009 = vsel %vm947, %v834, 0
    %v1012 = vsel %vm947, %v835, 0
    %v1015 = vsel %vm947, %v836, 0
    %v1018 = vsel %vm947, %v837, 0
    %v1021 = vsel %vm947, %v838, 0
    %v1024 = vsel %vm947, %v839, 0
    %v1027 = vsel %vm947, %v840, 0
    %v1030 = vsel %vm947, %v841, 0
    %v1033 = vsel %vm947, %v842, 0
    %v1036 = vsel %vm947, %v843, 0
    %v1039 = vsel %vm947, %v844, 0
    %v1042 = vsel %vm947, %v845, 0
    %v1045 = vsel %vm947, %v846, 0
    %v1048 = vsel %vm947, %v847, 0
    %v1051 = vsel %vm947, %v848, 0
    %v1054 = vsel %vm947, %v849, 0
    %v1057 = vsel %vm947, %v850, 0
    %v1060 = vsel %vm947, %v851, 0
    %v1063 = vsel %vm947, %v852, 0
    %v1066 = vsel %vm947, %v853, 0
    %v1069 = vsel %vm947, %v854, 0
    %v1072 = vsel %vm947, %v855, 0
    %v1075 = vsel %vm947, %v856, 0
    %v1078 = vsel %vm947, %v857, 0
    %v1081 = vsel %vm947, %v858, 0
    %v1084 = vsel %vm947, %v859, 0
    %v1087 = vsel %vm947, %v860, 0
    %v1090 = vsel %vm947, %v861, 0
    %v1093 = vsel %vm947, %v862, 0
    %v1096 = vsel %vm947, %v863, 0
    %v1099 = vsel %vm947, %v864, 0
    %v1102 = vsel %vm947, %v865, 0
    %v1105 = vsel %vm947, %v866, 0
    %v1108 = vsel %vm947, %v867, 0
    %v1111 = vsel %vm947, %v868, 0
    %v1114 = vsel %vm947, %v869, 0
    %v1117 = vsel %vm947, %v870, 0
    %v1120 = vsel %vm947, %v871, 0
    %v1123 = vsel %vm947, %v872, 0
    %v1126 = vsel %vm947, %v873, 0
    %v1129 = vsel %vm947, %v874, 0
    %v1132 = vsel %vm947, %v875, 0
    %v1135 = vsel %vm947, %v876, 0
    %v1138 = vsel %vm947, %v877, 0
    %v1141 = vsel %vm947, %v878, 0
    %v1144 = vsel %vm947, %v879, 0
    %v1147 = vsel %vm947, %v880, 0
    %v1150 = vsel %vm947, %v881, 0
    %v1153 = vsel %vm947, %v882, 0
    %v1156 = vsel %vm947, %v883, 0
    %v1159 = vsel %vm947, %v884, 0
    %v1162 = vsel %vm947, %v885, 0
    %v1165 = vsel %vm947, %v886, 0
    %v1168 = vsel %vm947, %v887, 0
    %v1171 = vsel %vm947, %v888, 0
    %v1174 = vsel %vm947, %v889, 0
    %v1177 = vsel %vm947, %v890, 0
    %v1180 = vsel %vm947, %v891, 0
    %v1183 = vsel %vm947, %v892, 0
    %v1186 = vsel %vm947, %v893, 0
    %v1189 = vsel %vm947, %v894, 0
    %v1192 = vsel %vm947, %v895, 0
    %v1195 = vsel %vm947, %v896, 0
    %v1198 = vsel %vm947, %v897, 0
    %v1201 = vsel %vm947, %v898, 0
    %v1204 = vsel %vm947, %v899, 0
    %v1207 = vsel %vm947, %v900, 0
    %v1210 = vsel %vm947, %v901, 0
    %v1213 = vsel %vm947, %v902, 0
    %v1216 = vsel %vm947, %v903, 0
    %v1219 = vsel %vm947, %v904, 0
    %v1222 = vsel %vm947, %v905, 0
    %v1225 = vsel %vm947, %v906, 0
    %v1228 = vsel %vm947, %v907, 0
    %v1231 = vsel %vm947, %v908, 0
    %v1234 = vsel %vm947, %v909, 0
    %v1237 = vsel %vm947, %v910, 0
    %v1240 = vsel %vm947, %v911, 0
    %v1243 = vsel %vm947, %v912, 0
    %v1246 = vsel %vm947, %v913, 0
    %v1249 = vsel %vm947, %v914, 0
    %v1252 = vsel %vm947, %v915, 0
    %v1255 = vsel %vm947, %v916, 0
    %v1258 = vsel %vm947, %v917, 0
    %v1261 = vsel %vm947, %v918, 0
    %v1264 = vsel %vm947, %v919, 0
    %v1267 = vsel %vm947, %v920, 0
    %v1270 = vsel %vm947, %v921, 0
    %v1273 = vsel %vm947, %v922, 0
    %v1276 = vsel %vm947, %v923, 0
    %v1279 = vsel %vm947, %v924, 0
    %v1282 = vsel %vm947, %v925, 0
    %v1285 = vsel %vm947, %v926, 0
    %v1288 = vsel %vm947, %v927, 0
    %v1291 = vsel %vm947, %v928, 0
    %v1294 = vsel %vm947, %v929, 0
    %v1297 = vsel %vm947, %v930, 0
    %v1300 = vsel %vm947, %v931, 0
    %v1303 = vsel %vm947, %v932, 0
    %v1306 = vsel %vm947, %v933, 0
    %v1309 = vsel %vm947, %v934, 0
    %v1312 = vsel %vm947, %v935, 0
    %v1315 = vsel %vm947, %v936, 0
    %v1318 = vsel %vm947, %v937, 0
    %v1321 = vsel %vm947, %v938, 0
    %v1324 = vsel %vm947, %v939, 0
    %v1327 = vsel %vm947, %v940, 0
    %v1330 = vsel %vm947, %v941, 0
    %vm1332 = vcmask 1043456
    %vm1333 = vcmask 1044480
    %v1334 = vsel %vm1332, 4294967295, 65535
    %v1335 = vsel %vm1333, %v1334, 0
    %v1337 = vand.u32 %v946, %v1335
    %1339 = vmatpush.bf16.msra.mxu0 0
    %1340 = vmatpush.bf16.msra.mxu0 0
    %1341 = vmatpush.bf16.msra.mxu0 0
    %1342 = vmatpush.bf16.msra.mxu0 0
    %1343 = vmatpush.bf16.msra.mxu0 0
    %1344 = vmatpush.bf16.msra.mxu0 0
    %1345 = vmatpush.bf16.msra.mxu0 0
    %1346 = vmatpush.bf16.msra.mxu0 %v1337
    %1347 = vmatmul.bf16.gmra.mxu0 %v949
    %v1348 = vpop.f32.mrf.mxu0
    %v1349 = vadd.f32 %v300, %v1348
    %v1350 = vpop.f32.mrf.mxu0
    %v1351 = vadd.f32 %v300, %v1350
    %1352 = vmatmul.bf16.gmra.mxu0 %v952
    %v1353 = vpop.f32.mrf.mxu0
    %v1354 = vadd.f32 %v300, %v1353
    %v1355 = vpop.f32.mrf.mxu0
    %v1356 = vadd.f32 %v300, %v1355
    %1357 = vmatmul.bf16.gmra.mxu0 %v955
    %v1358 = vpop.f32.mrf.mxu0
    %v1359 = vadd.f32 %v300, %v1358
    %v1360 = vpop.f32.mrf.mxu0
    %v1361 = vadd.f32 %v300, %v1360
    %1362 = vmatmul.bf16.gmra.mxu0 %v958
    %v1363 = vpop.f32.mrf.mxu0
    %v1364 = vadd.f32 %v300, %v1363
    %v1365 = vpop.f32.mrf.mxu0
    %v1366 = vadd.f32 %v300, %v1365
    %1367 = vmatmul.bf16.gmra.mxu0 %v961
    %v1368 = vpop.f32.mrf.mxu0
    %v1369 = vadd.f32 %v300, %v1368
    %v1370 = vpop.f32.mrf.mxu0
    %v1371 = vadd.f32 %v300, %v1370
    %1372 = vmatmul.bf16.gmra.mxu0 %v964
    %v1373 = vpop.f32.mrf.mxu0
    %v1374 = vadd.f32 %v300, %v1373
    %v1375 = vpop.f32.mrf.mxu0
    %v1376 = vadd.f32 %v300, %v1375
    %1377 = vmatmul.bf16.gmra.mxu0 %v967
    %v1378 = vpop.f32.mrf.mxu0
    %v1379 = vadd.f32 %v300, %v1378
    %v1380 = vpop.f32.mrf.mxu0
    %v1381 = vadd.f32 %v300, %v1380
    %1382 = vmatmul.bf16.gmra.mxu0 %v970
    %v1383 = vpop.f32.mrf.mxu0
    %v1384 = vadd.f32 %v300, %v1383
    %v1385 = vpop.f32.mrf.mxu0
    %v1386 = vadd.f32 %v300, %v1385
    %1387 = vmatmul.bf16.gmra.mxu0 %v973
    %v1388 = vpop.f32.mrf.mxu0
    %v1389 = vadd.f32 %v300, %v1388
    %v1390 = vpop.f32.mrf.mxu0
    %v1391 = vadd.f32 %v300, %v1390
    %1392 = vmatmul.bf16.gmra.mxu0 %v976
    %v1393 = vpop.f32.mrf.mxu0
    %v1394 = vadd.f32 %v300, %v1393
    %v1395 = vpop.f32.mrf.mxu0
    %v1396 = vadd.f32 %v300, %v1395
    %1397 = vmatmul.bf16.gmra.mxu0 %v979
    %v1398 = vpop.f32.mrf.mxu0
    %v1399 = vadd.f32 %v300, %v1398
    %v1400 = vpop.f32.mrf.mxu0
    %v1401 = vadd.f32 %v300, %v1400
    %1402 = vmatmul.bf16.gmra.mxu0 %v982
    %v1403 = vpop.f32.mrf.mxu0
    %v1404 = vadd.f32 %v300, %v1403
    %v1405 = vpop.f32.mrf.mxu0
    %v1406 = vadd.f32 %v300, %v1405
    %1407 = vmatmul.bf16.gmra.mxu0 %v985
    %v1408 = vpop.f32.mrf.mxu0
    %v1409 = vadd.f32 %v300, %v1408
    %v1410 = vpop.f32.mrf.mxu0
    %v1411 = vadd.f32 %v300, %v1410
    %1412 = vmatmul.bf16.gmra.mxu0 %v988
    %v1413 = vpop.f32.mrf.mxu0
    %v1414 = vadd.f32 %v300, %v1413
    %v1415 = vpop.f32.mrf.mxu0
    %v1416 = vadd.f32 %v300, %v1415
    %1417 = vmatmul.bf16.gmra.mxu0 %v991
    %v1418 = vpop.f32.mrf.mxu0
    %v1419 = vadd.f32 %v300, %v1418
    %v1420 = vpop.f32.mrf.mxu0
    %v1421 = vadd.f32 %v300, %v1420
    %1422 = vmatmul.bf16.gmra.mxu0 %v994
    %v1423 = vpop.f32.mrf.mxu0
    %v1424 = vadd.f32 %v300, %v1423
    %v1425 = vpop.f32.mrf.mxu0
    %v1426 = vadd.f32 %v300, %v1425
    %1427 = vmatmul.bf16.gmra.mxu0 %v997
    %v1428 = vpop.f32.mrf.mxu0
    %v1429 = vadd.f32 %v300, %v1428
    %v1430 = vpop.f32.mrf.mxu0
    %v1431 = vadd.f32 %v300, %v1430
    %1432 = vmatmul.bf16.gmra.mxu0 %v1000
    %v1433 = vpop.f32.mrf.mxu0
    %v1434 = vadd.f32 %v300, %v1433
    %v1435 = vpop.f32.mrf.mxu0
    %v1436 = vadd.f32 %v300, %v1435
    %1437 = vmatmul.bf16.gmra.mxu0 %v1003
    %v1438 = vpop.f32.mrf.mxu0
    %v1439 = vadd.f32 %v300, %v1438
    %v1440 = vpop.f32.mrf.mxu0
    %v1441 = vadd.f32 %v300, %v1440
    %1442 = vmatmul.bf16.gmra.mxu0 %v1006
    %v1443 = vpop.f32.mrf.mxu0
    %v1444 = vadd.f32 %v300, %v1443
    %v1445 = vpop.f32.mrf.mxu0
    %v1446 = vadd.f32 %v300, %v1445
    %1447 = vmatmul.bf16.gmra.mxu0 %v1009
    %v1448 = vpop.f32.mrf.mxu0
    %v1449 = vadd.f32 %v300, %v1448
    %v1450 = vpop.f32.mrf.mxu0
    %v1451 = vadd.f32 %v300, %v1450
    %1452 = vmatmul.bf16.gmra.mxu0 %v1012
    %v1453 = vpop.f32.mrf.mxu0
    %v1454 = vadd.f32 %v300, %v1453
    %v1455 = vpop.f32.mrf.mxu0
    %v1456 = vadd.f32 %v300, %v1455
    %1457 = vmatmul.bf16.gmra.mxu0 %v1015
    %v1458 = vpop.f32.mrf.mxu0
    %v1459 = vadd.f32 %v300, %v1458
    %v1460 = vpop.f32.mrf.mxu0
    %v1461 = vadd.f32 %v300, %v1460
    %1462 = vmatmul.bf16.gmra.mxu0 %v1018
    %v1463 = vpop.f32.mrf.mxu0
    %v1464 = vadd.f32 %v300, %v1463
    %v1465 = vpop.f32.mrf.mxu0
    %v1466 = vadd.f32 %v300, %v1465
    %1467 = vmatmul.bf16.gmra.mxu0 %v1021
    %v1468 = vpop.f32.mrf.mxu0
    %v1469 = vadd.f32 %v300, %v1468
    %v1470 = vpop.f32.mrf.mxu0
    %v1471 = vadd.f32 %v300, %v1470
    %1472 = vmatmul.bf16.gmra.mxu0 %v1024
    %v1473 = vpop.f32.mrf.mxu0
    %v1474 = vadd.f32 %v300, %v1473
    %v1475 = vpop.f32.mrf.mxu0
    %v1476 = vadd.f32 %v300, %v1475
    %1477 = vmatmul.bf16.gmra.mxu0 %v1027
    %v1478 = vpop.f32.mrf.mxu0
    %v1479 = vadd.f32 %v300, %v1478
    %v1480 = vpop.f32.mrf.mxu0
    %v1481 = vadd.f32 %v300, %v1480
    %1482 = vmatmul.bf16.gmra.mxu0 %v1030
    %v1483 = vpop.f32.mrf.mxu0
    %v1484 = vadd.f32 %v300, %v1483
    %v1485 = vpop.f32.mrf.mxu0
    %v1486 = vadd.f32 %v300, %v1485
    %1487 = vmatmul.bf16.gmra.mxu0 %v1033
    %v1488 = vpop.f32.mrf.mxu0
    %v1489 = vadd.f32 %v300, %v1488
    %v1490 = vpop.f32.mrf.mxu0
    %v1491 = vadd.f32 %v300, %v1490
    %1492 = vmatmul.bf16.gmra.mxu0 %v1036
    %v1493 = vpop.f32.mrf.mxu0
    %v1494 = vadd.f32 %v300, %v1493
    %v1495 = vpop.f32.mrf.mxu0
    %v1496 = vadd.f32 %v300, %v1495
    %1497 = vmatmul.bf16.gmra.mxu0 %v1039
    %v1498 = vpop.f32.mrf.mxu0
    %v1499 = vadd.f32 %v300, %v1498
    %v1500 = vpop.f32.mrf.mxu0
    %v1501 = vadd.f32 %v300, %v1500
    %1502 = vmatmul.bf16.gmra.mxu0 %v1042
    %v1503 = vpop.f32.mrf.mxu0
    %v1504 = vadd.f32 %v300, %v1503
    %v1505 = vpop.f32.mrf.mxu0
    %v1506 = vadd.f32 %v300, %v1505
    %1507 = vmatmul.bf16.gmra.mxu0 %v1045
    %v1508 = vpop.f32.mrf.mxu0
    %v1509 = vadd.f32 %v300, %v1508
    %v1510 = vpop.f32.mrf.mxu0
    %v1511 = vadd.f32 %v300, %v1510
    %1512 = vmatmul.bf16.gmra.mxu0 %v1048
    %v1513 = vpop.f32.mrf.mxu0
    %v1514 = vadd.f32 %v300, %v1513
    %v1515 = vpop.f32.mrf.mxu0
    %v1516 = vadd.f32 %v300, %v1515
    %1517 = vmatmul.bf16.gmra.mxu0 %v1051
    %v1518 = vpop.f32.mrf.mxu0
    %v1519 = vadd.f32 %v300, %v1518
    %v1520 = vpop.f32.mrf.mxu0
    %v1521 = vadd.f32 %v300, %v1520
    %1522 = vmatmul.bf16.gmra.mxu0 %v1054
    %v1523 = vpop.f32.mrf.mxu0
    %v1524 = vadd.f32 %v300, %v1523
    %v1525 = vpop.f32.mrf.mxu0
    %v1526 = vadd.f32 %v300, %v1525
    %1527 = vmatmul.bf16.gmra.mxu0 %v1057
    %v1528 = vpop.f32.mrf.mxu0
    %v1529 = vadd.f32 %v300, %v1528
    %v1530 = vpop.f32.mrf.mxu0
    %v1531 = vadd.f32 %v300, %v1530
    %1532 = vmatmul.bf16.gmra.mxu0 %v1060
    %v1533 = vpop.f32.mrf.mxu0
    %v1534 = vadd.f32 %v300, %v1533
    %v1535 = vpop.f32.mrf.mxu0
    %v1536 = vadd.f32 %v300, %v1535
    %1537 = vmatmul.bf16.gmra.mxu0 %v1063
    %v1538 = vpop.f32.mrf.mxu0
    %v1539 = vadd.f32 %v300, %v1538
    %v1540 = vpop.f32.mrf.mxu0
    %v1541 = vadd.f32 %v300, %v1540
    %1542 = vmatmul.bf16.gmra.mxu0 %v1066
    %v1543 = vpop.f32.mrf.mxu0
    %v1544 = vadd.f32 %v300, %v1543
    %v1545 = vpop.f32.mrf.mxu0
    %v1546 = vadd.f32 %v300, %v1545
    %1547 = vmatmul.bf16.gmra.mxu0 %v1069
    %v1548 = vpop.f32.mrf.mxu0
    %v1549 = vadd.f32 %v300, %v1548
    %v1550 = vpop.f32.mrf.mxu0
    %v1551 = vadd.f32 %v300, %v1550
    %1552 = vmatmul.bf16.gmra.mxu0 %v1072
    %v1553 = vpop.f32.mrf.mxu0
    %v1554 = vadd.f32 %v300, %v1553
    %v1555 = vpop.f32.mrf.mxu0
    %v1556 = vadd.f32 %v300, %v1555
    %1557 = vmatmul.bf16.gmra.mxu0 %v1075
    %v1558 = vpop.f32.mrf.mxu0
    %v1559 = vadd.f32 %v300, %v1558
    %v1560 = vpop.f32.mrf.mxu0
    %v1561 = vadd.f32 %v300, %v1560
    %1562 = vmatmul.bf16.gmra.mxu0 %v1078
    %v1563 = vpop.f32.mrf.mxu0
    %v1564 = vadd.f32 %v300, %v1563
    %v1565 = vpop.f32.mrf.mxu0
    %v1566 = vadd.f32 %v300, %v1565
    %1567 = vmatmul.bf16.gmra.mxu0 %v1081
    %v1568 = vpop.f32.mrf.mxu0
    %v1569 = vadd.f32 %v300, %v1568
    %v1570 = vpop.f32.mrf.mxu0
    %v1571 = vadd.f32 %v300, %v1570
    %1572 = vmatmul.bf16.gmra.mxu0 %v1084
    %v1573 = vpop.f32.mrf.mxu0
    %v1574 = vadd.f32 %v300, %v1573
    %v1575 = vpop.f32.mrf.mxu0
    %v1576 = vadd.f32 %v300, %v1575
    %1577 = vmatmul.bf16.gmra.mxu0 %v1087
    %v1578 = vpop.f32.mrf.mxu0
    %v1579 = vadd.f32 %v300, %v1578
    %v1580 = vpop.f32.mrf.mxu0
    %v1581 = vadd.f32 %v300, %v1580
    %1582 = vmatmul.bf16.gmra.mxu0 %v1090
    %v1583 = vpop.f32.mrf.mxu0
    %v1584 = vadd.f32 %v300, %v1583
    %v1585 = vpop.f32.mrf.mxu0
    %v1586 = vadd.f32 %v300, %v1585
    %1587 = vmatmul.bf16.gmra.mxu0 %v1093
    %v1588 = vpop.f32.mrf.mxu0
    %v1589 = vadd.f32 %v300, %v1588
    %v1590 = vpop.f32.mrf.mxu0
    %v1591 = vadd.f32 %v300, %v1590
    %1592 = vmatmul.bf16.gmra.mxu0 %v1096
    %v1593 = vpop.f32.mrf.mxu0
    %v1594 = vadd.f32 %v300, %v1593
    %v1595 = vpop.f32.mrf.mxu0
    %v1596 = vadd.f32 %v300, %v1595
    %1597 = vmatmul.bf16.gmra.mxu0 %v1099
    %v1598 = vpop.f32.mrf.mxu0
    %v1599 = vadd.f32 %v300, %v1598
    %v1600 = vpop.f32.mrf.mxu0
    %v1601 = vadd.f32 %v300, %v1600
    %1602 = vmatmul.bf16.gmra.mxu0 %v1102
    %v1603 = vpop.f32.mrf.mxu0
    %v1604 = vadd.f32 %v300, %v1603
    %v1605 = vpop.f32.mrf.mxu0
    %v1606 = vadd.f32 %v300, %v1605
    %1607 = vmatmul.bf16.gmra.mxu0 %v1105
    %v1608 = vpop.f32.mrf.mxu0
    %v1609 = vadd.f32 %v300, %v1608
    %v1610 = vpop.f32.mrf.mxu0
    %v1611 = vadd.f32 %v300, %v1610
    %1612 = vmatmul.bf16.gmra.mxu0 %v1108
    %v1613 = vpop.f32.mrf.mxu0
    %v1614 = vadd.f32 %v300, %v1613
    %v1615 = vpop.f32.mrf.mxu0
    %v1616 = vadd.f32 %v300, %v1615
    %1617 = vmatmul.bf16.gmra.mxu0 %v1111
    %v1618 = vpop.f32.mrf.mxu0
    %v1619 = vadd.f32 %v300, %v1618
    %v1620 = vpop.f32.mrf.mxu0
    %v1621 = vadd.f32 %v300, %v1620
    %1622 = vmatmul.bf16.gmra.mxu0 %v1114
    %v1623 = vpop.f32.mrf.mxu0
    %v1624 = vadd.f32 %v300, %v1623
    %v1625 = vpop.f32.mrf.mxu0
    %v1626 = vadd.f32 %v300, %v1625
    %1627 = vmatmul.bf16.gmra.mxu0 %v1117
    %v1628 = vpop.f32.mrf.mxu0
    %v1629 = vadd.f32 %v300, %v1628
    %v1630 = vpop.f32.mrf.mxu0
    %v1631 = vadd.f32 %v300, %v1630
    %1632 = vmatmul.bf16.gmra.mxu0 %v1120
    %v1633 = vpop.f32.mrf.mxu0
    %v1634 = vadd.f32 %v300, %v1633
    %v1635 = vpop.f32.mrf.mxu0
    %v1636 = vadd.f32 %v300, %v1635
    %1637 = vmatmul.bf16.gmra.mxu0 %v1123
    %v1638 = vpop.f32.mrf.mxu0
    %v1639 = vadd.f32 %v300, %v1638
    %v1640 = vpop.f32.mrf.mxu0
    %v1641 = vadd.f32 %v300, %v1640
    %1642 = vmatmul.bf16.gmra.mxu0 %v1126
    %v1643 = vpop.f32.mrf.mxu0
    %v1644 = vadd.f32 %v300, %v1643
    %v1645 = vpop.f32.mrf.mxu0
    %v1646 = vadd.f32 %v300, %v1645
    %1647 = vmatmul.bf16.gmra.mxu0 %v1129
    %v1648 = vpop.f32.mrf.mxu0
    %v1649 = vadd.f32 %v300, %v1648
    %v1650 = vpop.f32.mrf.mxu0
    %v1651 = vadd.f32 %v300, %v1650
    %1652 = vmatmul.bf16.gmra.mxu0 %v1132
    %v1653 = vpop.f32.mrf.mxu0
    %v1654 = vadd.f32 %v300, %v1653
    %v1655 = vpop.f32.mrf.mxu0
    %v1656 = vadd.f32 %v300, %v1655
    %1657 = vmatmul.bf16.gmra.mxu0 %v1135
    %v1658 = vpop.f32.mrf.mxu0
    %v1659 = vadd.f32 %v300, %v1658
    %v1660 = vpop.f32.mrf.mxu0
    %v1661 = vadd.f32 %v300, %v1660
    %1662 = vmatmul.bf16.gmra.mxu0 %v1138
    %v1663 = vpop.f32.mrf.mxu0
    %v1664 = vadd.f32 %v300, %v1663
    %v1665 = vpop.f32.mrf.mxu0
    %v1666 = vadd.f32 %v300, %v1665
    %1667 = vmatmul.bf16.gmra.mxu0 %v1141
    %v1668 = vpop.f32.mrf.mxu0
    %v1669 = vadd.f32 %v300, %v1668
    %v1670 = vpop.f32.mrf.mxu0
    %v1671 = vadd.f32 %v300, %v1670
    %1672 = vmatmul.bf16.gmra.mxu0 %v1144
    %v1673 = vpop.f32.mrf.mxu0
    %v1674 = vadd.f32 %v300, %v1673
    %v1675 = vpop.f32.mrf.mxu0
    %v1676 = vadd.f32 %v300, %v1675
    %1677 = vmatmul.bf16.gmra.mxu0 %v1147
    %v1678 = vpop.f32.mrf.mxu0
    %v1679 = vadd.f32 %v300, %v1678
    %v1680 = vpop.f32.mrf.mxu0
    %v1681 = vadd.f32 %v300, %v1680
    %1682 = vmatmul.bf16.gmra.mxu0 %v1150
    %v1683 = vpop.f32.mrf.mxu0
    %v1684 = vadd.f32 %v300, %v1683
    %v1685 = vpop.f32.mrf.mxu0
    %v1686 = vadd.f32 %v300, %v1685
    %1687 = vmatmul.bf16.gmra.mxu0 %v1153
    %v1688 = vpop.f32.mrf.mxu0
    %v1689 = vadd.f32 %v300, %v1688
    %v1690 = vpop.f32.mrf.mxu0
    %v1691 = vadd.f32 %v300, %v1690
    %1692 = vmatmul.bf16.gmra.mxu0 %v1156
    %v1693 = vpop.f32.mrf.mxu0
    %v1694 = vadd.f32 %v300, %v1693
    %v1695 = vpop.f32.mrf.mxu0
    %v1696 = vadd.f32 %v300, %v1695
    %1697 = vmatmul.bf16.gmra.mxu0 %v1159
    %v1698 = vpop.f32.mrf.mxu0
    %v1699 = vadd.f32 %v300, %v1698
    %v1700 = vpop.f32.mrf.mxu0
    %v1701 = vadd.f32 %v300, %v1700
    %1702 = vmatmul.bf16.gmra.mxu0 %v1162
    %v1703 = vpop.f32.mrf.mxu0
    %v1704 = vadd.f32 %v300, %v1703
    %v1705 = vpop.f32.mrf.mxu0
    %v1706 = vadd.f32 %v300, %v1705
    %1707 = vmatmul.bf16.gmra.mxu0 %v1165
    %v1708 = vpop.f32.mrf.mxu0
    %v1709 = vadd.f32 %v300, %v1708
    %v1710 = vpop.f32.mrf.mxu0
    %v1711 = vadd.f32 %v300, %v1710
    %1712 = vmatmul.bf16.gmra.mxu0 %v1168
    %v1713 = vpop.f32.mrf.mxu0
    %v1714 = vadd.f32 %v300, %v1713
    %v1715 = vpop.f32.mrf.mxu0
    %v1716 = vadd.f32 %v300, %v1715
    %1717 = vmatmul.bf16.gmra.mxu0 %v1171
    %v1718 = vpop.f32.mrf.mxu0
    %v1719 = vadd.f32 %v300, %v1718
    %v1720 = vpop.f32.mrf.mxu0
    %v1721 = vadd.f32 %v300, %v1720
    %1722 = vmatmul.bf16.gmra.mxu0 %v1174
    %v1723 = vpop.f32.mrf.mxu0
    %v1724 = vadd.f32 %v300, %v1723
    %v1725 = vpop.f32.mrf.mxu0
    %v1726 = vadd.f32 %v300, %v1725
    %1727 = vmatmul.bf16.gmra.mxu0 %v1177
    %v1728 = vpop.f32.mrf.mxu0
    %v1729 = vadd.f32 %v300, %v1728
    %v1730 = vpop.f32.mrf.mxu0
    %v1731 = vadd.f32 %v300, %v1730
    %1732 = vmatmul.bf16.gmra.mxu0 %v1180
    %v1733 = vpop.f32.mrf.mxu0
    %v1734 = vadd.f32 %v300, %v1733
    %v1735 = vpop.f32.mrf.mxu0
    %v1736 = vadd.f32 %v300, %v1735
    %1737 = vmatmul.bf16.gmra.mxu0 %v1183
    %v1738 = vpop.f32.mrf.mxu0
    %v1739 = vadd.f32 %v300, %v1738
    %v1740 = vpop.f32.mrf.mxu0
    %v1741 = vadd.f32 %v300, %v1740
    %1742 = vmatmul.bf16.gmra.mxu0 %v1186
    %v1743 = vpop.f32.mrf.mxu0
    %v1744 = vadd.f32 %v300, %v1743
    %v1745 = vpop.f32.mrf.mxu0
    %v1746 = vadd.f32 %v300, %v1745
    %1747 = vmatmul.bf16.gmra.mxu0 %v1189
    %v1748 = vpop.f32.mrf.mxu0
    %v1749 = vadd.f32 %v300, %v1748
    %v1750 = vpop.f32.mrf.mxu0
    %v1751 = vadd.f32 %v300, %v1750
    %1752 = vmatmul.bf16.gmra.mxu0 %v1192
    %v1753 = vpop.f32.mrf.mxu0
    %v1754 = vadd.f32 %v300, %v1753
    %v1755 = vpop.f32.mrf.mxu0
    %v1756 = vadd.f32 %v300, %v1755
    %1757 = vmatmul.bf16.gmra.mxu0 %v1195
    %v1758 = vpop.f32.mrf.mxu0
    %v1759 = vadd.f32 %v300, %v1758
    %v1760 = vpop.f32.mrf.mxu0
    %v1761 = vadd.f32 %v300, %v1760
    %1762 = vmatmul.bf16.gmra.mxu0 %v1198
    %v1763 = vpop.f32.mrf.mxu0
    %v1764 = vadd.f32 %v300, %v1763
    %v1765 = vpop.f32.mrf.mxu0
    %v1766 = vadd.f32 %v300, %v1765
    %1767 = vmatmul.bf16.gmra.mxu0 %v1201
    %v1768 = vpop.f32.mrf.mxu0
    %v1769 = vadd.f32 %v300, %v1768
    %v1770 = vpop.f32.mrf.mxu0
    %v1771 = vadd.f32 %v300, %v1770
    %1772 = vmatmul.bf16.gmra.mxu0 %v1204
    %v1773 = vpop.f32.mrf.mxu0
    %v1774 = vadd.f32 %v300, %v1773
    %v1775 = vpop.f32.mrf.mxu0
    %v1776 = vadd.f32 %v300, %v1775
    %1777 = vmatmul.bf16.gmra.mxu0 %v1207
    %v1778 = vpop.f32.mrf.mxu0
    %v1779 = vadd.f32 %v300, %v1778
    %v1780 = vpop.f32.mrf.mxu0
    %v1781 = vadd.f32 %v300, %v1780
    %1782 = vmatmul.bf16.gmra.mxu0 %v1210
    %v1783 = vpop.f32.mrf.mxu0
    %v1784 = vadd.f32 %v300, %v1783
    %v1785 = vpop.f32.mrf.mxu0
    %v1786 = vadd.f32 %v300, %v1785
    %1787 = vmatmul.bf16.gmra.mxu0 %v1213
    %v1788 = vpop.f32.mrf.mxu0
    %v1789 = vadd.f32 %v300, %v1788
    %v1790 = vpop.f32.mrf.mxu0
    %v1791 = vadd.f32 %v300, %v1790
    %1792 = vmatmul.bf16.gmra.mxu0 %v1216
    %v1793 = vpop.f32.mrf.mxu0
    %v1794 = vadd.f32 %v300, %v1793
    %v1795 = vpop.f32.mrf.mxu0
    %v1796 = vadd.f32 %v300, %v1795
    %1797 = vmatmul.bf16.gmra.mxu0 %v1219
    %v1798 = vpop.f32.mrf.mxu0
    %v1799 = vadd.f32 %v300, %v1798
    %v1800 = vpop.f32.mrf.mxu0
    %v1801 = vadd.f32 %v300, %v1800
    %1802 = vmatmul.bf16.gmra.mxu0 %v1222
    %v1803 = vpop.f32.mrf.mxu0
    %v1804 = vadd.f32 %v300, %v1803
    %v1805 = vpop.f32.mrf.mxu0
    %v1806 = vadd.f32 %v300, %v1805
    %1807 = vmatmul.bf16.gmra.mxu0 %v1225
    %v1808 = vpop.f32.mrf.mxu0
    %v1809 = vadd.f32 %v300, %v1808
    %v1810 = vpop.f32.mrf.mxu0
    %v1811 = vadd.f32 %v300, %v1810
    %1812 = vmatmul.bf16.gmra.mxu0 %v1228
    %v1813 = vpop.f32.mrf.mxu0
    %v1814 = vadd.f32 %v300, %v1813
    %v1815 = vpop.f32.mrf.mxu0
    %v1816 = vadd.f32 %v300, %v1815
    %1817 = vmatmul.bf16.gmra.mxu0 %v1231
    %v1818 = vpop.f32.mrf.mxu0
    %v1819 = vadd.f32 %v300, %v1818
    %v1820 = vpop.f32.mrf.mxu0
    %v1821 = vadd.f32 %v300, %v1820
    %1822 = vmatmul.bf16.gmra.mxu0 %v1234
    %v1823 = vpop.f32.mrf.mxu0
    %v1824 = vadd.f32 %v300, %v1823
    %v1825 = vpop.f32.mrf.mxu0
    %v1826 = vadd.f32 %v300, %v1825
    %1827 = vmatmul.bf16.gmra.mxu0 %v1237
    %v1828 = vpop.f32.mrf.mxu0
    %v1829 = vadd.f32 %v300, %v1828
    %v1830 = vpop.f32.mrf.mxu0
    %v1831 = vadd.f32 %v300, %v1830
    %1832 = vmatmul.bf16.gmra.mxu0 %v1240
    %v1833 = vpop.f32.mrf.mxu0
    %v1834 = vadd.f32 %v300, %v1833
    %v1835 = vpop.f32.mrf.mxu0
    %v1836 = vadd.f32 %v300, %v1835
    %1837 = vmatmul.bf16.gmra.mxu0 %v1243
    %v1838 = vpop.f32.mrf.mxu0
    %v1839 = vadd.f32 %v300, %v1838
    %v1840 = vpop.f32.mrf.mxu0
    %v1841 = vadd.f32 %v300, %v1840
    %1842 = vmatmul.bf16.gmra.mxu0 %v1246
    %v1843 = vpop.f32.mrf.mxu0
    %v1844 = vadd.f32 %v300, %v1843
    %v1845 = vpop.f32.mrf.mxu0
    %v1846 = vadd.f32 %v300, %v1845
    %1847 = vmatmul.bf16.gmra.mxu0 %v1249
    %v1848 = vpop.f32.mrf.mxu0
    %v1849 = vadd.f32 %v300, %v1848
    %v1850 = vpop.f32.mrf.mxu0
    %v1851 = vadd.f32 %v300, %v1850
    %1852 = vmatmul.bf16.gmra.mxu0 %v1252
    %v1853 = vpop.f32.mrf.mxu0
    %v1854 = vadd.f32 %v300, %v1853
    %v1855 = vpop.f32.mrf.mxu0
    %v1856 = vadd.f32 %v300, %v1855
    %1857 = vmatmul.bf16.gmra.mxu0 %v1255
    %v1858 = vpop.f32.mrf.mxu0
    %v1859 = vadd.f32 %v300, %v1858
    %v1860 = vpop.f32.mrf.mxu0
    %v1861 = vadd.f32 %v300, %v1860
    %1862 = vmatmul.bf16.gmra.mxu0 %v1258
    %v1863 = vpop.f32.mrf.mxu0
    %v1864 = vadd.f32 %v300, %v1863
    %v1865 = vpop.f32.mrf.mxu0
    %v1866 = vadd.f32 %v300, %v1865
    %1867 = vmatmul.bf16.gmra.mxu0 %v1261
    %v1868 = vpop.f32.mrf.mxu0
    %v1869 = vadd.f32 %v300, %v1868
    %v1870 = vpop.f32.mrf.mxu0
    %v1871 = vadd.f32 %v300, %v1870
    %1872 = vmatmul.bf16.gmra.mxu0 %v1264
    %v1873 = vpop.f32.mrf.mxu0
    %v1874 = vadd.f32 %v300, %v1873
    %v1875 = vpop.f32.mrf.mxu0
    %v1876 = vadd.f32 %v300, %v1875
    %1877 = vmatmul.bf16.gmra.mxu0 %v1267
    %v1878 = vpop.f32.mrf.mxu0
    %v1879 = vadd.f32 %v300, %v1878
    %v1880 = vpop.f32.mrf.mxu0
    %v1881 = vadd.f32 %v300, %v1880
    %1882 = vmatmul.bf16.gmra.mxu0 %v1270
    %v1883 = vpop.f32.mrf.mxu0
    %v1884 = vadd.f32 %v300, %v1883
    %v1885 = vpop.f32.mrf.mxu0
    %v1886 = vadd.f32 %v300, %v1885
    %1887 = vmatmul.bf16.gmra.mxu0 %v1273
    %v1888 = vpop.f32.mrf.mxu0
    %v1889 = vadd.f32 %v300, %v1888
    %v1890 = vpop.f32.mrf.mxu0
    %v1891 = vadd.f32 %v300, %v1890
    %1892 = vmatmul.bf16.gmra.mxu0 %v1276
    %v1893 = vpop.f32.mrf.mxu0
    %v1894 = vadd.f32 %v300, %v1893
    %v1895 = vpop.f32.mrf.mxu0
    %v1896 = vadd.f32 %v300, %v1895
    %1897 = vmatmul.bf16.gmra.mxu0 %v1279
    %v1898 = vpop.f32.mrf.mxu0
    %v1899 = vadd.f32 %v300, %v1898
    %v1900 = vpop.f32.mrf.mxu0
    %v1901 = vadd.f32 %v300, %v1900
    %1902 = vmatmul.bf16.gmra.mxu0 %v1282
    %v1903 = vpop.f32.mrf.mxu0
    %v1904 = vadd.f32 %v300, %v1903
    %v1905 = vpop.f32.mrf.mxu0
    %v1906 = vadd.f32 %v300, %v1905
    %1907 = vmatmul.bf16.gmra.mxu0 %v1285
    %v1908 = vpop.f32.mrf.mxu0
    %v1909 = vadd.f32 %v300, %v1908
    %v1910 = vpop.f32.mrf.mxu0
    %v1911 = vadd.f32 %v300, %v1910
    %1912 = vmatmul.bf16.gmra.mxu0 %v1288
    %v1913 = vpop.f32.mrf.mxu0
    %v1914 = vadd.f32 %v300, %v1913
    %v1915 = vpop.f32.mrf.mxu0
    %v1916 = vadd.f32 %v300, %v1915
    %1917 = vmatmul.bf16.gmra.mxu0 %v1291
    %v1918 = vpop.f32.mrf.mxu0
    %v1919 = vadd.f32 %v300, %v1918
    %v1920 = vpop.f32.mrf.mxu0
    %v1921 = vadd.f32 %v300, %v1920
    %1922 = vmatmul.bf16.gmra.mxu0 %v1294
    %v1923 = vpop.f32.mrf.mxu0
    %v1924 = vadd.f32 %v300, %v1923
    %v1925 = vpop.f32.mrf.mxu0
    %v1926 = vadd.f32 %v300, %v1925
    %1927 = vmatmul.bf16.gmra.mxu0 %v1297
    %v1928 = vpop.f32.mrf.mxu0
    %v1929 = vadd.f32 %v300, %v1928
    %v1930 = vpop.f32.mrf.mxu0
    %v1931 = vadd.f32 %v300, %v1930
    %1932 = vmatmul.bf16.gmra.mxu0 %v1300
    %v1933 = vpop.f32.mrf.mxu0
    %v1934 = vadd.f32 %v300, %v1933
    %v1935 = vpop.f32.mrf.mxu0
    %v1936 = vadd.f32 %v300, %v1935
    %1937 = vmatmul.bf16.gmra.mxu0 %v1303
    %v1938 = vpop.f32.mrf.mxu0
    %v1939 = vadd.f32 %v300, %v1938
    %v1940 = vpop.f32.mrf.mxu0
    %v1941 = vadd.f32 %v300, %v1940
    %1942 = vmatmul.bf16.gmra.mxu0 %v1306
    %v1943 = vpop.f32.mrf.mxu0
    %v1944 = vadd.f32 %v300, %v1943
    %v1945 = vpop.f32.mrf.mxu0
    %v1946 = vadd.f32 %v300, %v1945
    %1947 = vmatmul.bf16.gmra.mxu0 %v1309
    %v1948 = vpop.f32.mrf.mxu0
    %v1949 = vadd.f32 %v300, %v1948
    %v1950 = vpop.f32.mrf.mxu0
    %v1951 = vadd.f32 %v300, %v1950
    %1952 = vmatmul.bf16.gmra.mxu0 %v1312
    %v1953 = vpop.f32.mrf.mxu0
    %v1954 = vadd.f32 %v300, %v1953
    %v1955 = vpop.f32.mrf.mxu0
    %v1956 = vadd.f32 %v300, %v1955
    %1957 = vmatmul.bf16.gmra.mxu0 %v1315
    %v1958 = vpop.f32.mrf.mxu0
    %v1959 = vadd.f32 %v300, %v1958
    %v1960 = vpop.f32.mrf.mxu0
    %v1961 = vadd.f32 %v300, %v1960
    %1962 = vmatmul.bf16.gmra.mxu0 %v1318
    %v1963 = vpop.f32.mrf.mxu0
    %v1964 = vadd.f32 %v300, %v1963
    %v1965 = vpop.f32.mrf.mxu0
    %v1966 = vadd.f32 %v300, %v1965
    %1967 = vmatmul.bf16.gmra.mxu0 %v1321
    %v1968 = vpop.f32.mrf.mxu0
    %v1969 = vadd.f32 %v300, %v1968
    %v1970 = vpop.f32.mrf.mxu0
    %v1971 = vadd.f32 %v300, %v1970
    %1972 = vmatmul.bf16.gmra.mxu0 %v1324
    %v1973 = vpop.f32.mrf.mxu0
    %v1974 = vadd.f32 %v300, %v1973
    %v1975 = vpop.f32.mrf.mxu0
    %v1976 = vadd.f32 %v300, %v1975
    %1977 = vmatmul.bf16.gmra.mxu0 %v1327
    %v1978 = vpop.f32.mrf.mxu0
    %v1979 = vadd.f32 %v300, %v1978
    %v1980 = vpop.f32.mrf.mxu0
    %v1981 = vadd.f32 %v300, %v1980
    %1982 = vmatmul.bf16.gmra.mxu0 %v1330
    %v1983 = vpop.f32.mrf.mxu0
    %v1984 = vadd.f32 %v300, %v1983
    %v1985 = vpop.f32.mrf.mxu0
    %v1986 = vadd.f32 %v300, %v1985
    %1987 = vdwg.mxu0
    %v1988 = vmax.f32 %v1349, 0.0
    %v1989 = vmax.f32 %v1351, 0.0
    %v1990 = vmax.f32 %v1354, 0.0
    %v1991 = vmax.f32 %v1356, 0.0
    %v1992 = vmax.f32 %v1359, 0.0
    %v1993 = vmax.f32 %v1361, 0.0
    %v1994 = vmax.f32 %v1364, 0.0
    %v1995 = vmax.f32 %v1366, 0.0
    %v1996 = vmax.f32 %v1369, 0.0
    %v1997 = vmax.f32 %v1371, 0.0
    %v1998 = vmax.f32 %v1374, 0.0
    %v1999 = vmax.f32 %v1376, 0.0
    %v2000 = vmax.f32 %v1379, 0.0
    %v2001 = vmax.f32 %v1381, 0.0
    %v2002 = vmax.f32 %v1384, 0.0
    %v2003 = vmax.f32 %v1386, 0.0
    %v2004 = vmax.f32 %v1389, 0.0
    %v2005 = vmax.f32 %v1391, 0.0
    %v2006 = vmax.f32 %v1394, 0.0
    %v2007 = vmax.f32 %v1396, 0.0
    %v2008 = vmax.f32 %v1399, 0.0
    %v2009 = vmax.f32 %v1401, 0.0
    %v2010 = vmax.f32 %v1404, 0.0
    %v2011 = vmax.f32 %v1406, 0.0
    %v2012 = vmax.f32 %v1409, 0.0
    %v2013 = vmax.f32 %v1411, 0.0
    %v2014 = vmax.f32 %v1414, 0.0
    %v2015 = vmax.f32 %v1416, 0.0
    %v2016 = vmax.f32 %v1419, 0.0
    %v2017 = vmax.f32 %v1421, 0.0
    %v2018 = vmax.f32 %v1424, 0.0
    %v2019 = vmax.f32 %v1426, 0.0
    %v2020 = vmax.f32 %v1429, 0.0
    %v2021 = vmax.f32 %v1431, 0.0
    %v2022 = vmax.f32 %v1434, 0.0
    %v2023 = vmax.f32 %v1436, 0.0
    %v2024 = vmax.f32 %v1439, 0.0
    %v2025 = vmax.f32 %v1441, 0.0
    %v2026 = vmax.f32 %v1444, 0.0
    %v2027 = vmax.f32 %v1446, 0.0
    %v2028 = vmax.f32 %v1449, 0.0
    %v2029 = vmax.f32 %v1451, 0.0
    %v2030 = vmax.f32 %v1454, 0.0
    %v2031 = vmax.f32 %v1456, 0.0
    %v2032 = vmax.f32 %v1459, 0.0
    %v2033 = vmax.f32 %v1461, 0.0
    %v2034 = vmax.f32 %v1464, 0.0
    %v2035 = vmax.f32 %v1466, 0.0
    %v2036 = vmax.f32 %v1469, 0.0
    %v2037 = vmax.f32 %v1471, 0.0
    %v2038 = vmax.f32 %v1474, 0.0
    %v2039 = vmax.f32 %v1476, 0.0
    %v2040 = vmax.f32 %v1479, 0.0
    %v2041 = vmax.f32 %v1481, 0.0
    %v2042 = vmax.f32 %v1484, 0.0
    %v2043 = vmax.f32 %v1486, 0.0
    %v2044 = vmax.f32 %v1489, 0.0
    %v2045 = vmax.f32 %v1491, 0.0
    %v2046 = vmax.f32 %v1494, 0.0
    %v2047 = vmax.f32 %v1496, 0.0
    %v2048 = vmax.f32 %v1499, 0.0
    %v2049 = vmax.f32 %v1501, 0.0
    %v2050 = vmax.f32 %v1504, 0.0
    %v2051 = vmax.f32 %v1506, 0.0
    %v2052 = vmax.f32 %v1509, 0.0
    %v2053 = vmax.f32 %v1511, 0.0
    %v2054 = vmax.f32 %v1514, 0.0
    %v2055 = vmax.f32 %v1516, 0.0
    %v2056 = vmax.f32 %v1519, 0.0
    %v2057 = vmax.f32 %v1521, 0.0
    %v2058 = vmax.f32 %v1524, 0.0
    %v2059 = vmax.f32 %v1526, 0.0
    %v2060 = vmax.f32 %v1529, 0.0
    %v2061 = vmax.f32 %v1531, 0.0
    %v2062 = vmax.f32 %v1534, 0.0
    %v2063 = vmax.f32 %v1536, 0.0
    %v2064 = vmax.f32 %v1539, 0.0
    %v2065 = vmax.f32 %v1541, 0.0
    %v2066 = vmax.f32 %v1544, 0.0
    %v2067 = vmax.f32 %v1546, 0.0
    %v2068 = vmax.f32 %v1549, 0.0
    %v2069 = vmax.f32 %v1551, 0.0
    %v2070 = vmax.f32 %v1554, 0.0
    %v2071 = vmax.f32 %v1556, 0.0
    %v2072 = vmax.f32 %v1559, 0.0
    %v2073 = vmax.f32 %v1561, 0.0
    %v2074 = vmax.f32 %v1564, 0.0
    %v2075 = vmax.f32 %v1566, 0.0
    %v2076 = vmax.f32 %v1569, 0.0
    %v2077 = vmax.f32 %v1571, 0.0
    %v2078 = vmax.f32 %v1574, 0.0
    %v2079 = vmax.f32 %v1576, 0.0
    %v2080 = vmax.f32 %v1579, 0.0
    %v2081 = vmax.f32 %v1581, 0.0
    %v2082 = vmax.f32 %v1584, 0.0
    %v2083 = vmax.f32 %v1586, 0.0
    %v2084 = vmax.f32 %v1589, 0.0
    %v2085 = vmax.f32 %v1591, 0.0
    %v2086 = vmax.f32 %v1594, 0.0
    %v2087 = vmax.f32 %v1596, 0.0
    %v2088 = vmax.f32 %v1599, 0.0
    %v2089 = vmax.f32 %v1601, 0.0
    %v2090 = vmax.f32 %v1604, 0.0
    %v2091 = vmax.f32 %v1606, 0.0
    %v2092 = vmax.f32 %v1609, 0.0
    %v2093 = vmax.f32 %v1611, 0.0
    %v2094 = vmax.f32 %v1614, 0.0
    %v2095 = vmax.f32 %v1616, 0.0
    %v2096 = vmax.f32 %v1619, 0.0
    %v2097 = vmax.f32 %v1621, 0.0
    %v2098 = vmax.f32 %v1624, 0.0
    %v2099 = vmax.f32 %v1626, 0.0
    %v2100 = vmax.f32 %v1629, 0.0
    %v2101 = vmax.f32 %v1631, 0.0
    %v2102 = vmax.f32 %v1634, 0.0
    %v2103 = vmax.f32 %v1636, 0.0
    %v2104 = vmax.f32 %v1639, 0.0
    %v2105 = vmax.f32 %v1641, 0.0
    %v2106 = vmax.f32 %v1644, 0.0
    %v2107 = vmax.f32 %v1646, 0.0
    %v2108 = vmax.f32 %v1649, 0.0
    %v2109 = vmax.f32 %v1651, 0.0
    %v2110 = vmax.f32 %v1654, 0.0
    %v2111 = vmax.f32 %v1656, 0.0
    %v2112 = vmax.f32 %v1659, 0.0
    %v2113 = vmax.f32 %v1661, 0.0
    %v2114 = vmax.f32 %v1664, 0.0
    %v2115 = vmax.f32 %v1666, 0.0
    %v2116 = vmax.f32 %v1669, 0.0
    %v2117 = vmax.f32 %v1671, 0.0
    %v2118 = vmax.f32 %v1674, 0.0
    %v2119 = vmax.f32 %v1676, 0.0
    %v2120 = vmax.f32 %v1679, 0.0
    %v2121 = vmax.f32 %v1681, 0.0
    %v2122 = vmax.f32 %v1684, 0.0
    %v2123 = vmax.f32 %v1686, 0.0
    %v2124 = vmax.f32 %v1689, 0.0
    %v2125 = vmax.f32 %v1691, 0.0
    %v2126 = vmax.f32 %v1694, 0.0
    %v2127 = vmax.f32 %v1696, 0.0
    %v2128 = vmax.f32 %v1699, 0.0
    %v2129 = vmax.f32 %v1701, 0.0
    %v2130 = vmax.f32 %v1704, 0.0
    %v2131 = vmax.f32 %v1706, 0.0
    %v2132 = vmax.f32 %v1709, 0.0
    %v2133 = vmax.f32 %v1711, 0.0
    %v2134 = vmax.f32 %v1714, 0.0
    %v2135 = vmax.f32 %v1716, 0.0
    %v2136 = vmax.f32 %v1719, 0.0
    %v2137 = vmax.f32 %v1721, 0.0
    %v2138 = vmax.f32 %v1724, 0.0
    %v2139 = vmax.f32 %v1726, 0.0
    %v2140 = vmax.f32 %v1729, 0.0
    %v2141 = vmax.f32 %v1731, 0.0
    %v2142 = vmax.f32 %v1734, 0.0
    %v2143 = vmax.f32 %v1736, 0.0
    %v2144 = vmax.f32 %v1739, 0.0
    %v2145 = vmax.f32 %v1741, 0.0
    %v2146 = vmax.f32 %v1744, 0.0
    %v2147 = vmax.f32 %v1746, 0.0
    %v2148 = vmax.f32 %v1749, 0.0
    %v2149 = vmax.f32 %v1751, 0.0
    %v2150 = vmax.f32 %v1754, 0.0
    %v2151 = vmax.f32 %v1756, 0.0
    %v2152 = vmax.f32 %v1759, 0.0
    %v2153 = vmax.f32 %v1761, 0.0
    %v2154 = vmax.f32 %v1764, 0.0
    %v2155 = vmax.f32 %v1766, 0.0
    %v2156 = vmax.f32 %v1769, 0.0
    %v2157 = vmax.f32 %v1771, 0.0
    %v2158 = vmax.f32 %v1774, 0.0
    %v2159 = vmax.f32 %v1776, 0.0
    %v2160 = vmax.f32 %v1779, 0.0
    %v2161 = vmax.f32 %v1781, 0.0
    %v2162 = vmax.f32 %v1784, 0.0
    %v2163 = vmax.f32 %v1786, 0.0
    %v2164 = vmax.f32 %v1789, 0.0
    %v2165 = vmax.f32 %v1791, 0.0
    %v2166 = vmax.f32 %v1794, 0.0
    %v2167 = vmax.f32 %v1796, 0.0
    %v2168 = vmax.f32 %v1799, 0.0
    %v2169 = vmax.f32 %v1801, 0.0
    %v2170 = vmax.f32 %v1804, 0.0
    %v2171 = vmax.f32 %v1806, 0.0
    %v2172 = vmax.f32 %v1809, 0.0
    %v2173 = vmax.f32 %v1811, 0.0
    %v2174 = vmax.f32 %v1814, 0.0
    %v2175 = vmax.f32 %v1816, 0.0
    %v2176 = vmax.f32 %v1819, 0.0
    %v2177 = vmax.f32 %v1821, 0.0
    %v2178 = vmax.f32 %v1824, 0.0
    %v2179 = vmax.f32 %v1826, 0.0
    %v2180 = vmax.f32 %v1829, 0.0
    %v2181 = vmax.f32 %v1831, 0.0
    %v2182 = vmax.f32 %v1834, 0.0
    %v2183 = vmax.f32 %v1836, 0.0
    %v2184 = vmax.f32 %v1839, 0.0
    %v2185 = vmax.f32 %v1841, 0.0
    %v2186 = vmax.f32 %v1844, 0.0
    %v2187 = vmax.f32 %v1846, 0.0
    %v2188 = vmax.f32 %v1849, 0.0
    %v2189 = vmax.f32 %v1851, 0.0
    %v2190 = vmax.f32 %v1854, 0.0
    %v2191 = vmax.f32 %v1856, 0.0
    %v2192 = vmax.f32 %v1859, 0.0
    %v2193 = vmax.f32 %v1861, 0.0
    %v2194 = vmax.f32 %v1864, 0.0
    %v2195 = vmax.f32 %v1866, 0.0
    %v2196 = vmax.f32 %v1869, 0.0
    %v2197 = vmax.f32 %v1871, 0.0
    %v2198 = vmax.f32 %v1874, 0.0
    %v2199 = vmax.f32 %v1876, 0.0
    %v2200 = vmax.f32 %v1879, 0.0
    %v2201 = vmax.f32 %v1881, 0.0
    %v2202 = vmax.f32 %v1884, 0.0
    %v2203 = vmax.f32 %v1886, 0.0
    %v2204 = vmax.f32 %v1889, 0.0
    %v2205 = vmax.f32 %v1891, 0.0
    %v2206 = vmax.f32 %v1894, 0.0
    %v2207 = vmax.f32 %v1896, 0.0
    %v2208 = vmax.f32 %v1899, 0.0
    %v2209 = vmax.f32 %v1901, 0.0
    %v2210 = vmax.f32 %v1904, 0.0
    %v2211 = vmax.f32 %v1906, 0.0
    %v2212 = vmax.f32 %v1909, 0.0
    %v2213 = vmax.f32 %v1911, 0.0
    %v2214 = vmax.f32 %v1914, 0.0
    %v2215 = vmax.f32 %v1916, 0.0
    %v2216 = vmax.f32 %v1919, 0.0
    %v2217 = vmax.f32 %v1921, 0.0
    %v2218 = vmax.f32 %v1924, 0.0
    %v2219 = vmax.f32 %v1926, 0.0
    %v2220 = vmax.f32 %v1929, 0.0
    %v2221 = vmax.f32 %v1931, 0.0
    %v2222 = vmax.f32 %v1934, 0.0
    %v2223 = vmax.f32 %v1936, 0.0
    %v2224 = vmax.f32 %v1939, 0.0
    %v2225 = vmax.f32 %v1941, 0.0
    %v2226 = vmax.f32 %v1944, 0.0
    %v2227 = vmax.f32 %v1946, 0.0
    %v2228 = vmax.f32 %v1949, 0.0
    %v2229 = vmax.f32 %v1951, 0.0
    %v2230 = vmax.f32 %v1954, 0.0
    %v2231 = vmax.f32 %v1956, 0.0
    %v2232 = vmax.f32 %v1959, 0.0
    %v2233 = vmax.f32 %v1961, 0.0
    %v2234 = vmax.f32 %v1964, 0.0
    %v2235 = vmax.f32 %v1966, 0.0
    %v2236 = vmax.f32 %v1969, 0.0
    %v2237 = vmax.f32 %v1971, 0.0
    %v2238 = vmax.f32 %v1974, 0.0
    %v2239 = vmax.f32 %v1976, 0.0
    %v2240 = vmax.f32 %v1979, 0.0
    %v2241 = vmax.f32 %v1981, 0.0
    %v2242 = vmax.f32 %v1984, 0.0
    %v2243 = vmax.f32 %v1986, 0.0
    %vm2244 = vcmask 261120
    %v2245 = vsel %vm2244, %v1988, -inf
    %v2246 = vsel %vm2244, %v1989, -inf
    %v2247 = vmax.f32 %v2245, %v2246
    %v2248 = vsel %vm2244, %v1990, -inf
    %v2249 = vsel %vm2244, %v1991, -inf
    %v2250 = vmax.f32 %v2248, %v2249
    %v2251 = vsel %vm2244, %v1992, -inf
    %v2252 = vsel %vm2244, %v1993, -inf
    %v2253 = vmax.f32 %v2251, %v2252
    %v2254 = vsel %vm2244, %v1994, -inf
    %v2255 = vsel %vm2244, %v1995, -inf
    %v2256 = vmax.f32 %v2254, %v2255
    %v2257 = vsel %vm2244, %v1996, -inf
    %v2258 = vsel %vm2244, %v1997, -inf
    %v2259 = vmax.f32 %v2257, %v2258
    %v2260 = vsel %vm2244, %v1998, -inf
    %v2261 = vsel %vm2244, %v1999, -inf
    %v2262 = vmax.f32 %v2260, %v2261
    %v2263 = vsel %vm2244, %v2000, -inf
    %v2264 = vsel %vm2244, %v2001, -inf
    %v2265 = vmax.f32 %v2263, %v2264
    %v2266 = vsel %vm2244, %v2002, -inf
    %v2267 = vsel %vm2244, %v2003, -inf
    %v2268 = vmax.f32 %v2266, %v2267
    %v2269 = vsel %vm2244, %v2004, -inf
    %v2270 = vsel %vm2244, %v2005, -inf
    %v2271 = vmax.f32 %v2269, %v2270
    %v2272 = vsel %vm2244, %v2006, -inf
    %v2273 = vsel %vm2244, %v2007, -inf
    %v2274 = vmax.f32 %v2272, %v2273
    %v2275 = vsel %vm2244, %v2008, -inf
    %v2276 = vsel %vm2244, %v2009, -inf
    %v2277 = vmax.f32 %v2275, %v2276
    %v2278 = vsel %vm2244, %v2010, -inf
    %v2279 = vsel %vm2244, %v2011, -inf
    %v2280 = vmax.f32 %v2278, %v2279
    %v2281 = vsel %vm2244, %v2012, -inf
    %v2282 = vsel %vm2244, %v2013, -inf
    %v2283 = vmax.f32 %v2281, %v2282
    %v2284 = vsel %vm2244, %v2014, -inf
    %v2285 = vsel %vm2244, %v2015, -inf
    %v2286 = vmax.f32 %v2284, %v2285
    %v2287 = vsel %vm2244, %v2016, -inf
    %v2288 = vsel %vm2244, %v2017, -inf
    %v2289 = vmax.f32 %v2287, %v2288
    %v2290 = vsel %vm2244, %v2018, -inf
    %v2291 = vsel %vm2244, %v2019, -inf
    %v2292 = vmax.f32 %v2290, %v2291
    %v2293 = vsel %vm2244, %v2020, -inf
    %v2294 = vsel %vm2244, %v2021, -inf
    %v2295 = vmax.f32 %v2293, %v2294
    %v2296 = vsel %vm2244, %v2022, -inf
    %v2297 = vsel %vm2244, %v2023, -inf
    %v2298 = vmax.f32 %v2296, %v2297
    %v2299 = vsel %vm2244, %v2024, -inf
    %v2300 = vsel %vm2244, %v2025, -inf
    %v2301 = vmax.f32 %v2299, %v2300
    %v2302 = vsel %vm2244, %v2026, -inf
    %v2303 = vsel %vm2244, %v2027, -inf
    %v2304 = vmax.f32 %v2302, %v2303
    %v2305 = vsel %vm2244, %v2028, -inf
    %v2306 = vsel %vm2244, %v2029, -inf
    %v2307 = vmax.f32 %v2305, %v2306
    %v2308 = vsel %vm2244, %v2030, -inf
    %v2309 = vsel %vm2244, %v2031, -inf
    %v2310 = vmax.f32 %v2308, %v2309
    %v2311 = vsel %vm2244, %v2032, -inf
    %v2312 = vsel %vm2244, %v2033, -inf
    %v2313 = vmax.f32 %v2311, %v2312
    %v2314 = vsel %vm2244, %v2034, -inf
    %v2315 = vsel %vm2244, %v2035, -inf
    %v2316 = vmax.f32 %v2314, %v2315
    %v2317 = vsel %vm2244, %v2036, -inf
    %v2318 = vsel %vm2244, %v2037, -inf
    %v2319 = vmax.f32 %v2317, %v2318
    %v2320 = vsel %vm2244, %v2038, -inf
    %v2321 = vsel %vm2244, %v2039, -inf
    %v2322 = vmax.f32 %v2320, %v2321
    %v2323 = vsel %vm2244, %v2040, -inf
    %v2324 = vsel %vm2244, %v2041, -inf
    %v2325 = vmax.f32 %v2323, %v2324
    %v2326 = vsel %vm2244, %v2042, -inf
    %v2327 = vsel %vm2244, %v2043, -inf
    %v2328 = vmax.f32 %v2326, %v2327
    %v2329 = vsel %vm2244, %v2044, -inf
    %v2330 = vsel %vm2244, %v2045, -inf
    %v2331 = vmax.f32 %v2329, %v2330
    %v2332 = vsel %vm2244, %v2046, -inf
    %v2333 = vsel %vm2244, %v2047, -inf
    %v2334 = vmax.f32 %v2332, %v2333
    %v2335 = vsel %vm2244, %v2048, -inf
    %v2336 = vsel %vm2244, %v2049, -inf
    %v2337 = vmax.f32 %v2335, %v2336
    %v2338 = vsel %vm2244, %v2050, -inf
    %v2339 = vsel %vm2244, %v2051, -inf
    %v2340 = vmax.f32 %v2338, %v2339
    %v2341 = vsel %vm2244, %v2052, -inf
    %v2342 = vsel %vm2244, %v2053, -inf
    %v2343 = vmax.f32 %v2341, %v2342
    %v2344 = vsel %vm2244, %v2054, -inf
    %v2345 = vsel %vm2244, %v2055, -inf
    %v2346 = vmax.f32 %v2344, %v2345
    %v2347 = vsel %vm2244, %v2056, -inf
    %v2348 = vsel %vm2244, %v2057, -inf
    %v2349 = vmax.f32 %v2347, %v2348
    %v2350 = vsel %vm2244, %v2058, -inf
    %v2351 = vsel %vm2244, %v2059, -inf
    %v2352 = vmax.f32 %v2350, %v2351
    %v2353 = vsel %vm2244, %v2060, -inf
    %v2354 = vsel %vm2244, %v2061, -inf
    %v2355 = vmax.f32 %v2353, %v2354
    %v2356 = vsel %vm2244, %v2062, -inf
    %v2357 = vsel %vm2244, %v2063, -inf
    %v2358 = vmax.f32 %v2356, %v2357
    %v2359 = vsel %vm2244, %v2064, -inf
    %v2360 = vsel %vm2244, %v2065, -inf
    %v2361 = vmax.f32 %v2359, %v2360
    %v2362 = vsel %vm2244, %v2066, -inf
    %v2363 = vsel %vm2244, %v2067, -inf
    %v2364 = vmax.f32 %v2362, %v2363
    %v2365 = vsel %vm2244, %v2068, -inf
    %v2366 = vsel %vm2244, %v2069, -inf
    %v2367 = vmax.f32 %v2365, %v2366
    %v2368 = vsel %vm2244, %v2070, -inf
    %v2369 = vsel %vm2244, %v2071, -inf
    %v2370 = vmax.f32 %v2368, %v2369
    %v2371 = vsel %vm2244, %v2072, -inf
    %v2372 = vsel %vm2244, %v2073, -inf
    %v2373 = vmax.f32 %v2371, %v2372
    %v2374 = vsel %vm2244, %v2074, -inf
    %v2375 = vsel %vm2244, %v2075, -inf
    %v2376 = vmax.f32 %v2374, %v2375
    %v2377 = vsel %vm2244, %v2076, -inf
    %v2378 = vsel %vm2244, %v2077, -inf
    %v2379 = vmax.f32 %v2377, %v2378
    %v2380 = vsel %vm2244, %v2078, -inf
    %v2381 = vsel %vm2244, %v2079, -inf
    %v2382 = vmax.f32 %v2380, %v2381
    %v2383 = vsel %vm2244, %v2080, -inf
    %v2384 = vsel %vm2244, %v2081, -inf
    %v2385 = vmax.f32 %v2383, %v2384
    %v2386 = vsel %vm2244, %v2082, -inf
    %v2387 = vsel %vm2244, %v2083, -inf
    %v2388 = vmax.f32 %v2386, %v2387
    %v2389 = vsel %vm2244, %v2084, -inf
    %v2390 = vsel %vm2244, %v2085, -inf
    %v2391 = vmax.f32 %v2389, %v2390
    %v2392 = vsel %vm2244, %v2086, -inf
    %v2393 = vsel %vm2244, %v2087, -inf
    %v2394 = vmax.f32 %v2392, %v2393
    %v2395 = vsel %vm2244, %v2088, -inf
    %v2396 = vsel %vm2244, %v2089, -inf
    %v2397 = vmax.f32 %v2395, %v2396
    %v2398 = vsel %vm2244, %v2090, -inf
    %v2399 = vsel %vm2244, %v2091, -inf
    %v2400 = vmax.f32 %v2398, %v2399
    %v2401 = vsel %vm2244, %v2092, -inf
    %v2402 = vsel %vm2244, %v2093, -inf
    %v2403 = vmax.f32 %v2401, %v2402
    %v2404 = vsel %vm2244, %v2094, -inf
    %v2405 = vsel %vm2244, %v2095, -inf
    %v2406 = vmax.f32 %v2404, %v2405
    %v2407 = vsel %vm2244, %v2096, -inf
    %v2408 = vsel %vm2244, %v2097, -inf
    %v2409 = vmax.f32 %v2407, %v2408
    %v2410 = vsel %vm2244, %v2098, -inf
    %v2411 = vsel %vm2244, %v2099, -inf
    %v2412 = vmax.f32 %v2410, %v2411
    %v2413 = vsel %vm2244, %v2100, -inf
    %v2414 = vsel %vm2244, %v2101, -inf
    %v2415 = vmax.f32 %v2413, %v2414
    %v2416 = vsel %vm2244, %v2102, -inf
    %v2417 = vsel %vm2244, %v2103, -inf
    %v2418 = vmax.f32 %v2416, %v2417
    %v2419 = vsel %vm2244, %v2104, -inf
    %v2420 = vsel %vm2244, %v2105, -inf
    %v2421 = vmax.f32 %v2419, %v2420
    %v2422 = vsel %vm2244, %v2106, -inf
    %v2423 = vsel %vm2244, %v2107, -inf
    %v2424 = vmax.f32 %v2422, %v2423
    %v2425 = vsel %vm2244, %v2108, -inf
    %v2426 = vsel %vm2244, %v2109, -inf
    %v2427 = vmax.f32 %v2425, %v2426
    %v2428 = vsel %vm2244, %v2110, -inf
    %v2429 = vsel %vm2244, %v2111, -inf
    %v2430 = vmax.f32 %v2428, %v2429
    %v2431 = vsel %vm2244, %v2112, -inf
    %v2432 = vsel %vm2244, %v2113, -inf
    %v2433 = vmax.f32 %v2431, %v2432
    %v2434 = vsel %vm2244, %v2114, -inf
    %v2435 = vsel %vm2244, %v2115, -inf
    %v2436 = vmax.f32 %v2434, %v2435
    %v2437 = vsel %vm2244, %v2116, -inf
    %v2438 = vsel %vm2244, %v2117, -inf
    %v2439 = vmax.f32 %v2437, %v2438
    %v2440 = vsel %vm2244, %v2118, -inf
    %v2441 = vsel %vm2244, %v2119, -inf
    %v2442 = vmax.f32 %v2440, %v2441
    %v2443 = vsel %vm2244, %v2120, -inf
    %v2444 = vsel %vm2244, %v2121, -inf
    %v2445 = vmax.f32 %v2443, %v2444
    %v2446 = vsel %vm2244, %v2122, -inf
    %v2447 = vsel %vm2244, %v2123, -inf
    %v2448 = vmax.f32 %v2446, %v2447
    %v2449 = vsel %vm2244, %v2124, -inf
    %v2450 = vsel %vm2244, %v2125, -inf
    %v2451 = vmax.f32 %v2449, %v2450
    %v2452 = vsel %vm2244, %v2126, -inf
    %v2453 = vsel %vm2244, %v2127, -inf
    %v2454 = vmax.f32 %v2452, %v2453
    %v2455 = vsel %vm2244, %v2128, -inf
    %v2456 = vsel %vm2244, %v2129, -inf
    %v2457 = vmax.f32 %v2455, %v2456
    %v2458 = vsel %vm2244, %v2130, -inf
    %v2459 = vsel %vm2244, %v2131, -inf
    %v2460 = vmax.f32 %v2458, %v2459
    %v2461 = vsel %vm2244, %v2132, -inf
    %v2462 = vsel %vm2244, %v2133, -inf
    %v2463 = vmax.f32 %v2461, %v2462
    %v2464 = vsel %vm2244, %v2134, -inf
    %v2465 = vsel %vm2244, %v2135, -inf
    %v2466 = vmax.f32 %v2464, %v2465
    %v2467 = vsel %vm2244, %v2136, -inf
    %v2468 = vsel %vm2244, %v2137, -inf
    %v2469 = vmax.f32 %v2467, %v2468
    %v2470 = vsel %vm2244, %v2138, -inf
    %v2471 = vsel %vm2244, %v2139, -inf
    %v2472 = vmax.f32 %v2470, %v2471
    %v2473 = vsel %vm2244, %v2140, -inf
    %v2474 = vsel %vm2244, %v2141, -inf
    %v2475 = vmax.f32 %v2473, %v2474
    %v2476 = vsel %vm2244, %v2142, -inf
    %v2477 = vsel %vm2244, %v2143, -inf
    %v2478 = vmax.f32 %v2476, %v2477
    %v2479 = vsel %vm2244, %v2144, -inf
    %v2480 = vsel %vm2244, %v2145, -inf
    %v2481 = vmax.f32 %v2479, %v2480
    %v2482 = vsel %vm2244, %v2146, -inf
    %v2483 = vsel %vm2244, %v2147, -inf
    %v2484 = vmax.f32 %v2482, %v2483
    %v2485 = vsel %vm2244, %v2148, -inf
    %v2486 = vsel %vm2244, %v2149, -inf
    %v2487 = vmax.f32 %v2485, %v2486
    %v2488 = vsel %vm2244, %v2150, -inf
    %v2489 = vsel %vm2244, %v2151, -inf
    %v2490 = vmax.f32 %v2488, %v2489
    %v2491 = vsel %vm2244, %v2152, -inf
    %v2492 = vsel %vm2244, %v2153, -inf
    %v2493 = vmax.f32 %v2491, %v2492
    %v2494 = vsel %vm2244, %v2154, -inf
    %v2495 = vsel %vm2244, %v2155, -inf
    %v2496 = vmax.f32 %v2494, %v2495
    %v2497 = vsel %vm2244, %v2156, -inf
    %v2498 = vsel %vm2244, %v2157, -inf
    %v2499 = vmax.f32 %v2497, %v2498
    %v2500 = vsel %vm2244, %v2158, -inf
    %v2501 = vsel %vm2244, %v2159, -inf
    %v2502 = vmax.f32 %v2500, %v2501
    %v2503 = vsel %vm2244, %v2160, -inf
    %v2504 = vsel %vm2244, %v2161, -inf
    %v2505 = vmax.f32 %v2503, %v2504
    %v2506 = vsel %vm2244, %v2162, -inf
    %v2507 = vsel %vm2244, %v2163, -inf
    %v2508 = vmax.f32 %v2506, %v2507
    %v2509 = vsel %vm2244, %v2164, -inf
    %v2510 = vsel %vm2244, %v2165, -inf
    %v2511 = vmax.f32 %v2509, %v2510
    %v2512 = vsel %vm2244, %v2166, -inf
    %v2513 = vsel %vm2244, %v2167, -inf
    %v2514 = vmax.f32 %v2512, %v2513
    %v2515 = vsel %vm2244, %v2168, -inf
    %v2516 = vsel %vm2244, %v2169, -inf
    %v2517 = vmax.f32 %v2515, %v2516
    %v2518 = vsel %vm2244, %v2170, -inf
    %v2519 = vsel %vm2244, %v2171, -inf
    %v2520 = vmax.f32 %v2518, %v2519
    %v2521 = vsel %vm2244, %v2172, -inf
    %v2522 = vsel %vm2244, %v2173, -inf
    %v2523 = vmax.f32 %v2521, %v2522
    %v2524 = vsel %vm2244, %v2174, -inf
    %v2525 = vsel %vm2244, %v2175, -inf
    %v2526 = vmax.f32 %v2524, %v2525
    %v2527 = vsel %vm2244, %v2176, -inf
    %v2528 = vsel %vm2244, %v2177, -inf
    %v2529 = vmax.f32 %v2527, %v2528
    %v2530 = vsel %vm2244, %v2178, -inf
    %v2531 = vsel %vm2244, %v2179, -inf
    %v2532 = vmax.f32 %v2530, %v2531
    %v2533 = vsel %vm2244, %v2180, -inf
    %v2534 = vsel %vm2244, %v2181, -inf
    %v2535 = vmax.f32 %v2533, %v2534
    %v2536 = vsel %vm2244, %v2182, -inf
    %v2537 = vsel %vm2244, %v2183, -inf
    %v2538 = vmax.f32 %v2536, %v2537
    %v2539 = vsel %vm2244, %v2184, -inf
    %v2540 = vsel %vm2244, %v2185, -inf
    %v2541 = vmax.f32 %v2539, %v2540
    %v2542 = vsel %vm2244, %v2186, -inf
    %v2543 = vsel %vm2244, %v2187, -inf
    %v2544 = vmax.f32 %v2542, %v2543
    %v2545 = vsel %vm2244, %v2188, -inf
    %v2546 = vsel %vm2244, %v2189, -inf
    %v2547 = vmax.f32 %v2545, %v2546
    %v2548 = vsel %vm2244, %v2190, -inf
    %v2549 = vsel %vm2244, %v2191, -inf
    %v2550 = vmax.f32 %v2548, %v2549
    %v2551 = vsel %vm2244, %v2192, -inf
    %v2552 = vsel %vm2244, %v2193, -inf
    %v2553 = vmax.f32 %v2551, %v2552
    %v2554 = vsel %vm2244, %v2194, -inf
    %v2555 = vsel %vm2244, %v2195, -inf
    %v2556 = vmax.f32 %v2554, %v2555
    %v2557 = vsel %vm2244, %v2196, -inf
    %v2558 = vsel %vm2244, %v2197, -inf
    %v2559 = vmax.f32 %v2557, %v2558
    %v2560 = vsel %vm2244, %v2198, -inf
    %v2561 = vsel %vm2244, %v2199, -inf
    %v2562 = vmax.f32 %v2560, %v2561
    %v2563 = vsel %vm2244, %v2200, -inf
    %v2564 = vsel %vm2244, %v2201, -inf
    %v2565 = vmax.f32 %v2563, %v2564
    %v2566 = vsel %vm2244, %v2202, -inf
    %v2567 = vsel %vm2244, %v2203, -inf
    %v2568 = vmax.f32 %v2566, %v2567
    %v2569 = vsel %vm2244, %v2204, -inf
    %v2570 = vsel %vm2244, %v2205, -inf
    %v2571 = vmax.f32 %v2569, %v2570
    %v2572 = vsel %vm2244, %v2206, -inf
    %v2573 = vsel %vm2244, %v2207, -inf
    %v2574 = vmax.f32 %v2572, %v2573
    %v2575 = vsel %vm2244, %v2208, -inf
    %v2576 = vsel %vm2244, %v2209, -inf
    %v2577 = vmax.f32 %v2575, %v2576
    %v2578 = vsel %vm2244, %v2210, -inf
    %v2579 = vsel %vm2244, %v2211, -inf
    %v2580 = vmax.f32 %v2578, %v2579
    %v2581 = vsel %vm2244, %v2212, -inf
    %v2582 = vsel %vm2244, %v2213, -inf
    %v2583 = vmax.f32 %v2581, %v2582
    %v2584 = vsel %vm2244, %v2214, -inf
    %v2585 = vsel %vm2244, %v2215, -inf
    %v2586 = vmax.f32 %v2584, %v2585
    %v2587 = vsel %vm2244, %v2216, -inf
    %v2588 = vsel %vm2244, %v2217, -inf
    %v2589 = vmax.f32 %v2587, %v2588
    %v2590 = vsel %vm2244, %v2218, -inf
    %v2591 = vsel %vm2244, %v2219, -inf
    %v2592 = vmax.f32 %v2590, %v2591
    %v2593 = vsel %vm2244, %v2220, -inf
    %v2594 = vsel %vm2244, %v2221, -inf
    %v2595 = vmax.f32 %v2593, %v2594
    %v2596 = vsel %vm2244, %v2222, -inf
    %v2597 = vsel %vm2244, %v2223, -inf
    %v2598 = vmax.f32 %v2596, %v2597
    %v2599 = vsel %vm2244, %v2224, -inf
    %v2600 = vsel %vm2244, %v2225, -inf
    %v2601 = vmax.f32 %v2599, %v2600
    %v2602 = vsel %vm2244, %v2226, -inf
    %v2603 = vsel %vm2244, %v2227, -inf
    %v2604 = vmax.f32 %v2602, %v2603
    %v2605 = vsel %vm2244, %v2228, -inf
    %v2606 = vsel %vm2244, %v2229, -inf
    %v2607 = vmax.f32 %v2605, %v2606
    %v2608 = vsel %vm2244, %v2230, -inf
    %v2609 = vsel %vm2244, %v2231, -inf
    %v2610 = vmax.f32 %v2608, %v2609
    %v2611 = vsel %vm2244, %v2232, -inf
    %v2612 = vsel %vm2244, %v2233, -inf
    %v2613 = vmax.f32 %v2611, %v2612
    %v2614 = vsel %vm2244, %v2234, -inf
    %v2615 = vsel %vm2244, %v2235, -inf
    %v2616 = vmax.f32 %v2614, %v2615
    %v2617 = vsel %vm2244, %v2236, -inf
    %v2618 = vsel %vm2244, %v2237, -inf
    %v2619 = vmax.f32 %v2617, %v2618
    %v2620 = vsel %vm2244, %v2238, -inf
    %v2621 = vsel %vm2244, %v2239, -inf
    %v2622 = vmax.f32 %v2620, %v2621
    %v2623 = vsel %vm2244, %v2240, -inf
    %v2624 = vsel %vm2244, %v2241, -inf
    %v2625 = vmax.f32 %v2623, %v2624
    %v2626 = vsel %vm2244, %v2242, -inf
    %v2627 = vsel %vm2244, %v2243, -inf
    %v2628 = vmax.f32 %v2626, %v2627
    %v2629 = vsel %vm2244, %v2247, -inf
    %v2630 = vsel %vm2244, %v2271, -inf
    %v2631 = vmax.f32 %v2629, %v2630
    %v2632 = vsel %vm2244, %v2250, -inf
    %v2633 = vsel %vm2244, %v2274, -inf
    %v2634 = vmax.f32 %v2632, %v2633
    %v2635 = vsel %vm2244, %v2253, -inf
    %v2636 = vsel %vm2244, %v2277, -inf
    %v2637 = vmax.f32 %v2635, %v2636
    %v2638 = vsel %vm2244, %v2256, -inf
    %v2639 = vsel %vm2244, %v2280, -inf
    %v2640 = vmax.f32 %v2638, %v2639
    %v2641 = vsel %vm2244, %v2259, -inf
    %v2642 = vsel %vm2244, %v2283, -inf
    %v2643 = vmax.f32 %v2641, %v2642
    %v2644 = vsel %vm2244, %v2262, -inf
    %v2645 = vsel %vm2244, %v2286, -inf
    %v2646 = vmax.f32 %v2644, %v2645
    %v2647 = vsel %vm2244, %v2265, -inf
    %v2648 = vsel %vm2244, %v2289, -inf
    %v2649 = vmax.f32 %v2647, %v2648
    %v2650 = vsel %vm2244, %v2268, -inf
    %v2651 = vsel %vm2244, %v2292, -inf
    %v2652 = vmax.f32 %v2650, %v2651
    %v2653 = vsel %vm2244, %v2295, -inf
    %v2654 = vsel %vm2244, %v2319, -inf
    %v2655 = vmax.f32 %v2653, %v2654
    %v2656 = vsel %vm2244, %v2298, -inf
    %v2657 = vsel %vm2244, %v2322, -inf
    %v2658 = vmax.f32 %v2656, %v2657
    %v2659 = vsel %vm2244, %v2301, -inf
    %v2660 = vsel %vm2244, %v2325, -inf
    %v2661 = vmax.f32 %v2659, %v2660
    %v2662 = vsel %vm2244, %v2304, -inf
    %v2663 = vsel %vm2244, %v2328, -inf
    %v2664 = vmax.f32 %v2662, %v2663
    %v2665 = vsel %vm2244, %v2307, -inf
    %v2666 = vsel %vm2244, %v2331, -inf
    %v2667 = vmax.f32 %v2665, %v2666
    %v2668 = vsel %vm2244, %v2310, -inf
    %v2669 = vsel %vm2244, %v2334, -inf
    %v2670 = vmax.f32 %v2668, %v2669
    %v2671 = vsel %vm2244, %v2313, -inf
    %v2672 = vsel %vm2244, %v2337, -inf
    %v2673 = vmax.f32 %v2671, %v2672
    %v2674 = vsel %vm2244, %v2316, -inf
    %v2675 = vsel %vm2244, %v2340, -inf
    %v2676 = vmax.f32 %v2674, %v2675
    %v2677 = vsel %vm2244, %v2343, -inf
    %v2678 = vsel %vm2244, %v2367, -inf
    %v2679 = vmax.f32 %v2677, %v2678
    %v2680 = vsel %vm2244, %v2346, -inf
    %v2681 = vsel %vm2244, %v2370, -inf
    %v2682 = vmax.f32 %v2680, %v2681
    %v2683 = vsel %vm2244, %v2349, -inf
    %v2684 = vsel %vm2244, %v2373, -inf
    %v2685 = vmax.f32 %v2683, %v2684
    %v2686 = vsel %vm2244, %v2352, -inf
    %v2687 = vsel %vm2244, %v2376, -inf
    %v2688 = vmax.f32 %v2686, %v2687
    %v2689 = vsel %vm2244, %v2355, -inf
    %v2690 = vsel %vm2244, %v2379, -inf
    %v2691 = vmax.f32 %v2689, %v2690
    %v2692 = vsel %vm2244, %v2358, -inf
    %v2693 = vsel %vm2244, %v2382, -inf
    %v2694 = vmax.f32 %v2692, %v2693
    %v2695 = vsel %vm2244, %v2361, -inf
    %v2696 = vsel %vm2244, %v2385, -inf
    %v2697 = vmax.f32 %v2695, %v2696
    %v2698 = vsel %vm2244, %v2364, -inf
    %v2699 = vsel %vm2244, %v2388, -inf
    %v2700 = vmax.f32 %v2698, %v2699
    %v2701 = vsel %vm2244, %v2391, -inf
    %v2702 = vsel %vm2244, %v2415, -inf
    %v2703 = vmax.f32 %v2701, %v2702
    %v2704 = vsel %vm2244, %v2394, -inf
    %v2705 = vsel %vm2244, %v2418, -inf
    %v2706 = vmax.f32 %v2704, %v2705
    %v2707 = vsel %vm2244, %v2397, -inf
    %v2708 = vsel %vm2244, %v2421, -inf
    %v2709 = vmax.f32 %v2707, %v2708
    %v2710 = vsel %vm2244, %v2400, -inf
    %v2711 = vsel %vm2244, %v2424, -inf
    %v2712 = vmax.f32 %v2710, %v2711
    %v2713 = vsel %vm2244, %v2403, -inf
    %v2714 = vsel %vm2244, %v2427, -inf
    %v2715 = vmax.f32 %v2713, %v2714
    %v2716 = vsel %vm2244, %v2406, -inf
    %v2717 = vsel %vm2244, %v2430, -inf
    %v2718 = vmax.f32 %v2716, %v2717
    %v2719 = vsel %vm2244, %v2409, -inf
    %v2720 = vsel %vm2244, %v2433, -inf
    %v2721 = vmax.f32 %v2719, %v2720
    %v2722 = vsel %vm2244, %v2412, -inf
    %v2723 = vsel %vm2244, %v2436, -inf
    %v2724 = vmax.f32 %v2722, %v2723
    %v2725 = vsel %vm2244, %v2439, -inf
    %v2726 = vsel %vm2244, %v2463, -inf
    %v2727 = vmax.f32 %v2725, %v2726
    %v2728 = vsel %vm2244, %v2442, -inf
    %v2729 = vsel %vm2244, %v2466, -inf
    %v2730 = vmax.f32 %v2728, %v2729
    %v2731 = vsel %vm2244, %v2445, -inf
    %v2732 = vsel %vm2244, %v2469, -inf
    %v2733 = vmax.f32 %v2731, %v2732
    %v2734 = vsel %vm2244, %v2448, -inf
    %v2735 = vsel %vm2244, %v2472, -inf
    %v2736 = vmax.f32 %v2734, %v2735
    %v2737 = vsel %vm2244, %v2451, -inf
    %v2738 = vsel %vm2244, %v2475, -inf
    %v2739 = vmax.f32 %v2737, %v2738
    %v2740 = vsel %vm2244, %v2454, -inf
    %v2741 = vsel %vm2244, %v2478, -inf
    %v2742 = vmax.f32 %v2740, %v2741
    %v2743 = vsel %vm2244, %v2457, -inf
    %v2744 = vsel %vm2244, %v2481, -inf
    %v2745 = vmax.f32 %v2743, %v2744
    %v2746 = vsel %vm2244, %v2460, -inf
    %v2747 = vsel %vm2244, %v2484, -inf
    %v2748 = vmax.f32 %v2746, %v2747
    %v2749 = vsel %vm2244, %v2487, -inf
    %v2750 = vsel %vm2244, %v2511, -inf
    %v2751 = vmax.f32 %v2749, %v2750
    %v2752 = vsel %vm2244, %v2490, -inf
    %v2753 = vsel %vm2244, %v2514, -inf
    %v2754 = vmax.f32 %v2752, %v2753
    %v2755 = vsel %vm2244, %v2493, -inf
    %v2756 = vsel %vm2244, %v2517, -inf
    %v2757 = vmax.f32 %v2755, %v2756
    %v2758 = vsel %vm2244, %v2496, -inf
    %v2759 = vsel %vm2244, %v2520, -inf
    %v2760 = vmax.f32 %v2758, %v2759
    %v2761 = vsel %vm2244, %v2499, -inf
    %v2762 = vsel %vm2244, %v2523, -inf
    %v2763 = vmax.f32 %v2761, %v2762
    %v2764 = vsel %vm2244, %v2502, -inf
    %v2765 = vsel %vm2244, %v2526, -inf
    %v2766 = vmax.f32 %v2764, %v2765
    %v2767 = vsel %vm2244, %v2505, -inf
    %v2768 = vsel %vm2244, %v2529, -inf
    %v2769 = vmax.f32 %v2767, %v2768
    %v2770 = vsel %vm2244, %v2508, -inf
    %v2771 = vsel %vm2244, %v2532, -inf
    %v2772 = vmax.f32 %v2770, %v2771
    %v2773 = vsel %vm2244, %v2535, -inf
    %v2774 = vsel %vm2244, %v2559, -inf
    %v2775 = vmax.f32 %v2773, %v2774
    %v2776 = vsel %vm2244, %v2538, -inf
    %v2777 = vsel %vm2244, %v2562, -inf
    %v2778 = vmax.f32 %v2776, %v2777
    %v2779 = vsel %vm2244, %v2541, -inf
    %v2780 = vsel %vm2244, %v2565, -inf
    %v2781 = vmax.f32 %v2779, %v2780
    %v2782 = vsel %vm2244, %v2544, -inf
    %v2783 = vsel %vm2244, %v2568, -inf
    %v2784 = vmax.f32 %v2782, %v2783
    %v2785 = vsel %vm2244, %v2547, -inf
    %v2786 = vsel %vm2244, %v2571, -inf
    %v2787 = vmax.f32 %v2785, %v2786
    %v2788 = vsel %vm2244, %v2550, -inf
    %v2789 = vsel %vm2244, %v2574, -inf
    %v2790 = vmax.f32 %v2788, %v2789
    %v2791 = vsel %vm2244, %v2553, -inf
    %v2792 = vsel %vm2244, %v2577, -inf
    %v2793 = vmax.f32 %v2791, %v2792
    %v2794 = vsel %vm2244, %v2556, -inf
    %v2795 = vsel %vm2244, %v2580, -inf
    %v2796 = vmax.f32 %v2794, %v2795
    %v2797 = vsel %vm2244, %v2583, -inf
    %v2798 = vsel %vm2244, %v2607, -inf
    %v2799 = vmax.f32 %v2797, %v2798
    %v2800 = vsel %vm2244, %v2586, -inf
    %v2801 = vsel %vm2244, %v2610, -inf
    %v2802 = vmax.f32 %v2800, %v2801
    %v2803 = vsel %vm2244, %v2589, -inf
    %v2804 = vsel %vm2244, %v2613, -inf
    %v2805 = vmax.f32 %v2803, %v2804
    %v2806 = vsel %vm2244, %v2592, -inf
    %v2807 = vsel %vm2244, %v2616, -inf
    %v2808 = vmax.f32 %v2806, %v2807
    %v2809 = vsel %vm2244, %v2595, -inf
    %v2810 = vsel %vm2244, %v2619, -inf
    %v2811 = vmax.f32 %v2809, %v2810
    %v2812 = vsel %vm2244, %v2598, -inf
    %v2813 = vsel %vm2244, %v2622, -inf
    %v2814 = vmax.f32 %v2812, %v2813
    %v2815 = vsel %vm2244, %v2601, -inf
    %v2816 = vsel %vm2244, %v2625, -inf
    %v2817 = vmax.f32 %v2815, %v2816
    %v2818 = vsel %vm2244, %v2604, -inf
    %v2819 = vsel %vm2244, %v2628, -inf
    %v2820 = vmax.f32 %v2818, %v2819
    %vm2821 = vcmask 257024
    %2822 = vst.msk [vmem:[#allocation2] sm:$0xf] %vm2821, 0
    %2823 = vst.msk [vmem:[#allocation2 + $0x4] sm:$0xf] %vm2821, 0
    %2824 = vst.msk [vmem:[#allocation2 + $0x8] sm:$0xf] %vm2821, 0
    %2825 = vst.msk [vmem:[#allocation2 + $0xc] sm:$0xf] %vm2821, 0
    %2826 = vst.msk [vmem:[#allocation2 + $0x10] sm:$0xf] %vm2821, 0
    %2827 = vst.msk [vmem:[#allocation2 + $0x14] sm:$0xf] %vm2821, 0
    %2828 = vst.msk [vmem:[#allocation2 + $0x18] sm:$0xf] %vm2821, 0
    %2829 = vst.msk [vmem:[#allocation2 + $0x1c] sm:$0xf] %vm2821, 0
    %2830 = vst.msk [vmem:[#allocation2 + $0x20] sm:$0xf] %vm2821, 0
    %2831 = vst.msk [vmem:[#allocation2 + $0x24] sm:$0xf] %vm2821, 0
    %s2832 = scalar_lea.vmem [#allocation2], 360
    %2833 = vst.msk [vmem:[%s2832] sm:$0xf] %vm2821, 0
    %2834 = vst.msk [vmem:[%s2832 + $0x4] sm:$0xf] %vm2821, 0
    %2835 = vst.msk [vmem:[%s2832 + $0x8] sm:$0xf] %vm2821, 0
    %2836 = vst.msk [vmem:[%s2832 + $0xc] sm:$0xf] %vm2821, 0
    %2837 = vst.msk [vmem:[%s2832 + $0x10] sm:$0xf] %vm2821, 0
    %2838 = vst.msk [vmem:[%s2832 + $0x14] sm:$0xf] %vm2821, 0
    %2839 = vst.msk [vmem:[%s2832 + $0x18] sm:$0xf] %vm2821, 0
    %2840 = vst.msk [vmem:[%s2832 + $0x1c] sm:$0xf] %vm2821, 0
    %2841 = vst.msk [vmem:[%s2832 + $0x20] sm:$0xf] %vm2821, 0
    %2842 = vst.msk [vmem:[%s2832 + $0x24] sm:$0xf] %vm2821, 0
    %s2843 = scalar_lea.vmem [#allocation2], 40
    %2844 = vst.msk [vmem:[%s2843] sm:$0xf] %vm2821, 0
    %2845 = vst.msk [vmem:[%s2843 + $0x28] sm:$0xf] %vm2821, 0
    %2846 = vst.msk [vmem:[%s2843 + $0x50] sm:$0xf] %vm2821, 0
    %2847 = vst.msk [vmem:[%s2843 + $0x78] sm:$0xf] %vm2821, 0
    %2848 = vst.msk [vmem:[%s2843 + $0xa0] sm:$0xf] %vm2821, 0
    %2849 = vst.msk [vmem:[%s2843 + $0xc8] sm:$0xf] %vm2821, 0
    %2850 = vst.msk [vmem:[%s2843 + $0xf0] sm:$0xf] %vm2821, 0
    %2851 = vst.msk [vmem:[%s2843 + $0x118] sm:$0xf] %vm2821, 0
    %s2852 = scalar_lea.vmem [#allocation2], 76
    %2853 = vst.msk [vmem:[%s2852] sm:$0xf] %vm2821, 0
    %2854 = vst.msk [vmem:[%s2852 + $0x28] sm:$0xf] %vm2821, 0
    %2855 = vst.msk [vmem:[%s2852 + $0x50] sm:$0xf] %vm2821, 0
    %2856 = vst.msk [vmem:[%s2852 + $0x78] sm:$0xf] %vm2821, 0
    %2857 = vst.msk [vmem:[%s2852 + $0xa0] sm:$0xf] %vm2821, 0
    %2858 = vst.msk [vmem:[%s2852 + $0xc8] sm:$0xf] %vm2821, 0
    %2859 = vst.msk [vmem:[%s2852 + $0xf0] sm:$0xf] %vm2821, 0
    %2860 = vst.msk [vmem:[%s2852 + $0x118] sm:$0xf] %vm2821, 0
    %v2861 = vpack.c.bf16 %v2631, %v2631
    %v2862 = vpack.c.bf16 %v2634, %v2634
    %v2863 = vpack.c.bf16 %v2637, %v2637
    %v2864 = vpack.c.bf16 %v2640, %v2640
    %v2865 = vpack.c.bf16 %v2643, %v2643
    %v2866 = vpack.c.bf16 %v2646, %v2646
    %v2867 = vpack.c.bf16 %v2649, %v2649
    %v2868 = vpack.c.bf16 %v2652, %v2652
    %v2869 = vpack.c.bf16 %v2655, %v2655
    %v2870 = vpack.c.bf16 %v2658, %v2658
    %v2871 = vpack.c.bf16 %v2661, %v2661
    %v2872 = vpack.c.bf16 %v2664, %v2664
    %v2873 = vpack.c.bf16 %v2667, %v2667
    %v2874 = vpack.c.bf16 %v2670, %v2670
    %v2875 = vpack.c.bf16 %v2673, %v2673
    %v2876 = vpack.c.bf16 %v2676, %v2676
    %v2877 = vpack.c.bf16 %v2679, %v2679
    %v2878 = vpack.c.bf16 %v2682, %v2682
    %v2879 = vpack.c.bf16 %v2685, %v2685
    %v2880 = vpack.c.bf16 %v2688, %v2688
    %v2881 = vpack.c.bf16 %v2691, %v2691
    %v2882 = vpack.c.bf16 %v2694, %v2694
    %v2883 = vpack.c.bf16 %v2697, %v2697
    %v2884 = vpack.c.bf16 %v2700, %v2700
    %v2885 = vpack.c.bf16 %v2703, %v2703
    %v2886 = vpack.c.bf16 %v2706, %v2706
    %v2887 = vpack.c.bf16 %v2709, %v2709
    %v2888 = vpack.c.bf16 %v2712, %v2712
    %v2889 = vpack.c.bf16 %v2715, %v2715
    %v2890 = vpack.c.bf16 %v2718, %v2718
    %v2891 = vpack.c.bf16 %v2721, %v2721
    %v2892 = vpack.c.bf16 %v2724, %v2724
    %v2893 = vpack.c.bf16 %v2727, %v2727
    %v2894 = vpack.c.bf16 %v2730, %v2730
    %v2895 = vpack.c.bf16 %v2733, %v2733
    %v2896 = vpack.c.bf16 %v2736, %v2736
    %v2897 = vpack.c.bf16 %v2739, %v2739
    %v2898 = vpack.c.bf16 %v2742, %v2742
    %v2899 = vpack.c.bf16 %v2745, %v2745
    %v2900 = vpack.c.bf16 %v2748, %v2748
    %v2901 = vpack.c.bf16 %v2751, %v2751
    %v2902 = vpack.c.bf16 %v2754, %v2754
    %v2903 = vpack.c.bf16 %v2757, %v2757
    %v2904 = vpack.c.bf16 %v2760, %v2760
    %v2905 = vpack.c.bf16 %v2763, %v2763
    %v2906 = vpack.c.bf16 %v2766, %v2766
    %v2907 = vpack.c.bf16 %v2769, %v2769
    %v2908 = vpack.c.bf16 %v2772, %v2772
    %v2909 = vpack.c.bf16 %v2775, %v2775
    %v2910 = vpack.c.bf16 %v2778, %v2778
    %v2911 = vpack.c.bf16 %v2781, %v2781
    %v2912 = vpack.c.bf16 %v2784, %v2784
    %v2913 = vpack.c.bf16 %v2787, %v2787
    %v2914 = vpack.c.bf16 %v2790, %v2790
    %v2915 = vpack.c.bf16 %v2793, %v2793
    %v2916 = vpack.c.bf16 %v2796, %v2796
    %v2917 = vpack.c.bf16 %v2799, %v2799
    %v2918 = vpack.c.bf16 %v2802, %v2802
    %v2919 = vpack.c.bf16 %v2805, %v2805
    %v2920 = vpack.c.bf16 %v2808, %v2808
    %v2921 = vpack.c.bf16 %v2811, %v2811
    %v2922 = vpack.c.bf16 %v2814, %v2814
    %v2923 = vpack.c.bf16 %v2817, %v2817
    %v2924 = vpack.c.bf16 %v2820, %v2820
    %s2925 = scalar_lea.vmem [#allocation2], 44
    %2926 = vst.msk [vmem:[%s2925] sm:$0xf] %vm2821, %v2861
    %2927 = vst.msk [vmem:[%s2925 + $0x4] sm:$0xf] %vm2821, %v2862
    %2928 = vst.msk [vmem:[%s2925 + $0x8] sm:$0xf] %vm2821, %v2863
    %2929 = vst.msk [vmem:[%s2925 + $0xc] sm:$0xf] %vm2821, %v2864
    %2930 = vst.msk [vmem:[%s2925 + $0x10] sm:$0xf] %vm2821, %v2865
    %2931 = vst.msk [vmem:[%s2925 + $0x14] sm:$0xf] %vm2821, %v2866
    %2932 = vst.msk [vmem:[%s2925 + $0x18] sm:$0xf] %vm2821, %v2867
    %2933 = vst.msk [vmem:[%s2925 + $0x1c] sm:$0xf] %vm2821, %v2868
    %2934 = vst.msk [vmem:[%s2925 + $0x28] sm:$0xf] %vm2821, %v2869
    %2935 = vst.msk [vmem:[%s2925 + $0x2c] sm:$0xf] %vm2821, %v2870
    %2936 = vst.msk [vmem:[%s2925 + $0x30] sm:$0xf] %vm2821, %v2871
    %2937 = vst.msk [vmem:[%s2925 + $0x34] sm:$0xf] %vm2821, %v2872
    %2938 = vst.msk [vmem:[%s2925 + $0x38] sm:$0xf] %vm2821, %v2873
    %2939 = vst.msk [vmem:[%s2925 + $0x3c] sm:$0xf] %vm2821, %v2874
    %2940 = vst.msk [vmem:[%s2925 + $0x40] sm:$0xf] %vm2821, %v2875
    %2941 = vst.msk [vmem:[%s2925 + $0x44] sm:$0xf] %vm2821, %v2876
    %2942 = vst.msk [vmem:[%s2925 + $0x50] sm:$0xf] %vm2821, %v2877
    %2943 = vst.msk [vmem:[%s2925 + $0x54] sm:$0xf] %vm2821, %v2878
    %2944 = vst.msk [vmem:[%s2925 + $0x58] sm:$0xf] %vm2821, %v2879
    %2945 = vst.msk [vmem:[%s2925 + $0x5c] sm:$0xf] %vm2821, %v2880
    %2946 = vst.msk [vmem:[%s2925 + $0x60] sm:$0xf] %vm2821, %v2881
    %2947 = vst.msk [vmem:[%s2925 + $0x64] sm:$0xf] %vm2821, %v2882
    %2948 = vst.msk [vmem:[%s2925 + $0x68] sm:$0xf] %vm2821, %v2883
    %2949 = vst.msk [vmem:[%s2925 + $0x6c] sm:$0xf] %vm2821, %v2884
    %2950 = vst.msk [vmem:[%s2925 + $0x78] sm:$0xf] %vm2821, %v2885
    %2951 = vst.msk [vmem:[%s2925 + $0x7c] sm:$0xf] %vm2821, %v2886
    %2952 = vst.msk [vmem:[%s2925 + $0x80] sm:$0xf] %vm2821, %v2887
    %2953 = vst.msk [vmem:[%s2925 + $0x84] sm:$0xf] %vm2821, %v2888
    %2954 = vst.msk [vmem:[%s2925 + $0x88] sm:$0xf] %vm2821, %v2889
    %2955 = vst.msk [vmem:[%s2925 + $0x8c] sm:$0xf] %vm2821, %v2890
    %2956 = vst.msk [vmem:[%s2925 + $0x90] sm:$0xf] %vm2821, %v2891
    %2957 = vst.msk [vmem:[%s2925 + $0x94] sm:$0xf] %vm2821, %v2892
    %2958 = vst.msk [vmem:[%s2925 + $0xa0] sm:$0xf] %vm2821, %v2893
    %2959 = vst.msk [vmem:[%s2925 + $0xa4] sm:$0xf] %vm2821, %v2894
    %2960 = vst.msk [vmem:[%s2925 + $0xa8] sm:$0xf] %vm2821, %v2895
    %2961 = vst.msk [vmem:[%s2925 + $0xac] sm:$0xf] %vm2821, %v2896
    %2962 = vst.msk [vmem:[%s2925 + $0xb0] sm:$0xf] %vm2821, %v2897
    %2963 = vst.msk [vmem:[%s2925 + $0xb4] sm:$0xf] %vm2821, %v2898
    %2964 = vst.msk [vmem:[%s2925 + $0xb8] sm:$0xf] %vm2821, %v2899
    %2965 = vst.msk [vmem:[%s2925 + $0xbc] sm:$0xf] %vm2821, %v2900
    %2966 = vst.msk [vmem:[%s2925 + $0xc8] sm:$0xf] %vm2821, %v2901
    %2967 = vst.msk [vmem:[%s2925 + $0xcc] sm:$0xf] %vm2821, %v2902
    %2968 = vst.msk [vmem:[%s2925 + $0xd0] sm:$0xf] %vm2821, %v2903
    %2969 = vst.msk [vmem:[%s2925 + $0xd4] sm:$0xf] %vm2821, %v2904
    %2970 = vst.msk [vmem:[%s2925 + $0xd8] sm:$0xf] %vm2821, %v2905
    %2971 = vst.msk [vmem:[%s2925 + $0xdc] sm:$0xf] %vm2821, %v2906
    %2972 = vst.msk [vmem:[%s2925 + $0xe0] sm:$0xf] %vm2821, %v2907
    %2973 = vst.msk [vmem:[%s2925 + $0xe4] sm:$0xf] %vm2821, %v2908
    %2974 = vst.msk [vmem:[%s2925 + $0xf0] sm:$0xf] %vm2821, %v2909
    %2975 = vst.msk [vmem:[%s2925 + $0xf4] sm:$0xf] %vm2821, %v2910
    %2976 = vst.msk [vmem:[%s2925 + $0xf8] sm:$0xf] %vm2821, %v2911
    %2977 = vst.msk [vmem:[%s2925 + $0xfc] sm:$0xf] %vm2821, %v2912
    %2978 = vst.msk [vmem:[%s2925 + $0x100] sm:$0xf] %vm2821, %v2913
    %2979 = vst.msk [vmem:[%s2925 + $0x104] sm:$0xf] %vm2821, %v2914
    %2980 = vst.msk [vmem:[%s2925 + $0x108] sm:$0xf] %vm2821, %v2915
    %2981 = vst.msk [vmem:[%s2925 + $0x10c] sm:$0xf] %vm2821, %v2916
    %2982 = vst.msk [vmem:[%s2925 + $0x118] sm:$0xf] %vm2821, %v2917
    %2983 = vst.msk [vmem:[%s2925 + $0x11c] sm:$0xf] %vm2821, %v2918
    %2984 = vst.msk [vmem:[%s2925 + $0x120] sm:$0xf] %vm2821, %v2919
    %2985 = vst.msk [vmem:[%s2925 + $0x124] sm:$0xf] %vm2821, %v2920
    %2986 = vst.msk [vmem:[%s2925 + $0x128] sm:$0xf] %vm2821, %v2921
    %2987 = vst.msk [vmem:[%s2925 + $0x12c] sm:$0xf] %vm2821, %v2922
    %2988 = vst.msk [vmem:[%s2925 + $0x130] sm:$0xf] %vm2821, %v2923
    %2989 = vst.msk [vmem:[%s2925 + $0x134] sm:$0xf] %vm2821, %v2924
    %v2990 = vld [vmem:[#allocation2] sm:$0xf]
    %v2991 = vld [vmem:[#allocation2 + $0x4] sm:$0xf]
    %v2992 = vld [vmem:[#allocation2 + $0x8] sm:$0xf]
    %v2993 = vld [vmem:[#allocation2 + $0xc] sm:$0xf]
    %v2994 = vld [vmem:[#allocation2 + $0x10] sm:$0xf]
    %v2995 = vld [vmem:[#allocation2 + $0x14] sm:$0xf]
    %v2996 = vld [vmem:[#allocation2 + $0x18] sm:$0xf]
    %v2997 = vld [vmem:[#allocation2 + $0x1c] sm:$0xf]
    %v2998 = vld [vmem:[#allocation2 + $0x20] sm:$0xf]
    %v2999 = vld [vmem:[#allocation2 + $0x24] sm:$0xf]
    %v3000 = vld [vmem:[#allocation2 + $0x28] sm:$0xf]
    %v3001 = vld [vmem:[#allocation2 + $0x2c] sm:$0xf]
    %v3002 = vld [vmem:[#allocation2 + $0x30] sm:$0xf]
    %v3003 = vld [vmem:[#allocation2 + $0x34] sm:$0xf]
    %v3004 = vld [vmem:[#allocation2 + $0x38] sm:$0xf]
    %v3005 = vld [vmem:[#allocation2 + $0x3c] sm:$0xf]
    %v3006 = vld [vmem:[#allocation2 + $0x40] sm:$0xf]
    %v3007 = vld [vmem:[#allocation2 + $0x44] sm:$0xf]
    %v3008 = vld [vmem:[#allocation2 + $0x48] sm:$0xf]
    %v3009 = vld [vmem:[#allocation2 + $0x4c] sm:$0xf]
    %v3010 = vld [vmem:[#allocation2 + $0x50] sm:$0xf]
    %v3011 = vld [vmem:[#allocation2 + $0x54] sm:$0xf]
    %v3012 = vld [vmem:[#allocation2 + $0x58] sm:$0xf]
    %v3013 = vld [vmem:[#allocation2 + $0x5c] sm:$0xf]
    %v3014 = vld [vmem:[#allocation2 + $0x60] sm:$0xf]
    %v3015 = vld [vmem:[#allocation2 + $0x64] sm:$0xf]
    %v3016 = vld [vmem:[#allocation2 + $0x68] sm:$0xf]
    %v3017 = vld [vmem:[#allocation2 + $0x6c] sm:$0xf]
    %v3018 = vld [vmem:[#allocation2 + $0x70] sm:$0xf]
    %v3019 = vld [vmem:[#allocation2 + $0x74] sm:$0xf]
    %v3020 = vld [vmem:[#allocation2 + $0x78] sm:$0xf]
    %v3021 = vld [vmem:[#allocation2 + $0x7c] sm:$0xf]
    %v3022 = vld [vmem:[#allocation2 + $0x80] sm:$0xf]
    %v3023 = vld [vmem:[#allocation2 + $0x84] sm:$0xf]
    %v3024 = vld [vmem:[#allocation2 + $0x88] sm:$0xf]
    %v3025 = vld [vmem:[#allocation2 + $0x8c] sm:$0xf]
    %v3026 = vld [vmem:[#allocation2 + $0x90] sm:$0xf]
    %v3027 = vld [vmem:[#allocation2 + $0x94] sm:$0xf]
    %v3028 = vld [vmem:[#allocation2 + $0x98] sm:$0xf]
    %v3029 = vld [vmem:[#allocation2 + $0x9c] sm:$0xf]
    %v3030 = vld [vmem:[#allocation2 + $0xa0] sm:$0xf]
    %v3031 = vld [vmem:[#allocation2 + $0xa4] sm:$0xf]
    %v3032 = vld [vmem:[#allocation2 + $0xa8] sm:$0xf]
    %v3033 = vld [vmem:[#allocation2 + $0xac] sm:$0xf]
    %v3034 = vld [vmem:[#allocation2 + $0xb0] sm:$0xf]
    %v3035 = vld [vmem:[#allocation2 + $0xb4] sm:$0xf]
    %v3036 = vld [vmem:[#allocation2 + $0xb8] sm:$0xf]
    %v3037 = vld [vmem:[#allocation2 + $0xbc] sm:$0xf]
    %v3038 = vld [vmem:[#allocation2 + $0xc0] sm:$0xf]
    %v3039 = vld [vmem:[#allocation2 + $0xc4] sm:$0xf]
    %v3040 = vld [vmem:[#allocation2 + $0xc8] sm:$0xf]
    %v3041 = vld [vmem:[#allocation2 + $0xcc] sm:$0xf]
    %v3042 = vld [vmem:[#allocation2 + $0xd0] sm:$0xf]
    %v3043 = vld [vmem:[#allocation2 + $0xd4] sm:$0xf]
    %v3044 = vld [vmem:[#allocation2 + $0xd8] sm:$0xf]
    %v3045 = vld [vmem:[#allocation2 + $0xdc] sm:$0xf]
    %v3046 = vld [vmem:[#allocation2 + $0xe0] sm:$0xf]
    %v3047 = vld [vmem:[#allocation2 + $0xe4] sm:$0xf]
    %v3048 = vld [vmem:[#allocation2 + $0xe8] sm:$0xf]
    %v3049 = vld [vmem:[#allocation2 + $0xec] sm:$0xf]
    %v3050 = vld [vmem:[#allocation2 + $0xf0] sm:$0xf]
    %v3051 = vld [vmem:[#allocation2 + $0xf4] sm:$0xf]
    %v3052 = vld [vmem:[#allocation2 + $0xf8] sm:$0xf]
    %v3053 = vld [vmem:[#allocation2 + $0xfc] sm:$0xf]
    %v3054 = vld [vmem:[#allocation2 + $0x100] sm:$0xf]
    %v3055 = vld [vmem:[#allocation2 + $0x104] sm:$0xf]
    %v3056 = vld [vmem:[#allocation2 + $0x108] sm:$0xf]
    %v3057 = vld [vmem:[#allocation2 + $0x10c] sm:$0xf]
    %v3058 = vld [vmem:[#allocation2 + $0x110] sm:$0xf]
    %v3059 = vld [vmem:[#allocation2 + $0x114] sm:$0xf]
    %v3060 = vld [vmem:[#allocation2 + $0x118] sm:$0xf]
    %v3061 = vld [vmem:[#allocation2 + $0x11c] sm:$0xf]
    %v3062 = vld [vmem:[#allocation2 + $0x120] sm:$0xf]
    %v3063 = vld [vmem:[#allocation2 + $0x124] sm:$0xf]
    %v3064 = vld [vmem:[#allocation2 + $0x128] sm:$0xf]
    %v3065 = vld [vmem:[#allocation2 + $0x12c] sm:$0xf]
    %v3066 = vld [vmem:[#allocation2 + $0x130] sm:$0xf]
    %v3067 = vld [vmem:[#allocation2 + $0x134] sm:$0xf]
    %v3068 = vld [vmem:[#allocation2 + $0x138] sm:$0xf]
    %v3069 = vld [vmem:[#allocation2 + $0x13c] sm:$0xf]
    %v3070 = vld [vmem:[#allocation2 + $0x140] sm:$0xf]
    %v3071 = vld [vmem:[#allocation2 + $0x144] sm:$0xf]
    %v3072 = vld [vmem:[#allocation2 + $0x148] sm:$0xf]
    %v3073 = vld [vmem:[#allocation2 + $0x14c] sm:$0xf]
    %v3074 = vld [vmem:[#allocation2 + $0x150] sm:$0xf]
    %v3075 = vld [vmem:[#allocation2 + $0x154] sm:$0xf]
    %v3076 = vld [vmem:[#allocation2 + $0x158] sm:$0xf]
    %v3077 = vld [vmem:[#allocation2 + $0x15c] sm:$0xf]
    %v3078 = vld [vmem:[#allocation2 + $0x160] sm:$0xf]
    %v3079 = vld [vmem:[#allocation2 + $0x164] sm:$0xf]
    %v3080 = vld [vmem:[#allocation2 + $0x168] sm:$0xf]
    %v3081 = vld [vmem:[#allocation2 + $0x16c] sm:$0xf]
    %v3082 = vld [vmem:[#allocation2 + $0x170] sm:$0xf]
    %v3083 = vld [vmem:[#allocation2 + $0x174] sm:$0xf]
    %v3084 = vld [vmem:[#allocation2 + $0x178] sm:$0xf]
    %v3085 = vld [vmem:[#allocation2 + $0x17c] sm:$0xf]
    %v3086 = vld [vmem:[#allocation2 + $0x180] sm:$0xf]
    %v3087 = vld [vmem:[#allocation2 + $0x184] sm:$0xf]
    %v3088 = vld [vmem:[#allocation2 + $0x188] sm:$0xf]
    %v3089 = vld [vmem:[#allocation2 + $0x18c] sm:$0xf]
    %v3090 = vld [vmem:[%s3] sm:$0xf]
    %v3091 = vld [vmem:[%s3 + $0x4] sm:$0xf]
    %v3092 = vld [vmem:[%s3 + $0x8] sm:$0xf]
    %v3093 = vld [vmem:[%s3 + $0xc] sm:$0xf]
    %s3094 = scalar_lea.vmem %s3, 16
    %v3095 = vld [vmem:[%s3094] sm:$0xf]
    %v3096 = vld [vmem:[%s3094 + $0x4] sm:$0xf]
    %v3097 = vld [vmem:[%s3094 + $0x8] sm:$0xf]
    %v3098 = vld [vmem:[%s3094 + $0xc] sm:$0xf]
    %v3163 = vunpack.c.l.b16 %v2991
    %v3164 = vunpack.c.l.b16 %v2992
    %v3165 = vunpack.c.l.b16 %v2993
    %v3166 = vunpack.c.l.b16 %v2994
    %v3167 = vunpack.c.l.b16 %v2995
    %v3168 = vunpack.c.l.b16 %v2996
    %v3169 = vunpack.c.l.b16 %v2997
    %v3170 = vunpack.c.l.b16 %v2998
    %v3171 = vunpack.c.l.b16 %v3001
    %v3172 = vunpack.c.l.b16 %v3002
    %v3173 = vunpack.c.l.b16 %v3003
    %v3174 = vunpack.c.l.b16 %v3004
    %v3175 = vunpack.c.l.b16 %v3005
    %v3176 = vunpack.c.l.b16 %v3006
    %v3177 = vunpack.c.l.b16 %v3007
    %v3178 = vunpack.c.l.b16 %v3008
    %v3179 = vunpack.c.l.b16 %v3011
    %v3180 = vunpack.c.l.b16 %v3012
    %v3181 = vunpack.c.l.b16 %v3013
    %v3182 = vunpack.c.l.b16 %v3014
    %v3183 = vunpack.c.l.b16 %v3015
    %v3184 = vunpack.c.l.b16 %v3016
    %v3185 = vunpack.c.l.b16 %v3017
    %v3186 = vunpack.c.l.b16 %v3018
    %v3187 = vunpack.c.l.b16 %v3021
    %v3188 = vunpack.c.l.b16 %v3022
    %v3189 = vunpack.c.l.b16 %v3023
    %v3190 = vunpack.c.l.b16 %v3024
    %v3191 = vunpack.c.l.b16 %v3025
    %v3192 = vunpack.c.l.b16 %v3026
    %v3193 = vunpack.c.l.b16 %v3027
    %v3194 = vunpack.c.l.b16 %v3028
    %v3195 = vunpack.c.l.b16 %v3031
    %v3196 = vunpack.c.l.b16 %v3032
    %v3197 = vunpack.c.l.b16 %v3033
    %v3198 = vunpack.c.l.b16 %v3034
    %v3199 = vunpack.c.l.b16 %v3035
    %v3200 = vunpack.c.l.b16 %v3036
    %v3201 = vunpack.c.l.b16 %v3037
    %v3202 = vunpack.c.l.b16 %v3038
    %v3203 = vunpack.c.l.b16 %v3041
    %v3204 = vunpack.c.l.b16 %v3042
    %v3205 = vunpack.c.l.b16 %v3043
    %v3206 = vunpack.c.l.b16 %v3044
    %v3207 = vunpack.c.l.b16 %v3045
    %v3208 = vunpack.c.l.b16 %v3046
    %v3209 = vunpack.c.l.b16 %v3047
    %v3210 = vunpack.c.l.b16 %v3048
    %v3211 = vunpack.c.l.b16 %v3051
    %v3212 = vunpack.c.l.b16 %v3052
    %v3213 = vunpack.c.l.b16 %v3053
    %v3214 = vunpack.c.l.b16 %v3054
    %v3215 = vunpack.c.l.b16 %v3055
    %v3216 = vunpack.c.l.b16 %v3056
    %v3217 = vunpack.c.l.b16 %v3057
    %v3218 = vunpack.c.l.b16 %v3058
    %v3219 = vunpack.c.l.b16 %v3061
    %v3220 = vunpack.c.l.b16 %v3062
    %v3221 = vunpack.c.l.b16 %v3063
    %v3222 = vunpack.c.l.b16 %v3064
    %v3223 = vunpack.c.l.b16 %v3065
    %v3224 = vunpack.c.l.b16 %v3066
    %v3225 = vunpack.c.l.b16 %v3067
    %v3226 = vunpack.c.l.b16 %v3068
    %v3227 = vpack.c.b16 %v3164, %v3163
    %v3228 = vpack.c.b16 %v3166, %v3165
    %v3229 = vpack.c.b16 %v3168, %v3167
    %v3230 = vpack.c.b16 %v3170, %v3169
    %v3231 = vpack.c.b16 %v3172, %v3171
    %v3232 = vpack.c.b16 %v3174, %v3173
    %v3233 = vpack.c.b16 %v3176, %v3175
    %v3234 = vpack.c.b16 %v3178, %v3177
    %v3235 = vpack.c.b16 %v3180, %v3179
    %v3236 = vpack.c.b16 %v3182, %v3181
    %v3237 = vpack.c.b16 %v3184, %v3183
    %v3238 = vpack.c.b16 %v3186, %v3185
    %v3239 = vpack.c.b16 %v3188, %v3187
    %v3240 = vpack.c.b16 %v3190, %v3189
    %v3241 = vpack.c.b16 %v3192, %v3191
    %v3242 = vpack.c.b16 %v3194, %v3193
    %v3243 = vpack.c.b16 %v3196, %v3195
    %v3244 = vpack.c.b16 %v3198, %v3197
    %v3245 = vpack.c.b16 %v3200, %v3199
    %v3246 = vpack.c.b16 %v3202, %v3201
    %v3247 = vpack.c.b16 %v3204, %v3203
    %v3248 = vpack.c.b16 %v3206, %v3205
    %v3249 = vpack.c.b16 %v3208, %v3207
    %v3250 = vpack.c.b16 %v3210, %v3209
    %v3251 = vpack.c.b16 %v3212, %v3211
    %v3252 = vpack.c.b16 %v3214, %v3213
    %v3253 = vpack.c.b16 %v3216, %v3215
    %v3254 = vpack.c.b16 %v3218, %v3217
    %v3255 = vpack.c.b16 %v3220, %v3219
    %v3256 = vpack.c.b16 %v3222, %v3221
    %v3257 = vpack.c.b16 %v3224, %v3223
    %v3258 = vpack.c.b16 %v3226, %v3225
    %v3263 = vunpack.c.l.b16 %v3095
    %v3264 = vunpack.c.l.b16 %v3096
    %v3265 = vunpack.c.l.b16 %v3097
    %v3266 = vunpack.c.l.b16 %v3098
    %v3267 = vpack.c.b16 %v3264, %v3263
    %v3268 = vpack.c.b16 %v3266, %v3265
    %v3272 = vsel %vm2244, %v3227, 0
    %v3275 = vsel %vm2244, %v3228, 0
    %v3278 = vsel %vm2244, %v3229, 0
    %v3281 = vsel %vm2244, %v3230, 0
    %v3284 = vsel %vm2244, %v3231, 0
    %v3287 = vsel %vm2244, %v3232, 0
    %v3290 = vsel %vm2244, %v3233, 0
    %v3293 = vsel %vm2244, %v3234, 0
    %v3296 = vsel %vm2244, %v3235, 0
    %v3299 = vsel %vm2244, %v3236, 0
    %v3302 = vsel %vm2244, %v3237, 0
    %v3305 = vsel %vm2244, %v3238, 0
    %v3308 = vsel %vm2244, %v3239, 0
    %v3311 = vsel %vm2244, %v3240, 0
    %v3314 = vsel %vm2244, %v3241, 0
    %v3317 = vsel %vm2244, %v3242, 0
    %v3320 = vsel %vm2244, %v3243, 0
    %v3323 = vsel %vm2244, %v3244, 0
    %v3326 = vsel %vm2244, %v3245, 0
    %v3329 = vsel %vm2244, %v3246, 0
    %v3332 = vsel %vm2244, %v3247, 0
    %v3335 = vsel %vm2244, %v3248, 0
    %v3338 = vsel %vm2244, %v3249, 0
    %v3341 = vsel %vm2244, %v3250, 0
    %v3344 = vsel %vm2244, %v3251, 0
    %v3347 = vsel %vm2244, %v3252, 0
    %v3350 = vsel %vm2244, %v3253, 0
    %v3353 = vsel %vm2244, %v3254, 0
    %v3356 = vsel %vm2244, %v3255, 0
    %v3359 = vsel %vm2244, %v3256, 0
    %v3362 = vsel %vm2244, %v3257, 0
    %v3365 = vsel %vm2244, %v3258, 0
    %3367 = vmatpush.bf16.msra.mxu0 0
    %3368 = vmatpush.bf16.msra.mxu0 0
    %3369 = vmatpush.bf16.msra.mxu0 0
    %3370 = vmatpush.bf16.msra.mxu0 0
    %3371 = vmatpush.bf16.msra.mxu0 0
    %3372 = vmatpush.bf16.msra.mxu0 0
    %3373 = vmatpush.bf16.msra.mxu0 %v3268
    %3374 = vmatpush.bf16.msra.mxu0 %v3267
    %3375 = vmatmul.bf16.gmra.mxu0 %v3272
    %v3376 = vpop.f32.mrf.mxu0
    %v3377 = vadd.f32 0.0, %v3376
    %v3378 = vpop.f32.mrf.mxu0
    %v3379 = vadd.f32 0.0, %v3378
    %3380 = vmatmul.bf16.gmra.mxu0 %v3275
    %v3381 = vpop.f32.mrf.mxu0
    %v3382 = vadd.f32 0.0, %v3381
    %v3383 = vpop.f32.mrf.mxu0
    %v3384 = vadd.f32 0.0, %v3383
    %3385 = vmatmul.bf16.gmra.mxu0 %v3278
    %v3386 = vpop.f32.mrf.mxu0
    %v3387 = vadd.f32 0.0, %v3386
    %v3388 = vpop.f32.mrf.mxu0
    %v3389 = vadd.f32 0.0, %v3388
    %3390 = vmatmul.bf16.gmra.mxu0 %v3281
    %v3391 = vpop.f32.mrf.mxu0
    %v3392 = vadd.f32 0.0, %v3391
    %v3393 = vpop.f32.mrf.mxu0
    %v3394 = vadd.f32 0.0, %v3393
    %3395 = vmatmul.bf16.gmra.mxu0 %v3284
    %v3396 = vpop.f32.mrf.mxu0
    %v3397 = vadd.f32 0.0, %v3396
    %v3398 = vpop.f32.mrf.mxu0
    %v3399 = vadd.f32 0.0, %v3398
    %3400 = vmatmul.bf16.gmra.mxu0 %v3287
    %v3401 = vpop.f32.mrf.mxu0
    %v3402 = vadd.f32 0.0, %v3401
    %v3403 = vpop.f32.mrf.mxu0
    %v3404 = vadd.f32 0.0, %v3403
    %3405 = vmatmul.bf16.gmra.mxu0 %v3290
    %v3406 = vpop.f32.mrf.mxu0
    %v3407 = vadd.f32 0.0, %v3406
    %v3408 = vpop.f32.mrf.mxu0
    %v3409 = vadd.f32 0.0, %v3408
    %3410 = vmatmul.bf16.gmra.mxu0 %v3293
    %v3411 = vpop.f32.mrf.mxu0
    %v3412 = vadd.f32 0.0, %v3411
    %v3413 = vpop.f32.mrf.mxu0
    %v3414 = vadd.f32 0.0, %v3413
    %3415 = vmatmul.bf16.gmra.mxu0 %v3296
    %v3416 = vpop.f32.mrf.mxu0
    %v3417 = vadd.f32 0.0, %v3416
    %v3418 = vpop.f32.mrf.mxu0
    %v3419 = vadd.f32 0.0, %v3418
    %3420 = vmatmul.bf16.gmra.mxu0 %v3299
    %v3421 = vpop.f32.mrf.mxu0
    %v3422 = vadd.f32 0.0, %v3421
    %v3423 = vpop.f32.mrf.mxu0
    %v3424 = vadd.f32 0.0, %v3423
    %3425 = vmatmul.bf16.gmra.mxu0 %v3302
    %v3426 = vpop.f32.mrf.mxu0
    %v3427 = vadd.f32 0.0, %v3426
    %v3428 = vpop.f32.mrf.mxu0
    %v3429 = vadd.f32 0.0, %v3428
    %3430 = vmatmul.bf16.gmra.mxu0 %v3305
    %v3431 = vpop.f32.mrf.mxu0
    %v3432 = vadd.f32 0.0, %v3431
    %v3433 = vpop.f32.mrf.mxu0
    %v3434 = vadd.f32 0.0, %v3433
    %3435 = vmatmul.bf16.gmra.mxu0 %v3308
    %v3436 = vpop.f32.mrf.mxu0
    %v3437 = vadd.f32 0.0, %v3436
    %v3438 = vpop.f32.mrf.mxu0
    %v3439 = vadd.f32 0.0, %v3438
    %3440 = vmatmul.bf16.gmra.mxu0 %v3311
    %v3441 = vpop.f32.mrf.mxu0
    %v3442 = vadd.f32 0.0, %v3441
    %v3443 = vpop.f32.mrf.mxu0
    %v3444 = vadd.f32 0.0, %v3443
    %3445 = vmatmul.bf16.gmra.mxu0 %v3314
    %v3446 = vpop.f32.mrf.mxu0
    %v3447 = vadd.f32 0.0, %v3446
    %v3448 = vpop.f32.mrf.mxu0
    %v3449 = vadd.f32 0.0, %v3448
    %3450 = vmatmul.bf16.gmra.mxu0 %v3317
    %v3451 = vpop.f32.mrf.mxu0
    %v3452 = vadd.f32 0.0, %v3451
    %v3453 = vpop.f32.mrf.mxu0
    %v3454 = vadd.f32 0.0, %v3453
    %3455 = vmatmul.bf16.gmra.mxu0 %v3320
    %v3456 = vpop.f32.mrf.mxu0
    %v3457 = vadd.f32 0.0, %v3456
    %v3458 = vpop.f32.mrf.mxu0
    %v3459 = vadd.f32 0.0, %v3458
    %3460 = vmatmul.bf16.gmra.mxu0 %v3323
    %v3461 = vpop.f32.mrf.mxu0
    %v3462 = vadd.f32 0.0, %v3461
    %v3463 = vpop.f32.mrf.mxu0
    %v3464 = vadd.f32 0.0, %v3463
    %3465 = vmatmul.bf16.gmra.mxu0 %v3326
    %v3466 = vpop.f32.mrf.mxu0
    %v3467 = vadd.f32 0.0, %v3466
    %v3468 = vpop.f32.mrf.mxu0
    %v3469 = vadd.f32 0.0, %v3468
    %3470 = vmatmul.bf16.gmra.mxu0 %v3329
    %v3471 = vpop.f32.mrf.mxu0
    %v3472 = vadd.f32 0.0, %v3471
    %v3473 = vpop.f32.mrf.mxu0
    %v3474 = vadd.f32 0.0, %v3473
    %3475 = vmatmul.bf16.gmra.mxu0 %v3332
    %v3476 = vpop.f32.mrf.mxu0
    %v3477 = vadd.f32 0.0, %v3476
    %v3478 = vpop.f32.mrf.mxu0
    %v3479 = vadd.f32 0.0, %v3478
    %3480 = vmatmul.bf16.gmra.mxu0 %v3335
    %v3481 = vpop.f32.mrf.mxu0
    %v3482 = vadd.f32 0.0, %v3481
    %v3483 = vpop.f32.mrf.mxu0
    %v3484 = vadd.f32 0.0, %v3483
    %3485 = vmatmul.bf16.gmra.mxu0 %v3338
    %v3486 = vpop.f32.mrf.mxu0
    %v3487 = vadd.f32 0.0, %v3486
    %v3488 = vpop.f32.mrf.mxu0
    %v3489 = vadd.f32 0.0, %v3488
    %3490 = vmatmul.bf16.gmra.mxu0 %v3341
    %v3491 = vpop.f32.mrf.mxu0
    %v3492 = vadd.f32 0.0, %v3491
    %v3493 = vpop.f32.mrf.mxu0
    %v3494 = vadd.f32 0.0, %v3493
    %3495 = vmatmul.bf16.gmra.mxu0 %v3344
    %v3496 = vpop.f32.mrf.mxu0
    %v3497 = vadd.f32 0.0, %v3496
    %v3498 = vpop.f32.mrf.mxu0
    %v3499 = vadd.f32 0.0, %v3498
    %3500 = vmatmul.bf16.gmra.mxu0 %v3347
    %v3501 = vpop.f32.mrf.mxu0
    %v3502 = vadd.f32 0.0, %v3501
    %v3503 = vpop.f32.mrf.mxu0
    %v3504 = vadd.f32 0.0, %v3503
    %3505 = vmatmul.bf16.gmra.mxu0 %v3350
    %v3506 = vpop.f32.mrf.mxu0
    %v3507 = vadd.f32 0.0, %v3506
    %v3508 = vpop.f32.mrf.mxu0
    %v3509 = vadd.f32 0.0, %v3508
    %3510 = vmatmul.bf16.gmra.mxu0 %v3353
    %v3511 = vpop.f32.mrf.mxu0
    %v3512 = vadd.f32 0.0, %v3511
    %v3513 = vpop.f32.mrf.mxu0
    %v3514 = vadd.f32 0.0, %v3513
    %3515 = vmatmul.bf16.gmra.mxu0 %v3356
    %v3516 = vpop.f32.mrf.mxu0
    %v3517 = vadd.f32 0.0, %v3516
    %v3518 = vpop.f32.mrf.mxu0
    %v3519 = vadd.f32 0.0, %v3518
    %3520 = vmatmul.bf16.gmra.mxu0 %v3359
    %v3521 = vpop.f32.mrf.mxu0
    %v3522 = vadd.f32 0.0, %v3521
    %v3523 = vpop.f32.mrf.mxu0
    %v3524 = vadd.f32 0.0, %v3523
    %3525 = vmatmul.bf16.gmra.mxu0 %v3362
    %v3526 = vpop.f32.mrf.mxu0
    %v3527 = vadd.f32 0.0, %v3526
    %v3528 = vpop.f32.mrf.mxu0
    %v3529 = vadd.f32 0.0, %v3528
    %3530 = vmatmul.bf16.gmra.mxu0 %v3365
    %v3531 = vpop.f32.mrf.mxu0
    %v3532 = vadd.f32 0.0, %v3531
    %v3533 = vpop.f32.mrf.mxu0
    %v3534 = vadd.f32 0.0, %v3533
    %3535 = vdwg.mxu0
    %v3544 = vunpack.c.l.b16 %v2990
    %v3545 = vunpack.c.l.b16 %v3000
    %v3546 = vunpack.c.l.b16 %v3010
    %v3547 = vunpack.c.l.b16 %v3020
    %v3548 = vunpack.c.l.b16 %v3030
    %v3549 = vunpack.c.l.b16 %v3040
    %v3550 = vunpack.c.l.b16 %v3050
    %v3551 = vunpack.c.l.b16 %v3060
    %v3552 = vpack.c.b16 %v3163, %v3544
    %v3553 = vpack.c.b16 %v3165, %v3164
    %v3554 = vpack.c.b16 %v3167, %v3166
    %v3555 = vpack.c.b16 %v3169, %v3168
    %v3556 = vpack.c.b16 %v3171, %v3545
    %v3557 = vpack.c.b16 %v3173, %v3172
    %v3558 = vpack.c.b16 %v3175, %v3174
    %v3559 = vpack.c.b16 %v3177, %v3176
    %v3560 = vpack.c.b16 %v3179, %v3546
    %v3561 = vpack.c.b16 %v3181, %v3180
    %v3562 = vpack.c.b16 %v3183, %v3182
    %v3563 = vpack.c.b16 %v3185, %v3184
    %v3564 = vpack.c.b16 %v3187, %v3547
    %v3565 = vpack.c.b16 %v3189, %v3188
    %v3566 = vpack.c.b16 %v3191, %v3190
    %v3567 = vpack.c.b16 %v3193, %v3192
    %v3568 = vpack.c.b16 %v3195, %v3548
    %v3569 = vpack.c.b16 %v3197, %v3196
    %v3570 = vpack.c.b16 %v3199, %v3198
    %v3571 = vpack.c.b16 %v3201, %v3200
    %v3572 = vpack.c.b16 %v3203, %v3549
    %v3573 = vpack.c.b16 %v3205, %v3204
    %v3574 = vpack.c.b16 %v3207, %v3206
    %v3575 = vpack.c.b16 %v3209, %v3208
    %v3576 = vpack.c.b16 %v3211, %v3550
    %v3577 = vpack.c.b16 %v3213, %v3212
    %v3578 = vpack.c.b16 %v3215, %v3214
    %v3579 = vpack.c.b16 %v3217, %v3216
    %v3580 = vpack.c.b16 %v3219, %v3551
    %v3581 = vpack.c.b16 %v3221, %v3220
    %v3582 = vpack.c.b16 %v3223, %v3222
    %v3583 = vpack.c.b16 %v3225, %v3224
    %v3588 = vunpack.c.l.b16 %v3090
    %v3589 = vunpack.c.l.b16 %v3091
    %v3590 = vunpack.c.l.b16 %v3092
    %v3591 = vunpack.c.l.b16 %v3093
    %v3592 = vpack.c.b16 %v3589, %v3588
    %v3593 = vpack.c.b16 %v3591, %v3590
    %v3597 = vsel %vm2244, %v3552, 0
    %v3600 = vsel %vm2244, %v3553, 0
    %v3603 = vsel %vm2244, %v3554, 0
    %v3606 = vsel %vm2244, %v3555, 0
    %v3609 = vsel %vm2244, %v3556, 0
    %v3612 = vsel %vm2244, %v3557, 0
    %v3615 = vsel %vm2244, %v3558, 0
    %v3618 = vsel %vm2244, %v3559, 0
    %v3621 = vsel %vm2244, %v3560, 0
    %v3624 = vsel %vm2244, %v3561, 0
    %v3627 = vsel %vm2244, %v3562, 0
    %v3630 = vsel %vm2244, %v3563, 0
    %v3633 = vsel %vm2244, %v3564, 0
    %v3636 = vsel %vm2244, %v3565, 0
    %v3639 = vsel %vm2244, %v3566, 0
    %v3642 = vsel %vm2244, %v3567, 0
    %v3645 = vsel %vm2244, %v3568, 0
    %v3648 = vsel %vm2244, %v3569, 0
    %v3651 = vsel %vm2244, %v3570, 0
    %v3654 = vsel %vm2244, %v3571, 0
    %v3657 = vsel %vm2244, %v3572, 0
    %v3660 = vsel %vm2244, %v3573, 0
    %v3663 = vsel %vm2244, %v3574, 0
    %v3666 = vsel %vm2244, %v3575, 0
    %v3669 = vsel %vm2244, %v3576, 0
    %v3672 = vsel %vm2244, %v3577, 0
    %v3675 = vsel %vm2244, %v3578, 0
    %v3678 = vsel %vm2244, %v3579, 0
    %v3681 = vsel %vm2244, %v3580, 0
    %v3684 = vsel %vm2244, %v3581, 0
    %v3687 = vsel %vm2244, %v3582, 0
    %v3690 = vsel %vm2244, %v3583, 0
    %3692 = vmatpush.bf16.msra.mxu0 0
    %3693 = vmatpush.bf16.msra.mxu0 0
    %3694 = vmatpush.bf16.msra.mxu0 0
    %3695 = vmatpush.bf16.msra.mxu0 0
    %3696 = vmatpush.bf16.msra.mxu0 0
    %3697 = vmatpush.bf16.msra.mxu0 0
    %3698 = vmatpush.bf16.msra.mxu0 %v3593
    %3699 = vmatpush.bf16.msra.mxu0 %v3592
    %3700 = vmatmul.bf16.gmra.mxu0 %v3597
    %v3701 = vpop.f32.mrf.mxu0
    %v3702 = vadd.f32 %v3377, %v3701
    %v3703 = vpop.f32.mrf.mxu0
    %v3704 = vadd.f32 %v3379, %v3703
    %3705 = vmatmul.bf16.gmra.mxu0 %v3600
    %v3706 = vpop.f32.mrf.mxu0
    %v3707 = vadd.f32 %v3382, %v3706
    %v3708 = vpop.f32.mrf.mxu0
    %v3709 = vadd.f32 %v3384, %v3708
    %3710 = vmatmul.bf16.gmra.mxu0 %v3603
    %v3711 = vpop.f32.mrf.mxu0
    %v3712 = vadd.f32 %v3387, %v3711
    %v3713 = vpop.f32.mrf.mxu0
    %v3714 = vadd.f32 %v3389, %v3713
    %3715 = vmatmul.bf16.gmra.mxu0 %v3606
    %v3716 = vpop.f32.mrf.mxu0
    %v3717 = vadd.f32 %v3392, %v3716
    %v3718 = vpop.f32.mrf.mxu0
    %v3719 = vadd.f32 %v3394, %v3718
    %3720 = vmatmul.bf16.gmra.mxu0 %v3609
    %v3721 = vpop.f32.mrf.mxu0
    %v3722 = vadd.f32 %v3397, %v3721
    %v3723 = vpop.f32.mrf.mxu0
    %v3724 = vadd.f32 %v3399, %v3723
    %3725 = vmatmul.bf16.gmra.mxu0 %v3612
    %v3726 = vpop.f32.mrf.mxu0
    %v3727 = vadd.f32 %v3402, %v3726
    %v3728 = vpop.f32.mrf.mxu0
    %v3729 = vadd.f32 %v3404, %v3728
    %3730 = vmatmul.bf16.gmra.mxu0 %v3615
    %v3731 = vpop.f32.mrf.mxu0
    %v3732 = vadd.f32 %v3407, %v3731
    %v3733 = vpop.f32.mrf.mxu0
    %v3734 = vadd.f32 %v3409, %v3733
    %3735 = vmatmul.bf16.gmra.mxu0 %v3618
    %v3736 = vpop.f32.mrf.mxu0
    %v3737 = vadd.f32 %v3412, %v3736
    %v3738 = vpop.f32.mrf.mxu0
    %v3739 = vadd.f32 %v3414, %v3738
    %3740 = vmatmul.bf16.gmra.mxu0 %v3621
    %v3741 = vpop.f32.mrf.mxu0
    %v3742 = vadd.f32 %v3417, %v3741
    %v3743 = vpop.f32.mrf.mxu0
    %v3744 = vadd.f32 %v3419, %v3743
    %3745 = vmatmul.bf16.gmra.mxu0 %v3624
    %v3746 = vpop.f32.mrf.mxu0
    %v3747 = vadd.f32 %v3422, %v3746
    %v3748 = vpop.f32.mrf.mxu0
    %v3749 = vadd.f32 %v3424, %v3748
    %3750 = vmatmul.bf16.gmra.mxu0 %v3627
    %v3751 = vpop.f32.mrf.mxu0
    %v3752 = vadd.f32 %v3427, %v3751
    %v3753 = vpop.f32.mrf.mxu0
    %v3754 = vadd.f32 %v3429, %v3753
    %3755 = vmatmul.bf16.gmra.mxu0 %v3630
    %v3756 = vpop.f32.mrf.mxu0
    %v3757 = vadd.f32 %v3432, %v3756
    %v3758 = vpop.f32.mrf.mxu0
    %v3759 = vadd.f32 %v3434, %v3758
    %3760 = vmatmul.bf16.gmra.mxu0 %v3633
    %v3761 = vpop.f32.mrf.mxu0
    %v3762 = vadd.f32 %v3437, %v3761
    %v3763 = vpop.f32.mrf.mxu0
    %v3764 = vadd.f32 %v3439, %v3763
    %3765 = vmatmul.bf16.gmra.mxu0 %v3636
    %v3766 = vpop.f32.mrf.mxu0
    %v3767 = vadd.f32 %v3442, %v3766
    %v3768 = vpop.f32.mrf.mxu0
    %v3769 = vadd.f32 %v3444, %v3768
    %3770 = vmatmul.bf16.gmra.mxu0 %v3639
    %v3771 = vpop.f32.mrf.mxu0
    %v3772 = vadd.f32 %v3447, %v3771
    %v3773 = vpop.f32.mrf.mxu0
    %v3774 = vadd.f32 %v3449, %v3773
    %3775 = vmatmul.bf16.gmra.mxu0 %v3642
    %v3776 = vpop.f32.mrf.mxu0
    %v3777 = vadd.f32 %v3452, %v3776
    %v3778 = vpop.f32.mrf.mxu0
    %v3779 = vadd.f32 %v3454, %v3778
    %3780 = vmatmul.bf16.gmra.mxu0 %v3645
    %v3781 = vpop.f32.mrf.mxu0
    %v3782 = vadd.f32 %v3457, %v3781
    %v3783 = vpop.f32.mrf.mxu0
    %v3784 = vadd.f32 %v3459, %v3783
    %3785 = vmatmul.bf16.gmra.mxu0 %v3648
    %v3786 = vpop.f32.mrf.mxu0
    %v3787 = vadd.f32 %v3462, %v3786
    %v3788 = vpop.f32.mrf.mxu0
    %v3789 = vadd.f32 %v3464, %v3788
    %3790 = vmatmul.bf16.gmra.mxu0 %v3651
    %v3791 = vpop.f32.mrf.mxu0
    %v3792 = vadd.f32 %v3467, %v3791
    %v3793 = vpop.f32.mrf.mxu0
    %v3794 = vadd.f32 %v3469, %v3793
    %3795 = vmatmul.bf16.gmra.mxu0 %v3654
    %v3796 = vpop.f32.mrf.mxu0
    %v3797 = vadd.f32 %v3472, %v3796
    %v3798 = vpop.f32.mrf.mxu0
    %v3799 = vadd.f32 %v3474, %v3798
    %3800 = vmatmul.bf16.gmra.mxu0 %v3657
    %v3801 = vpop.f32.mrf.mxu0
    %v3802 = vadd.f32 %v3477, %v3801
    %v3803 = vpop.f32.mrf.mxu0
    %v3804 = vadd.f32 %v3479, %v3803
    %3805 = vmatmul.bf16.gmra.mxu0 %v3660
    %v3806 = vpop.f32.mrf.mxu0
    %v3807 = vadd.f32 %v3482, %v3806
    %v3808 = vpop.f32.mrf.mxu0
    %v3809 = vadd.f32 %v3484, %v3808
    %3810 = vmatmul.bf16.gmra.mxu0 %v3663
    %v3811 = vpop.f32.mrf.mxu0
    %v3812 = vadd.f32 %v3487, %v3811
    %v3813 = vpop.f32.mrf.mxu0
    %v3814 = vadd.f32 %v3489, %v3813
    %3815 = vmatmul.bf16.gmra.mxu0 %v3666
    %v3816 = vpop.f32.mrf.mxu0
    %v3817 = vadd.f32 %v3492, %v3816
    %v3818 = vpop.f32.mrf.mxu0
    %v3819 = vadd.f32 %v3494, %v3818
    %3820 = vmatmul.bf16.gmra.mxu0 %v3669
    %v3821 = vpop.f32.mrf.mxu0
    %v3822 = vadd.f32 %v3497, %v3821
    %v3823 = vpop.f32.mrf.mxu0
    %v3824 = vadd.f32 %v3499, %v3823
    %3825 = vmatmul.bf16.gmra.mxu0 %v3672
    %v3826 = vpop.f32.mrf.mxu0
    %v3827 = vadd.f32 %v3502, %v3826
    %v3828 = vpop.f32.mrf.mxu0
    %v3829 = vadd.f32 %v3504, %v3828
    %3830 = vmatmul.bf16.gmra.mxu0 %v3675
    %v3831 = vpop.f32.mrf.mxu0
    %v3832 = vadd.f32 %v3507, %v3831
    %v3833 = vpop.f32.mrf.mxu0
    %v3834 = vadd.f32 %v3509, %v3833
    %3835 = vmatmul.bf16.gmra.mxu0 %v3678
    %v3836 = vpop.f32.mrf.mxu0
    %v3837 = vadd.f32 %v3512, %v3836
    %v3838 = vpop.f32.mrf.mxu0
    %v3839 = vadd.f32 %v3514, %v3838
    %3840 = vmatmul.bf16.gmra.mxu0 %v3681
    %v3841 = vpop.f32.mrf.mxu0
    %v3842 = vadd.f32 %v3517, %v3841
    %v3843 = vpop.f32.mrf.mxu0
    %v3844 = vadd.f32 %v3519, %v3843
    %3845 = vmatmul.bf16.gmra.mxu0 %v3684
    %v3846 = vpop.f32.mrf.mxu0
    %v3847 = vadd.f32 %v3522, %v3846
    %v3848 = vpop.f32.mrf.mxu0
    %v3849 = vadd.f32 %v3524, %v3848
    %3850 = vmatmul.bf16.gmra.mxu0 %v3687
    %v3851 = vpop.f32.mrf.mxu0
    %v3852 = vadd.f32 %v3527, %v3851
    %v3853 = vpop.f32.mrf.mxu0
    %v3854 = vadd.f32 %v3529, %v3853
    %3855 = vmatmul.bf16.gmra.mxu0 %v3690
    %v3856 = vpop.f32.mrf.mxu0
    %v3857 = vadd.f32 %v3532, %v3856
    %v3858 = vpop.f32.mrf.mxu0
    %v3859 = vadd.f32 %v3534, %v3858
    %3860 = vdwg.mxu0
    %s3861 = scalar_lea.vmem %s3, 32
    %v3862 = vld [vmem:[%s3861] sm:$0xf]
    %v3863 = vld [vmem:[%s3861 + $0x4] sm:$0xf]
    %v3864 = vld [vmem:[%s3861 + $0x8] sm:$0xf]
    %v3865 = vld [vmem:[%s3861 + $0xc] sm:$0xf]
    %v3874 = vunpack.c.l.b16 %v2999
    %v3875 = vunpack.c.l.b16 %v3009
    %v3876 = vunpack.c.l.b16 %v3019
    %v3877 = vunpack.c.l.b16 %v3029
    %v3878 = vunpack.c.l.b16 %v3039
    %v3879 = vunpack.c.l.b16 %v3049
    %v3880 = vunpack.c.l.b16 %v3059
    %v3881 = vunpack.c.l.b16 %v3069
    %v3882 = vpack.c.b16 %v3874, %v3170
    %v3883 = vpack.c.b16 %v3875, %v3178
    %v3884 = vpack.c.b16 %v3876, %v3186
    %v3885 = vpack.c.b16 %v3877, %v3194
    %v3886 = vpack.c.b16 %v3878, %v3202
    %v3887 = vpack.c.b16 %v3879, %v3210
    %v3888 = vpack.c.b16 %v3880, %v3218
    %v3889 = vpack.c.b16 %v3881, %v3226
    %v3894 = vunpack.c.l.b16 %v3862
    %v3895 = vunpack.c.l.b16 %v3863
    %v3896 = vunpack.c.l.b16 %v3864
    %v3897 = vunpack.c.l.b16 %v3865
    %v3898 = vpack.c.b16 %v3895, %v3894
    %v3899 = vpack.c.b16 %v3897, %v3896
    %v3903 = vsel %vm2244, %v3882, 0
    %v3906 = vsel %vm2244, %v3883, 0
    %v3909 = vsel %vm2244, %v3884, 0
    %v3912 = vsel %vm2244, %v3885, 0
    %v3915 = vsel %vm2244, %v3886, 0
    %v3918 = vsel %vm2244, %v3887, 0
    %v3921 = vsel %vm2244, %v3888, 0
    %v3924 = vsel %vm2244, %v3889, 0
    %3926 = vmatpush.bf16.msra.mxu0 0
    %3927 = vmatpush.bf16.msra.mxu0 0
    %3928 = vmatpush.bf16.msra.mxu0 0
    %3929 = vmatpush.bf16.msra.mxu0 0
    %3930 = vmatpush.bf16.msra.mxu0 0
    %3931 = vmatpush.bf16.msra.mxu0 0
    %3932 = vmatpush.bf16.msra.mxu0 %v3899
    %3933 = vmatpush.bf16.msra.mxu0 %v3898
    %3934 = vmatmul.bf16.gmra.mxu0 %v3600
    %v3935 = vpop.f32.mrf.mxu0
    %v3936 = vadd.f32 0.0, %v3935
    %v3937 = vpop.f32.mrf.mxu0
    %v3938 = vadd.f32 0.0, %v3937
    %3939 = vmatmul.bf16.gmra.mxu0 %v3603
    %v3940 = vpop.f32.mrf.mxu0
    %v3941 = vadd.f32 0.0, %v3940
    %v3942 = vpop.f32.mrf.mxu0
    %v3943 = vadd.f32 0.0, %v3942
    %3944 = vmatmul.bf16.gmra.mxu0 %v3606
    %v3945 = vpop.f32.mrf.mxu0
    %v3946 = vadd.f32 0.0, %v3945
    %v3947 = vpop.f32.mrf.mxu0
    %v3948 = vadd.f32 0.0, %v3947
    %3949 = vmatmul.bf16.gmra.mxu0 %v3903
    %v3950 = vpop.f32.mrf.mxu0
    %v3951 = vadd.f32 0.0, %v3950
    %v3952 = vpop.f32.mrf.mxu0
    %v3953 = vadd.f32 0.0, %v3952
    %3954 = vmatmul.bf16.gmra.mxu0 %v3612
    %v3955 = vpop.f32.mrf.mxu0
    %v3956 = vadd.f32 0.0, %v3955
    %v3957 = vpop.f32.mrf.mxu0
    %v3958 = vadd.f32 0.0, %v3957
    %3959 = vmatmul.bf16.gmra.mxu0 %v3615
    %v3960 = vpop.f32.mrf.mxu0
    %v3961 = vadd.f32 0.0, %v3960
    %v3962 = vpop.f32.mrf.mxu0
    %v3963 = vadd.f32 0.0, %v3962
    %3964 = vmatmul.bf16.gmra.mxu0 %v3618
    %v3965 = vpop.f32.mrf.mxu0
    %v3966 = vadd.f32 0.0, %v3965
    %v3967 = vpop.f32.mrf.mxu0
    %v3968 = vadd.f32 0.0, %v3967
    %3969 = vmatmul.bf16.gmra.mxu0 %v3906
    %v3970 = vpop.f32.mrf.mxu0
    %v3971 = vadd.f32 0.0, %v3970
    %v3972 = vpop.f32.mrf.mxu0
    %v3973 = vadd.f32 0.0, %v3972
    %3974 = vmatmul.bf16.gmra.mxu0 %v3624
    %v3975 = vpop.f32.mrf.mxu0
    %v3976 = vadd.f32 0.0, %v3975
    %v3977 = vpop.f32.mrf.mxu0
    %v3978 = vadd.f32 0.0, %v3977
    %3979 = vmatmul.bf16.gmra.mxu0 %v3627
    %v3980 = vpop.f32.mrf.mxu0
    %v3981 = vadd.f32 0.0, %v3980
    %v3982 = vpop.f32.mrf.mxu0
    %v3983 = vadd.f32 0.0, %v3982
    %3984 = vmatmul.bf16.gmra.mxu0 %v3630
    %v3985 = vpop.f32.mrf.mxu0
    %v3986 = vadd.f32 0.0, %v3985
    %v3987 = vpop.f32.mrf.mxu0
    %v3988 = vadd.f32 0.0, %v3987
    %3989 = vmatmul.bf16.gmra.mxu0 %v3909
    %v3990 = vpop.f32.mrf.mxu0
    %v3991 = vadd.f32 0.0, %v3990
    %v3992 = vpop.f32.mrf.mxu0
    %v3993 = vadd.f32 0.0, %v3992
    %3994 = vmatmul.bf16.gmra.mxu0 %v3636
    %v3995 = vpop.f32.mrf.mxu0
    %v3996 = vadd.f32 0.0, %v3995
    %v3997 = vpop.f32.mrf.mxu0
    %v3998 = vadd.f32 0.0, %v3997
    %3999 = vmatmul.bf16.gmra.mxu0 %v3639
    %v4000 = vpop.f32.mrf.mxu0
    %v4001 = vadd.f32 0.0, %v4000
    %v4002 = vpop.f32.mrf.mxu0
    %v4003 = vadd.f32 0.0, %v4002
    %4004 = vmatmul.bf16.gmra.mxu0 %v3642
    %v4005 = vpop.f32.mrf.mxu0
    %v4006 = vadd.f32 0.0, %v4005
    %v4007 = vpop.f32.mrf.mxu0
    %v4008 = vadd.f32 0.0, %v4007
    %4009 = vmatmul.bf16.gmra.mxu0 %v3912
    %v4010 = vpop.f32.mrf.mxu0
    %v4011 = vadd.f32 0.0, %v4010
    %v4012 = vpop.f32.mrf.mxu0
    %v4013 = vadd.f32 0.0, %v4012
    %4014 = vmatmul.bf16.gmra.mxu0 %v3648
    %v4015 = vpop.f32.mrf.mxu0
    %v4016 = vadd.f32 0.0, %v4015
    %v4017 = vpop.f32.mrf.mxu0
    %v4018 = vadd.f32 0.0, %v4017
    %4019 = vmatmul.bf16.gmra.mxu0 %v3651
    %v4020 = vpop.f32.mrf.mxu0
    %v4021 = vadd.f32 0.0, %v4020
    %v4022 = vpop.f32.mrf.mxu0
    %v4023 = vadd.f32 0.0, %v4022
    %4024 = vmatmul.bf16.gmra.mxu0 %v3654
    %v4025 = vpop.f32.mrf.mxu0
    %v4026 = vadd.f32 0.0, %v4025
    %v4027 = vpop.f32.mrf.mxu0
    %v4028 = vadd.f32 0.0, %v4027
    %4029 = vmatmul.bf16.gmra.mxu0 %v3915
    %v4030 = vpop.f32.mrf.mxu0
    %v4031 = vadd.f32 0.0, %v4030
    %v4032 = vpop.f32.mrf.mxu0
    %v4033 = vadd.f32 0.0, %v4032
    %4034 = vmatmul.bf16.gmra.mxu0 %v3660
    %v4035 = vpop.f32.mrf.mxu0
    %v4036 = vadd.f32 0.0, %v4035
    %v4037 = vpop.f32.mrf.mxu0
    %v4038 = vadd.f32 0.0, %v4037
    %4039 = vmatmul.bf16.gmra.mxu0 %v3663
    %v4040 = vpop.f32.mrf.mxu0
    %v4041 = vadd.f32 0.0, %v4040
    %v4042 = vpop.f32.mrf.mxu0
    %v4043 = vadd.f32 0.0, %v4042
    %4044 = vmatmul.bf16.gmra.mxu0 %v3666
    %v4045 = vpop.f32.mrf.mxu0
    %v4046 = vadd.f32 0.0, %v4045
    %v4047 = vpop.f32.mrf.mxu0
    %v4048 = vadd.f32 0.0, %v4047
    %4049 = vmatmul.bf16.gmra.mxu0 %v3918
    %v4050 = vpop.f32.mrf.mxu0
    %v4051 = vadd.f32 0.0, %v4050
    %v4052 = vpop.f32.mrf.mxu0
    %v4053 = vadd.f32 0.0, %v4052
    %4054 = vmatmul.bf16.gmra.mxu0 %v3672
    %v4055 = vpop.f32.mrf.mxu0
    %v4056 = vadd.f32 0.0, %v4055
    %v4057 = vpop.f32.mrf.mxu0
    %v4058 = vadd.f32 0.0, %v4057
    %4059 = vmatmul.bf16.gmra.mxu0 %v3675
    %v4060 = vpop.f32.mrf.mxu0
    %v4061 = vadd.f32 0.0, %v4060
    %v4062 = vpop.f32.mrf.mxu0
    %v4063 = vadd.f32 0.0, %v4062
    %4064 = vmatmul.bf16.gmra.mxu0 %v3678
    %v4065 = vpop.f32.mrf.mxu0
    %v4066 = vadd.f32 0.0, %v4065
    %v4067 = vpop.f32.mrf.mxu0
    %v4068 = vadd.f32 0.0, %v4067
    %4069 = vmatmul.bf16.gmra.mxu0 %v3921
    %v4070 = vpop.f32.mrf.mxu0
    %v4071 = vadd.f32 0.0, %v4070
    %v4072 = vpop.f32.mrf.mxu0
    %v4073 = vadd.f32 0.0, %v4072
    %4074 = vmatmul.bf16.gmra.mxu0 %v3684
    %v4075 = vpop.f32.mrf.mxu0
    %v4076 = vadd.f32 0.0, %v4075
    %v4077 = vpop.f32.mrf.mxu0
    %v4078 = vadd.f32 0.0, %v4077
    %4079 = vmatmul.bf16.gmra.mxu0 %v3687
    %v4080 = vpop.f32.mrf.mxu0
    %v4081 = vadd.f32 0.0, %v4080
    %v4082 = vpop.f32.mrf.mxu0
    %v4083 = vadd.f32 0.0, %v4082
    %4084 = vmatmul.bf16.gmra.mxu0 %v3690
    %v4085 = vpop.f32.mrf.mxu0
    %v4086 = vadd.f32 0.0, %v4085
    %v4087 = vpop.f32.mrf.mxu0
    %v4088 = vadd.f32 0.0, %v4087
    %4089 = vmatmul.bf16.gmra.mxu0 %v3924
    %v4090 = vpop.f32.mrf.mxu0
    %v4091 = vadd.f32 0.0, %v4090
    %v4092 = vpop.f32.mrf.mxu0
    %v4093 = vadd.f32 0.0, %v4092
    %4094 = vdwg.mxu0
    %v4095 = vadd.f32 %v3702, %v3936
    %v4096 = vadd.f32 %v3704, %v3938
    %v4097 = vadd.f32 %v3707, %v3941
    %v4098 = vadd.f32 %v3709, %v3943
    %v4099 = vadd.f32 %v3712, %v3946
    %v4100 = vadd.f32 %v3714, %v3948
    %v4101 = vadd.f32 %v3717, %v3951
    %v4102 = vadd.f32 %v3719, %v3953
    %v4103 = vadd.f32 %v3722, %v3956
    %v4104 = vadd.f32 %v3724, %v3958
    %v4105 = vadd.f32 %v3727, %v3961
    %v4106 = vadd.f32 %v3729, %v3963
    %v4107 = vadd.f32 %v3732, %v3966
    %v4108 = vadd.f32 %v3734, %v3968
    %v4109 = vadd.f32 %v3737, %v3971
    %v4110 = vadd.f32 %v3739, %v3973
    %v4111 = vadd.f32 %v3742, %v3976
    %v4112 = vadd.f32 %v3744, %v3978
    %v4113 = vadd.f32 %v3747, %v3981
    %v4114 = vadd.f32 %v3749, %v3983
    %v4115 = vadd.f32 %v3752, %v3986
    %v4116 = vadd.f32 %v3754, %v3988
    %v4117 = vadd.f32 %v3757, %v3991
    %v4118 = vadd.f32 %v3759, %v3993
    %v4119 = vadd.f32 %v3762, %v3996
    %v4120 = vadd.f32 %v3764, %v3998
    %v4121 = vadd.f32 %v3767, %v4001
    %v4122 = vadd.f32 %v3769, %v4003
    %v4123 = vadd.f32 %v3772, %v4006
    %v4124 = vadd.f32 %v3774, %v4008
    %v4125 = vadd.f32 %v3777, %v4011
    %v4126 = vadd.f32 %v3779, %v4013
    %v4127 = vadd.f32 %v3782, %v4016
    %v4128 = vadd.f32 %v3784, %v4018
    %v4129 = vadd.f32 %v3787, %v4021
    %v4130 = vadd.f32 %v3789, %v4023
    %v4131 = vadd.f32 %v3792, %v4026
    %v4132 = vadd.f32 %v3794, %v4028
    %v4133 = vadd.f32 %v3797, %v4031
    %v4134 = vadd.f32 %v3799, %v4033
    %v4135 = vadd.f32 %v3802, %v4036
    %v4136 = vadd.f32 %v3804, %v4038
    %v4137 = vadd.f32 %v3807, %v4041
    %v4138 = vadd.f32 %v3809, %v4043
    %v4139 = vadd.f32 %v3812, %v4046
    %v4140 = vadd.f32 %v3814, %v4048
    %v4141 = vadd.f32 %v3817, %v4051
    %v4142 = vadd.f32 %v3819, %v4053
    %v4143 = vadd.f32 %v3822, %v4056
    %v4144 = vadd.f32 %v3824, %v4058
    %v4145 = vadd.f32 %v3827, %v4061
    %v4146 = vadd.f32 %v3829, %v4063
    %v4147 = vadd.f32 %v3832, %v4066
    %v4148 = vadd.f32 %v3834, %v4068
    %v4149 = vadd.f32 %v3837, %v4071
    %v4150 = vadd.f32 %v3839, %v4073
    %v4151 = vadd.f32 %v3842, %v4076
    %v4152 = vadd.f32 %v3844, %v4078
    %v4153 = vadd.f32 %v3847, %v4081
    %v4154 = vadd.f32 %v3849, %v4083
    %v4155 = vadd.f32 %v3852, %v4086
    %v4156 = vadd.f32 %v3854, %v4088
    %v4157 = vadd.f32 %v3857, %v4091
    %v4158 = vadd.f32 %v3859, %v4093
    %s4159 = scalar_lea.vmem %s3, 48
    %v4160 = vld [vmem:[%s4159] sm:$0xf]
    %v4161 = vld [vmem:[%s4159 + $0x4] sm:$0xf]
    %v4162 = vld [vmem:[%s4159 + $0x8] sm:$0xf]
    %v4163 = vld [vmem:[%s4159 + $0xc] sm:$0xf]
    %v4172 = vunpack.c.l.b16 %v3070
    %v4173 = vunpack.c.l.b16 %v3071
    %v4174 = vunpack.c.l.b16 %v3072
    %v4175 = vunpack.c.l.b16 %v3073
    %v4176 = vunpack.c.l.b16 %v3074
    %v4177 = vunpack.c.l.b16 %v3075
    %v4178 = vunpack.c.l.b16 %v3076
    %v4179 = vunpack.c.l.b16 %v3077
    %v4180 = vpack.c.b16 %v4173, %v4172
    %v4181 = vpack.c.b16 %v4175, %v4174
    %v4182 = vpack.c.b16 %v4177, %v4176
    %v4183 = vpack.c.b16 %v4179, %v4178
    %v4188 = vunpack.c.l.b16 %v4160
    %v4189 = vunpack.c.l.b16 %v4161
    %v4190 = vunpack.c.l.b16 %v4162
    %v4191 = vunpack.c.l.b16 %v4163
    %v4192 = vpack.c.b16 %v4189, %v4188
    %v4193 = vpack.c.b16 %v4191, %v4190
    %v4197 = vsel %vm2244, %v4180, 0
    %v4200 = vsel %vm2244, %v4181, 0
    %v4203 = vsel %vm2244, %v4182, 0
    %v4206 = vsel %vm2244, %v4183, 0
    %4208 = vmatpush.bf16.msra.mxu0 0
    %4209 = vmatpush.bf16.msra.mxu0 0
    %4210 = vmatpush.bf16.msra.mxu0 0
    %4211 = vmatpush.bf16.msra.mxu0 0
    %4212 = vmatpush.bf16.msra.mxu0 0
    %4213 = vmatpush.bf16.msra.mxu0 0
    %4214 = vmatpush.bf16.msra.mxu0 %v4193
    %4215 = vmatpush.bf16.msra.mxu0 %v4192
    %4216 = vmatmul.bf16.gmra.mxu0 %v3609
    %v4217 = vpop.f32.mrf.mxu0
    %v4218 = vadd.f32 0.0, %v4217
    %v4219 = vpop.f32.mrf.mxu0
    %v4220 = vadd.f32 0.0, %v4219
    %4221 = vmatmul.bf16.gmra.mxu0 %v3612
    %v4222 = vpop.f32.mrf.mxu0
    %v4223 = vadd.f32 0.0, %v4222
    %v4224 = vpop.f32.mrf.mxu0
    %v4225 = vadd.f32 0.0, %v4224
    %4226 = vmatmul.bf16.gmra.mxu0 %v3615
    %v4227 = vpop.f32.mrf.mxu0
    %v4228 = vadd.f32 0.0, %v4227
    %v4229 = vpop.f32.mrf.mxu0
    %v4230 = vadd.f32 0.0, %v4229
    %4231 = vmatmul.bf16.gmra.mxu0 %v3618
    %v4232 = vpop.f32.mrf.mxu0
    %v4233 = vadd.f32 0.0, %v4232
    %v4234 = vpop.f32.mrf.mxu0
    %v4235 = vadd.f32 0.0, %v4234
    %4236 = vmatmul.bf16.gmra.mxu0 %v3621
    %v4237 = vpop.f32.mrf.mxu0
    %v4238 = vadd.f32 0.0, %v4237
    %v4239 = vpop.f32.mrf.mxu0
    %v4240 = vadd.f32 0.0, %v4239
    %4241 = vmatmul.bf16.gmra.mxu0 %v3624
    %v4242 = vpop.f32.mrf.mxu0
    %v4243 = vadd.f32 0.0, %v4242
    %v4244 = vpop.f32.mrf.mxu0
    %v4245 = vadd.f32 0.0, %v4244
    %4246 = vmatmul.bf16.gmra.mxu0 %v3627
    %v4247 = vpop.f32.mrf.mxu0
    %v4248 = vadd.f32 0.0, %v4247
    %v4249 = vpop.f32.mrf.mxu0
    %v4250 = vadd.f32 0.0, %v4249
    %4251 = vmatmul.bf16.gmra.mxu0 %v3630
    %v4252 = vpop.f32.mrf.mxu0
    %v4253 = vadd.f32 0.0, %v4252
    %v4254 = vpop.f32.mrf.mxu0
    %v4255 = vadd.f32 0.0, %v4254
    %4256 = vmatmul.bf16.gmra.mxu0 %v3633
    %v4257 = vpop.f32.mrf.mxu0
    %v4258 = vadd.f32 0.0, %v4257
    %v4259 = vpop.f32.mrf.mxu0
    %v4260 = vadd.f32 0.0, %v4259
    %4261 = vmatmul.bf16.gmra.mxu0 %v3636
    %v4262 = vpop.f32.mrf.mxu0
    %v4263 = vadd.f32 0.0, %v4262
    %v4264 = vpop.f32.mrf.mxu0
    %v4265 = vadd.f32 0.0, %v4264
    %4266 = vmatmul.bf16.gmra.mxu0 %v3639
    %v4267 = vpop.f32.mrf.mxu0
    %v4268 = vadd.f32 0.0, %v4267
    %v4269 = vpop.f32.mrf.mxu0
    %v4270 = vadd.f32 0.0, %v4269
    %4271 = vmatmul.bf16.gmra.mxu0 %v3642
    %v4272 = vpop.f32.mrf.mxu0
    %v4273 = vadd.f32 0.0, %v4272
    %v4274 = vpop.f32.mrf.mxu0
    %v4275 = vadd.f32 0.0, %v4274
    %4276 = vmatmul.bf16.gmra.mxu0 %v3645
    %v4277 = vpop.f32.mrf.mxu0
    %v4278 = vadd.f32 0.0, %v4277
    %v4279 = vpop.f32.mrf.mxu0
    %v4280 = vadd.f32 0.0, %v4279
    %4281 = vmatmul.bf16.gmra.mxu0 %v3648
    %v4282 = vpop.f32.mrf.mxu0
    %v4283 = vadd.f32 0.0, %v4282
    %v4284 = vpop.f32.mrf.mxu0
    %v4285 = vadd.f32 0.0, %v4284
    %4286 = vmatmul.bf16.gmra.mxu0 %v3651
    %v4287 = vpop.f32.mrf.mxu0
    %v4288 = vadd.f32 0.0, %v4287
    %v4289 = vpop.f32.mrf.mxu0
    %v4290 = vadd.f32 0.0, %v4289
    %4291 = vmatmul.bf16.gmra.mxu0 %v3654
    %v4292 = vpop.f32.mrf.mxu0
    %v4293 = vadd.f32 0.0, %v4292
    %v4294 = vpop.f32.mrf.mxu0
    %v4295 = vadd.f32 0.0, %v4294
    %4296 = vmatmul.bf16.gmra.mxu0 %v3657
    %v4297 = vpop.f32.mrf.mxu0
    %v4298 = vadd.f32 0.0, %v4297
    %v4299 = vpop.f32.mrf.mxu0
    %v4300 = vadd.f32 0.0, %v4299
    %4301 = vmatmul.bf16.gmra.mxu0 %v3660
    %v4302 = vpop.f32.mrf.mxu0
    %v4303 = vadd.f32 0.0, %v4302
    %v4304 = vpop.f32.mrf.mxu0
    %v4305 = vadd.f32 0.0, %v4304
    %4306 = vmatmul.bf16.gmra.mxu0 %v3663
    %v4307 = vpop.f32.mrf.mxu0
    %v4308 = vadd.f32 0.0, %v4307
    %v4309 = vpop.f32.mrf.mxu0
    %v4310 = vadd.f32 0.0, %v4309
    %4311 = vmatmul.bf16.gmra.mxu0 %v3666
    %v4312 = vpop.f32.mrf.mxu0
    %v4313 = vadd.f32 0.0, %v4312
    %v4314 = vpop.f32.mrf.mxu0
    %v4315 = vadd.f32 0.0, %v4314
    %4316 = vmatmul.bf16.gmra.mxu0 %v3669
    %v4317 = vpop.f32.mrf.mxu0
    %v4318 = vadd.f32 0.0, %v4317
    %v4319 = vpop.f32.mrf.mxu0
    %v4320 = vadd.f32 0.0, %v4319
    %4321 = vmatmul.bf16.gmra.mxu0 %v3672
    %v4322 = vpop.f32.mrf.mxu0
    %v4323 = vadd.f32 0.0, %v4322
    %v4324 = vpop.f32.mrf.mxu0
    %v4325 = vadd.f32 0.0, %v4324
    %4326 = vmatmul.bf16.gmra.mxu0 %v3675
    %v4327 = vpop.f32.mrf.mxu0
    %v4328 = vadd.f32 0.0, %v4327
    %v4329 = vpop.f32.mrf.mxu0
    %v4330 = vadd.f32 0.0, %v4329
    %4331 = vmatmul.bf16.gmra.mxu0 %v3678
    %v4332 = vpop.f32.mrf.mxu0
    %v4333 = vadd.f32 0.0, %v4332
    %v4334 = vpop.f32.mrf.mxu0
    %v4335 = vadd.f32 0.0, %v4334
    %4336 = vmatmul.bf16.gmra.mxu0 %v3681
    %v4337 = vpop.f32.mrf.mxu0
    %v4338 = vadd.f32 0.0, %v4337
    %v4339 = vpop.f32.mrf.mxu0
    %v4340 = vadd.f32 0.0, %v4339
    %4341 = vmatmul.bf16.gmra.mxu0 %v3684
    %v4342 = vpop.f32.mrf.mxu0
    %v4343 = vadd.f32 0.0, %v4342
    %v4344 = vpop.f32.mrf.mxu0
    %v4345 = vadd.f32 0.0, %v4344
    %4346 = vmatmul.bf16.gmra.mxu0 %v3687
    %v4347 = vpop.f32.mrf.mxu0
    %v4348 = vadd.f32 0.0, %v4347
    %v4349 = vpop.f32.mrf.mxu0
    %v4350 = vadd.f32 0.0, %v4349
    %4351 = vmatmul.bf16.gmra.mxu0 %v3690
    %v4352 = vpop.f32.mrf.mxu0
    %v4353 = vadd.f32 0.0, %v4352
    %v4354 = vpop.f32.mrf.mxu0
    %v4355 = vadd.f32 0.0, %v4354
    %4356 = vmatmul.bf16.gmra.mxu0 %v4197
    %v4357 = vpop.f32.mrf.mxu0
    %v4358 = vadd.f32 0.0, %v4357
    %v4359 = vpop.f32.mrf.mxu0
    %v4360 = vadd.f32 0.0, %v4359
    %4361 = vmatmul.bf16.gmra.mxu0 %v4200
    %v4362 = vpop.f32.mrf.mxu0
    %v4363 = vadd.f32 0.0, %v4362
    %v4364 = vpop.f32.mrf.mxu0
    %v4365 = vadd.f32 0.0, %v4364
    %4366 = vmatmul.bf16.gmra.mxu0 %v4203
    %v4367 = vpop.f32.mrf.mxu0
    %v4368 = vadd.f32 0.0, %v4367
    %v4369 = vpop.f32.mrf.mxu0
    %v4370 = vadd.f32 0.0, %v4369
    %4371 = vmatmul.bf16.gmra.mxu0 %v4206
    %v4372 = vpop.f32.mrf.mxu0
    %v4373 = vadd.f32 0.0, %v4372
    %v4374 = vpop.f32.mrf.mxu0
    %v4375 = vadd.f32 0.0, %v4374
    %4376 = vdwg.mxu0
    %v4377 = vadd.f32 %v4095, %v4218
    %v4378 = vadd.f32 %v4096, %v4220
    %v4379 = vadd.f32 %v4097, %v4223
    %v4380 = vadd.f32 %v4098, %v4225
    %v4381 = vadd.f32 %v4099, %v4228
    %v4382 = vadd.f32 %v4100, %v4230
    %v4383 = vadd.f32 %v4101, %v4233
    %v4384 = vadd.f32 %v4102, %v4235
    %v4385 = vadd.f32 %v4103, %v4238
    %v4386 = vadd.f32 %v4104, %v4240
    %v4387 = vadd.f32 %v4105, %v4243
    %v4388 = vadd.f32 %v4106, %v4245
    %v4389 = vadd.f32 %v4107, %v4248
    %v4390 = vadd.f32 %v4108, %v4250
    %v4391 = vadd.f32 %v4109, %v4253
    %v4392 = vadd.f32 %v4110, %v4255
    %v4393 = vadd.f32 %v4111, %v4258
    %v4394 = vadd.f32 %v4112, %v4260
    %v4395 = vadd.f32 %v4113, %v4263
    %v4396 = vadd.f32 %v4114, %v4265
    %v4397 = vadd.f32 %v4115, %v4268
    %v4398 = vadd.f32 %v4116, %v4270
    %v4399 = vadd.f32 %v4117, %v4273
    %v4400 = vadd.f32 %v4118, %v4275
    %v4401 = vadd.f32 %v4119, %v4278
    %v4402 = vadd.f32 %v4120, %v4280
    %v4403 = vadd.f32 %v4121, %v4283
    %v4404 = vadd.f32 %v4122, %v4285
    %v4405 = vadd.f32 %v4123, %v4288
    %v4406 = vadd.f32 %v4124, %v4290
    %v4407 = vadd.f32 %v4125, %v4293
    %v4408 = vadd.f32 %v4126, %v4295
    %v4409 = vadd.f32 %v4127, %v4298
    %v4410 = vadd.f32 %v4128, %v4300
    %v4411 = vadd.f32 %v4129, %v4303
    %v4412 = vadd.f32 %v4130, %v4305
    %v4413 = vadd.f32 %v4131, %v4308
    %v4414 = vadd.f32 %v4132, %v4310
    %v4415 = vadd.f32 %v4133, %v4313
    %v4416 = vadd.f32 %v4134, %v4315
    %v4417 = vadd.f32 %v4135, %v4318
    %v4418 = vadd.f32 %v4136, %v4320
    %v4419 = vadd.f32 %v4137, %v4323
    %v4420 = vadd.f32 %v4138, %v4325
    %v4421 = vadd.f32 %v4139, %v4328
    %v4422 = vadd.f32 %v4140, %v4330
    %v4423 = vadd.f32 %v4141, %v4333
    %v4424 = vadd.f32 %v4142, %v4335
    %v4425 = vadd.f32 %v4143, %v4338
    %v4426 = vadd.f32 %v4144, %v4340
    %v4427 = vadd.f32 %v4145, %v4343
    %v4428 = vadd.f32 %v4146, %v4345
    %v4429 = vadd.f32 %v4147, %v4348
    %v4430 = vadd.f32 %v4148, %v4350
    %v4431 = vadd.f32 %v4149, %v4353
    %v4432 = vadd.f32 %v4150, %v4355
    %v4433 = vadd.f32 %v4151, %v4358
    %v4434 = vadd.f32 %v4152, %v4360
    %v4435 = vadd.f32 %v4153, %v4363
    %v4436 = vadd.f32 %v4154, %v4365
    %v4437 = vadd.f32 %v4155, %v4368
    %v4438 = vadd.f32 %v4156, %v4370
    %v4439 = vadd.f32 %v4157, %v4373
    %v4440 = vadd.f32 %v4158, %v4375
    %s4441 = scalar_lea.vmem %s3, 64
    %v4442 = vld [vmem:[%s4441] sm:$0xf]
    %v4443 = vld [vmem:[%s4441 + $0x4] sm:$0xf]
    %v4444 = vld [vmem:[%s4441 + $0x8] sm:$0xf]
    %v4445 = vld [vmem:[%s4441 + $0xc] sm:$0xf]
    %v4447 = vunpack.c.l.b16 %v3078
    %v4448 = vpack.c.b16 %v4174, %v4173
    %v4449 = vpack.c.b16 %v4176, %v4175
    %v4450 = vpack.c.b16 %v4178, %v4177
    %v4451 = vpack.c.b16 %v4447, %v4179
    %v4456 = vunpack.c.l.b16 %v4442
    %v4457 = vunpack.c.l.b16 %v4443
    %v4458 = vunpack.c.l.b16 %v4444
    %v4459 = vunpack.c.l.b16 %v4445
    %v4460 = vpack.c.b16 %v4457, %v4456
    %v4461 = vpack.c.b16 %v4459, %v4458
    %v4465 = vsel %vm2244, %v4448, 0
    %v4468 = vsel %vm2244, %v4449, 0
    %v4471 = vsel %vm2244, %v4450, 0
    %v4474 = vsel %vm2244, %v4451, 0
    %4476 = vmatpush.bf16.msra.mxu0 0
    %4477 = vmatpush.bf16.msra.mxu0 0
    %4478 = vmatpush.bf16.msra.mxu0 0
    %4479 = vmatpush.bf16.msra.mxu0 0
    %4480 = vmatpush.bf16.msra.mxu0 0
    %4481 = vmatpush.bf16.msra.mxu0 0
    %4482 = vmatpush.bf16.msra.mxu0 %v4461
    %4483 = vmatpush.bf16.msra.mxu0 %v4460
    %4484 = vmatmul.bf16.gmra.mxu0 %v3284
    %v4485 = vpop.f32.mrf.mxu0
    %v4486 = vadd.f32 0.0, %v4485
    %v4487 = vpop.f32.mrf.mxu0
    %v4488 = vadd.f32 0.0, %v4487
    %4489 = vmatmul.bf16.gmra.mxu0 %v3287
    %v4490 = vpop.f32.mrf.mxu0
    %v4491 = vadd.f32 0.0, %v4490
    %v4492 = vpop.f32.mrf.mxu0
    %v4493 = vadd.f32 0.0, %v4492
    %4494 = vmatmul.bf16.gmra.mxu0 %v3290
    %v4495 = vpop.f32.mrf.mxu0
    %v4496 = vadd.f32 0.0, %v4495
    %v4497 = vpop.f32.mrf.mxu0
    %v4498 = vadd.f32 0.0, %v4497
    %4499 = vmatmul.bf16.gmra.mxu0 %v3293
    %v4500 = vpop.f32.mrf.mxu0
    %v4501 = vadd.f32 0.0, %v4500
    %v4502 = vpop.f32.mrf.mxu0
    %v4503 = vadd.f32 0.0, %v4502
    %4504 = vmatmul.bf16.gmra.mxu0 %v3296
    %v4505 = vpop.f32.mrf.mxu0
    %v4506 = vadd.f32 0.0, %v4505
    %v4507 = vpop.f32.mrf.mxu0
    %v4508 = vadd.f32 0.0, %v4507
    %4509 = vmatmul.bf16.gmra.mxu0 %v3299
    %v4510 = vpop.f32.mrf.mxu0
    %v4511 = vadd.f32 0.0, %v4510
    %v4512 = vpop.f32.mrf.mxu0
    %v4513 = vadd.f32 0.0, %v4512
    %4514 = vmatmul.bf16.gmra.mxu0 %v3302
    %v4515 = vpop.f32.mrf.mxu0
    %v4516 = vadd.f32 0.0, %v4515
    %v4517 = vpop.f32.mrf.mxu0
    %v4518 = vadd.f32 0.0, %v4517
    %4519 = vmatmul.bf16.gmra.mxu0 %v3305
    %v4520 = vpop.f32.mrf.mxu0
    %v4521 = vadd.f32 0.0, %v4520
    %v4522 = vpop.f32.mrf.mxu0
    %v4523 = vadd.f32 0.0, %v4522
    %4524 = vmatmul.bf16.gmra.mxu0 %v3308
    %v4525 = vpop.f32.mrf.mxu0
    %v4526 = vadd.f32 0.0, %v4525
    %v4527 = vpop.f32.mrf.mxu0
    %v4528 = vadd.f32 0.0, %v4527
    %4529 = vmatmul.bf16.gmra.mxu0 %v3311
    %v4530 = vpop.f32.mrf.mxu0
    %v4531 = vadd.f32 0.0, %v4530
    %v4532 = vpop.f32.mrf.mxu0
    %v4533 = vadd.f32 0.0, %v4532
    %4534 = vmatmul.bf16.gmra.mxu0 %v3314
    %v4535 = vpop.f32.mrf.mxu0
    %v4536 = vadd.f32 0.0, %v4535
    %v4537 = vpop.f32.mrf.mxu0
    %v4538 = vadd.f32 0.0, %v4537
    %4539 = vmatmul.bf16.gmra.mxu0 %v3317
    %v4540 = vpop.f32.mrf.mxu0
    %v4541 = vadd.f32 0.0, %v4540
    %v4542 = vpop.f32.mrf.mxu0
    %v4543 = vadd.f32 0.0, %v4542
    %4544 = vmatmul.bf16.gmra.mxu0 %v3320
    %v4545 = vpop.f32.mrf.mxu0
    %v4546 = vadd.f32 0.0, %v4545
    %v4547 = vpop.f32.mrf.mxu0
    %v4548 = vadd.f32 0.0, %v4547
    %4549 = vmatmul.bf16.gmra.mxu0 %v3323
    %v4550 = vpop.f32.mrf.mxu0
    %v4551 = vadd.f32 0.0, %v4550
    %v4552 = vpop.f32.mrf.mxu0
    %v4553 = vadd.f32 0.0, %v4552
    %4554 = vmatmul.bf16.gmra.mxu0 %v3326
    %v4555 = vpop.f32.mrf.mxu0
    %v4556 = vadd.f32 0.0, %v4555
    %v4557 = vpop.f32.mrf.mxu0
    %v4558 = vadd.f32 0.0, %v4557
    %4559 = vmatmul.bf16.gmra.mxu0 %v3329
    %v4560 = vpop.f32.mrf.mxu0
    %v4561 = vadd.f32 0.0, %v4560
    %v4562 = vpop.f32.mrf.mxu0
    %v4563 = vadd.f32 0.0, %v4562
    %4564 = vmatmul.bf16.gmra.mxu0 %v3332
    %v4565 = vpop.f32.mrf.mxu0
    %v4566 = vadd.f32 0.0, %v4565
    %v4567 = vpop.f32.mrf.mxu0
    %v4568 = vadd.f32 0.0, %v4567
    %4569 = vmatmul.bf16.gmra.mxu0 %v3335
    %v4570 = vpop.f32.mrf.mxu0
    %v4571 = vadd.f32 0.0, %v4570
    %v4572 = vpop.f32.mrf.mxu0
    %v4573 = vadd.f32 0.0, %v4572
    %4574 = vmatmul.bf16.gmra.mxu0 %v3338
    %v4575 = vpop.f32.mrf.mxu0
    %v4576 = vadd.f32 0.0, %v4575
    %v4577 = vpop.f32.mrf.mxu0
    %v4578 = vadd.f32 0.0, %v4577
    %4579 = vmatmul.bf16.gmra.mxu0 %v3341
    %v4580 = vpop.f32.mrf.mxu0
    %v4581 = vadd.f32 0.0, %v4580
    %v4582 = vpop.f32.mrf.mxu0
    %v4583 = vadd.f32 0.0, %v4582
    %4584 = vmatmul.bf16.gmra.mxu0 %v3344
    %v4585 = vpop.f32.mrf.mxu0
    %v4586 = vadd.f32 0.0, %v4585
    %v4587 = vpop.f32.mrf.mxu0
    %v4588 = vadd.f32 0.0, %v4587
    %4589 = vmatmul.bf16.gmra.mxu0 %v3347
    %v4590 = vpop.f32.mrf.mxu0
    %v4591 = vadd.f32 0.0, %v4590
    %v4592 = vpop.f32.mrf.mxu0
    %v4593 = vadd.f32 0.0, %v4592
    %4594 = vmatmul.bf16.gmra.mxu0 %v3350
    %v4595 = vpop.f32.mrf.mxu0
    %v4596 = vadd.f32 0.0, %v4595
    %v4597 = vpop.f32.mrf.mxu0
    %v4598 = vadd.f32 0.0, %v4597
    %4599 = vmatmul.bf16.gmra.mxu0 %v3353
    %v4600 = vpop.f32.mrf.mxu0
    %v4601 = vadd.f32 0.0, %v4600
    %v4602 = vpop.f32.mrf.mxu0
    %v4603 = vadd.f32 0.0, %v4602
    %4604 = vmatmul.bf16.gmra.mxu0 %v3356
    %v4605 = vpop.f32.mrf.mxu0
    %v4606 = vadd.f32 0.0, %v4605
    %v4607 = vpop.f32.mrf.mxu0
    %v4608 = vadd.f32 0.0, %v4607
    %4609 = vmatmul.bf16.gmra.mxu0 %v3359
    %v4610 = vpop.f32.mrf.mxu0
    %v4611 = vadd.f32 0.0, %v4610
    %v4612 = vpop.f32.mrf.mxu0
    %v4613 = vadd.f32 0.0, %v4612
    %4614 = vmatmul.bf16.gmra.mxu0 %v3362
    %v4615 = vpop.f32.mrf.mxu0
    %v4616 = vadd.f32 0.0, %v4615
    %v4617 = vpop.f32.mrf.mxu0
    %v4618 = vadd.f32 0.0, %v4617
    %4619 = vmatmul.bf16.gmra.mxu0 %v3365
    %v4620 = vpop.f32.mrf.mxu0
    %v4621 = vadd.f32 0.0, %v4620
    %v4622 = vpop.f32.mrf.mxu0
    %v4623 = vadd.f32 0.0, %v4622
    %4624 = vmatmul.bf16.gmra.mxu0 %v4465
    %v4625 = vpop.f32.mrf.mxu0
    %v4626 = vadd.f32 0.0, %v4625
    %v4627 = vpop.f32.mrf.mxu0
    %v4628 = vadd.f32 0.0, %v4627
    %4629 = vmatmul.bf16.gmra.mxu0 %v4468
    %v4630 = vpop.f32.mrf.mxu0
    %v4631 = vadd.f32 0.0, %v4630
    %v4632 = vpop.f32.mrf.mxu0
    %v4633 = vadd.f32 0.0, %v4632
    %4634 = vmatmul.bf16.gmra.mxu0 %v4471
    %v4635 = vpop.f32.mrf.mxu0
    %v4636 = vadd.f32 0.0, %v4635
    %v4637 = vpop.f32.mrf.mxu0
    %v4638 = vadd.f32 0.0, %v4637
    %4639 = vmatmul.bf16.gmra.mxu0 %v4474
    %v4640 = vpop.f32.mrf.mxu0
    %v4641 = vadd.f32 0.0, %v4640
    %v4642 = vpop.f32.mrf.mxu0
    %v4643 = vadd.f32 0.0, %v4642
    %4644 = vdwg.mxu0
    %v4645 = vadd.f32 %v4377, %v4486
    %v4646 = vadd.f32 %v4378, %v4488
    %v4647 = vadd.f32 %v4379, %v4491
    %v4648 = vadd.f32 %v4380, %v4493
    %v4649 = vadd.f32 %v4381, %v4496
    %v4650 = vadd.f32 %v4382, %v4498
    %v4651 = vadd.f32 %v4383, %v4501
    %v4652 = vadd.f32 %v4384, %v4503
    %v4653 = vadd.f32 %v4385, %v4506
    %v4654 = vadd.f32 %v4386, %v4508
    %v4655 = vadd.f32 %v4387, %v4511
    %v4656 = vadd.f32 %v4388, %v4513
    %v4657 = vadd.f32 %v4389, %v4516
    %v4658 = vadd.f32 %v4390, %v4518
    %v4659 = vadd.f32 %v4391, %v4521
    %v4660 = vadd.f32 %v4392, %v4523
    %v4661 = vadd.f32 %v4393, %v4526
    %v4662 = vadd.f32 %v4394, %v4528
    %v4663 = vadd.f32 %v4395, %v4531
    %v4664 = vadd.f32 %v4396, %v4533
    %v4665 = vadd.f32 %v4397, %v4536
    %v4666 = vadd.f32 %v4398, %v4538
    %v4667 = vadd.f32 %v4399, %v4541
    %v4668 = vadd.f32 %v4400, %v4543
    %v4669 = vadd.f32 %v4401, %v4546
    %v4670 = vadd.f32 %v4402, %v4548
    %v4671 = vadd.f32 %v4403, %v4551
    %v4672 = vadd.f32 %v4404, %v4553
    %v4673 = vadd.f32 %v4405, %v4556
    %v4674 = vadd.f32 %v4406, %v4558
    %v4675 = vadd.f32 %v4407, %v4561
    %v4676 = vadd.f32 %v4408, %v4563
    %v4677 = vadd.f32 %v4409, %v4566
    %v4678 = vadd.f32 %v4410, %v4568
    %v4679 = vadd.f32 %v4411, %v4571
    %v4680 = vadd.f32 %v4412, %v4573
    %v4681 = vadd.f32 %v4413, %v4576
    %v4682 = vadd.f32 %v4414, %v4578
    %v4683 = vadd.f32 %v4415, %v4581
    %v4684 = vadd.f32 %v4416, %v4583
    %v4685 = vadd.f32 %v4417, %v4586
    %v4686 = vadd.f32 %v4418, %v4588
    %v4687 = vadd.f32 %v4419, %v4591
    %v4688 = vadd.f32 %v4420, %v4593
    %v4689 = vadd.f32 %v4421, %v4596
    %v4690 = vadd.f32 %v4422, %v4598
    %v4691 = vadd.f32 %v4423, %v4601
    %v4692 = vadd.f32 %v4424, %v4603
    %v4693 = vadd.f32 %v4425, %v4606
    %v4694 = vadd.f32 %v4426, %v4608
    %v4695 = vadd.f32 %v4427, %v4611
    %v4696 = vadd.f32 %v4428, %v4613
    %v4697 = vadd.f32 %v4429, %v4616
    %v4698 = vadd.f32 %v4430, %v4618
    %v4699 = vadd.f32 %v4431, %v4621
    %v4700 = vadd.f32 %v4432, %v4623
    %v4701 = vadd.f32 %v4433, %v4626
    %v4702 = vadd.f32 %v4434, %v4628
    %v4703 = vadd.f32 %v4435, %v4631
    %v4704 = vadd.f32 %v4436, %v4633
    %v4705 = vadd.f32 %v4437, %v4636
    %v4706 = vadd.f32 %v4438, %v4638
    %v4707 = vadd.f32 %v4439, %v4641
    %v4708 = vadd.f32 %v4440, %v4643
    %s4709 = scalar_lea.vmem %s3, 80
    %v4710 = vld [vmem:[%s4709] sm:$0xf]
    %v4711 = vld [vmem:[%s4709 + $0x4] sm:$0xf]
    %v4712 = vld [vmem:[%s4709 + $0x8] sm:$0xf]
    %v4713 = vld [vmem:[%s4709 + $0xc] sm:$0xf]
    %v4715 = vunpack.c.l.b16 %v3079
    %v4716 = vpack.c.b16 %v4715, %v4447
    %v4721 = vunpack.c.l.b16 %v4710
    %v4722 = vunpack.c.l.b16 %v4711
    %v4723 = vunpack.c.l.b16 %v4712
    %v4724 = vunpack.c.l.b16 %v4713
    %v4725 = vpack.c.b16 %v4722, %v4721
    %v4726 = vpack.c.b16 %v4724, %v4723
    %v4730 = vsel %vm2244, %v4716, 0
    %4732 = vmatpush.bf16.msra.mxu0 0
    %4733 = vmatpush.bf16.msra.mxu0 0
    %4734 = vmatpush.bf16.msra.mxu0 0
    %4735 = vmatpush.bf16.msra.mxu0 0
    %4736 = vmatpush.bf16.msra.mxu0 0
    %4737 = vmatpush.bf16.msra.mxu0 0
    %4738 = vmatpush.bf16.msra.mxu0 %v4726
    %4739 = vmatpush.bf16.msra.mxu0 %v4725
    %4740 = vmatmul.bf16.gmra.mxu0 %v3612
    %v4741 = vpop.f32.mrf.mxu0
    %v4742 = vadd.f32 0.0, %v4741
    %v4743 = vpop.f32.mrf.mxu0
    %v4744 = vadd.f32 0.0, %v4743
    %4745 = vmatmul.bf16.gmra.mxu0 %v3615
    %v4746 = vpop.f32.mrf.mxu0
    %v4747 = vadd.f32 0.0, %v4746
    %v4748 = vpop.f32.mrf.mxu0
    %v4749 = vadd.f32 0.0, %v4748
    %4750 = vmatmul.bf16.gmra.mxu0 %v3618
    %v4751 = vpop.f32.mrf.mxu0
    %v4752 = vadd.f32 0.0, %v4751
    %v4753 = vpop.f32.mrf.mxu0
    %v4754 = vadd.f32 0.0, %v4753
    %4755 = vmatmul.bf16.gmra.mxu0 %v3906
    %v4756 = vpop.f32.mrf.mxu0
    %v4757 = vadd.f32 0.0, %v4756
    %v4758 = vpop.f32.mrf.mxu0
    %v4759 = vadd.f32 0.0, %v4758
    %4760 = vmatmul.bf16.gmra.mxu0 %v3624
    %v4761 = vpop.f32.mrf.mxu0
    %v4762 = vadd.f32 0.0, %v4761
    %v4763 = vpop.f32.mrf.mxu0
    %v4764 = vadd.f32 0.0, %v4763
    %4765 = vmatmul.bf16.gmra.mxu0 %v3627
    %v4766 = vpop.f32.mrf.mxu0
    %v4767 = vadd.f32 0.0, %v4766
    %v4768 = vpop.f32.mrf.mxu0
    %v4769 = vadd.f32 0.0, %v4768
    %4770 = vmatmul.bf16.gmra.mxu0 %v3630
    %v4771 = vpop.f32.mrf.mxu0
    %v4772 = vadd.f32 0.0, %v4771
    %v4773 = vpop.f32.mrf.mxu0
    %v4774 = vadd.f32 0.0, %v4773
    %4775 = vmatmul.bf16.gmra.mxu0 %v3909
    %v4776 = vpop.f32.mrf.mxu0
    %v4777 = vadd.f32 0.0, %v4776
    %v4778 = vpop.f32.mrf.mxu0
    %v4779 = vadd.f32 0.0, %v4778
    %4780 = vmatmul.bf16.gmra.mxu0 %v3636
    %v4781 = vpop.f32.mrf.mxu0
    %v4782 = vadd.f32 0.0, %v4781
    %v4783 = vpop.f32.mrf.mxu0
    %v4784 = vadd.f32 0.0, %v4783
    %4785 = vmatmul.bf16.gmra.mxu0 %v3639
    %v4786 = vpop.f32.mrf.mxu0
    %v4787 = vadd.f32 0.0, %v4786
    %v4788 = vpop.f32.mrf.mxu0
    %v4789 = vadd.f32 0.0, %v4788
    %4790 = vmatmul.bf16.gmra.mxu0 %v3642
    %v4791 = vpop.f32.mrf.mxu0
    %v4792 = vadd.f32 0.0, %v4791
    %v4793 = vpop.f32.mrf.mxu0
    %v4794 = vadd.f32 0.0, %v4793
    %4795 = vmatmul.bf16.gmra.mxu0 %v3912
    %v4796 = vpop.f32.mrf.mxu0
    %v4797 = vadd.f32 0.0, %v4796
    %v4798 = vpop.f32.mrf.mxu0
    %v4799 = vadd.f32 0.0, %v4798
    %4800 = vmatmul.bf16.gmra.mxu0 %v3648
    %v4801 = vpop.f32.mrf.mxu0
    %v4802 = vadd.f32 0.0, %v4801
    %v4803 = vpop.f32.mrf.mxu0
    %v4804 = vadd.f32 0.0, %v4803
    %4805 = vmatmul.bf16.gmra.mxu0 %v3651
    %v4806 = vpop.f32.mrf.mxu0
    %v4807 = vadd.f32 0.0, %v4806
    %v4808 = vpop.f32.mrf.mxu0
    %v4809 = vadd.f32 0.0, %v4808
    %4810 = vmatmul.bf16.gmra.mxu0 %v3654
    %v4811 = vpop.f32.mrf.mxu0
    %v4812 = vadd.f32 0.0, %v4811
    %v4813 = vpop.f32.mrf.mxu0
    %v4814 = vadd.f32 0.0, %v4813
    %4815 = vmatmul.bf16.gmra.mxu0 %v3915
    %v4816 = vpop.f32.mrf.mxu0
    %v4817 = vadd.f32 0.0, %v4816
    %v4818 = vpop.f32.mrf.mxu0
    %v4819 = vadd.f32 0.0, %v4818
    %4820 = vmatmul.bf16.gmra.mxu0 %v3660
    %v4821 = vpop.f32.mrf.mxu0
    %v4822 = vadd.f32 0.0, %v4821
    %v4823 = vpop.f32.mrf.mxu0
    %v4824 = vadd.f32 0.0, %v4823
    %4825 = vmatmul.bf16.gmra.mxu0 %v3663
    %v4826 = vpop.f32.mrf.mxu0
    %v4827 = vadd.f32 0.0, %v4826
    %v4828 = vpop.f32.mrf.mxu0
    %v4829 = vadd.f32 0.0, %v4828
    %4830 = vmatmul.bf16.gmra.mxu0 %v3666
    %v4831 = vpop.f32.mrf.mxu0
    %v4832 = vadd.f32 0.0, %v4831
    %v4833 = vpop.f32.mrf.mxu0
    %v4834 = vadd.f32 0.0, %v4833
    %4835 = vmatmul.bf16.gmra.mxu0 %v3918
    %v4836 = vpop.f32.mrf.mxu0
    %v4837 = vadd.f32 0.0, %v4836
    %v4838 = vpop.f32.mrf.mxu0
    %v4839 = vadd.f32 0.0, %v4838
    %4840 = vmatmul.bf16.gmra.mxu0 %v3672
    %v4841 = vpop.f32.mrf.mxu0
    %v4842 = vadd.f32 0.0, %v4841
    %v4843 = vpop.f32.mrf.mxu0
    %v4844 = vadd.f32 0.0, %v4843
    %4845 = vmatmul.bf16.gmra.mxu0 %v3675
    %v4846 = vpop.f32.mrf.mxu0
    %v4847 = vadd.f32 0.0, %v4846
    %v4848 = vpop.f32.mrf.mxu0
    %v4849 = vadd.f32 0.0, %v4848
    %4850 = vmatmul.bf16.gmra.mxu0 %v3678
    %v4851 = vpop.f32.mrf.mxu0
    %v4852 = vadd.f32 0.0, %v4851
    %v4853 = vpop.f32.mrf.mxu0
    %v4854 = vadd.f32 0.0, %v4853
    %4855 = vmatmul.bf16.gmra.mxu0 %v3921
    %v4856 = vpop.f32.mrf.mxu0
    %v4857 = vadd.f32 0.0, %v4856
    %v4858 = vpop.f32.mrf.mxu0
    %v4859 = vadd.f32 0.0, %v4858
    %4860 = vmatmul.bf16.gmra.mxu0 %v3684
    %v4861 = vpop.f32.mrf.mxu0
    %v4862 = vadd.f32 0.0, %v4861
    %v4863 = vpop.f32.mrf.mxu0
    %v4864 = vadd.f32 0.0, %v4863
    %4865 = vmatmul.bf16.gmra.mxu0 %v3687
    %v4866 = vpop.f32.mrf.mxu0
    %v4867 = vadd.f32 0.0, %v4866
    %v4868 = vpop.f32.mrf.mxu0
    %v4869 = vadd.f32 0.0, %v4868
    %4870 = vmatmul.bf16.gmra.mxu0 %v3690
    %v4871 = vpop.f32.mrf.mxu0
    %v4872 = vadd.f32 0.0, %v4871
    %v4873 = vpop.f32.mrf.mxu0
    %v4874 = vadd.f32 0.0, %v4873
    %4875 = vmatmul.bf16.gmra.mxu0 %v3924
    %v4876 = vpop.f32.mrf.mxu0
    %v4877 = vadd.f32 0.0, %v4876
    %v4878 = vpop.f32.mrf.mxu0
    %v4879 = vadd.f32 0.0, %v4878
    %4880 = vmatmul.bf16.gmra.mxu0 %v4200
    %v4881 = vpop.f32.mrf.mxu0
    %v4882 = vadd.f32 0.0, %v4881
    %v4883 = vpop.f32.mrf.mxu0
    %v4884 = vadd.f32 0.0, %v4883
    %4885 = vmatmul.bf16.gmra.mxu0 %v4203
    %v4886 = vpop.f32.mrf.mxu0
    %v4887 = vadd.f32 0.0, %v4886
    %v4888 = vpop.f32.mrf.mxu0
    %v4889 = vadd.f32 0.0, %v4888
    %4890 = vmatmul.bf16.gmra.mxu0 %v4206
    %v4891 = vpop.f32.mrf.mxu0
    %v4892 = vadd.f32 0.0, %v4891
    %v4893 = vpop.f32.mrf.mxu0
    %v4894 = vadd.f32 0.0, %v4893
    %4895 = vmatmul.bf16.gmra.mxu0 %v4730
    %v4896 = vpop.f32.mrf.mxu0
    %v4897 = vadd.f32 0.0, %v4896
    %v4898 = vpop.f32.mrf.mxu0
    %v4899 = vadd.f32 0.0, %v4898
    %4900 = vdwg.mxu0
    %v4901 = vadd.f32 %v4645, %v4742
    %v4902 = vadd.f32 %v4646, %v4744
    %v4903 = vadd.f32 %v4647, %v4747
    %v4904 = vadd.f32 %v4648, %v4749
    %v4905 = vadd.f32 %v4649, %v4752
    %v4906 = vadd.f32 %v4650, %v4754
    %v4907 = vadd.f32 %v4651, %v4757
    %v4908 = vadd.f32 %v4652, %v4759
    %v4909 = vadd.f32 %v4653, %v4762
    %v4910 = vadd.f32 %v4654, %v4764
    %v4911 = vadd.f32 %v4655, %v4767
    %v4912 = vadd.f32 %v4656, %v4769
    %v4913 = vadd.f32 %v4657, %v4772
    %v4914 = vadd.f32 %v4658, %v4774
    %v4915 = vadd.f32 %v4659, %v4777
    %v4916 = vadd.f32 %v4660, %v4779
    %v4917 = vadd.f32 %v4661, %v4782
    %v4918 = vadd.f32 %v4662, %v4784
    %v4919 = vadd.f32 %v4663, %v4787
    %v4920 = vadd.f32 %v4664, %v4789
    %v4921 = vadd.f32 %v4665, %v4792
    %v4922 = vadd.f32 %v4666, %v4794
    %v4923 = vadd.f32 %v4667, %v4797
    %v4924 = vadd.f32 %v4668, %v4799
    %v4925 = vadd.f32 %v4669, %v4802
    %v4926 = vadd.f32 %v4670, %v4804
    %v4927 = vadd.f32 %v4671, %v4807
    %v4928 = vadd.f32 %v4672, %v4809
    %v4929 = vadd.f32 %v4673, %v4812
    %v4930 = vadd.f32 %v4674, %v4814
    %v4931 = vadd.f32 %v4675, %v4817
    %v4932 = vadd.f32 %v4676, %v4819
    %v4933 = vadd.f32 %v4677, %v4822
    %v4934 = vadd.f32 %v4678, %v4824
    %v4935 = vadd.f32 %v4679, %v4827
    %v4936 = vadd.f32 %v4680, %v4829
    %v4937 = vadd.f32 %v4681, %v4832
    %v4938 = vadd.f32 %v4682, %v4834
    %v4939 = vadd.f32 %v4683, %v4837
    %v4940 = vadd.f32 %v4684, %v4839
    %v4941 = vadd.f32 %v4685, %v4842
    %v4942 = vadd.f32 %v4686, %v4844
    %v4943 = vadd.f32 %v4687, %v4847
    %v4944 = vadd.f32 %v4688, %v4849
    %v4945 = vadd.f32 %v4689, %v4852
    %v4946 = vadd.f32 %v4690, %v4854
    %v4947 = vadd.f32 %v4691, %v4857
    %v4948 = vadd.f32 %v4692, %v4859
    %v4949 = vadd.f32 %v4693, %v4862
    %v4950 = vadd.f32 %v4694, %v4864
    %v4951 = vadd.f32 %v4695, %v4867
    %v4952 = vadd.f32 %v4696, %v4869
    %v4953 = vadd.f32 %v4697, %v4872
    %v4954 = vadd.f32 %v4698, %v4874
    %v4955 = vadd.f32 %v4699, %v4877
    %v4956 = vadd.f32 %v4700, %v4879
    %v4957 = vadd.f32 %v4701, %v4882
    %v4958 = vadd.f32 %v4702, %v4884
    %v4959 = vadd.f32 %v4703, %v4887
    %v4960 = vadd.f32 %v4704, %v4889
    %v4961 = vadd.f32 %v4705, %v4892
    %v4962 = vadd.f32 %v4706, %v4894
    %v4963 = vadd.f32 %v4707, %v4897
    %v4964 = vadd.f32 %v4708, %v4899
    %s4965 = scalar_lea.vmem %s3, 96
    %v4966 = vld [vmem:[%s4965] sm:$0xf]
    %v4967 = vld [vmem:[%s4965 + $0x4] sm:$0xf]
    %v4968 = vld [vmem:[%s4965 + $0x8] sm:$0xf]
    %v4969 = vld [vmem:[%s4965 + $0xc] sm:$0xf]
    %v4978 = vunpack.c.l.b16 %v3080
    %v4979 = vunpack.c.l.b16 %v3081
    %v4980 = vunpack.c.l.b16 %v3082
    %v4981 = vunpack.c.l.b16 %v3083
    %v4982 = vunpack.c.l.b16 %v3084
    %v4983 = vunpack.c.l.b16 %v3085
    %v4984 = vunpack.c.l.b16 %v3086
    %v4985 = vunpack.c.l.b16 %v3087
    %v4986 = vpack.c.b16 %v4979, %v4978
    %v4987 = vpack.c.b16 %v4981, %v4980
    %v4988 = vpack.c.b16 %v4983, %v4982
    %v4989 = vpack.c.b16 %v4985, %v4984
    %v4994 = vunpack.c.l.b16 %v4966
    %v4995 = vunpack.c.l.b16 %v4967
    %v4996 = vunpack.c.l.b16 %v4968
    %v4997 = vunpack.c.l.b16 %v4969
    %v4998 = vpack.c.b16 %v4995, %v4994
    %v4999 = vpack.c.b16 %v4997, %v4996
    %v5003 = vsel %vm2244, %v4986, 0
    %v5006 = vsel %vm2244, %v4987, 0
    %v5009 = vsel %vm2244, %v4988, 0
    %v5012 = vsel %vm2244, %v4989, 0
    %5014 = vmatpush.bf16.msra.mxu0 0
    %5015 = vmatpush.bf16.msra.mxu0 0
    %5016 = vmatpush.bf16.msra.mxu0 0
    %5017 = vmatpush.bf16.msra.mxu0 0
    %5018 = vmatpush.bf16.msra.mxu0 0
    %5019 = vmatpush.bf16.msra.mxu0 0
    %5020 = vmatpush.bf16.msra.mxu0 %v4999
    %5021 = vmatpush.bf16.msra.mxu0 %v4998
    %5022 = vmatmul.bf16.gmra.mxu0 %v3621
    %v5023 = vpop.f32.mrf.mxu0
    %v5024 = vadd.f32 0.0, %v5023
    %v5025 = vpop.f32.mrf.mxu0
    %v5026 = vadd.f32 0.0, %v5025
    %5027 = vmatmul.bf16.gmra.mxu0 %v3624
    %v5028 = vpop.f32.mrf.mxu0
    %v5029 = vadd.f32 0.0, %v5028
    %v5030 = vpop.f32.mrf.mxu0
    %v5031 = vadd.f32 0.0, %v5030
    %5032 = vmatmul.bf16.gmra.mxu0 %v3627
    %v5033 = vpop.f32.mrf.mxu0
    %v5034 = vadd.f32 0.0, %v5033
    %v5035 = vpop.f32.mrf.mxu0
    %v5036 = vadd.f32 0.0, %v5035
    %5037 = vmatmul.bf16.gmra.mxu0 %v3630
    %v5038 = vpop.f32.mrf.mxu0
    %v5039 = vadd.f32 0.0, %v5038
    %v5040 = vpop.f32.mrf.mxu0
    %v5041 = vadd.f32 0.0, %v5040
    %5042 = vmatmul.bf16.gmra.mxu0 %v3633
    %v5043 = vpop.f32.mrf.mxu0
    %v5044 = vadd.f32 0.0, %v5043
    %v5045 = vpop.f32.mrf.mxu0
    %v5046 = vadd.f32 0.0, %v5045
    %5047 = vmatmul.bf16.gmra.mxu0 %v3636
    %v5048 = vpop.f32.mrf.mxu0
    %v5049 = vadd.f32 0.0, %v5048
    %v5050 = vpop.f32.mrf.mxu0
    %v5051 = vadd.f32 0.0, %v5050
    %5052 = vmatmul.bf16.gmra.mxu0 %v3639
    %v5053 = vpop.f32.mrf.mxu0
    %v5054 = vadd.f32 0.0, %v5053
    %v5055 = vpop.f32.mrf.mxu0
    %v5056 = vadd.f32 0.0, %v5055
    %5057 = vmatmul.bf16.gmra.mxu0 %v3642
    %v5058 = vpop.f32.mrf.mxu0
    %v5059 = vadd.f32 0.0, %v5058
    %v5060 = vpop.f32.mrf.mxu0
    %v5061 = vadd.f32 0.0, %v5060
    %5062 = vmatmul.bf16.gmra.mxu0 %v3645
    %v5063 = vpop.f32.mrf.mxu0
    %v5064 = vadd.f32 0.0, %v5063
    %v5065 = vpop.f32.mrf.mxu0
    %v5066 = vadd.f32 0.0, %v5065
    %5067 = vmatmul.bf16.gmra.mxu0 %v3648
    %v5068 = vpop.f32.mrf.mxu0
    %v5069 = vadd.f32 0.0, %v5068
    %v5070 = vpop.f32.mrf.mxu0
    %v5071 = vadd.f32 0.0, %v5070
    %5072 = vmatmul.bf16.gmra.mxu0 %v3651
    %v5073 = vpop.f32.mrf.mxu0
    %v5074 = vadd.f32 0.0, %v5073
    %v5075 = vpop.f32.mrf.mxu0
    %v5076 = vadd.f32 0.0, %v5075
    %5077 = vmatmul.bf16.gmra.mxu0 %v3654
    %v5078 = vpop.f32.mrf.mxu0
    %v5079 = vadd.f32 0.0, %v5078
    %v5080 = vpop.f32.mrf.mxu0
    %v5081 = vadd.f32 0.0, %v5080
    %5082 = vmatmul.bf16.gmra.mxu0 %v3657
    %v5083 = vpop.f32.mrf.mxu0
    %v5084 = vadd.f32 0.0, %v5083
    %v5085 = vpop.f32.mrf.mxu0
    %v5086 = vadd.f32 0.0, %v5085
    %5087 = vmatmul.bf16.gmra.mxu0 %v3660
    %v5088 = vpop.f32.mrf.mxu0
    %v5089 = vadd.f32 0.0, %v5088
    %v5090 = vpop.f32.mrf.mxu0
    %v5091 = vadd.f32 0.0, %v5090
    %5092 = vmatmul.bf16.gmra.mxu0 %v3663
    %v5093 = vpop.f32.mrf.mxu0
    %v5094 = vadd.f32 0.0, %v5093
    %v5095 = vpop.f32.mrf.mxu0
    %v5096 = vadd.f32 0.0, %v5095
    %5097 = vmatmul.bf16.gmra.mxu0 %v3666
    %v5098 = vpop.f32.mrf.mxu0
    %v5099 = vadd.f32 0.0, %v5098
    %v5100 = vpop.f32.mrf.mxu0
    %v5101 = vadd.f32 0.0, %v5100
    %5102 = vmatmul.bf16.gmra.mxu0 %v3669
    %v5103 = vpop.f32.mrf.mxu0
    %v5104 = vadd.f32 0.0, %v5103
    %v5105 = vpop.f32.mrf.mxu0
    %v5106 = vadd.f32 0.0, %v5105
    %5107 = vmatmul.bf16.gmra.mxu0 %v3672
    %v5108 = vpop.f32.mrf.mxu0
    %v5109 = vadd.f32 0.0, %v5108
    %v5110 = vpop.f32.mrf.mxu0
    %v5111 = vadd.f32 0.0, %v5110
    %5112 = vmatmul.bf16.gmra.mxu0 %v3675
    %v5113 = vpop.f32.mrf.mxu0
    %v5114 = vadd.f32 0.0, %v5113
    %v5115 = vpop.f32.mrf.mxu0
    %v5116 = vadd.f32 0.0, %v5115
    %5117 = vmatmul.bf16.gmra.mxu0 %v3678
    %v5118 = vpop.f32.mrf.mxu0
    %v5119 = vadd.f32 0.0, %v5118
    %v5120 = vpop.f32.mrf.mxu0
    %v5121 = vadd.f32 0.0, %v5120
    %5122 = vmatmul.bf16.gmra.mxu0 %v3681
    %v5123 = vpop.f32.mrf.mxu0
    %v5124 = vadd.f32 0.0, %v5123
    %v5125 = vpop.f32.mrf.mxu0
    %v5126 = vadd.f32 0.0, %v5125
    %5127 = vmatmul.bf16.gmra.mxu0 %v3684
    %v5128 = vpop.f32.mrf.mxu0
    %v5129 = vadd.f32 0.0, %v5128
    %v5130 = vpop.f32.mrf.mxu0
    %v5131 = vadd.f32 0.0, %v5130
    %5132 = vmatmul.bf16.gmra.mxu0 %v3687
    %v5133 = vpop.f32.mrf.mxu0
    %v5134 = vadd.f32 0.0, %v5133
    %v5135 = vpop.f32.mrf.mxu0
    %v5136 = vadd.f32 0.0, %v5135
    %5137 = vmatmul.bf16.gmra.mxu0 %v3690
    %v5138 = vpop.f32.mrf.mxu0
    %v5139 = vadd.f32 0.0, %v5138
    %v5140 = vpop.f32.mrf.mxu0
    %v5141 = vadd.f32 0.0, %v5140
    %5142 = vmatmul.bf16.gmra.mxu0 %v4197
    %v5143 = vpop.f32.mrf.mxu0
    %v5144 = vadd.f32 0.0, %v5143
    %v5145 = vpop.f32.mrf.mxu0
    %v5146 = vadd.f32 0.0, %v5145
    %5147 = vmatmul.bf16.gmra.mxu0 %v4200
    %v5148 = vpop.f32.mrf.mxu0
    %v5149 = vadd.f32 0.0, %v5148
    %v5150 = vpop.f32.mrf.mxu0
    %v5151 = vadd.f32 0.0, %v5150
    %5152 = vmatmul.bf16.gmra.mxu0 %v4203
    %v5153 = vpop.f32.mrf.mxu0
    %v5154 = vadd.f32 0.0, %v5153
    %v5155 = vpop.f32.mrf.mxu0
    %v5156 = vadd.f32 0.0, %v5155
    %5157 = vmatmul.bf16.gmra.mxu0 %v4206
    %v5158 = vpop.f32.mrf.mxu0
    %v5159 = vadd.f32 0.0, %v5158
    %v5160 = vpop.f32.mrf.mxu0
    %v5161 = vadd.f32 0.0, %v5160
    %5162 = vmatmul.bf16.gmra.mxu0 %v5003
    %v5163 = vpop.f32.mrf.mxu0
    %v5164 = vadd.f32 0.0, %v5163
    %v5165 = vpop.f32.mrf.mxu0
    %v5166 = vadd.f32 0.0, %v5165
    %5167 = vmatmul.bf16.gmra.mxu0 %v5006
    %v5168 = vpop.f32.mrf.mxu0
    %v5169 = vadd.f32 0.0, %v5168
    %v5170 = vpop.f32.mrf.mxu0
    %v5171 = vadd.f32 0.0, %v5170
    %5172 = vmatmul.bf16.gmra.mxu0 %v5009
    %v5173 = vpop.f32.mrf.mxu0
    %v5174 = vadd.f32 0.0, %v5173
    %v5175 = vpop.f32.mrf.mxu0
    %v5176 = vadd.f32 0.0, %v5175
    %5177 = vmatmul.bf16.gmra.mxu0 %v5012
    %v5178 = vpop.f32.mrf.mxu0
    %v5179 = vadd.f32 0.0, %v5178
    %v5180 = vpop.f32.mrf.mxu0
    %v5181 = vadd.f32 0.0, %v5180
    %5182 = vdwg.mxu0
    %v5183 = vadd.f32 %v4901, %v5024
    %v5184 = vadd.f32 %v4902, %v5026
    %v5185 = vadd.f32 %v4903, %v5029
    %v5186 = vadd.f32 %v4904, %v5031
    %v5187 = vadd.f32 %v4905, %v5034
    %v5188 = vadd.f32 %v4906, %v5036
    %v5189 = vadd.f32 %v4907, %v5039
    %v5190 = vadd.f32 %v4908, %v5041
    %v5191 = vadd.f32 %v4909, %v5044
    %v5192 = vadd.f32 %v4910, %v5046
    %v5193 = vadd.f32 %v4911, %v5049
    %v5194 = vadd.f32 %v4912, %v5051
    %v5195 = vadd.f32 %v4913, %v5054
    %v5196 = vadd.f32 %v4914, %v5056
    %v5197 = vadd.f32 %v4915, %v5059
    %v5198 = vadd.f32 %v4916, %v5061
    %v5199 = vadd.f32 %v4917, %v5064
    %v5200 = vadd.f32 %v4918, %v5066
    %v5201 = vadd.f32 %v4919, %v5069
    %v5202 = vadd.f32 %v4920, %v5071
    %v5203 = vadd.f32 %v4921, %v5074
    %v5204 = vadd.f32 %v4922, %v5076
    %v5205 = vadd.f32 %v4923, %v5079
    %v5206 = vadd.f32 %v4924, %v5081
    %v5207 = vadd.f32 %v4925, %v5084
    %v5208 = vadd.f32 %v4926, %v5086
    %v5209 = vadd.f32 %v4927, %v5089
    %v5210 = vadd.f32 %v4928, %v5091
    %v5211 = vadd.f32 %v4929, %v5094
    %v5212 = vadd.f32 %v4930, %v5096
    %v5213 = vadd.f32 %v4931, %v5099
    %v5214 = vadd.f32 %v4932, %v5101
    %v5215 = vadd.f32 %v4933, %v5104
    %v5216 = vadd.f32 %v4934, %v5106
    %v5217 = vadd.f32 %v4935, %v5109
    %v5218 = vadd.f32 %v4936, %v5111
    %v5219 = vadd.f32 %v4937, %v5114
    %v5220 = vadd.f32 %v4938, %v5116
    %v5221 = vadd.f32 %v4939, %v5119
    %v5222 = vadd.f32 %v4940, %v5121
    %v5223 = vadd.f32 %v4941, %v5124
    %v5224 = vadd.f32 %v4942, %v5126
    %v5225 = vadd.f32 %v4943, %v5129
    %v5226 = vadd.f32 %v4944, %v5131
    %v5227 = vadd.f32 %v4945, %v5134
    %v5228 = vadd.f32 %v4946, %v5136
    %v5229 = vadd.f32 %v4947, %v5139
    %v5230 = vadd.f32 %v4948, %v5141
    %v5231 = vadd.f32 %v4949, %v5144
    %v5232 = vadd.f32 %v4950, %v5146
    %v5233 = vadd.f32 %v4951, %v5149
    %v5234 = vadd.f32 %v4952, %v5151
    %v5235 = vadd.f32 %v4953, %v5154
    %v5236 = vadd.f32 %v4954, %v5156
    %v5237 = vadd.f32 %v4955, %v5159
    %v5238 = vadd.f32 %v4956, %v5161
    %v5239 = vadd.f32 %v4957, %v5164
    %v5240 = vadd.f32 %v4958, %v5166
    %v5241 = vadd.f32 %v4959, %v5169
    %v5242 = vadd.f32 %v4960, %v5171
    %v5243 = vadd.f32 %v4961, %v5174
    %v5244 = vadd.f32 %v4962, %v5176
    %v5245 = vadd.f32 %v4963, %v5179
    %v5246 = vadd.f32 %v4964, %v5181
    %s5247 = scalar_lea.vmem %s3, 112
    %v5248 = vld [vmem:[%s5247] sm:$0xf]
    %v5249 = vld [vmem:[%s5247 + $0x4] sm:$0xf]
    %v5250 = vld [vmem:[%s5247 + $0x8] sm:$0xf]
    %v5251 = vld [vmem:[%s5247 + $0xc] sm:$0xf]
    %v5253 = vunpack.c.l.b16 %v3088
    %v5254 = vpack.c.b16 %v4980, %v4979
    %v5255 = vpack.c.b16 %v4982, %v4981
    %v5256 = vpack.c.b16 %v4984, %v4983
    %v5257 = vpack.c.b16 %v5253, %v4985
    %v5262 = vunpack.c.l.b16 %v5248
    %v5263 = vunpack.c.l.b16 %v5249
    %v5264 = vunpack.c.l.b16 %v5250
    %v5265 = vunpack.c.l.b16 %v5251
    %v5266 = vpack.c.b16 %v5263, %v5262
    %v5267 = vpack.c.b16 %v5265, %v5264
    %v5271 = vsel %vm2244, %v5254, 0
    %v5274 = vsel %vm2244, %v5255, 0
    %v5277 = vsel %vm2244, %v5256, 0
    %v5280 = vsel %vm2244, %v5257, 0
    %5282 = vmatpush.bf16.msra.mxu0 0
    %5283 = vmatpush.bf16.msra.mxu0 0
    %5284 = vmatpush.bf16.msra.mxu0 0
    %5285 = vmatpush.bf16.msra.mxu0 0
    %5286 = vmatpush.bf16.msra.mxu0 0
    %5287 = vmatpush.bf16.msra.mxu0 0
    %5288 = vmatpush.bf16.msra.mxu0 %v5267
    %5289 = vmatpush.bf16.msra.mxu0 %v5266
    %5290 = vmatmul.bf16.gmra.mxu0 %v3296
    %v5291 = vpop.f32.mrf.mxu0
    %v5292 = vadd.f32 0.0, %v5291
    %v5293 = vpop.f32.mrf.mxu0
    %v5294 = vadd.f32 0.0, %v5293
    %5295 = vmatmul.bf16.gmra.mxu0 %v3299
    %v5296 = vpop.f32.mrf.mxu0
    %v5297 = vadd.f32 0.0, %v5296
    %v5298 = vpop.f32.mrf.mxu0
    %v5299 = vadd.f32 0.0, %v5298
    %5300 = vmatmul.bf16.gmra.mxu0 %v3302
    %v5301 = vpop.f32.mrf.mxu0
    %v5302 = vadd.f32 0.0, %v5301
    %v5303 = vpop.f32.mrf.mxu0
    %v5304 = vadd.f32 0.0, %v5303
    %5305 = vmatmul.bf16.gmra.mxu0 %v3305
    %v5306 = vpop.f32.mrf.mxu0
    %v5307 = vadd.f32 0.0, %v5306
    %v5308 = vpop.f32.mrf.mxu0
    %v5309 = vadd.f32 0.0, %v5308
    %5310 = vmatmul.bf16.gmra.mxu0 %v3308
    %v5311 = vpop.f32.mrf.mxu0
    %v5312 = vadd.f32 0.0, %v5311
    %v5313 = vpop.f32.mrf.mxu0
    %v5314 = vadd.f32 0.0, %v5313
    %5315 = vmatmul.bf16.gmra.mxu0 %v3311
    %v5316 = vpop.f32.mrf.mxu0
    %v5317 = vadd.f32 0.0, %v5316
    %v5318 = vpop.f32.mrf.mxu0
    %v5319 = vadd.f32 0.0, %v5318
    %5320 = vmatmul.bf16.gmra.mxu0 %v3314
    %v5321 = vpop.f32.mrf.mxu0
    %v5322 = vadd.f32 0.0, %v5321
    %v5323 = vpop.f32.mrf.mxu0
    %v5324 = vadd.f32 0.0, %v5323
    %5325 = vmatmul.bf16.gmra.mxu0 %v3317
    %v5326 = vpop.f32.mrf.mxu0
    %v5327 = vadd.f32 0.0, %v5326
    %v5328 = vpop.f32.mrf.mxu0
    %v5329 = vadd.f32 0.0, %v5328
    %5330 = vmatmul.bf16.gmra.mxu0 %v3320
    %v5331 = vpop.f32.mrf.mxu0
    %v5332 = vadd.f32 0.0, %v5331
    %v5333 = vpop.f32.mrf.mxu0
    %v5334 = vadd.f32 0.0, %v5333
    %5335 = vmatmul.bf16.gmra.mxu0 %v3323
    %v5336 = vpop.f32.mrf.mxu0
    %v5337 = vadd.f32 0.0, %v5336
    %v5338 = vpop.f32.mrf.mxu0
    %v5339 = vadd.f32 0.0, %v5338
    %5340 = vmatmul.bf16.gmra.mxu0 %v3326
    %v5341 = vpop.f32.mrf.mxu0
    %v5342 = vadd.f32 0.0, %v5341
    %v5343 = vpop.f32.mrf.mxu0
    %v5344 = vadd.f32 0.0, %v5343
    %5345 = vmatmul.bf16.gmra.mxu0 %v3329
    %v5346 = vpop.f32.mrf.mxu0
    %v5347 = vadd.f32 0.0, %v5346
    %v5348 = vpop.f32.mrf.mxu0
    %v5349 = vadd.f32 0.0, %v5348
    %5350 = vmatmul.bf16.gmra.mxu0 %v3332
    %v5351 = vpop.f32.mrf.mxu0
    %v5352 = vadd.f32 0.0, %v5351
    %v5353 = vpop.f32.mrf.mxu0
    %v5354 = vadd.f32 0.0, %v5353
    %5355 = vmatmul.bf16.gmra.mxu0 %v3335
    %v5356 = vpop.f32.mrf.mxu0
    %v5357 = vadd.f32 0.0, %v5356
    %v5358 = vpop.f32.mrf.mxu0
    %v5359 = vadd.f32 0.0, %v5358
    %5360 = vmatmul.bf16.gmra.mxu0 %v3338
    %v5361 = vpop.f32.mrf.mxu0
    %v5362 = vadd.f32 0.0, %v5361
    %v5363 = vpop.f32.mrf.mxu0
    %v5364 = vadd.f32 0.0, %v5363
    %5365 = vmatmul.bf16.gmra.mxu0 %v3341
    %v5366 = vpop.f32.mrf.mxu0
    %v5367 = vadd.f32 0.0, %v5366
    %v5368 = vpop.f32.mrf.mxu0
    %v5369 = vadd.f32 0.0, %v5368
    %5370 = vmatmul.bf16.gmra.mxu0 %v3344
    %v5371 = vpop.f32.mrf.mxu0
    %v5372 = vadd.f32 0.0, %v5371
    %v5373 = vpop.f32.mrf.mxu0
    %v5374 = vadd.f32 0.0, %v5373
    %5375 = vmatmul.bf16.gmra.mxu0 %v3347
    %v5376 = vpop.f32.mrf.mxu0
    %v5377 = vadd.f32 0.0, %v5376
    %v5378 = vpop.f32.mrf.mxu0
    %v5379 = vadd.f32 0.0, %v5378
    %5380 = vmatmul.bf16.gmra.mxu0 %v3350
    %v5381 = vpop.f32.mrf.mxu0
    %v5382 = vadd.f32 0.0, %v5381
    %v5383 = vpop.f32.mrf.mxu0
    %v5384 = vadd.f32 0.0, %v5383
    %5385 = vmatmul.bf16.gmra.mxu0 %v3353
    %v5386 = vpop.f32.mrf.mxu0
    %v5387 = vadd.f32 0.0, %v5386
    %v5388 = vpop.f32.mrf.mxu0
    %v5389 = vadd.f32 0.0, %v5388
    %5390 = vmatmul.bf16.gmra.mxu0 %v3356
    %v5391 = vpop.f32.mrf.mxu0
    %v5392 = vadd.f32 0.0, %v5391
    %v5393 = vpop.f32.mrf.mxu0
    %v5394 = vadd.f32 0.0, %v5393
    %5395 = vmatmul.bf16.gmra.mxu0 %v3359
    %v5396 = vpop.f32.mrf.mxu0
    %v5397 = vadd.f32 0.0, %v5396
    %v5398 = vpop.f32.mrf.mxu0
    %v5399 = vadd.f32 0.0, %v5398
    %5400 = vmatmul.bf16.gmra.mxu0 %v3362
    %v5401 = vpop.f32.mrf.mxu0
    %v5402 = vadd.f32 0.0, %v5401
    %v5403 = vpop.f32.mrf.mxu0
    %v5404 = vadd.f32 0.0, %v5403
    %5405 = vmatmul.bf16.gmra.mxu0 %v3365
    %v5406 = vpop.f32.mrf.mxu0
    %v5407 = vadd.f32 0.0, %v5406
    %v5408 = vpop.f32.mrf.mxu0
    %v5409 = vadd.f32 0.0, %v5408
    %5410 = vmatmul.bf16.gmra.mxu0 %v4465
    %v5411 = vpop.f32.mrf.mxu0
    %v5412 = vadd.f32 0.0, %v5411
    %v5413 = vpop.f32.mrf.mxu0
    %v5414 = vadd.f32 0.0, %v5413
    %5415 = vmatmul.bf16.gmra.mxu0 %v4468
    %v5416 = vpop.f32.mrf.mxu0
    %v5417 = vadd.f32 0.0, %v5416
    %v5418 = vpop.f32.mrf.mxu0
    %v5419 = vadd.f32 0.0, %v5418
    %5420 = vmatmul.bf16.gmra.mxu0 %v4471
    %v5421 = vpop.f32.mrf.mxu0
    %v5422 = vadd.f32 0.0, %v5421
    %v5423 = vpop.f32.mrf.mxu0
    %v5424 = vadd.f32 0.0, %v5423
    %5425 = vmatmul.bf16.gmra.mxu0 %v4474
    %v5426 = vpop.f32.mrf.mxu0
    %v5427 = vadd.f32 0.0, %v5426
    %v5428 = vpop.f32.mrf.mxu0
    %v5429 = vadd.f32 0.0, %v5428
    %5430 = vmatmul.bf16.gmra.mxu0 %v5271
    %v5431 = vpop.f32.mrf.mxu0
    %v5432 = vadd.f32 0.0, %v5431
    %v5433 = vpop.f32.mrf.mxu0
    %v5434 = vadd.f32 0.0, %v5433
    %5435 = vmatmul.bf16.gmra.mxu0 %v5274
    %v5436 = vpop.f32.mrf.mxu0
    %v5437 = vadd.f32 0.0, %v5436
    %v5438 = vpop.f32.mrf.mxu0
    %v5439 = vadd.f32 0.0, %v5438
    %5440 = vmatmul.bf16.gmra.mxu0 %v5277
    %v5441 = vpop.f32.mrf.mxu0
    %v5442 = vadd.f32 0.0, %v5441
    %v5443 = vpop.f32.mrf.mxu0
    %v5444 = vadd.f32 0.0, %v5443
    %5445 = vmatmul.bf16.gmra.mxu0 %v5280
    %v5446 = vpop.f32.mrf.mxu0
    %v5447 = vadd.f32 0.0, %v5446
    %v5448 = vpop.f32.mrf.mxu0
    %v5449 = vadd.f32 0.0, %v5448
    %5450 = vdwg.mxu0
    %v5451 = vadd.f32 %v5183, %v5292
    %v5452 = vadd.f32 %v5184, %v5294
    %v5453 = vadd.f32 %v5185, %v5297
    %v5454 = vadd.f32 %v5186, %v5299
    %v5455 = vadd.f32 %v5187, %v5302
    %v5456 = vadd.f32 %v5188, %v5304
    %v5457 = vadd.f32 %v5189, %v5307
    %v5458 = vadd.f32 %v5190, %v5309
    %v5459 = vadd.f32 %v5191, %v5312
    %v5460 = vadd.f32 %v5192, %v5314
    %v5461 = vadd.f32 %v5193, %v5317
    %v5462 = vadd.f32 %v5194, %v5319
    %v5463 = vadd.f32 %v5195, %v5322
    %v5464 = vadd.f32 %v5196, %v5324
    %v5465 = vadd.f32 %v5197, %v5327
    %v5466 = vadd.f32 %v5198, %v5329
    %v5467 = vadd.f32 %v5199, %v5332
    %v5468 = vadd.f32 %v5200, %v5334
    %v5469 = vadd.f32 %v5201, %v5337
    %v5470 = vadd.f32 %v5202, %v5339
    %v5471 = vadd.f32 %v5203, %v5342
    %v5472 = vadd.f32 %v5204, %v5344
    %v5473 = vadd.f32 %v5205, %v5347
    %v5474 = vadd.f32 %v5206, %v5349
    %v5475 = vadd.f32 %v5207, %v5352
    %v5476 = vadd.f32 %v5208, %v5354
    %v5477 = vadd.f32 %v5209, %v5357
    %v5478 = vadd.f32 %v5210, %v5359
    %v5479 = vadd.f32 %v5211, %v5362
    %v5480 = vadd.f32 %v5212, %v5364
    %v5481 = vadd.f32 %v5213, %v5367
    %v5482 = vadd.f32 %v5214, %v5369
    %v5483 = vadd.f32 %v5215, %v5372
    %v5484 = vadd.f32 %v5216, %v5374
    %v5485 = vadd.f32 %v5217, %v5377
    %v5486 = vadd.f32 %v5218, %v5379
    %v5487 = vadd.f32 %v5219, %v5382
    %v5488 = vadd.f32 %v5220, %v5384
    %v5489 = vadd.f32 %v5221, %v5387
    %v5490 = vadd.f32 %v5222, %v5389
    %v5491 = vadd.f32 %v5223, %v5392
    %v5492 = vadd.f32 %v5224, %v5394
    %v5493 = vadd.f32 %v5225, %v5397
    %v5494 = vadd.f32 %v5226, %v5399
    %v5495 = vadd.f32 %v5227, %v5402
    %v5496 = vadd.f32 %v5228, %v5404
    %v5497 = vadd.f32 %v5229, %v5407
    %v5498 = vadd.f32 %v5230, %v5409
    %v5499 = vadd.f32 %v5231, %v5412
    %v5500 = vadd.f32 %v5232, %v5414
    %v5501 = vadd.f32 %v5233, %v5417
    %v5502 = vadd.f32 %v5234, %v5419
    %v5503 = vadd.f32 %v5235, %v5422
    %v5504 = vadd.f32 %v5236, %v5424
    %v5505 = vadd.f32 %v5237, %v5427
    %v5506 = vadd.f32 %v5238, %v5429
    %v5507 = vadd.f32 %v5239, %v5432
    %v5508 = vadd.f32 %v5240, %v5434
    %v5509 = vadd.f32 %v5241, %v5437
    %v5510 = vadd.f32 %v5242, %v5439
    %v5511 = vadd.f32 %v5243, %v5442
    %v5512 = vadd.f32 %v5244, %v5444
    %v5513 = vadd.f32 %v5245, %v5447
    %v5514 = vadd.f32 %v5246, %v5449
    %s5515 = scalar_lea.vmem %s3, 128
    %v5516 = vld [vmem:[%s5515] sm:$0xf]
    %v5517 = vld [vmem:[%s5515 + $0x4] sm:$0xf]
    %v5518 = vld [vmem:[%s5515 + $0x8] sm:$0xf]
    %v5519 = vld [vmem:[%s5515 + $0xc] sm:$0xf]
    %v5521 = vunpack.c.l.b16 %v3089
    %v5522 = vpack.c.b16 %v5521, %v5253
    %v5527 = vunpack.c.l.b16 %v5516
    %v5528 = vunpack.c.l.b16 %v5517
    %v5529 = vunpack.c.l.b16 %v5518
    %v5530 = vunpack.c.l.b16 %v5519
    %v5531 = vpack.c.b16 %v5528, %v5527
    %v5532 = vpack.c.b16 %v5530, %v5529
    %v5536 = vsel %vm2244, %v5522, 0
    %5538 = vmatpush.bf16.msra.mxu0 0
    %5539 = vmatpush.bf16.msra.mxu0 0
    %5540 = vmatpush.bf16.msra.mxu0 0
    %5541 = vmatpush.bf16.msra.mxu0 0
    %5542 = vmatpush.bf16.msra.mxu0 0
    %5543 = vmatpush.bf16.msra.mxu0 0
    %5544 = vmatpush.bf16.msra.mxu0 %v5532
    %5545 = vmatpush.bf16.msra.mxu0 %v5531
    %5546 = vmatmul.bf16.gmra.mxu0 %v3624
    %v5547 = vpop.f32.mrf.mxu0
    %v5548 = vadd.f32 0.0, %v5547
    %v5549 = vpop.f32.mrf.mxu0
    %v5550 = vadd.f32 0.0, %v5549
    %5551 = vmatmul.bf16.gmra.mxu0 %v3627
    %v5552 = vpop.f32.mrf.mxu0
    %v5553 = vadd.f32 0.0, %v5552
    %v5554 = vpop.f32.mrf.mxu0
    %v5555 = vadd.f32 0.0, %v5554
    %5556 = vmatmul.bf16.gmra.mxu0 %v3630
    %v5557 = vpop.f32.mrf.mxu0
    %v5558 = vadd.f32 0.0, %v5557
    %v5559 = vpop.f32.mrf.mxu0
    %v5560 = vadd.f32 0.0, %v5559
    %5561 = vmatmul.bf16.gmra.mxu0 %v3909
    %v5562 = vpop.f32.mrf.mxu0
    %v5563 = vadd.f32 0.0, %v5562
    %v5564 = vpop.f32.mrf.mxu0
    %v5565 = vadd.f32 0.0, %v5564
    %5566 = vmatmul.bf16.gmra.mxu0 %v3636
    %v5567 = vpop.f32.mrf.mxu0
    %v5568 = vadd.f32 0.0, %v5567
    %v5569 = vpop.f32.mrf.mxu0
    %v5570 = vadd.f32 0.0, %v5569
    %5571 = vmatmul.bf16.gmra.mxu0 %v3639
    %v5572 = vpop.f32.mrf.mxu0
    %v5573 = vadd.f32 0.0, %v5572
    %v5574 = vpop.f32.mrf.mxu0
    %v5575 = vadd.f32 0.0, %v5574
    %5576 = vmatmul.bf16.gmra.mxu0 %v3642
    %v5577 = vpop.f32.mrf.mxu0
    %v5578 = vadd.f32 0.0, %v5577
    %v5579 = vpop.f32.mrf.mxu0
    %v5580 = vadd.f32 0.0, %v5579
    %5581 = vmatmul.bf16.gmra.mxu0 %v3912
    %v5582 = vpop.f32.mrf.mxu0
    %v5583 = vadd.f32 0.0, %v5582
    %v5584 = vpop.f32.mrf.mxu0
    %v5585 = vadd.f32 0.0, %v5584
    %5586 = vmatmul.bf16.gmra.mxu0 %v3648
    %v5587 = vpop.f32.mrf.mxu0
    %v5588 = vadd.f32 0.0, %v5587
    %v5589 = vpop.f32.mrf.mxu0
    %v5590 = vadd.f32 0.0, %v5589
    %5591 = vmatmul.bf16.gmra.mxu0 %v3651
    %v5592 = vpop.f32.mrf.mxu0
    %v5593 = vadd.f32 0.0, %v5592
    %v5594 = vpop.f32.mrf.mxu0
    %v5595 = vadd.f32 0.0, %v5594
    %5596 = vmatmul.bf16.gmra.mxu0 %v3654
    %v5597 = vpop.f32.mrf.mxu0
    %v5598 = vadd.f32 0.0, %v5597
    %v5599 = vpop.f32.mrf.mxu0
    %v5600 = vadd.f32 0.0, %v5599
    %5601 = vmatmul.bf16.gmra.mxu0 %v3915
    %v5602 = vpop.f32.mrf.mxu0
    %v5603 = vadd.f32 0.0, %v5602
    %v5604 = vpop.f32.mrf.mxu0
    %v5605 = vadd.f32 0.0, %v5604
    %5606 = vmatmul.bf16.gmra.mxu0 %v3660
    %v5607 = vpop.f32.mrf.mxu0
    %v5608 = vadd.f32 0.0, %v5607
    %v5609 = vpop.f32.mrf.mxu0
    %v5610 = vadd.f32 0.0, %v5609
    %5611 = vmatmul.bf16.gmra.mxu0 %v3663
    %v5612 = vpop.f32.mrf.mxu0
    %v5613 = vadd.f32 0.0, %v5612
    %v5614 = vpop.f32.mrf.mxu0
    %v5615 = vadd.f32 0.0, %v5614
    %5616 = vmatmul.bf16.gmra.mxu0 %v3666
    %v5617 = vpop.f32.mrf.mxu0
    %v5618 = vadd.f32 0.0, %v5617
    %v5619 = vpop.f32.mrf.mxu0
    %v5620 = vadd.f32 0.0, %v5619
    %5621 = vmatmul.bf16.gmra.mxu0 %v3918
    %v5622 = vpop.f32.mrf.mxu0
    %v5623 = vadd.f32 0.0, %v5622
    %v5624 = vpop.f32.mrf.mxu0
    %v5625 = vadd.f32 0.0, %v5624
    %5626 = vmatmul.bf16.gmra.mxu0 %v3672
    %v5627 = vpop.f32.mrf.mxu0
    %v5628 = vadd.f32 0.0, %v5627
    %v5629 = vpop.f32.mrf.mxu0
    %v5630 = vadd.f32 0.0, %v5629
    %5631 = vmatmul.bf16.gmra.mxu0 %v3675
    %v5632 = vpop.f32.mrf.mxu0
    %v5633 = vadd.f32 0.0, %v5632
    %v5634 = vpop.f32.mrf.mxu0
    %v5635 = vadd.f32 0.0, %v5634
    %5636 = vmatmul.bf16.gmra.mxu0 %v3678
    %v5637 = vpop.f32.mrf.mxu0
    %v5638 = vadd.f32 0.0, %v5637
    %v5639 = vpop.f32.mrf.mxu0
    %v5640 = vadd.f32 0.0, %v5639
    %5641 = vmatmul.bf16.gmra.mxu0 %v3921
    %v5642 = vpop.f32.mrf.mxu0
    %v5643 = vadd.f32 0.0, %v5642
    %v5644 = vpop.f32.mrf.mxu0
    %v5645 = vadd.f32 0.0, %v5644
    %5646 = vmatmul.bf16.gmra.mxu0 %v3684
    %v5647 = vpop.f32.mrf.mxu0
    %v5648 = vadd.f32 0.0, %v5647
    %v5649 = vpop.f32.mrf.mxu0
    %v5650 = vadd.f32 0.0, %v5649
    %5651 = vmatmul.bf16.gmra.mxu0 %v3687
    %v5652 = vpop.f32.mrf.mxu0
    %v5653 = vadd.f32 0.0, %v5652
    %v5654 = vpop.f32.mrf.mxu0
    %v5655 = vadd.f32 0.0, %v5654
    %5656 = vmatmul.bf16.gmra.mxu0 %v3690
    %v5657 = vpop.f32.mrf.mxu0
    %v5658 = vadd.f32 0.0, %v5657
    %v5659 = vpop.f32.mrf.mxu0
    %v5660 = vadd.f32 0.0, %v5659
    %5661 = vmatmul.bf16.gmra.mxu0 %v3924
    %v5662 = vpop.f32.mrf.mxu0
    %v5663 = vadd.f32 0.0, %v5662
    %v5664 = vpop.f32.mrf.mxu0
    %v5665 = vadd.f32 0.0, %v5664
    %5666 = vmatmul.bf16.gmra.mxu0 %v4200
    %v5667 = vpop.f32.mrf.mxu0
    %v5668 = vadd.f32 0.0, %v5667
    %v5669 = vpop.f32.mrf.mxu0
    %v5670 = vadd.f32 0.0, %v5669
    %5671 = vmatmul.bf16.gmra.mxu0 %v4203
    %v5672 = vpop.f32.mrf.mxu0
    %v5673 = vadd.f32 0.0, %v5672
    %v5674 = vpop.f32.mrf.mxu0
    %v5675 = vadd.f32 0.0, %v5674
    %5676 = vmatmul.bf16.gmra.mxu0 %v4206
    %v5677 = vpop.f32.mrf.mxu0
    %v5678 = vadd.f32 0.0, %v5677
    %v5679 = vpop.f32.mrf.mxu0
    %v5680 = vadd.f32 0.0, %v5679
    %5681 = vmatmul.bf16.gmra.mxu0 %v4730
    %v5682 = vpop.f32.mrf.mxu0
    %v5683 = vadd.f32 0.0, %v5682
    %v5684 = vpop.f32.mrf.mxu0
    %v5685 = vadd.f32 0.0, %v5684
    %5686 = vmatmul.bf16.gmra.mxu0 %v5006
    %v5687 = vpop.f32.mrf.mxu0
    %v5688 = vadd.f32 0.0, %v5687
    %v5689 = vpop.f32.mrf.mxu0
    %v5690 = vadd.f32 0.0, %v5689
    %5691 = vmatmul.bf16.gmra.mxu0 %v5009
    %v5692 = vpop.f32.mrf.mxu0
    %v5693 = vadd.f32 0.0, %v5692
    %v5694 = vpop.f32.mrf.mxu0
    %v5695 = vadd.f32 0.0, %v5694
    %5696 = vmatmul.bf16.gmra.mxu0 %v5012
    %v5697 = vpop.f32.mrf.mxu0
    %v5698 = vadd.f32 0.0, %v5697
    %v5699 = vpop.f32.mrf.mxu0
    %v5700 = vadd.f32 0.0, %v5699
    %5701 = vmatmul.bf16.gmra.mxu0 %v5536
    %v5702 = vpop.f32.mrf.mxu0
    %v5703 = vadd.f32 0.0, %v5702
    %v5704 = vpop.f32.mrf.mxu0
    %v5705 = vadd.f32 0.0, %v5704
    %5706 = vdwg.mxu0
    %v5707 = vadd.f32 %v5451, %v5548
    %v5708 = vadd.f32 %v5452, %v5550
    %v5709 = vadd.f32 %v5453, %v5553
    %v5710 = vadd.f32 %v5454, %v5555
    %v5711 = vadd.f32 %v5455, %v5558
    %v5712 = vadd.f32 %v5456, %v5560
    %v5713 = vadd.f32 %v5457, %v5563
    %v5714 = vadd.f32 %v5458, %v5565
    %v5715 = vadd.f32 %v5459, %v5568
    %v5716 = vadd.f32 %v5460, %v5570
    %v5717 = vadd.f32 %v5461, %v5573
    %v5718 = vadd.f32 %v5462, %v5575
    %v5719 = vadd.f32 %v5463, %v5578
    %v5720 = vadd.f32 %v5464, %v5580
    %v5721 = vadd.f32 %v5465, %v5583
    %v5722 = vadd.f32 %v5466, %v5585
    %v5723 = vadd.f32 %v5467, %v5588
    %v5724 = vadd.f32 %v5468, %v5590
    %v5725 = vadd.f32 %v5469, %v5593
    %v5726 = vadd.f32 %v5470, %v5595
    %v5727 = vadd.f32 %v5471, %v5598
    %v5728 = vadd.f32 %v5472, %v5600
    %v5729 = vadd.f32 %v5473, %v5603
    %v5730 = vadd.f32 %v5474, %v5605
    %v5731 = vadd.f32 %v5475, %v5608
    %v5732 = vadd.f32 %v5476, %v5610
    %v5733 = vadd.f32 %v5477, %v5613
    %v5734 = vadd.f32 %v5478, %v5615
    %v5735 = vadd.f32 %v5479, %v5618
    %v5736 = vadd.f32 %v5480, %v5620
    %v5737 = vadd.f32 %v5481, %v5623
    %v5738 = vadd.f32 %v5482, %v5625
    %v5739 = vadd.f32 %v5483, %v5628
    %v5740 = vadd.f32 %v5484, %v5630
    %v5741 = vadd.f32 %v5485, %v5633
    %v5742 = vadd.f32 %v5486, %v5635
    %v5743 = vadd.f32 %v5487, %v5638
    %v5744 = vadd.f32 %v5488, %v5640
    %v5745 = vadd.f32 %v5489, %v5643
    %v5746 = vadd.f32 %v5490, %v5645
    %v5747 = vadd.f32 %v5491, %v5648
    %v5748 = vadd.f32 %v5492, %v5650
    %v5749 = vadd.f32 %v5493, %v5653
    %v5750 = vadd.f32 %v5494, %v5655
    %v5751 = vadd.f32 %v5495, %v5658
    %v5752 = vadd.f32 %v5496, %v5660
    %v5753 = vadd.f32 %v5497, %v5663
    %v5754 = vadd.f32 %v5498, %v5665
    %v5755 = vadd.f32 %v5499, %v5668
    %v5756 = vadd.f32 %v5500, %v5670
    %v5757 = vadd.f32 %v5501, %v5673
    %v5758 = vadd.f32 %v5502, %v5675
    %v5759 = vadd.f32 %v5503, %v5678
    %v5760 = vadd.f32 %v5504, %v5680
    %v5761 = vadd.f32 %v5505, %v5683
    %v5762 = vadd.f32 %v5506, %v5685
    %v5763 = vadd.f32 %v5507, %v5688
    %v5764 = vadd.f32 %v5508, %v5690
    %v5765 = vadd.f32 %v5509, %v5693
    %v5766 = vadd.f32 %v5510, %v5695
    %v5767 = vadd.f32 %v5511, %v5698
    %v5768 = vadd.f32 %v5512, %v5700
    %v5769 = vadd.f32 %v5513, %v5703
    %v5770 = vadd.f32 %v5514, %v5705
    %v5771 = vld [vmem:[%s4] sm:$0x1]
    %v5773 = vperm.slane %v5771, 0
    %v5775 = vadd.f32 %v5707, %v5773
    %v5776 = vadd.f32 %v5708, %v5773
    %v5777 = vadd.f32 %v5709, %v5773
    %v5778 = vadd.f32 %v5710, %v5773
    %v5779 = vadd.f32 %v5711, %v5773
    %v5780 = vadd.f32 %v5712, %v5773
    %v5781 = vadd.f32 %v5713, %v5773
    %v5782 = vadd.f32 %v5714, %v5773
    %v5783 = vadd.f32 %v5715, %v5773
    %v5784 = vadd.f32 %v5716, %v5773
    %v5785 = vadd.f32 %v5717, %v5773
    %v5786 = vadd.f32 %v5718, %v5773
    %v5787 = vadd.f32 %v5719, %v5773
    %v5788 = vadd.f32 %v5720, %v5773
    %v5789 = vadd.f32 %v5721, %v5773
    %v5790 = vadd.f32 %v5722, %v5773
    %v5791 = vadd.f32 %v5723, %v5773
    %v5792 = vadd.f32 %v5724, %v5773
    %v5793 = vadd.f32 %v5725, %v5773
    %v5794 = vadd.f32 %v5726, %v5773
    %v5795 = vadd.f32 %v5727, %v5773
    %v5796 = vadd.f32 %v5728, %v5773
    %v5797 = vadd.f32 %v5729, %v5773
    %v5798 = vadd.f32 %v5730, %v5773
    %v5799 = vadd.f32 %v5731, %v5773
    %v5800 = vadd.f32 %v5732, %v5773
    %v5801 = vadd.f32 %v5733, %v5773
    %v5802 = vadd.f32 %v5734, %v5773
    %v5803 = vadd.f32 %v5735, %v5773
    %v5804 = vadd.f32 %v5736, %v5773
    %v5805 = vadd.f32 %v5737, %v5773
    %v5806 = vadd.f32 %v5738, %v5773
    %v5807 = vadd.f32 %v5739, %v5773
    %v5808 = vadd.f32 %v5740, %v5773
    %v5809 = vadd.f32 %v5741, %v5773
    %v5810 = vadd.f32 %v5742, %v5773
    %v5811 = vadd.f32 %v5743, %v5773
    %v5812 = vadd.f32 %v5744, %v5773
    %v5813 = vadd.f32 %v5745, %v5773
    %v5814 = vadd.f32 %v5746, %v5773
    %v5815 = vadd.f32 %v5747, %v5773
    %v5816 = vadd.f32 %v5748, %v5773
    %v5817 = vadd.f32 %v5749, %v5773
    %v5818 = vadd.f32 %v5750, %v5773
    %v5819 = vadd.f32 %v5751, %v5773
    %v5820 = vadd.f32 %v5752, %v5773
    %v5821 = vadd.f32 %v5753, %v5773
    %v5822 = vadd.f32 %v5754, %v5773
    %v5823 = vadd.f32 %v5755, %v5773
    %v5824 = vadd.f32 %v5756, %v5773
    %v5825 = vadd.f32 %v5757, %v5773
    %v5826 = vadd.f32 %v5758, %v5773
    %v5827 = vadd.f32 %v5759, %v5773
    %v5828 = vadd.f32 %v5760, %v5773
    %v5829 = vadd.f32 %v5761, %v5773
    %v5830 = vadd.f32 %v5762, %v5773
    %v5831 = vadd.f32 %v5763, %v5773
    %v5832 = vadd.f32 %v5764, %v5773
    %v5833 = vadd.f32 %v5765, %v5773
    %v5834 = vadd.f32 %v5766, %v5773
    %v5835 = vadd.f32 %v5767, %v5773
    %v5836 = vadd.f32 %v5768, %v5773
    %v5837 = vadd.f32 %v5769, %v5773
    %v5838 = vadd.f32 %v5770, %v5773
    %v5839 = vmax.f32 %v5775, 0.0
    %v5840 = vmax.f32 %v5776, 0.0
    %v5841 = vmax.f32 %v5777, 0.0
    %v5842 = vmax.f32 %v5778, 0.0
    %v5843 = vmax.f32 %v5779, 0.0
    %v5844 = vmax.f32 %v5780, 0.0
    %v5845 = vmax.f32 %v5781, 0.0
    %v5846 = vmax.f32 %v5782, 0.0
    %v5847 = vmax.f32 %v5783, 0.0
    %v5848 = vmax.f32 %v5784, 0.0
    %v5849 = vmax.f32 %v5785, 0.0
    %v5850 = vmax.f32 %v5786, 0.0
    %v5851 = vmax.f32 %v5787, 0.0
    %v5852 = vmax.f32 %v5788, 0.0
    %v5853 = vmax.f32 %v5789, 0.0
    %v5854 = vmax.f32 %v5790, 0.0
    %v5855 = vmax.f32 %v5791, 0.0
    %v5856 = vmax.f32 %v5792, 0.0
    %v5857 = vmax.f32 %v5793, 0.0
    %v5858 = vmax.f32 %v5794, 0.0
    %v5859 = vmax.f32 %v5795, 0.0
    %v5860 = vmax.f32 %v5796, 0.0
    %v5861 = vmax.f32 %v5797, 0.0
    %v5862 = vmax.f32 %v5798, 0.0
    %v5863 = vmax.f32 %v5799, 0.0
    %v5864 = vmax.f32 %v5800, 0.0
    %v5865 = vmax.f32 %v5801, 0.0
    %v5866 = vmax.f32 %v5802, 0.0
    %v5867 = vmax.f32 %v5803, 0.0
    %v5868 = vmax.f32 %v5804, 0.0
    %v5869 = vmax.f32 %v5805, 0.0
    %v5870 = vmax.f32 %v5806, 0.0
    %v5871 = vmax.f32 %v5807, 0.0
    %v5872 = vmax.f32 %v5808, 0.0
    %v5873 = vmax.f32 %v5809, 0.0
    %v5874 = vmax.f32 %v5810, 0.0
    %v5875 = vmax.f32 %v5811, 0.0
    %v5876 = vmax.f32 %v5812, 0.0
    %v5877 = vmax.f32 %v5813, 0.0
    %v5878 = vmax.f32 %v5814, 0.0
    %v5879 = vmax.f32 %v5815, 0.0
    %v5880 = vmax.f32 %v5816, 0.0
    %v5881 = vmax.f32 %v5817, 0.0
    %v5882 = vmax.f32 %v5818, 0.0
    %v5883 = vmax.f32 %v5819, 0.0
    %v5884 = vmax.f32 %v5820, 0.0
    %v5885 = vmax.f32 %v5821, 0.0
    %v5886 = vmax.f32 %v5822, 0.0
    %v5887 = vmax.f32 %v5823, 0.0
    %v5888 = vmax.f32 %v5824, 0.0
    %v5889 = vmax.f32 %v5825, 0.0
    %v5890 = vmax.f32 %v5826, 0.0
    %v5891 = vmax.f32 %v5827, 0.0
    %v5892 = vmax.f32 %v5828, 0.0
    %v5893 = vmax.f32 %v5829, 0.0
    %v5894 = vmax.f32 %v5830, 0.0
    %v5895 = vmax.f32 %v5831, 0.0
    %v5896 = vmax.f32 %v5832, 0.0
    %v5897 = vmax.f32 %v5833, 0.0
    %v5898 = vmax.f32 %v5834, 0.0
    %v5899 = vmax.f32 %v5835, 0.0
    %v5900 = vmax.f32 %v5836, 0.0
    %v5901 = vmax.f32 %v5837, 0.0
    %v5902 = vmax.f32 %v5838, 0.0
    %v5903 = vsel %vm2244, %v5839, -inf
    %v5904 = vsel %vm2244, %v5840, -inf
    %v5905 = vmax.f32 %v5903, %v5904
    %v5906 = vsel %vm2244, %v5841, -inf
    %v5907 = vsel %vm2244, %v5842, -inf
    %v5908 = vmax.f32 %v5906, %v5907
    %v5909 = vsel %vm2244, %v5843, -inf
    %v5910 = vsel %vm2244, %v5844, -inf
    %v5911 = vmax.f32 %v5909, %v5910
    %v5912 = vsel %vm2244, %v5845, -inf
    %v5913 = vsel %vm2244, %v5846, -inf
    %v5914 = vmax.f32 %v5912, %v5913
    %v5915 = vsel %vm2244, %v5847, -inf
    %v5916 = vsel %vm2244, %v5848, -inf
    %v5917 = vmax.f32 %v5915, %v5916
    %v5918 = vsel %vm2244, %v5849, -inf
    %v5919 = vsel %vm2244, %v5850, -inf
    %v5920 = vmax.f32 %v5918, %v5919
    %v5921 = vsel %vm2244, %v5851, -inf
    %v5922 = vsel %vm2244, %v5852, -inf
    %v5923 = vmax.f32 %v5921, %v5922
    %v5924 = vsel %vm2244, %v5853, -inf
    %v5925 = vsel %vm2244, %v5854, -inf
    %v5926 = vmax.f32 %v5924, %v5925
    %v5927 = vsel %vm2244, %v5855, -inf
    %v5928 = vsel %vm2244, %v5856, -inf
    %v5929 = vmax.f32 %v5927, %v5928
    %v5930 = vsel %vm2244, %v5857, -inf
    %v5931 = vsel %vm2244, %v5858, -inf
    %v5932 = vmax.f32 %v5930, %v5931
    %v5933 = vsel %vm2244, %v5859, -inf
    %v5934 = vsel %vm2244, %v5860, -inf
    %v5935 = vmax.f32 %v5933, %v5934
    %v5936 = vsel %vm2244, %v5861, -inf
    %v5937 = vsel %vm2244, %v5862, -inf
    %v5938 = vmax.f32 %v5936, %v5937
    %v5939 = vsel %vm2244, %v5863, -inf
    %v5940 = vsel %vm2244, %v5864, -inf
    %v5941 = vmax.f32 %v5939, %v5940
    %v5942 = vsel %vm2244, %v5865, -inf
    %v5943 = vsel %vm2244, %v5866, -inf
    %v5944 = vmax.f32 %v5942, %v5943
    %v5945 = vsel %vm2244, %v5867, -inf
    %v5946 = vsel %vm2244, %v5868, -inf
    %v5947 = vmax.f32 %v5945, %v5946
    %v5948 = vsel %vm2244, %v5869, -inf
    %v5949 = vsel %vm2244, %v5870, -inf
    %v5950 = vmax.f32 %v5948, %v5949
    %v5951 = vsel %vm2244, %v5871, -inf
    %v5952 = vsel %vm2244, %v5872, -inf
    %v5953 = vmax.f32 %v5951, %v5952
    %v5954 = vsel %vm2244, %v5873, -inf
    %v5955 = vsel %vm2244, %v5874, -inf
    %v5956 = vmax.f32 %v5954, %v5955
    %v5957 = vsel %vm2244, %v5875, -inf
    %v5958 = vsel %vm2244, %v5876, -inf
    %v5959 = vmax.f32 %v5957, %v5958
    %v5960 = vsel %vm2244, %v5877, -inf
    %v5961 = vsel %vm2244, %v5878, -inf
    %v5962 = vmax.f32 %v5960, %v5961
    %v5963 = vsel %vm2244, %v5879, -inf
    %v5964 = vsel %vm2244, %v5880, -inf
    %v5965 = vmax.f32 %v5963, %v5964
    %v5966 = vsel %vm2244, %v5881, -inf
    %v5967 = vsel %vm2244, %v5882, -inf
    %v5968 = vmax.f32 %v5966, %v5967
    %v5969 = vsel %vm2244, %v5883, -inf
    %v5970 = vsel %vm2244, %v5884, -inf
    %v5971 = vmax.f32 %v5969, %v5970
    %v5972 = vsel %vm2244, %v5885, -inf
    %v5973 = vsel %vm2244, %v5886, -inf
    %v5974 = vmax.f32 %v5972, %v5973
    %v5975 = vsel %vm2244, %v5887, -inf
    %v5976 = vsel %vm2244, %v5888, -inf
    %v5977 = vmax.f32 %v5975, %v5976
    %v5978 = vsel %vm2244, %v5889, -inf
    %v5979 = vsel %vm2244, %v5890, -inf
    %v5980 = vmax.f32 %v5978, %v5979
    %v5981 = vsel %vm2244, %v5891, -inf
    %v5982 = vsel %vm2244, %v5892, -inf
    %v5983 = vmax.f32 %v5981, %v5982
    %v5984 = vsel %vm2244, %v5893, -inf
    %v5985 = vsel %vm2244, %v5894, -inf
    %v5986 = vmax.f32 %v5984, %v5985
    %v5987 = vsel %vm2244, %v5895, -inf
    %v5988 = vsel %vm2244, %v5896, -inf
    %v5989 = vmax.f32 %v5987, %v5988
    %v5990 = vsel %vm2244, %v5897, -inf
    %v5991 = vsel %vm2244, %v5898, -inf
    %v5992 = vmax.f32 %v5990, %v5991
    %v5993 = vsel %vm2244, %v5899, -inf
    %v5994 = vsel %vm2244, %v5900, -inf
    %v5995 = vmax.f32 %v5993, %v5994
    %v5996 = vsel %vm2244, %v5901, -inf
    %v5997 = vsel %vm2244, %v5902, -inf
    %v5998 = vmax.f32 %v5996, %v5997
    %v5999 = vsel %vm2244, %v5905, -inf
    %v6000 = vsel %vm2244, %v5917, -inf
    %v6001 = vmax.f32 %v5999, %v6000
    %v6002 = vsel %vm2244, %v5908, -inf
    %v6003 = vsel %vm2244, %v5920, -inf
    %v6004 = vmax.f32 %v6002, %v6003
    %v6005 = vsel %vm2244, %v5911, -inf
    %v6006 = vsel %vm2244, %v5923, -inf
    %v6007 = vmax.f32 %v6005, %v6006
    %v6008 = vsel %vm2244, %v5914, -inf
    %v6009 = vsel %vm2244, %v5926, -inf
    %v6010 = vmax.f32 %v6008, %v6009
    %v6011 = vsel %vm2244, %v5929, -inf
    %v6012 = vsel %vm2244, %v5941, -inf
    %v6013 = vmax.f32 %v6011, %v6012
    %v6014 = vsel %vm2244, %v5932, -inf
    %v6015 = vsel %vm2244, %v5944, -inf
    %v6016 = vmax.f32 %v6014, %v6015
    %v6017 = vsel %vm2244, %v5935, -inf
    %v6018 = vsel %vm2244, %v5947, -inf
    %v6019 = vmax.f32 %v6017, %v6018
    %v6020 = vsel %vm2244, %v5938, -inf
    %v6021 = vsel %vm2244, %v5950, -inf
    %v6022 = vmax.f32 %v6020, %v6021
    %v6023 = vsel %vm2244, %v5953, -inf
    %v6024 = vsel %vm2244, %v5965, -inf
    %v6025 = vmax.f32 %v6023, %v6024
    %v6026 = vsel %vm2244, %v5956, -inf
    %v6027 = vsel %vm2244, %v5968, -inf
    %v6028 = vmax.f32 %v6026, %v6027
    %v6029 = vsel %vm2244, %v5959, -inf
    %v6030 = vsel %vm2244, %v5971, -inf
    %v6031 = vmax.f32 %v6029, %v6030
    %v6032 = vsel %vm2244, %v5962, -inf
    %v6033 = vsel %vm2244, %v5974, -inf
    %v6034 = vmax.f32 %v6032, %v6033
    %v6035 = vsel %vm2244, %v5977, -inf
    %v6036 = vsel %vm2244, %v5989, -inf
    %v6037 = vmax.f32 %v6035, %v6036
    %v6038 = vsel %vm2244, %v5980, -inf
    %v6039 = vsel %vm2244, %v5992, -inf
    %v6040 = vmax.f32 %v6038, %v6039
    %v6041 = vsel %vm2244, %v5983, -inf
    %v6042 = vsel %vm2244, %v5995, -inf
    %v6043 = vmax.f32 %v6041, %v6042
    %v6044 = vsel %vm2244, %v5986, -inf
    %v6045 = vsel %vm2244, %v5998, -inf
    %v6046 = vmax.f32 %v6044, %v6045
    %6047 = vst.msk [vmem:[#allocation2] sm:$0xf] %vm2821, 0
    %6048 = vst.msk [vmem:[#allocation2 + $0x4] sm:$0xf] %vm2821, 0
    %6049 = vst.msk [vmem:[#allocation2 + $0x8] sm:$0xf] %vm2821, 0
    %6050 = vst.msk [vmem:[#allocation2 + $0xc] sm:$0xf] %vm2821, 0
    %6051 = vst.msk [vmem:[#allocation2 + $0x10] sm:$0xf] %vm2821, 0
    %6052 = vst.msk [vmem:[#allocation2 + $0x14] sm:$0xf] %vm2821, 0
    %s6053 = scalar_lea.vmem [#allocation2], 200
    %6054 = vst.msk [vmem:[%s6053] sm:$0xf] %vm2821, 0
    %6055 = vst.msk [vmem:[%s6053 + $0x4] sm:$0xf] %vm2821, 0
    %6056 = vst.msk [vmem:[%s6053 + $0x8] sm:$0xf] %vm2821, 0
    %6057 = vst.msk [vmem:[%s6053 + $0xc] sm:$0xf] %vm2821, 0
    %6058 = vst.msk [vmem:[%s6053 + $0x10] sm:$0xf] %vm2821, 0
    %6059 = vst.msk [vmem:[%s6053 + $0x14] sm:$0xf] %vm2821, 0
    %6060 = vst.msk [vmem:[%s2843] sm:$0xf] %vm2821, 0
    %6061 = vst.msk [vmem:[%s2843 + $0x28] sm:$0xf] %vm2821, 0
    %6062 = vst.msk [vmem:[%s2843 + $0x50] sm:$0xf] %vm2821, 0
    %6063 = vst.msk [vmem:[%s2843 + $0x78] sm:$0xf] %vm2821, 0
    %s6064 = scalar_lea.vmem [#allocation2], 60
    %6065 = vst.msk [vmem:[%s6064] sm:$0xf] %vm2821, 0
    %6066 = vst.msk [vmem:[%s6064 + $0x28] sm:$0xf] %vm2821, 0
    %6067 = vst.msk [vmem:[%s6064 + $0x50] sm:$0xf] %vm2821, 0
    %6068 = vst.msk [vmem:[%s6064 + $0x78] sm:$0xf] %vm2821, 0
    %v6069 = vpack.c.bf16 %v6001, %v6001
    %v6070 = vpack.c.bf16 %v6004, %v6004
    %v6071 = vpack.c.bf16 %v6007, %v6007
    %v6072 = vpack.c.bf16 %v6010, %v6010
    %v6073 = vpack.c.bf16 %v6013, %v6013
    %v6074 = vpack.c.bf16 %v6016, %v6016
    %v6075 = vpack.c.bf16 %v6019, %v6019
    %v6076 = vpack.c.bf16 %v6022, %v6022
    %v6077 = vpack.c.bf16 %v6025, %v6025
    %v6078 = vpack.c.bf16 %v6028, %v6028
    %v6079 = vpack.c.bf16 %v6031, %v6031
    %v6080 = vpack.c.bf16 %v6034, %v6034
    %v6081 = vpack.c.bf16 %v6037, %v6037
    %v6082 = vpack.c.bf16 %v6040, %v6040
    %v6083 = vpack.c.bf16 %v6043, %v6043
    %v6084 = vpack.c.bf16 %v6046, %v6046
    %6085 = vst.msk [vmem:[%s2925] sm:$0xf] %vm2821, %v6069
    %6086 = vst.msk [vmem:[%s2925 + $0x4] sm:$0xf] %vm2821, %v6070
    %6087 = vst.msk [vmem:[%s2925 + $0x8] sm:$0xf] %vm2821, %v6071
    %6088 = vst.msk [vmem:[%s2925 + $0xc] sm:$0xf] %vm2821, %v6072
    %6089 = vst.msk [vmem:[%s2925 + $0x28] sm:$0xf] %vm2821, %v6073
    %6090 = vst.msk [vmem:[%s2925 + $0x2c] sm:$0xf] %vm2821, %v6074
    %6091 = vst.msk [vmem:[%s2925 + $0x30] sm:$0xf] %vm2821, %v6075
    %6092 = vst.msk [vmem:[%s2925 + $0x34] sm:$0xf] %vm2821, %v6076
    %6093 = vst.msk [vmem:[%s2925 + $0x50] sm:$0xf] %vm2821, %v6077
    %6094 = vst.msk [vmem:[%s2925 + $0x54] sm:$0xf] %vm2821, %v6078
    %6095 = vst.msk [vmem:[%s2925 + $0x58] sm:$0xf] %vm2821, %v6079
    %6096 = vst.msk [vmem:[%s2925 + $0x5c] sm:$0xf] %vm2821, %v6080
    %6097 = vst.msk [vmem:[%s2925 + $0x78] sm:$0xf] %vm2821, %v6081
    %6098 = vst.msk [vmem:[%s2925 + $0x7c] sm:$0xf] %vm2821, %v6082
    %6099 = vst.msk [vmem:[%s2925 + $0x80] sm:$0xf] %vm2821, %v6083
    %6100 = vst.msk [vmem:[%s2925 + $0x84] sm:$0xf] %vm2821, %v6084
    %v6101 = vld [vmem:[#allocation2] sm:$0xf]
    %v6102 = vld [vmem:[#allocation2 + $0x4] sm:$0xf]
    %v6103 = vld [vmem:[#allocation2 + $0x8] sm:$0xf]
    %v6104 = vld [vmem:[#allocation2 + $0xc] sm:$0xf]
    %v6105 = vld [vmem:[#allocation2 + $0x10] sm:$0xf]
    %v6106 = vld [vmem:[#allocation2 + $0x14] sm:$0xf]
    %v6107 = vld [vmem:[#allocation2 + $0x28] sm:$0xf]
    %v6108 = vld [vmem:[#allocation2 + $0x2c] sm:$0xf]
    %v6109 = vld [vmem:[#allocation2 + $0x30] sm:$0xf]
    %v6110 = vld [vmem:[#allocation2 + $0x34] sm:$0xf]
    %v6111 = vld [vmem:[#allocation2 + $0x38] sm:$0xf]
    %v6112 = vld [vmem:[#allocation2 + $0x3c] sm:$0xf]
    %v6113 = vld [vmem:[#allocation2 + $0x50] sm:$0xf]
    %v6114 = vld [vmem:[#allocation2 + $0x54] sm:$0xf]
    %v6115 = vld [vmem:[#allocation2 + $0x58] sm:$0xf]
    %v6116 = vld [vmem:[#allocation2 + $0x5c] sm:$0xf]
    %v6117 = vld [vmem:[#allocation2 + $0x60] sm:$0xf]
    %v6118 = vld [vmem:[#allocation2 + $0x64] sm:$0xf]
    %v6119 = vld [vmem:[#allocation2 + $0x78] sm:$0xf]
    %v6120 = vld [vmem:[#allocation2 + $0x7c] sm:$0xf]
    %v6121 = vld [vmem:[#allocation2 + $0x80] sm:$0xf]
    %v6122 = vld [vmem:[#allocation2 + $0x84] sm:$0xf]
    %v6123 = vld [vmem:[#allocation2 + $0x88] sm:$0xf]
    %v6124 = vld [vmem:[#allocation2 + $0x8c] sm:$0xf]
    %v6125 = vld [vmem:[#allocation2 + $0xa0] sm:$0xf]
    %v6126 = vld [vmem:[#allocation2 + $0xa4] sm:$0xf]
    %v6127 = vld [vmem:[#allocation2 + $0xa8] sm:$0xf]
    %v6128 = vld [vmem:[#allocation2 + $0xac] sm:$0xf]
    %v6129 = vld [vmem:[#allocation2 + $0xb0] sm:$0xf]
    %v6130 = vld [vmem:[#allocation2 + $0xb4] sm:$0xf]
    %v6131 = vld [vmem:[#allocation2 + $0xc8] sm:$0xf]
    %v6132 = vld [vmem:[#allocation2 + $0xcc] sm:$0xf]
    %v6133 = vld [vmem:[#allocation2 + $0xd0] sm:$0xf]
    %v6134 = vld [vmem:[#allocation2 + $0xd4] sm:$0xf]
    %v6135 = vld [vmem:[#allocation2 + $0xd8] sm:$0xf]
    %v6136 = vld [vmem:[#allocation2 + $0xdc] sm:$0xf]
    %v6137 = vld [vmem:[%s5] sm:$0xf]
    %v6138 = vld [vmem:[%s5 + $0x4] sm:$0xf]
    %v6139 = vld [vmem:[%s5 + $0x8] sm:$0xf]
    %v6140 = vld [vmem:[%s5 + $0xc] sm:$0xf]
    %s6141 = scalar_lea.vmem %s5, 16
    %v6142 = vld [vmem:[%s6141] sm:$0xf]
    %v6143 = vld [vmem:[%s6141 + $0x4] sm:$0xf]
    %v6144 = vld [vmem:[%s6141 + $0x8] sm:$0xf]
    %v6145 = vld [vmem:[%s6141 + $0xc] sm:$0xf]
    %v6162 = vunpack.c.l.b16 %v6102
    %v6163 = vunpack.c.l.b16 %v6103
    %v6164 = vunpack.c.l.b16 %v6104
    %v6165 = vunpack.c.l.b16 %v6105
    %v6166 = vunpack.c.l.b16 %v6108
    %v6167 = vunpack.c.l.b16 %v6109
    %v6168 = vunpack.c.l.b16 %v6110
    %v6169 = vunpack.c.l.b16 %v6111
    %v6170 = vunpack.c.l.b16 %v6114
    %v6171 = vunpack.c.l.b16 %v6115
    %v6172 = vunpack.c.l.b16 %v6116
    %v6173 = vunpack.c.l.b16 %v6117
    %v6174 = vunpack.c.l.b16 %v6120
    %v6175 = vunpack.c.l.b16 %v6121
    %v6176 = vunpack.c.l.b16 %v6122
    %v6177 = vunpack.c.l.b16 %v6123
    %v6178 = vpack.c.b16 %v6163, %v6162
    %v6179 = vpack.c.b16 %v6165, %v6164
    %v6180 = vpack.c.b16 %v6167, %v6166
    %v6181 = vpack.c.b16 %v6169, %v6168
    %v6182 = vpack.c.b16 %v6171, %v6170
    %v6183 = vpack.c.b16 %v6173, %v6172
    %v6184 = vpack.c.b16 %v6175, %v6174
    %v6185 = vpack.c.b16 %v6177, %v6176
    %v6190 = vunpack.c.l.b16 %v6142
    %v6191 = vunpack.c.l.b16 %v6143
    %v6192 = vunpack.c.l.b16 %v6144
    %v6193 = vunpack.c.l.b16 %v6145
    %v6194 = vpack.c.b16 %v6191, %v6190
    %v6195 = vpack.c.b16 %v6193, %v6192
    %v6199 = vsel %vm2244, %v6178, 0
    %v6202 = vsel %vm2244, %v6179, 0
    %v6205 = vsel %vm2244, %v6180, 0
    %v6208 = vsel %vm2244, %v6181, 0
    %v6211 = vsel %vm2244, %v6182, 0
    %v6214 = vsel %vm2244, %v6183, 0
    %v6217 = vsel %vm2244, %v6184, 0
    %v6220 = vsel %vm2244, %v6185, 0
    %6222 = vmatpush.bf16.msra.mxu0 0
    %6223 = vmatpush.bf16.msra.mxu0 0
    %6224 = vmatpush.bf16.msra.mxu0 0
    %6225 = vmatpush.bf16.msra.mxu0 0
    %6226 = vmatpush.bf16.msra.mxu0 0
    %6227 = vmatpush.bf16.msra.mxu0 0
    %6228 = vmatpush.bf16.msra.mxu0 %v6195
    %6229 = vmatpush.bf16.msra.mxu0 %v6194
    %6230 = vmatmul.bf16.gmra.mxu0 %v6199
    %v6231 = vpop.f32.mrf.mxu0
    %v6232 = vadd.f32 0.0, %v6231
    %v6233 = vpop.f32.mrf.mxu0
    %v6234 = vadd.f32 0.0, %v6233
    %6235 = vmatmul.bf16.gmra.mxu0 %v6202
    %v6236 = vpop.f32.mrf.mxu0
    %v6237 = vadd.f32 0.0, %v6236
    %v6238 = vpop.f32.mrf.mxu0
    %v6239 = vadd.f32 0.0, %v6238
    %6240 = vmatmul.bf16.gmra.mxu0 %v6205
    %v6241 = vpop.f32.mrf.mxu0
    %v6242 = vadd.f32 0.0, %v6241
    %v6243 = vpop.f32.mrf.mxu0
    %v6244 = vadd.f32 0.0, %v6243
    %6245 = vmatmul.bf16.gmra.mxu0 %v6208
    %v6246 = vpop.f32.mrf.mxu0
    %v6247 = vadd.f32 0.0, %v6246
    %v6248 = vpop.f32.mrf.mxu0
    %v6249 = vadd.f32 0.0, %v6248
    %6250 = vmatmul.bf16.gmra.mxu0 %v6211
    %v6251 = vpop.f32.mrf.mxu0
    %v6252 = vadd.f32 0.0, %v6251
    %v6253 = vpop.f32.mrf.mxu0
    %v6254 = vadd.f32 0.0, %v6253
    %6255 = vmatmul.bf16.gmra.mxu0 %v6214
    %v6256 = vpop.f32.mrf.mxu0
    %v6257 = vadd.f32 0.0, %v6256
    %v6258 = vpop.f32.mrf.mxu0
    %v6259 = vadd.f32 0.0, %v6258
    %6260 = vmatmul.bf16.gmra.mxu0 %v6217
    %v6261 = vpop.f32.mrf.mxu0
    %v6262 = vadd.f32 0.0, %v6261
    %v6263 = vpop.f32.mrf.mxu0
    %v6264 = vadd.f32 0.0, %v6263
    %6265 = vmatmul.bf16.gmra.mxu0 %v6220
    %v6266 = vpop.f32.mrf.mxu0
    %v6267 = vadd.f32 0.0, %v6266
    %v6268 = vpop.f32.mrf.mxu0
    %v6269 = vadd.f32 0.0, %v6268
    %6270 = vdwg.mxu0
    %v6275 = vunpack.c.l.b16 %v6101
    %v6276 = vunpack.c.l.b16 %v6107
    %v6277 = vunpack.c.l.b16 %v6113
    %v6278 = vunpack.c.l.b16 %v6119
    %v6279 = vpack.c.b16 %v6162, %v6275
    %v6280 = vpack.c.b16 %v6164, %v6163
    %v6281 = vpack.c.b16 %v6166, %v6276
    %v6282 = vpack.c.b16 %v6168, %v6167
    %v6283 = vpack.c.b16 %v6170, %v6277
    %v6284 = vpack.c.b16 %v6172, %v6171
    %v6285 = vpack.c.b16 %v6174, %v6278
    %v6286 = vpack.c.b16 %v6176, %v6175
    %v6291 = vunpack.c.l.b16 %v6137
    %v6292 = vunpack.c.l.b16 %v6138
    %v6293 = vunpack.c.l.b16 %v6139
    %v6294 = vunpack.c.l.b16 %v6140
    %v6295 = vpack.c.b16 %v6292, %v6291
    %v6296 = vpack.c.b16 %v6294, %v6293
    %v6300 = vsel %vm2244, %v6279, 0
    %v6303 = vsel %vm2244, %v6280, 0
    %v6306 = vsel %vm2244, %v6281, 0
    %v6309 = vsel %vm2244, %v6282, 0
    %v6312 = vsel %vm2244, %v6283, 0
    %v6315 = vsel %vm2244, %v6284, 0
    %v6318 = vsel %vm2244, %v6285, 0
    %v6321 = vsel %vm2244, %v6286, 0
    %6323 = vmatpush.bf16.msra.mxu0 0
    %6324 = vmatpush.bf16.msra.mxu0 0
    %6325 = vmatpush.bf16.msra.mxu0 0
    %6326 = vmatpush.bf16.msra.mxu0 0
    %6327 = vmatpush.bf16.msra.mxu0 0
    %6328 = vmatpush.bf16.msra.mxu0 0
    %6329 = vmatpush.bf16.msra.mxu0 %v6296
    %6330 = vmatpush.bf16.msra.mxu0 %v6295
    %6331 = vmatmul.bf16.gmra.mxu0 %v6300
    %v6332 = vpop.f32.mrf.mxu0
    %v6333 = vadd.f32 %v6232, %v6332
    %v6334 = vpop.f32.mrf.mxu0
    %v6335 = vadd.f32 %v6234, %v6334
    %6336 = vmatmul.bf16.gmra.mxu0 %v6303
    %v6337 = vpop.f32.mrf.mxu0
    %v6338 = vadd.f32 %v6237, %v6337
    %v6339 = vpop.f32.mrf.mxu0
    %v6340 = vadd.f32 %v6239, %v6339
    %6341 = vmatmul.bf16.gmra.mxu0 %v6306
    %v6342 = vpop.f32.mrf.mxu0
    %v6343 = vadd.f32 %v6242, %v6342
    %v6344 = vpop.f32.mrf.mxu0
    %v6345 = vadd.f32 %v6244, %v6344
    %6346 = vmatmul.bf16.gmra.mxu0 %v6309
    %v6347 = vpop.f32.mrf.mxu0
    %v6348 = vadd.f32 %v6247, %v6347
    %v6349 = vpop.f32.mrf.mxu0
    %v6350 = vadd.f32 %v6249, %v6349
    %6351 = vmatmul.bf16.gmra.mxu0 %v6312
    %v6352 = vpop.f32.mrf.mxu0
    %v6353 = vadd.f32 %v6252, %v6352
    %v6354 = vpop.f32.mrf.mxu0
    %v6355 = vadd.f32 %v6254, %v6354
    %6356 = vmatmul.bf16.gmra.mxu0 %v6315
    %v6357 = vpop.f32.mrf.mxu0
    %v6358 = vadd.f32 %v6257, %v6357
    %v6359 = vpop.f32.mrf.mxu0
    %v6360 = vadd.f32 %v6259, %v6359
    %6361 = vmatmul.bf16.gmra.mxu0 %v6318
    %v6362 = vpop.f32.mrf.mxu0
    %v6363 = vadd.f32 %v6262, %v6362
    %v6364 = vpop.f32.mrf.mxu0
    %v6365 = vadd.f32 %v6264, %v6364
    %6366 = vmatmul.bf16.gmra.mxu0 %v6321
    %v6367 = vpop.f32.mrf.mxu0
    %v6368 = vadd.f32 %v6267, %v6367
    %v6369 = vpop.f32.mrf.mxu0
    %v6370 = vadd.f32 %v6269, %v6369
    %6371 = vdwg.mxu0
    %s6372 = scalar_lea.vmem %s5, 32
    %v6373 = vld [vmem:[%s6372] sm:$0xf]
    %v6374 = vld [vmem:[%s6372 + $0x4] sm:$0xf]
    %v6375 = vld [vmem:[%s6372 + $0x8] sm:$0xf]
    %v6376 = vld [vmem:[%s6372 + $0xc] sm:$0xf]
    %v6381 = vunpack.c.l.b16 %v6106
    %v6382 = vunpack.c.l.b16 %v6112
    %v6383 = vunpack.c.l.b16 %v6118
    %v6384 = vunpack.c.l.b16 %v6124
    %v6385 = vpack.c.b16 %v6381, %v6165
    %v6386 = vpack.c.b16 %v6382, %v6169
    %v6387 = vpack.c.b16 %v6383, %v6173
    %v6388 = vpack.c.b16 %v6384, %v6177
    %v6393 = vunpack.c.l.b16 %v6373
    %v6394 = vunpack.c.l.b16 %v6374
    %v6395 = vunpack.c.l.b16 %v6375
    %v6396 = vunpack.c.l.b16 %v6376
    %v6397 = vpack.c.b16 %v6394, %v6393
    %v6398 = vpack.c.b16 %v6396, %v6395
    %v6402 = vsel %vm2244, %v6385, 0
    %v6405 = vsel %vm2244, %v6386, 0
    %v6408 = vsel %vm2244, %v6387, 0
    %v6411 = vsel %vm2244, %v6388, 0
    %6413 = vmatpush.bf16.msra.mxu0 0
    %6414 = vmatpush.bf16.msra.mxu0 0
    %6415 = vmatpush.bf16.msra.mxu0 0
    %6416 = vmatpush.bf16.msra.mxu0 0
    %6417 = vmatpush.bf16.msra.mxu0 0
    %6418 = vmatpush.bf16.msra.mxu0 0
    %6419 = vmatpush.bf16.msra.mxu0 %v6398
    %6420 = vmatpush.bf16.msra.mxu0 %v6397
    %6421 = vmatmul.bf16.gmra.mxu0 %v6303
    %v6422 = vpop.f32.mrf.mxu0
    %v6423 = vadd.f32 0.0, %v6422
    %v6424 = vpop.f32.mrf.mxu0
    %v6425 = vadd.f32 0.0, %v6424
    %6426 = vmatmul.bf16.gmra.mxu0 %v6402
    %v6427 = vpop.f32.mrf.mxu0
    %v6428 = vadd.f32 0.0, %v6427
    %v6429 = vpop.f32.mrf.mxu0
    %v6430 = vadd.f32 0.0, %v6429
    %6431 = vmatmul.bf16.gmra.mxu0 %v6309
    %v6432 = vpop.f32.mrf.mxu0
    %v6433 = vadd.f32 0.0, %v6432
    %v6434 = vpop.f32.mrf.mxu0
    %v6435 = vadd.f32 0.0, %v6434
    %6436 = vmatmul.bf16.gmra.mxu0 %v6405
    %v6437 = vpop.f32.mrf.mxu0
    %v6438 = vadd.f32 0.0, %v6437
    %v6439 = vpop.f32.mrf.mxu0
    %v6440 = vadd.f32 0.0, %v6439
    %6441 = vmatmul.bf16.gmra.mxu0 %v6315
    %v6442 = vpop.f32.mrf.mxu0
    %v6443 = vadd.f32 0.0, %v6442
    %v6444 = vpop.f32.mrf.mxu0
    %v6445 = vadd.f32 0.0, %v6444
    %6446 = vmatmul.bf16.gmra.mxu0 %v6408
    %v6447 = vpop.f32.mrf.mxu0
    %v6448 = vadd.f32 0.0, %v6447
    %v6449 = vpop.f32.mrf.mxu0
    %v6450 = vadd.f32 0.0, %v6449
    %6451 = vmatmul.bf16.gmra.mxu0 %v6321
    %v6452 = vpop.f32.mrf.mxu0
    %v6453 = vadd.f32 0.0, %v6452
    %v6454 = vpop.f32.mrf.mxu0
    %v6455 = vadd.f32 0.0, %v6454
    %6456 = vmatmul.bf16.gmra.mxu0 %v6411
    %v6457 = vpop.f32.mrf.mxu0
    %v6458 = vadd.f32 0.0, %v6457
    %v6459 = vpop.f32.mrf.mxu0
    %v6460 = vadd.f32 0.0, %v6459
    %6461 = vdwg.mxu0
    %v6462 = vadd.f32 %v6333, %v6423
    %v6463 = vadd.f32 %v6335, %v6425
    %v6464 = vadd.f32 %v6338, %v6428
    %v6465 = vadd.f32 %v6340, %v6430
    %v6466 = vadd.f32 %v6343, %v6433
    %v6467 = vadd.f32 %v6345, %v6435
    %v6468 = vadd.f32 %v6348, %v6438
    %v6469 = vadd.f32 %v6350, %v6440
    %v6470 = vadd.f32 %v6353, %v6443
    %v6471 = vadd.f32 %v6355, %v6445
    %v6472 = vadd.f32 %v6358, %v6448
    %v6473 = vadd.f32 %v6360, %v6450
    %v6474 = vadd.f32 %v6363, %v6453
    %v6475 = vadd.f32 %v6365, %v6455
    %v6476 = vadd.f32 %v6368, %v6458
    %v6477 = vadd.f32 %v6370, %v6460
    %s6478 = scalar_lea.vmem %s5, 48
    %v6479 = vld [vmem:[%s6478] sm:$0xf]
    %v6480 = vld [vmem:[%s6478 + $0x4] sm:$0xf]
    %v6481 = vld [vmem:[%s6478 + $0x8] sm:$0xf]
    %v6482 = vld [vmem:[%s6478 + $0xc] sm:$0xf]
    %v6487 = vunpack.c.l.b16 %v6125
    %v6488 = vunpack.c.l.b16 %v6126
    %v6489 = vunpack.c.l.b16 %v6127
    %v6490 = vunpack.c.l.b16 %v6128
    %v6491 = vpack.c.b16 %v6488, %v6487
    %v6492 = vpack.c.b16 %v6490, %v6489
    %v6497 = vunpack.c.l.b16 %v6479
    %v6498 = vunpack.c.l.b16 %v6480
    %v6499 = vunpack.c.l.b16 %v6481
    %v6500 = vunpack.c.l.b16 %v6482
    %v6501 = vpack.c.b16 %v6498, %v6497
    %v6502 = vpack.c.b16 %v6500, %v6499
    %v6506 = vsel %vm2244, %v6491, 0
    %v6509 = vsel %vm2244, %v6492, 0
    %6511 = vmatpush.bf16.msra.mxu0 0
    %6512 = vmatpush.bf16.msra.mxu0 0
    %6513 = vmatpush.bf16.msra.mxu0 0
    %6514 = vmatpush.bf16.msra.mxu0 0
    %6515 = vmatpush.bf16.msra.mxu0 0
    %6516 = vmatpush.bf16.msra.mxu0 0
    %6517 = vmatpush.bf16.msra.mxu0 %v6502
    %6518 = vmatpush.bf16.msra.mxu0 %v6501
    %6519 = vmatmul.bf16.gmra.mxu0 %v6306
    %v6520 = vpop.f32.mrf.mxu0
    %v6521 = vadd.f32 0.0, %v6520
    %v6522 = vpop.f32.mrf.mxu0
    %v6523 = vadd.f32 0.0, %v6522
    %6524 = vmatmul.bf16.gmra.mxu0 %v6309
    %v6525 = vpop.f32.mrf.mxu0
    %v6526 = vadd.f32 0.0, %v6525
    %v6527 = vpop.f32.mrf.mxu0
    %v6528 = vadd.f32 0.0, %v6527
    %6529 = vmatmul.bf16.gmra.mxu0 %v6312
    %v6530 = vpop.f32.mrf.mxu0
    %v6531 = vadd.f32 0.0, %v6530
    %v6532 = vpop.f32.mrf.mxu0
    %v6533 = vadd.f32 0.0, %v6532
    %6534 = vmatmul.bf16.gmra.mxu0 %v6315
    %v6535 = vpop.f32.mrf.mxu0
    %v6536 = vadd.f32 0.0, %v6535
    %v6537 = vpop.f32.mrf.mxu0
    %v6538 = vadd.f32 0.0, %v6537
    %6539 = vmatmul.bf16.gmra.mxu0 %v6318
    %v6540 = vpop.f32.mrf.mxu0
    %v6541 = vadd.f32 0.0, %v6540
    %v6542 = vpop.f32.mrf.mxu0
    %v6543 = vadd.f32 0.0, %v6542
    %6544 = vmatmul.bf16.gmra.mxu0 %v6321
    %v6545 = vpop.f32.mrf.mxu0
    %v6546 = vadd.f32 0.0, %v6545
    %v6547 = vpop.f32.mrf.mxu0
    %v6548 = vadd.f32 0.0, %v6547
    %6549 = vmatmul.bf16.gmra.mxu0 %v6506
    %v6550 = vpop.f32.mrf.mxu0
    %v6551 = vadd.f32 0.0, %v6550
    %v6552 = vpop.f32.mrf.mxu0
    %v6553 = vadd.f32 0.0, %v6552
    %6554 = vmatmul.bf16.gmra.mxu0 %v6509
    %v6555 = vpop.f32.mrf.mxu0
    %v6556 = vadd.f32 0.0, %v6555
    %v6557 = vpop.f32.mrf.mxu0
    %v6558 = vadd.f32 0.0, %v6557
    %6559 = vdwg.mxu0
    %v6560 = vadd.f32 %v6462, %v6521
    %v6561 = vadd.f32 %v6463, %v6523
    %v6562 = vadd.f32 %v6464, %v6526
    %v6563 = vadd.f32 %v6465, %v6528
    %v6564 = vadd.f32 %v6466, %v6531
    %v6565 = vadd.f32 %v6467, %v6533
    %v6566 = vadd.f32 %v6468, %v6536
    %v6567 = vadd.f32 %v6469, %v6538
    %v6568 = vadd.f32 %v6470, %v6541
    %v6569 = vadd.f32 %v6471, %v6543
    %v6570 = vadd.f32 %v6472, %v6546
    %v6571 = vadd.f32 %v6473, %v6548
    %v6572 = vadd.f32 %v6474, %v6551
    %v6573 = vadd.f32 %v6475, %v6553
    %v6574 = vadd.f32 %v6476, %v6556
    %v6575 = vadd.f32 %v6477, %v6558
    %s6576 = scalar_lea.vmem %s5, 64
    %v6577 = vld [vmem:[%s6576] sm:$0xf]
    %v6578 = vld [vmem:[%s6576 + $0x4] sm:$0xf]
    %v6579 = vld [vmem:[%s6576 + $0x8] sm:$0xf]
    %v6580 = vld [vmem:[%s6576 + $0xc] sm:$0xf]
    %v6582 = vunpack.c.l.b16 %v6129
    %v6583 = vpack.c.b16 %v6489, %v6488
    %v6584 = vpack.c.b16 %v6582, %v6490
    %v6589 = vunpack.c.l.b16 %v6577
    %v6590 = vunpack.c.l.b16 %v6578
    %v6591 = vunpack.c.l.b16 %v6579
    %v6592 = vunpack.c.l.b16 %v6580
    %v6593 = vpack.c.b16 %v6590, %v6589
    %v6594 = vpack.c.b16 %v6592, %v6591
    %v6598 = vsel %vm2244, %v6583, 0
    %v6601 = vsel %vm2244, %v6584, 0
    %6603 = vmatpush.bf16.msra.mxu0 0
    %6604 = vmatpush.bf16.msra.mxu0 0
    %6605 = vmatpush.bf16.msra.mxu0 0
    %6606 = vmatpush.bf16.msra.mxu0 0
    %6607 = vmatpush.bf16.msra.mxu0 0
    %6608 = vmatpush.bf16.msra.mxu0 0
    %6609 = vmatpush.bf16.msra.mxu0 %v6594
    %6610 = vmatpush.bf16.msra.mxu0 %v6593
    %6611 = vmatmul.bf16.gmra.mxu0 %v6205
    %v6612 = vpop.f32.mrf.mxu0
    %v6613 = vadd.f32 0.0, %v6612
    %v6614 = vpop.f32.mrf.mxu0
    %v6615 = vadd.f32 0.0, %v6614
    %6616 = vmatmul.bf16.gmra.mxu0 %v6208
    %v6617 = vpop.f32.mrf.mxu0
    %v6618 = vadd.f32 0.0, %v6617
    %v6619 = vpop.f32.mrf.mxu0
    %v6620 = vadd.f32 0.0, %v6619
    %6621 = vmatmul.bf16.gmra.mxu0 %v6211
    %v6622 = vpop.f32.mrf.mxu0
    %v6623 = vadd.f32 0.0, %v6622
    %v6624 = vpop.f32.mrf.mxu0
    %v6625 = vadd.f32 0.0, %v6624
    %6626 = vmatmul.bf16.gmra.mxu0 %v6214
    %v6627 = vpop.f32.mrf.mxu0
    %v6628 = vadd.f32 0.0, %v6627
    %v6629 = vpop.f32.mrf.mxu0
    %v6630 = vadd.f32 0.0, %v6629
    %6631 = vmatmul.bf16.gmra.mxu0 %v6217
    %v6632 = vpop.f32.mrf.mxu0
    %v6633 = vadd.f32 0.0, %v6632
    %v6634 = vpop.f32.mrf.mxu0
    %v6635 = vadd.f32 0.0, %v6634
    %6636 = vmatmul.bf16.gmra.mxu0 %v6220
    %v6637 = vpop.f32.mrf.mxu0
    %v6638 = vadd.f32 0.0, %v6637
    %v6639 = vpop.f32.mrf.mxu0
    %v6640 = vadd.f32 0.0, %v6639
    %6641 = vmatmul.bf16.gmra.mxu0 %v6598
    %v6642 = vpop.f32.mrf.mxu0
    %v6643 = vadd.f32 0.0, %v6642
    %v6644 = vpop.f32.mrf.mxu0
    %v6645 = vadd.f32 0.0, %v6644
    %6646 = vmatmul.bf16.gmra.mxu0 %v6601
    %v6647 = vpop.f32.mrf.mxu0
    %v6648 = vadd.f32 0.0, %v6647
    %v6649 = vpop.f32.mrf.mxu0
    %v6650 = vadd.f32 0.0, %v6649
    %6651 = vdwg.mxu0
    %v6652 = vadd.f32 %v6560, %v6613
    %v6653 = vadd.f32 %v6561, %v6615
    %v6654 = vadd.f32 %v6562, %v6618
    %v6655 = vadd.f32 %v6563, %v6620
    %v6656 = vadd.f32 %v6564, %v6623
    %v6657 = vadd.f32 %v6565, %v6625
    %v6658 = vadd.f32 %v6566, %v6628
    %v6659 = vadd.f32 %v6567, %v6630
    %v6660 = vadd.f32 %v6568, %v6633
    %v6661 = vadd.f32 %v6569, %v6635
    %v6662 = vadd.f32 %v6570, %v6638
    %v6663 = vadd.f32 %v6571, %v6640
    %v6664 = vadd.f32 %v6572, %v6643
    %v6665 = vadd.f32 %v6573, %v6645
    %v6666 = vadd.f32 %v6574, %v6648
    %v6667 = vadd.f32 %v6575, %v6650
    %s6668 = scalar_lea.vmem %s5, 80
    %v6669 = vld [vmem:[%s6668] sm:$0xf]
    %v6670 = vld [vmem:[%s6668 + $0x4] sm:$0xf]
    %v6671 = vld [vmem:[%s6668 + $0x8] sm:$0xf]
    %v6672 = vld [vmem:[%s6668 + $0xc] sm:$0xf]
    %v6674 = vunpack.c.l.b16 %v6130
    %v6675 = vpack.c.b16 %v6674, %v6582
    %v6680 = vunpack.c.l.b16 %v6669
    %v6681 = vunpack.c.l.b16 %v6670
    %v6682 = vunpack.c.l.b16 %v6671
    %v6683 = vunpack.c.l.b16 %v6672
    %v6684 = vpack.c.b16 %v6681, %v6680
    %v6685 = vpack.c.b16 %v6683, %v6682
    %v6689 = vsel %vm2244, %v6675, 0
    %6691 = vmatpush.bf16.msra.mxu0 0
    %6692 = vmatpush.bf16.msra.mxu0 0
    %6693 = vmatpush.bf16.msra.mxu0 0
    %6694 = vmatpush.bf16.msra.mxu0 0
    %6695 = vmatpush.bf16.msra.mxu0 0
    %6696 = vmatpush.bf16.msra.mxu0 0
    %6697 = vmatpush.bf16.msra.mxu0 %v6685
    %6698 = vmatpush.bf16.msra.mxu0 %v6684
    %6699 = vmatmul.bf16.gmra.mxu0 %v6309
    %v6700 = vpop.f32.mrf.mxu0
    %v6701 = vadd.f32 0.0, %v6700
    %v6702 = vpop.f32.mrf.mxu0
    %v6703 = vadd.f32 0.0, %v6702
    %6704 = vmatmul.bf16.gmra.mxu0 %v6405
    %v6705 = vpop.f32.mrf.mxu0
    %v6706 = vadd.f32 0.0, %v6705
    %v6707 = vpop.f32.mrf.mxu0
    %v6708 = vadd.f32 0.0, %v6707
    %6709 = vmatmul.bf16.gmra.mxu0 %v6315
    %v6710 = vpop.f32.mrf.mxu0
    %v6711 = vadd.f32 0.0, %v6710
    %v6712 = vpop.f32.mrf.mxu0
    %v6713 = vadd.f32 0.0, %v6712
    %6714 = vmatmul.bf16.gmra.mxu0 %v6408
    %v6715 = vpop.f32.mrf.mxu0
    %v6716 = vadd.f32 0.0, %v6715
    %v6717 = vpop.f32.mrf.mxu0
    %v6718 = vadd.f32 0.0, %v6717
    %6719 = vmatmul.bf16.gmra.mxu0 %v6321
    %v6720 = vpop.f32.mrf.mxu0
    %v6721 = vadd.f32 0.0, %v6720
    %v6722 = vpop.f32.mrf.mxu0
    %v6723 = vadd.f32 0.0, %v6722
    %6724 = vmatmul.bf16.gmra.mxu0 %v6411
    %v6725 = vpop.f32.mrf.mxu0
    %v6726 = vadd.f32 0.0, %v6725
    %v6727 = vpop.f32.mrf.mxu0
    %v6728 = vadd.f32 0.0, %v6727
    %6729 = vmatmul.bf16.gmra.mxu0 %v6509
    %v6730 = vpop.f32.mrf.mxu0
    %v6731 = vadd.f32 0.0, %v6730
    %v6732 = vpop.f32.mrf.mxu0
    %v6733 = vadd.f32 0.0, %v6732
    %6734 = vmatmul.bf16.gmra.mxu0 %v6689
    %v6735 = vpop.f32.mrf.mxu0
    %v6736 = vadd.f32 0.0, %v6735
    %v6737 = vpop.f32.mrf.mxu0
    %v6738 = vadd.f32 0.0, %v6737
    %6739 = vdwg.mxu0
    %v6740 = vadd.f32 %v6652, %v6701
    %v6741 = vadd.f32 %v6653, %v6703
    %v6742 = vadd.f32 %v6654, %v6706
    %v6743 = vadd.f32 %v6655, %v6708
    %v6744 = vadd.f32 %v6656, %v6711
    %v6745 = vadd.f32 %v6657, %v6713
    %v6746 = vadd.f32 %v6658, %v6716
    %v6747 = vadd.f32 %v6659, %v6718
    %v6748 = vadd.f32 %v6660, %v6721
    %v6749 = vadd.f32 %v6661, %v6723
    %v6750 = vadd.f32 %v6662, %v6726
    %v6751 = vadd.f32 %v6663, %v6728
    %v6752 = vadd.f32 %v6664, %v6731
    %v6753 = vadd.f32 %v6665, %v6733
    %v6754 = vadd.f32 %v6666, %v6736
    %v6755 = vadd.f32 %v6667, %v6738
    %s6756 = scalar_lea.vmem %s5, 96
    %v6757 = vld [vmem:[%s6756] sm:$0xf]
    %v6758 = vld [vmem:[%s6756 + $0x4] sm:$0xf]
    %v6759 = vld [vmem:[%s6756 + $0x8] sm:$0xf]
    %v6760 = vld [vmem:[%s6756 + $0xc] sm:$0xf]
    %v6765 = vunpack.c.l.b16 %v6131
    %v6766 = vunpack.c.l.b16 %v6132
    %v6767 = vunpack.c.l.b16 %v6133
    %v6768 = vunpack.c.l.b16 %v6134
    %v6769 = vpack.c.b16 %v6766, %v6765
    %v6770 = vpack.c.b16 %v6768, %v6767
    %v6775 = vunpack.c.l.b16 %v6757
    %v6776 = vunpack.c.l.b16 %v6758
    %v6777 = vunpack.c.l.b16 %v6759
    %v6778 = vunpack.c.l.b16 %v6760
    %v6779 = vpack.c.b16 %v6776, %v6775
    %v6780 = vpack.c.b16 %v6778, %v6777
    %v6784 = vsel %vm2244, %v6769, 0
    %v6787 = vsel %vm2244, %v6770, 0
    %6789 = vmatpush.bf16.msra.mxu0 0
    %6790 = vmatpush.bf16.msra.mxu0 0
    %6791 = vmatpush.bf16.msra.mxu0 0
    %6792 = vmatpush.bf16.msra.mxu0 0
    %6793 = vmatpush.bf16.msra.mxu0 0
    %6794 = vmatpush.bf16.msra.mxu0 0
    %6795 = vmatpush.bf16.msra.mxu0 %v6780
    %6796 = vmatpush.bf16.msra.mxu0 %v6779
    %6797 = vmatmul.bf16.gmra.mxu0 %v6312
    %v6798 = vpop.f32.mrf.mxu0
    %v6799 = vadd.f32 0.0, %v6798
    %v6800 = vpop.f32.mrf.mxu0
    %v6801 = vadd.f32 0.0, %v6800
    %6802 = vmatmul.bf16.gmra.mxu0 %v6315
    %v6803 = vpop.f32.mrf.mxu0
    %v6804 = vadd.f32 0.0, %v6803
    %v6805 = vpop.f32.mrf.mxu0
    %v6806 = vadd.f32 0.0, %v6805
    %6807 = vmatmul.bf16.gmra.mxu0 %v6318
    %v6808 = vpop.f32.mrf.mxu0
    %v6809 = vadd.f32 0.0, %v6808
    %v6810 = vpop.f32.mrf.mxu0
    %v6811 = vadd.f32 0.0, %v6810
    %6812 = vmatmul.bf16.gmra.mxu0 %v6321
    %v6813 = vpop.f32.mrf.mxu0
    %v6814 = vadd.f32 0.0, %v6813
    %v6815 = vpop.f32.mrf.mxu0
    %v6816 = vadd.f32 0.0, %v6815
    %6817 = vmatmul.bf16.gmra.mxu0 %v6506
    %v6818 = vpop.f32.mrf.mxu0
    %v6819 = vadd.f32 0.0, %v6818
    %v6820 = vpop.f32.mrf.mxu0
    %v6821 = vadd.f32 0.0, %v6820
    %6822 = vmatmul.bf16.gmra.mxu0 %v6509
    %v6823 = vpop.f32.mrf.mxu0
    %v6824 = vadd.f32 0.0, %v6823
    %v6825 = vpop.f32.mrf.mxu0
    %v6826 = vadd.f32 0.0, %v6825
    %6827 = vmatmul.bf16.gmra.mxu0 %v6784
    %v6828 = vpop.f32.mrf.mxu0
    %v6829 = vadd.f32 0.0, %v6828
    %v6830 = vpop.f32.mrf.mxu0
    %v6831 = vadd.f32 0.0, %v6830
    %6832 = vmatmul.bf16.gmra.mxu0 %v6787
    %v6833 = vpop.f32.mrf.mxu0
    %v6834 = vadd.f32 0.0, %v6833
    %v6835 = vpop.f32.mrf.mxu0
    %v6836 = vadd.f32 0.0, %v6835
    %6837 = vdwg.mxu0
    %v6838 = vadd.f32 %v6740, %v6799
    %v6839 = vadd.f32 %v6741, %v6801
    %v6840 = vadd.f32 %v6742, %v6804
    %v6841 = vadd.f32 %v6743, %v6806
    %v6842 = vadd.f32 %v6744, %v6809
    %v6843 = vadd.f32 %v6745, %v6811
    %v6844 = vadd.f32 %v6746, %v6814
    %v6845 = vadd.f32 %v6747, %v6816
    %v6846 = vadd.f32 %v6748, %v6819
    %v6847 = vadd.f32 %v6749, %v6821
    %v6848 = vadd.f32 %v6750, %v6824
    %v6849 = vadd.f32 %v6751, %v6826
    %v6850 = vadd.f32 %v6752, %v6829
    %v6851 = vadd.f32 %v6753, %v6831
    %v6852 = vadd.f32 %v6754, %v6834
    %v6853 = vadd.f32 %v6755, %v6836
    %s6854 = scalar_lea.vmem %s5, 112
    %v6855 = vld [vmem:[%s6854] sm:$0xf]
    %v6856 = vld [vmem:[%s6854 + $0x4] sm:$0xf]
    %v6857 = vld [vmem:[%s6854 + $0x8] sm:$0xf]
    %v6858 = vld [vmem:[%s6854 + $0xc] sm:$0xf]
    %v6860 = vunpack.c.l.b16 %v6135
    %v6861 = vpack.c.b16 %v6767, %v6766
    %v6862 = vpack.c.b16 %v6860, %v6768
    %v6867 = vunpack.c.l.b16 %v6855
    %v6868 = vunpack.c.l.b16 %v6856
    %v6869 = vunpack.c.l.b16 %v6857
    %v6870 = vunpack.c.l.b16 %v6858
    %v6871 = vpack.c.b16 %v6868, %v6867
    %v6872 = vpack.c.b16 %v6870, %v6869
    %v6876 = vsel %vm2244, %v6861, 0
    %v6879 = vsel %vm2244, %v6862, 0
    %6881 = vmatpush.bf16.msra.mxu0 0
    %6882 = vmatpush.bf16.msra.mxu0 0
    %6883 = vmatpush.bf16.msra.mxu0 0
    %6884 = vmatpush.bf16.msra.mxu0 0
    %6885 = vmatpush.bf16.msra.mxu0 0
    %6886 = vmatpush.bf16.msra.mxu0 0
    %6887 = vmatpush.bf16.msra.mxu0 %v6872
    %6888 = vmatpush.bf16.msra.mxu0 %v6871
    %6889 = vmatmul.bf16.gmra.mxu0 %v6211
    %v6890 = vpop.f32.mrf.mxu0
    %v6891 = vadd.f32 0.0, %v6890
    %v6892 = vpop.f32.mrf.mxu0
    %v6893 = vadd.f32 0.0, %v6892
    %6894 = vmatmul.bf16.gmra.mxu0 %v6214
    %v6895 = vpop.f32.mrf.mxu0
    %v6896 = vadd.f32 0.0, %v6895
    %v6897 = vpop.f32.mrf.mxu0
    %v6898 = vadd.f32 0.0, %v6897
    %6899 = vmatmul.bf16.gmra.mxu0 %v6217
    %v6900 = vpop.f32.mrf.mxu0
    %v6901 = vadd.f32 0.0, %v6900
    %v6902 = vpop.f32.mrf.mxu0
    %v6903 = vadd.f32 0.0, %v6902
    %6904 = vmatmul.bf16.gmra.mxu0 %v6220
    %v6905 = vpop.f32.mrf.mxu0
    %v6906 = vadd.f32 0.0, %v6905
    %v6907 = vpop.f32.mrf.mxu0
    %v6908 = vadd.f32 0.0, %v6907
    %6909 = vmatmul.bf16.gmra.mxu0 %v6598
    %v6910 = vpop.f32.mrf.mxu0
    %v6911 = vadd.f32 0.0, %v6910
    %v6912 = vpop.f32.mrf.mxu0
    %v6913 = vadd.f32 0.0, %v6912
    %6914 = vmatmul.bf16.gmra.mxu0 %v6601
    %v6915 = vpop.f32.mrf.mxu0
    %v6916 = vadd.f32 0.0, %v6915
    %v6917 = vpop.f32.mrf.mxu0
    %v6918 = vadd.f32 0.0, %v6917
    %6919 = vmatmul.bf16.gmra.mxu0 %v6876
    %v6920 = vpop.f32.mrf.mxu0
    %v6921 = vadd.f32 0.0, %v6920
    %v6922 = vpop.f32.mrf.mxu0
    %v6923 = vadd.f32 0.0, %v6922
    %6924 = vmatmul.bf16.gmra.mxu0 %v6879
    %v6925 = vpop.f32.mrf.mxu0
    %v6926 = vadd.f32 0.0, %v6925
    %v6927 = vpop.f32.mrf.mxu0
    %v6928 = vadd.f32 0.0, %v6927
    %6929 = vdwg.mxu0
    %v6930 = vadd.f32 %v6838, %v6891
    %v6931 = vadd.f32 %v6839, %v6893
    %v6932 = vadd.f32 %v6840, %v6896
    %v6933 = vadd.f32 %v6841, %v6898
    %v6934 = vadd.f32 %v6842, %v6901
    %v6935 = vadd.f32 %v6843, %v6903
    %v6936 = vadd.f32 %v6844, %v6906
    %v6937 = vadd.f32 %v6845, %v6908
    %v6938 = vadd.f32 %v6846, %v6911
    %v6939 = vadd.f32 %v6847, %v6913
    %v6940 = vadd.f32 %v6848, %v6916
    %v6941 = vadd.f32 %v6849, %v6918
    %v6942 = vadd.f32 %v6850, %v6921
    %v6943 = vadd.f32 %v6851, %v6923
    %v6944 = vadd.f32 %v6852, %v6926
    %v6945 = vadd.f32 %v6853, %v6928
    %s6946 = scalar_lea.vmem %s5, 128
    %v6947 = vld [vmem:[%s6946] sm:$0xf]
    %v6948 = vld [vmem:[%s6946 + $0x4] sm:$0xf]
    %v6949 = vld [vmem:[%s6946 + $0x8] sm:$0xf]
    %v6950 = vld [vmem:[%s6946 + $0xc] sm:$0xf]
    %v6952 = vunpack.c.l.b16 %v6136
    %v6953 = vpack.c.b16 %v6952, %v6860
    %v6958 = vunpack.c.l.b16 %v6947
    %v6959 = vunpack.c.l.b16 %v6948
    %v6960 = vunpack.c.l.b16 %v6949
    %v6961 = vunpack.c.l.b16 %v6950
    %v6962 = vpack.c.b16 %v6959, %v6958
    %v6963 = vpack.c.b16 %v6961, %v6960
    %v6967 = vsel %vm2244, %v6953, 0
    %6969 = vmatpush.bf16.msra.mxu0 0
    %6970 = vmatpush.bf16.msra.mxu0 0
    %6971 = vmatpush.bf16.msra.mxu0 0
    %6972 = vmatpush.bf16.msra.mxu0 0
    %6973 = vmatpush.bf16.msra.mxu0 0
    %6974 = vmatpush.bf16.msra.mxu0 0
    %6975 = vmatpush.bf16.msra.mxu0 %v6963
    %6976 = vmatpush.bf16.msra.mxu0 %v6962
    %6977 = vmatmul.bf16.gmra.mxu0 %v6315
    %v6978 = vpop.f32.mrf.mxu0
    %v6979 = vadd.f32 0.0, %v6978
    %v6980 = vpop.f32.mrf.mxu0
    %v6981 = vadd.f32 0.0, %v6980
    %6982 = vmatmul.bf16.gmra.mxu0 %v6408
    %v6983 = vpop.f32.mrf.mxu0
    %v6984 = vadd.f32 0.0, %v6983
    %v6985 = vpop.f32.mrf.mxu0
    %v6986 = vadd.f32 0.0, %v6985
    %6987 = vmatmul.bf16.gmra.mxu0 %v6321
    %v6988 = vpop.f32.mrf.mxu0
    %v6989 = vadd.f32 0.0, %v6988
    %v6990 = vpop.f32.mrf.mxu0
    %v6991 = vadd.f32 0.0, %v6990
    %6992 = vmatmul.bf16.gmra.mxu0 %v6411
    %v6993 = vpop.f32.mrf.mxu0
    %v6994 = vadd.f32 0.0, %v6993
    %v6995 = vpop.f32.mrf.mxu0
    %v6996 = vadd.f32 0.0, %v6995
    %6997 = vmatmul.bf16.gmra.mxu0 %v6509
    %v6998 = vpop.f32.mrf.mxu0
    %v6999 = vadd.f32 0.0, %v6998
    %v7000 = vpop.f32.mrf.mxu0
    %v7001 = vadd.f32 0.0, %v7000
    %7002 = vmatmul.bf16.gmra.mxu0 %v6689
    %v7003 = vpop.f32.mrf.mxu0
    %v7004 = vadd.f32 0.0, %v7003
    %v7005 = vpop.f32.mrf.mxu0
    %v7006 = vadd.f32 0.0, %v7005
    %7007 = vmatmul.bf16.gmra.mxu0 %v6787
    %v7008 = vpop.f32.mrf.mxu0
    %v7009 = vadd.f32 0.0, %v7008
    %v7010 = vpop.f32.mrf.mxu0
    %v7011 = vadd.f32 0.0, %v7010
    %7012 = vmatmul.bf16.gmra.mxu0 %v6967
    %v7013 = vpop.f32.mrf.mxu0
    %v7014 = vadd.f32 0.0, %v7013
    %v7015 = vpop.f32.mrf.mxu0
    %v7016 = vadd.f32 0.0, %v7015
    %7017 = vdwg.mxu0
    %v7018 = vadd.f32 %v6930, %v6979
    %v7019 = vadd.f32 %v6931, %v6981
    %v7020 = vadd.f32 %v6932, %v6984
    %v7021 = vadd.f32 %v6933, %v6986
    %v7022 = vadd.f32 %v6934, %v6989
    %v7023 = vadd.f32 %v6935, %v6991
    %v7024 = vadd.f32 %v6936, %v6994
    %v7025 = vadd.f32 %v6937, %v6996
    %v7026 = vadd.f32 %v6938, %v6999
    %v7027 = vadd.f32 %v6939, %v7001
    %v7028 = vadd.f32 %v6940, %v7004
    %v7029 = vadd.f32 %v6941, %v7006
    %v7030 = vadd.f32 %v6942, %v7009
    %v7031 = vadd.f32 %v6943, %v7011
    %v7032 = vadd.f32 %v6944, %v7014
    %v7033 = vadd.f32 %v6945, %v7016
    %v7034 = vld [vmem:[%s6] sm:$0x1]
    %v7036 = vperm.slane %v7034, 0
    %v7038 = vadd.f32 %v7018, %v7036
    %v7039 = vadd.f32 %v7019, %v7036
    %v7040 = vadd.f32 %v7020, %v7036
    %v7041 = vadd.f32 %v7021, %v7036
    %v7042 = vadd.f32 %v7022, %v7036
    %v7043 = vadd.f32 %v7023, %v7036
    %v7044 = vadd.f32 %v7024, %v7036
    %v7045 = vadd.f32 %v7025, %v7036
    %v7046 = vadd.f32 %v7026, %v7036
    %v7047 = vadd.f32 %v7027, %v7036
    %v7048 = vadd.f32 %v7028, %v7036
    %v7049 = vadd.f32 %v7029, %v7036
    %v7050 = vadd.f32 %v7030, %v7036
    %v7051 = vadd.f32 %v7031, %v7036
    %v7052 = vadd.f32 %v7032, %v7036
    %v7053 = vadd.f32 %v7033, %v7036
    %v7054 = vmax.f32 %v7038, 0.0
    %v7055 = vmax.f32 %v7039, 0.0
    %v7056 = vmax.f32 %v7040, 0.0
    %v7057 = vmax.f32 %v7041, 0.0
    %v7058 = vmax.f32 %v7042, 0.0
    %v7059 = vmax.f32 %v7043, 0.0
    %v7060 = vmax.f32 %v7044, 0.0
    %v7061 = vmax.f32 %v7045, 0.0
    %v7062 = vmax.f32 %v7046, 0.0
    %v7063 = vmax.f32 %v7047, 0.0
    %v7064 = vmax.f32 %v7048, 0.0
    %v7065 = vmax.f32 %v7049, 0.0
    %v7066 = vmax.f32 %v7050, 0.0
    %v7067 = vmax.f32 %v7051, 0.0
    %v7068 = vmax.f32 %v7052, 0.0
    %v7069 = vmax.f32 %v7053, 0.0
    %v7070 = vsel %vm2244, %v7054, -inf
    %v7071 = vsel %vm2244, %v7055, -inf
    %v7072 = vmax.f32 %v7070, %v7071
    %v7073 = vsel %vm2244, %v7056, -inf
    %v7074 = vsel %vm2244, %v7057, -inf
    %v7075 = vmax.f32 %v7073, %v7074
    %v7076 = vsel %vm2244, %v7058, -inf
    %v7077 = vsel %vm2244, %v7059, -inf
    %v7078 = vmax.f32 %v7076, %v7077
    %v7079 = vsel %vm2244, %v7060, -inf
    %v7080 = vsel %vm2244, %v7061, -inf
    %v7081 = vmax.f32 %v7079, %v7080
    %v7082 = vsel %vm2244, %v7062, -inf
    %v7083 = vsel %vm2244, %v7063, -inf
    %v7084 = vmax.f32 %v7082, %v7083
    %v7085 = vsel %vm2244, %v7064, -inf
    %v7086 = vsel %vm2244, %v7065, -inf
    %v7087 = vmax.f32 %v7085, %v7086
    %v7088 = vsel %vm2244, %v7066, -inf
    %v7089 = vsel %vm2244, %v7067, -inf
    %v7090 = vmax.f32 %v7088, %v7089
    %v7091 = vsel %vm2244, %v7068, -inf
    %v7092 = vsel %vm2244, %v7069, -inf
    %v7093 = vmax.f32 %v7091, %v7092
    %v7094 = vsel %vm2244, %v7072, -inf
    %v7095 = vsel %vm2244, %v7078, -inf
    %v7096 = vmax.f32 %v7094, %v7095
    %v7097 = vsel %vm2244, %v7075, -inf
    %v7098 = vsel %vm2244, %v7081, -inf
    %v7099 = vmax.f32 %v7097, %v7098
    %v7100 = vsel %vm2244, %v7084, -inf
    %v7101 = vsel %vm2244, %v7090, -inf
    %v7102 = vmax.f32 %v7100, %v7101
    %v7103 = vsel %vm2244, %v7087, -inf
    %v7104 = vsel %vm2244, %v7093, -inf
    %v7105 = vmax.f32 %v7103, %v7104
    %7106 = vst.msk [vmem:[#allocation2] sm:$0xf] %vm2821, 0
    %7107 = vst.msk [vmem:[#allocation2 + $0x4] sm:$0xf] %vm2821, 0
    %7108 = vst.msk [vmem:[#allocation2 + $0x8] sm:$0xf] %vm2821, 0
    %7109 = vst.msk [vmem:[#allocation2 + $0xc] sm:$0xf] %vm2821, 0
    %s7110 = scalar_lea.vmem [#allocation2], 120
    %7111 = vst.msk [vmem:[%s7110] sm:$0xf] %vm2821, 0
    %7112 = vst.msk [vmem:[%s7110 + $0x4] sm:$0xf] %vm2821, 0
    %7113 = vst.msk [vmem:[%s7110 + $0x8] sm:$0xf] %vm2821, 0
    %7114 = vst.msk [vmem:[%s7110 + $0xc] sm:$0xf] %vm2821, 0
    %7115 = vst.msk [vmem:[%s2843] sm:$0xf] %vm2821, 0
    %7116 = vst.msk [vmem:[%s2843 + $0x28] sm:$0xf] %vm2821, 0
    %s7117 = scalar_lea.vmem [#allocation2], 52
    %7118 = vst.msk [vmem:[%s7117] sm:$0xf] %vm2821, 0
    %7119 = vst.msk [vmem:[%s7117 + $0x28] sm:$0xf] %vm2821, 0
    %v7120 = vpack.c.bf16 %v7096, %v7096
    %v7121 = vpack.c.bf16 %v7099, %v7099
    %v7122 = vpack.c.bf16 %v7102, %v7102
    %v7123 = vpack.c.bf16 %v7105, %v7105
    %7124 = vst.msk [vmem:[%s2925] sm:$0xf] %vm2821, %v7120
    %7125 = vst.msk [vmem:[%s2925 + $0x4] sm:$0xf] %vm2821, %v7121
    %7126 = vst.msk [vmem:[%s2925 + $0x28] sm:$0xf] %vm2821, %v7122
    %7127 = vst.msk [vmem:[%s2925 + $0x2c] sm:$0xf] %vm2821, %v7123
    %v7128 = vld [vmem:[#allocation2] sm:$0xf]
    %v7129 = vld [vmem:[#allocation2 + $0x4] sm:$0xf]
    %v7130 = vld [vmem:[#allocation2 + $0x8] sm:$0xf]
    %v7131 = vld [vmem:[#allocation2 + $0xc] sm:$0xf]
    %v7132 = vld [vmem:[#allocation2 + $0x28] sm:$0xf]
    %v7133 = vld [vmem:[#allocation2 + $0x2c] sm:$0xf]
    %v7134 = vld [vmem:[#allocation2 + $0x30] sm:$0xf]
    %v7135 = vld [vmem:[#allocation2 + $0x34] sm:$0xf]
    %v7136 = vld [vmem:[#allocation2 + $0x50] sm:$0xf]
    %v7137 = vld [vmem:[#allocation2 + $0x54] sm:$0xf]
    %v7138 = vld [vmem:[#allocation2 + $0x58] sm:$0xf]
    %v7139 = vld [vmem:[#allocation2 + $0x5c] sm:$0xf]
    %v7140 = vld [vmem:[#allocation2 + $0x78] sm:$0xf]
    %v7141 = vld [vmem:[#allocation2 + $0x7c] sm:$0xf]
    %v7142 = vld [vmem:[#allocation2 + $0x80] sm:$0xf]
    %v7143 = vld [vmem:[#allocation2 + $0x84] sm:$0xf]
    %v7144 = vld [vmem:[%s7] sm:$0xf]
    %v7145 = vld [vmem:[%s7 + $0x4] sm:$0xf]
    %v7146 = vld [vmem:[%s7 + $0x8] sm:$0xf]
    %v7147 = vld [vmem:[%s7 + $0xc] sm:$0xf]
    %s7148 = scalar_lea.vmem %s7, 16
    %v7149 = vld [vmem:[%s7148] sm:$0xf]
    %v7150 = vld [vmem:[%s7148 + $0x4] sm:$0xf]
    %v7151 = vld [vmem:[%s7148 + $0x8] sm:$0xf]
    %v7152 = vld [vmem:[%s7148 + $0xc] sm:$0xf]
    %v7157 = vunpack.c.l.b16 %v7129
    %v7158 = vunpack.c.l.b16 %v7130
    %v7159 = vunpack.c.l.b16 %v7133
    %v7160 = vunpack.c.l.b16 %v7134
    %v7161 = vpack.c.b16 %v7158, %v7157
    %v7162 = vpack.c.b16 %v7160, %v7159
    %v7167 = vunpack.c.l.b16 %v7149
    %v7168 = vunpack.c.l.b16 %v7150
    %v7169 = vunpack.c.l.b16 %v7151
    %v7170 = vunpack.c.l.b16 %v7152
    %v7171 = vpack.c.b16 %v7168, %v7167
    %v7172 = vpack.c.b16 %v7170, %v7169
    %v7176 = vsel %vm2244, %v7161, 0
    %v7179 = vsel %vm2244, %v7162, 0
    %7181 = vmatpush.bf16.msra.mxu0 0
    %7182 = vmatpush.bf16.msra.mxu0 0
    %7183 = vmatpush.bf16.msra.mxu0 0
    %7184 = vmatpush.bf16.msra.mxu0 0
    %7185 = vmatpush.bf16.msra.mxu0 0
    %7186 = vmatpush.bf16.msra.mxu0 0
    %7187 = vmatpush.bf16.msra.mxu0 %v7172
    %7188 = vmatpush.bf16.msra.mxu0 %v7171
    %7189 = vmatmul.bf16.gmra.mxu0 %v7176
    %v7190 = vpop.f32.mrf.mxu0
    %v7191 = vadd.f32 0.0, %v7190
    %v7192 = vpop.f32.mrf.mxu0
    %v7193 = vadd.f32 0.0, %v7192
    %7194 = vmatmul.bf16.gmra.mxu0 %v7179
    %v7195 = vpop.f32.mrf.mxu0
    %v7196 = vadd.f32 0.0, %v7195
    %v7197 = vpop.f32.mrf.mxu0
    %v7198 = vadd.f32 0.0, %v7197
    %7199 = vdwg.mxu0
    %v7202 = vunpack.c.l.b16 %v7128
    %v7203 = vunpack.c.l.b16 %v7132
    %v7204 = vpack.c.b16 %v7157, %v7202
    %v7205 = vpack.c.b16 %v7159, %v7203
    %v7210 = vunpack.c.l.b16 %v7144
    %v7211 = vunpack.c.l.b16 %v7145
    %v7212 = vunpack.c.l.b16 %v7146
    %v7213 = vunpack.c.l.b16 %v7147
    %v7214 = vpack.c.b16 %v7211, %v7210
    %v7215 = vpack.c.b16 %v7213, %v7212
    %v7219 = vsel %vm2244, %v7204, 0
    %v7222 = vsel %vm2244, %v7205, 0
    %7224 = vmatpush.bf16.msra.mxu0 0
    %7225 = vmatpush.bf16.msra.mxu0 0
    %7226 = vmatpush.bf16.msra.mxu0 0
    %7227 = vmatpush.bf16.msra.mxu0 0
    %7228 = vmatpush.bf16.msra.mxu0 0
    %7229 = vmatpush.bf16.msra.mxu0 0
    %7230 = vmatpush.bf16.msra.mxu0 %v7215
    %7231 = vmatpush.bf16.msra.mxu0 %v7214
    %7232 = vmatmul.bf16.gmra.mxu0 %v7219
    %v7233 = vpop.f32.mrf.mxu0
    %v7234 = vadd.f32 %v7191, %v7233
    %v7235 = vpop.f32.mrf.mxu0
    %v7236 = vadd.f32 %v7193, %v7235
    %7237 = vmatmul.bf16.gmra.mxu0 %v7222
    %v7238 = vpop.f32.mrf.mxu0
    %v7239 = vadd.f32 %v7196, %v7238
    %v7240 = vpop.f32.mrf.mxu0
    %v7241 = vadd.f32 %v7198, %v7240
    %7242 = vdwg.mxu0
    %s7243 = scalar_lea.vmem %s7, 32
    %v7244 = vld [vmem:[%s7243] sm:$0xf]
    %v7245 = vld [vmem:[%s7243 + $0x4] sm:$0xf]
    %v7246 = vld [vmem:[%s7243 + $0x8] sm:$0xf]
    %v7247 = vld [vmem:[%s7243 + $0xc] sm:$0xf]
    %v7250 = vunpack.c.l.b16 %v7131
    %v7251 = vunpack.c.l.b16 %v7135
    %v7252 = vpack.c.b16 %v7250, %v7158
    %v7253 = vpack.c.b16 %v7251, %v7160
    %v7258 = vunpack.c.l.b16 %v7244
    %v7259 = vunpack.c.l.b16 %v7245
    %v7260 = vunpack.c.l.b16 %v7246
    %v7261 = vunpack.c.l.b16 %v7247
    %v7262 = vpack.c.b16 %v7259, %v7258
    %v7263 = vpack.c.b16 %v7261, %v7260
    %v7267 = vsel %vm2244, %v7252, 0
    %v7270 = vsel %vm2244, %v7253, 0
    %7272 = vmatpush.bf16.msra.mxu0 0
    %7273 = vmatpush.bf16.msra.mxu0 0
    %7274 = vmatpush.bf16.msra.mxu0 0
    %7275 = vmatpush.bf16.msra.mxu0 0
    %7276 = vmatpush.bf16.msra.mxu0 0
    %7277 = vmatpush.bf16.msra.mxu0 0
    %7278 = vmatpush.bf16.msra.mxu0 %v7263
    %7279 = vmatpush.bf16.msra.mxu0 %v7262
    %7280 = vmatmul.bf16.gmra.mxu0 %v7267
    %v7281 = vpop.f32.mrf.mxu0
    %v7282 = vadd.f32 0.0, %v7281
    %v7283 = vpop.f32.mrf.mxu0
    %v7284 = vadd.f32 0.0, %v7283
    %7285 = vmatmul.bf16.gmra.mxu0 %v7270
    %v7286 = vpop.f32.mrf.mxu0
    %v7287 = vadd.f32 0.0, %v7286
    %v7288 = vpop.f32.mrf.mxu0
    %v7289 = vadd.f32 0.0, %v7288
    %7290 = vdwg.mxu0
    %v7291 = vadd.f32 %v7234, %v7282
    %v7292 = vadd.f32 %v7236, %v7284
    %v7293 = vadd.f32 %v7239, %v7287
    %v7294 = vadd.f32 %v7241, %v7289
    %s7295 = scalar_lea.vmem %s7, 48
    %v7296 = vld [vmem:[%s7295] sm:$0xf]
    %v7297 = vld [vmem:[%s7295 + $0x4] sm:$0xf]
    %v7298 = vld [vmem:[%s7295 + $0x8] sm:$0xf]
    %v7299 = vld [vmem:[%s7295 + $0xc] sm:$0xf]
    %v7302 = vunpack.c.l.b16 %v7136
    %v7303 = vunpack.c.l.b16 %v7137
    %v7304 = vpack.c.b16 %v7303, %v7302
    %v7309 = vunpack.c.l.b16 %v7296
    %v7310 = vunpack.c.l.b16 %v7297
    %v7311 = vunpack.c.l.b16 %v7298
    %v7312 = vunpack.c.l.b16 %v7299
    %v7313 = vpack.c.b16 %v7310, %v7309
    %v7314 = vpack.c.b16 %v7312, %v7311
    %v7318 = vsel %vm2244, %v7304, 0
    %7320 = vmatpush.bf16.msra.mxu0 0
    %7321 = vmatpush.bf16.msra.mxu0 0
    %7322 = vmatpush.bf16.msra.mxu0 0
    %7323 = vmatpush.bf16.msra.mxu0 0
    %7324 = vmatpush.bf16.msra.mxu0 0
    %7325 = vmatpush.bf16.msra.mxu0 0
    %7326 = vmatpush.bf16.msra.mxu0 %v7314
    %7327 = vmatpush.bf16.msra.mxu0 %v7313
    %7328 = vmatmul.bf16.gmra.mxu0 %v7222
    %v7329 = vpop.f32.mrf.mxu0
    %v7330 = vadd.f32 0.0, %v7329
    %v7331 = vpop.f32.mrf.mxu0
    %v7332 = vadd.f32 0.0, %v7331
    %7333 = vmatmul.bf16.gmra.mxu0 %v7318
    %v7334 = vpop.f32.mrf.mxu0
    %v7335 = vadd.f32 0.0, %v7334
    %v7336 = vpop.f32.mrf.mxu0
    %v7337 = vadd.f32 0.0, %v7336
    %7338 = vdwg.mxu0
    %v7339 = vadd.f32 %v7291, %v7330
    %v7340 = vadd.f32 %v7292, %v7332
    %v7341 = vadd.f32 %v7293, %v7335
    %v7342 = vadd.f32 %v7294, %v7337
    %s7343 = scalar_lea.vmem %s7, 64
    %v7344 = vld [vmem:[%s7343] sm:$0xf]
    %v7345 = vld [vmem:[%s7343 + $0x4] sm:$0xf]
    %v7346 = vld [vmem:[%s7343 + $0x8] sm:$0xf]
    %v7347 = vld [vmem:[%s7343 + $0xc] sm:$0xf]
    %v7349 = vunpack.c.l.b16 %v7138
    %v7350 = vpack.c.b16 %v7349, %v7303
    %v7355 = vunpack.c.l.b16 %v7344
    %v7356 = vunpack.c.l.b16 %v7345
    %v7357 = vunpack.c.l.b16 %v7346
    %v7358 = vunpack.c.l.b16 %v7347
    %v7359 = vpack.c.b16 %v7356, %v7355
    %v7360 = vpack.c.b16 %v7358, %v7357
    %v7364 = vsel %vm2244, %v7350, 0
    %7366 = vmatpush.bf16.msra.mxu0 0
    %7367 = vmatpush.bf16.msra.mxu0 0
    %7368 = vmatpush.bf16.msra.mxu0 0
    %7369 = vmatpush.bf16.msra.mxu0 0
    %7370 = vmatpush.bf16.msra.mxu0 0
    %7371 = vmatpush.bf16.msra.mxu0 0
    %7372 = vmatpush.bf16.msra.mxu0 %v7360
    %7373 = vmatpush.bf16.msra.mxu0 %v7359
    %7374 = vmatmul.bf16.gmra.mxu0 %v7179
    %v7375 = vpop.f32.mrf.mxu0
    %v7376 = vadd.f32 0.0, %v7375
    %v7377 = vpop.f32.mrf.mxu0
    %v7378 = vadd.f32 0.0, %v7377
    %7379 = vmatmul.bf16.gmra.mxu0 %v7364
    %v7380 = vpop.f32.mrf.mxu0
    %v7381 = vadd.f32 0.0, %v7380
    %v7382 = vpop.f32.mrf.mxu0
    %v7383 = vadd.f32 0.0, %v7382
    %7384 = vdwg.mxu0
    %v7385 = vadd.f32 %v7339, %v7376
    %v7386 = vadd.f32 %v7340, %v7378
    %v7387 = vadd.f32 %v7341, %v7381
    %v7388 = vadd.f32 %v7342, %v7383
    %s7389 = scalar_lea.vmem %s7, 80
    %v7390 = vld [vmem:[%s7389] sm:$0xf]
    %v7391 = vld [vmem:[%s7389 + $0x4] sm:$0xf]
    %v7392 = vld [vmem:[%s7389 + $0x8] sm:$0xf]
    %v7393 = vld [vmem:[%s7389 + $0xc] sm:$0xf]
    %v7395 = vunpack.c.l.b16 %v7139
    %v7396 = vpack.c.b16 %v7395, %v7349
    %v7401 = vunpack.c.l.b16 %v7390
    %v7402 = vunpack.c.l.b16 %v7391
    %v7403 = vunpack.c.l.b16 %v7392
    %v7404 = vunpack.c.l.b16 %v7393
    %v7405 = vpack.c.b16 %v7402, %v7401
    %v7406 = vpack.c.b16 %v7404, %v7403
    %v7410 = vsel %vm2244, %v7396, 0
    %7412 = vmatpush.bf16.msra.mxu0 0
    %7413 = vmatpush.bf16.msra.mxu0 0
    %7414 = vmatpush.bf16.msra.mxu0 0
    %7415 = vmatpush.bf16.msra.mxu0 0
    %7416 = vmatpush.bf16.msra.mxu0 0
    %7417 = vmatpush.bf16.msra.mxu0 0
    %7418 = vmatpush.bf16.msra.mxu0 %v7406
    %7419 = vmatpush.bf16.msra.mxu0 %v7405
    %7420 = vmatmul.bf16.gmra.mxu0 %v7270
    %v7421 = vpop.f32.mrf.mxu0
    %v7422 = vadd.f32 0.0, %v7421
    %v7423 = vpop.f32.mrf.mxu0
    %v7424 = vadd.f32 0.0, %v7423
    %7425 = vmatmul.bf16.gmra.mxu0 %v7410
    %v7426 = vpop.f32.mrf.mxu0
    %v7427 = vadd.f32 0.0, %v7426
    %v7428 = vpop.f32.mrf.mxu0
    %v7429 = vadd.f32 0.0, %v7428
    %7430 = vdwg.mxu0
    %v7431 = vadd.f32 %v7385, %v7422
    %v7432 = vadd.f32 %v7386, %v7424
    %v7433 = vadd.f32 %v7387, %v7427
    %v7434 = vadd.f32 %v7388, %v7429
    %s7435 = scalar_lea.vmem %s7, 96
    %v7436 = vld [vmem:[%s7435] sm:$0xf]
    %v7437 = vld [vmem:[%s7435 + $0x4] sm:$0xf]
    %v7438 = vld [vmem:[%s7435 + $0x8] sm:$0xf]
    %v7439 = vld [vmem:[%s7435 + $0xc] sm:$0xf]
    %v7442 = vunpack.c.l.b16 %v7140
    %v7443 = vunpack.c.l.b16 %v7141
    %v7444 = vpack.c.b16 %v7443, %v7442
    %v7449 = vunpack.c.l.b16 %v7436
    %v7450 = vunpack.c.l.b16 %v7437
    %v7451 = vunpack.c.l.b16 %v7438
    %v7452 = vunpack.c.l.b16 %v7439
    %v7453 = vpack.c.b16 %v7450, %v7449
    %v7454 = vpack.c.b16 %v7452, %v7451
    %v7458 = vsel %vm2244, %v7444, 0
    %7460 = vmatpush.bf16.msra.mxu0 0
    %7461 = vmatpush.bf16.msra.mxu0 0
    %7462 = vmatpush.bf16.msra.mxu0 0
    %7463 = vmatpush.bf16.msra.mxu0 0
    %7464 = vmatpush.bf16.msra.mxu0 0
    %7465 = vmatpush.bf16.msra.mxu0 0
    %7466 = vmatpush.bf16.msra.mxu0 %v7454
    %7467 = vmatpush.bf16.msra.mxu0 %v7453
    %7468 = vmatmul.bf16.gmra.mxu0 %v7318
    %v7469 = vpop.f32.mrf.mxu0
    %v7470 = vadd.f32 0.0, %v7469
    %v7471 = vpop.f32.mrf.mxu0
    %v7472 = vadd.f32 0.0, %v7471
    %7473 = vmatmul.bf16.gmra.mxu0 %v7458
    %v7474 = vpop.f32.mrf.mxu0
    %v7475 = vadd.f32 0.0, %v7474
    %v7476 = vpop.f32.mrf.mxu0
    %v7477 = vadd.f32 0.0, %v7476
    %7478 = vdwg.mxu0
    %v7479 = vadd.f32 %v7431, %v7470
    %v7480 = vadd.f32 %v7432, %v7472
    %v7481 = vadd.f32 %v7433, %v7475
    %v7482 = vadd.f32 %v7434, %v7477
    %s7483 = scalar_lea.vmem %s7, 112
    %v7484 = vld [vmem:[%s7483] sm:$0xf]
    %v7485 = vld [vmem:[%s7483 + $0x4] sm:$0xf]
    %v7486 = vld [vmem:[%s7483 + $0x8] sm:$0xf]
    %v7487 = vld [vmem:[%s7483 + $0xc] sm:$0xf]
    %v7489 = vunpack.c.l.b16 %v7142
    %v7490 = vpack.c.b16 %v7489, %v7443
    %v7495 = vunpack.c.l.b16 %v7484
    %v7496 = vunpack.c.l.b16 %v7485
    %v7497 = vunpack.c.l.b16 %v7486
    %v7498 = vunpack.c.l.b16 %v7487
    %v7499 = vpack.c.b16 %v7496, %v7495
    %v7500 = vpack.c.b16 %v7498, %v7497
    %v7504 = vsel %vm2244, %v7490, 0
    %7506 = vmatpush.bf16.msra.mxu0 0
    %7507 = vmatpush.bf16.msra.mxu0 0
    %7508 = vmatpush.bf16.msra.mxu0 0
    %7509 = vmatpush.bf16.msra.mxu0 0
    %7510 = vmatpush.bf16.msra.mxu0 0
    %7511 = vmatpush.bf16.msra.mxu0 0
    %7512 = vmatpush.bf16.msra.mxu0 %v7500
    %7513 = vmatpush.bf16.msra.mxu0 %v7499
    %7514 = vmatmul.bf16.gmra.mxu0 %v7364
    %v7515 = vpop.f32.mrf.mxu0
    %v7516 = vadd.f32 0.0, %v7515
    %v7517 = vpop.f32.mrf.mxu0
    %v7518 = vadd.f32 0.0, %v7517
    %7519 = vmatmul.bf16.gmra.mxu0 %v7504
    %v7520 = vpop.f32.mrf.mxu0
    %v7521 = vadd.f32 0.0, %v7520
    %v7522 = vpop.f32.mrf.mxu0
    %v7523 = vadd.f32 0.0, %v7522
    %7524 = vdwg.mxu0
    %v7525 = vadd.f32 %v7479, %v7516
    %v7526 = vadd.f32 %v7480, %v7518
    %v7527 = vadd.f32 %v7481, %v7521
    %v7528 = vadd.f32 %v7482, %v7523
    %s7529 = scalar_lea.vmem %s7, 128
    %v7530 = vld [vmem:[%s7529] sm:$0xf]
    %v7531 = vld [vmem:[%s7529 + $0x4] sm:$0xf]
    %v7532 = vld [vmem:[%s7529 + $0x8] sm:$0xf]
    %v7533 = vld [vmem:[%s7529 + $0xc] sm:$0xf]
    %v7535 = vunpack.c.l.b16 %v7143
    %v7536 = vpack.c.b16 %v7535, %v7489
    %v7541 = vunpack.c.l.b16 %v7530
    %v7542 = vunpack.c.l.b16 %v7531
    %v7543 = vunpack.c.l.b16 %v7532
    %v7544 = vunpack.c.l.b16 %v7533
    %v7545 = vpack.c.b16 %v7542, %v7541
    %v7546 = vpack.c.b16 %v7544, %v7543
    %v7550 = vsel %vm2244, %v7536, 0
    %7552 = vmatpush.bf16.msra.mxu0 0
    %7553 = vmatpush.bf16.msra.mxu0 0
    %7554 = vmatpush.bf16.msra.mxu0 0
    %7555 = vmatpush.bf16.msra.mxu0 0
    %7556 = vmatpush.bf16.msra.mxu0 0
    %7557 = vmatpush.bf16.msra.mxu0 0
    %7558 = vmatpush.bf16.msra.mxu0 %v7546
    %7559 = vmatpush.bf16.msra.mxu0 %v7545
    %7560 = vmatmul.bf16.gmra.mxu0 %v7410
    %v7561 = vpop.f32.mrf.mxu0
    %v7562 = vadd.f32 0.0, %v7561
    %v7563 = vpop.f32.mrf.mxu0
    %v7564 = vadd.f32 0.0, %v7563
    %7565 = vmatmul.bf16.gmra.mxu0 %v7550
    %v7566 = vpop.f32.mrf.mxu0
    %v7567 = vadd.f32 0.0, %v7566
    %v7568 = vpop.f32.mrf.mxu0
    %v7569 = vadd.f32 0.0, %v7568
    %7570 = vdwg.mxu0
    %v7571 = vadd.f32 %v7525, %v7562
    %v7572 = vadd.f32 %v7526, %v7564
    %v7573 = vadd.f32 %v7527, %v7567
    %v7574 = vadd.f32 %v7528, %v7569
    %v7575 = vld [vmem:[%s8] sm:$0x1]
    %v7577 = vperm.slane %v7575, 0
    %v7579 = vadd.f32 %v7571, %v7577
    %v7580 = vadd.f32 %v7572, %v7577
    %v7581 = vadd.f32 %v7573, %v7577
    %v7582 = vadd.f32 %v7574, %v7577
    %v7583 = vmax.f32 %v7579, 0.0
    %v7584 = vmax.f32 %v7580, 0.0
    %v7585 = vmax.f32 %v7581, 0.0
    %v7586 = vmax.f32 %v7582, 0.0
    %v7587 = vsel %vm2244, %v7583, -inf
    %v7588 = vsel %vm2244, %v7584, -inf
    %v7589 = vmax.f32 %v7587, %v7588
    %v7590 = vsel %vm2244, %v7585, -inf
    %v7591 = vsel %vm2244, %v7586, -inf
    %v7592 = vmax.f32 %v7590, %v7591
    %v7593 = vsel %vm2244, %v7589, -inf
    %v7594 = vsel %vm2244, %v7592, -inf
    %v7595 = vmax.f32 %v7593, %v7594
    %v7596 = vpack.c.bf16 %v7595, %v7595
    %v7597 = vld [vmem:[%s9] sm:$0xf]
    %v7598 = vld [vmem:[%s9 + $0x4] sm:$0xf]
    %v7599 = vld [vmem:[%s9 + $0x8] sm:$0xf]
    %v7600 = vld [vmem:[%s9 + $0xc] sm:$0xf]
    %v7601 = vld [vmem:[%s10] sm:$0x1]
    %v7603 = vperm.slane %v7601, 0
    %v7609 = vunpack.c.l.b16 %v7597
    %v7610 = vunpack.c.l.b16 %v7598
    %v7611 = vunpack.c.l.b16 %v7599
    %v7612 = vunpack.c.l.b16 %v7600
    %v7613 = vpack.c.b16 %v7610, %v7609
    %v7614 = vpack.c.b16 %v7612, %v7611
    %v7618 = vsel %vm2244, %v7596, 0
    %7620 = vmatpush.bf16.msra.mxu0 0
    %7621 = vmatpush.bf16.msra.mxu0 0
    %7622 = vmatpush.bf16.msra.mxu0 0
    %7623 = vmatpush.bf16.msra.mxu0 0
    %7624 = vmatpush.bf16.msra.mxu0 0
    %7625 = vmatpush.bf16.msra.mxu0 0
    %7626 = vmatpush.bf16.msra.mxu0 %v7614
    %7627 = vmatpush.bf16.msra.mxu0 %v7613
    %7628 = vmatmul.bf16.gmra.mxu0 %v7618
    %v7629 = vpop.f32.mrf.mxu0
    %v7630 = vadd.f32 %v7603, %v7629
    %v7631 = vpop.f32.mrf.mxu0
    %7632 = vdwg.mxu0
    %7633 = vst [vmem:[#allocation3] sm:$0xff] %v7630
    // Predicated region
    $region46: #{tpu_custom_call.1} parent=1 // pred_check
      _
    $region47: #{tpu_custom_call.1} parent=1 // pred_check_branch
      %7635 = sbr.rel (0) target = $region49
    $region48: #{tpu_custom_call.1} parent=1 // pred_region
      %7637 = vsyncadd [#allocation4], 0
      %s7639 = sshll.u32 [#allocation3], 4
      %s7640 = int_to_ptr.vmem [resolvable:$true] %s7639
      %s7641 = sshll.u32 %s11, 4
      %s7642 = int_to_ptr.hbm [resolvable:$true] %s7641
      %7644 = dma.vmem_to_hbm [thread:$0]  %s7640, 128, %s7642, [#allocation4]
    $region49: #{tpu_custom_call.1} parent=1 // pred_fallthru
      _
    // Predicated region
    $region50: #{tpu_custom_call.1} parent=1 // pred_check
      _
    $region51: #{tpu_custom_call.1} parent=1 // pred_check_branch
      %7646 = sbr.rel (0) target = $region53
    $region52: #{tpu_custom_call.1} parent=1 // pred_region
      %7648 = dma.done [#allocation4], 128
    $region53: #{tpu_custom_call.1} parent=1 // pred_fallthru
      _
    %7649 = vsyncpa [#allocation4], 1

</llo_original>
